<compile_context>
chip_gen: v5e
topology: v5e:2x2
jax: 0.10.0
libtpu: 0.0.40
codegen_flags: <defaults>
</compile_context>

<pallas_src>
import jax
import jax.numpy as jnp
from jax import lax
from jax.experimental import pallas as pl
from jax.experimental.pallas import tpu as pltpu

EPS = 1e-5
LANE = 128


def _round_up(x, m):
    return (x + m - 1) // m * m


# ---------------------------------------------------------------------------
# Pallas kernels
# ---------------------------------------------------------------------------
def _make_block_kernel(stride, ho, wo, hq, cin_p, cout_p, fuse_head):
    """Fused 3x3-conv(+bias, ReLU) kernel processing one image per grid step.

    Input block is (1, G*hq, wq, cin_p): G=1 plane for stride 1 (the spatially
    padded image) or G=4 even/odd parity planes for stride 2, so every tap is
    a unit-stride static slice taken in VMEM (in-kernel im2col).
    """
    taps = []
    for ky in range(3):
        for kx in range(3):
            if stride == 1:
                taps.append((0, ky, kx))
            else:
                taps.append(((ky % 2) * 2 + (kx % 2), ky // 2, kx // 2))
    m = ho * wo
    inv_hw = 1.0 / float(m)

    def conv_body(x_ref, w_ref, b_ref):
        xv = x_ref[0]                                        # (G*hq, wq, cin_p)
        acc = jnp.zeros((m, cout_p), jnp.float32)
        for t, (g, dy, dx) in enumerate(taps):
            win = xv[g * hq + dy:g * hq + dy + ho, dx:dx + wo, :]
            acc = acc + jnp.dot(win.reshape(m, cin_p), w_ref[t],
                                preferred_element_type=jnp.float32)
        return jnp.maximum(acc + b_ref[...], 0.0)            # (m, cout_p) f32

    if not fuse_head:
        def kernel(x_ref, w_ref, b_ref, o_ref):
            y = conv_body(x_ref, w_ref, b_ref)
            o_ref[0] = y.reshape(ho, wo, cout_p).astype(o_ref.dtype)
    else:
        def kernel(x_ref, w_ref, b_ref, fw_ref, fb_ref, o_ref):
            y = conv_body(x_ref, w_ref, b_ref)
            pooled = jnp.sum(y, axis=0, keepdims=True) * inv_hw      # (1, C)
            logits = jnp.dot(pooled, fw_ref[...],
                             preferred_element_type=jnp.float32) + fb_ref[...]
            o_ref[0] = logits.astype(o_ref.dtype)
    return kernel


# ---------------------------------------------------------------------------
# Block wrapper (one pallas_call per fused RepVGG block)
# ---------------------------------------------------------------------------
def _parity_pack(xp, ho, wo):
    """Split a (N, H+2, W+2, C) padded input into the 4 even/odd parity planes
    needed by a stride-2 3x3 conv, stacked along rows:
    result (N, 4*(ho+1), wo+1, C); plane g = 2*py+px holds xp[:, py::2, px::2].
    """
    planes = []
    for py in range(2):
        for px in range(2):
            p = xp[:, py::2, px::2, :][:, :ho + 1, :wo + 1, :]
            ph, pw = p.shape[1], p.shape[2]
            if ph < ho + 1 or pw < wo + 1:
                p = jnp.pad(p, ((0, 0), (0, ho + 1 - ph),
                                (0, wo + 1 - pw), (0, 0)))
            planes.append(p)
    return jnp.concatenate(planes, axis=1)


def conv_block(x, blk, fc_w=None, fc_b=None):
    """One fused RepVGG block (conv+bias+ReLU) as a single pallas_call.
    If fc_w/fc_b are given, global-average-pool + Linear are fused in and the
    call returns padded logits instead of a feature map."""
    n, h, w, c = x.shape
    assert c == blk['cin_p'], (c, blk['cin_p'])
    s, cin_p, cout_p = blk['stride'], blk['cin_p'], blk['cout_p']
    ho = (h - 1) // s + 1
    wo = (w - 1) // s + 1
    xp = jnp.pad(x, ((0, 0), (1, 1), (1, 1), (0, 0)))
    if s == 1:
        xq, hq, wq, g = xp, h + 2, w + 2, 1
    else:
        hq, wq, g = ho + 1, wo + 1, 4
        xq = _parity_pack(xp, ho, wo)

    fuse_head = fc_w is not None
    kernel = _make_block_kernel(s, ho, wo, hq, cin_p, cout_p, fuse_head)

    in_specs = [
        pl.BlockSpec((1, g * hq, wq, cin_p), lambda i: (i, 0, 0, 0)),
        pl.BlockSpec((9, cin_p, cout_p), lambda i: (0, 0, 0)),
        pl.BlockSpec((1, cout_p), lambda i: (0, 0)),
    ]
    inputs = [xq, blk['w9'], blk['bias_p']]
    if fuse_head:
        ncp = fc_w.shape[1]
        in_specs += [pl.BlockSpec((cout_p, ncp), lambda i: (0, 0)),
                     pl.BlockSpec((1, ncp), lambda i: (0, 0))]
        inputs += [fc_w, fc_b]
        out_shape = jax.ShapeDtypeStruct((n, 1, ncp), jnp.float32)
        out_spec = pl.BlockSpec((1, 1, ncp), lambda i: (i, 0, 0))
    else:
        out_shape = jax.ShapeDtypeStruct((n, ho, wo, cout_p), jnp.bfloat16)
        out_spec = pl.BlockSpec((1, ho, wo, cout_p), lambda i: (i, 0, 0, 0))

    out = pl.pallas_call(
        kernel,
        out_shape=out_shape,
        grid_spec=pltpu.PrefetchScalarGridSpec(
            num_scalar_prefetch=0,
            grid=(n,),
            in_specs=in_specs,
            out_specs=out_spec),
        compiler_params=pltpu.CompilerParams(
            dimension_semantics=("parallel",),
            vmem_limit_bytes=48 * 1024 * 1024),
    )(*inputs)
    return out[:, 0, :] if fuse_head else out


# ---------------------------------------------------------------------------
# Parameter construction (plain JAX glue): deterministic init + BN fusion
# ---------------------------------------------------------------------------
def _fuse_conv_bn(kernel, gamma, beta, mean, var):
    std = jnp.sqrt(var + EPS)
    t = (gamma / std).reshape(-1, 1, 1, 1)
    return kernel * t, beta - mean * gamma / std


def _bn_params(key, c):
    k1, k2, k3, k4 = jax.random.split(key, 4)
    gamma = jax.random.uniform(k1, (c,), jnp.float32, 0.5, 1.5)
    beta = 0.1 * jax.random.normal(k2, (c,), jnp.float32)
    mean = 0.1 * jax.random.normal(k3, (c,), jnp.float32)
    var = jax.random.uniform(k4, (c,), jnp.float32, 0.5, 1.5)
    return gamma, beta, mean, var


def init_block(key, cin, cout, stride, cin_p):
    k3w, k3bn, k1w, k1bn, kidbn = jax.random.split(key, 5)
    w3 = 0.1 * jax.random.normal(k3w, (cout, cin, 3, 3), jnp.float32)
    w1 = 0.1 * jax.random.normal(k1w, (cout, cin, 1, 1), jnp.float32)
    k3, b3 = _fuse_conv_bn(w3, *_bn_params(k3bn, cout))
    k1, b1 = _fuse_conv_bn(w1, *_bn_params(k1bn, cout))
    k1 = jnp.pad(k1, ((0, 0), (0, 0), (1, 1), (1, 1)))   # 1x1 -> centered 3x3
    kernel = k3 + k1
    bias = b3 + b1
    if cin == cout and stride == 1:                       # identity-BN branch
        id_k = jnp.zeros((cin, cin, 3, 3), jnp.float32)
        id_k = id_k.at[jnp.arange(cin), jnp.arange(cin), 1, 1].set(1.0)
        kid, bid = _fuse_conv_bn(id_k, *_bn_params(kidbn, cin))
        kernel = kernel + kid
        bias = bias + bid
    cout_p = _round_up(cout, LANE)
    # (O, I, 3, 3) -> (ky, kx, I, O) -> (9, I, O); pad channels to 128-multiple
    # lanes and cast to bf16.  Padded rows/cols/bias are exactly zero so padded
    # lanes stay exactly zero through ReLU and downstream blocks.
    w9 = jnp.transpose(kernel, (2, 3, 1, 0)).reshape(9, cin, cout)
    w9_p = jnp.zeros((9, cin_p, cout_p), jnp.float32)
    w9_p = w9_p.at[:, :cin, :cout].set(w9).astype(jnp.bfloat16)
    bias_p = jnp.zeros((1, cout_p), jnp.float32).at[0, :cout].set(bias)
    return dict(w9=w9_p, bias_p=bias_p, kernel_oihw=kernel, bias=bias,
                cin=cin, cin_p=cin_p, cout=cout, cout_p=cout_p, stride=stride)


def build_repvgg(key, num_blocks, num_classes, width_multiplier):
    blocks = []
    in_planes = min(64, int(64 * width_multiplier[0]))
    key, k0 = jax.random.split(key)
    blocks.append(init_block(k0, 3, in_planes, 2, cin_p=3))        # stage0
    stage_planes = [int(64 * width_multiplier[0]), int(128 * width_multiplier[1]),
                    int(256 * width_multiplier[2]), int(512 * width_multiplier[3])]
    for planes, nb in zip(stage_planes, num_blocks):
        strides = [2] + [1] * (nb - 1)
        for s in strides:
            key, kb = jax.random.split(key)
            blocks.append(init_block(kb, in_planes, planes, s,
                                     cin_p=blocks[-1]['cout_p']))
            in_planes = planes
    key, kw, kb = jax.random.split(key, 3)
    lw = 0.05 * jax.random.normal(kw, (in_planes, num_classes), jnp.float32)
    lb = 0.05 * jax.random.normal(kb, (num_classes,), jnp.float32)
    cout_p_last = blocks[-1]['cout_p']
    ncp = _round_up(num_classes, LANE)
    lw_p = jnp.zeros((cout_p_last, ncp), jnp.float32)
    lw_p = lw_p.at[:in_planes, :num_classes].set(lw)
    lb_p = jnp.zeros((1, ncp), jnp.float32).at[0, :num_classes].set(lb)
    return dict(blocks=blocks, linear_w=lw, linear_b=lb,
                linear_w_p=lw_p, linear_b_p=lb_p, num_classes=num_classes)


# ---------------------------------------------------------------------------
# Forward pass
# ---------------------------------------------------------------------------
def repvgg_forward(x_nchw, params):
    x = jnp.transpose(x_nchw, (0, 2, 3, 1)).astype(jnp.bfloat16)   # NCHW->NHWC
    blocks = params['blocks']
    for blk in blocks[:-1]:
        x = conv_block(x, blk)
    # Last block has global-average-pool + Linear fused into its kernel.
    logits = conv_block(x, blocks[-1],
                        fc_w=params['linear_w_p'], fc_b=params['linear_b_p'])
    return logits[:, :params['num_classes']]


def repvgg_forward_ref(x_nchw, params):
    """Pure-JAX reference (lax.conv) mirroring the kernel's bf16 quantisation."""
    x = jnp.transpose(x_nchw, (0, 2, 3, 1)).astype(jnp.bfloat16)
    blocks = params['blocks']
    for i, blk in enumerate(blocks):
        w_hwio = jnp.transpose(blk['kernel_oihw'], (2, 3, 1, 0)).astype(jnp.bfloat16)
        y = lax.conv_general_dilated(
            x, w_hwio, (blk['stride'], blk['stride']), ((1, 1), (1, 1)),
            dimension_numbers=('NHWC', 'HWIO', 'NHWC'),
            preferred_element_type=jnp.float32)
        y = jnp.maximum(y + blk['bias'], 0.0)
        x = y if i == len(blocks) - 1 else y.astype(jnp.bfloat16)
    pooled = jnp.mean(x, axis=(1, 2))
    return pooled @ params['linear_w'] + params['linear_b']


if __name__ == "__main__":
    key = jax.random.PRNGKey(0)
    pkey, xkey = jax.random.split(key)
    # Tiny RepVGG: num_blocks=[2,1,1,1], width_multiplier=[0.25]*4, 10 classes.
    params = build_repvgg(pkey, num_blocks=[2, 1, 1, 1], num_classes=10,
                          width_multiplier=[0.25, 0.25, 0.25, 0.25])
    x = jax.random.normal(xkey, (2, 3, 32, 32), jnp.float32)   # NCHW like PyTorch
    fwd = jax.jit(lambda inp: repvgg_forward(inp, params))
    out = jax.block_until_ready(fwd(x))
    ref = repvgg_forward_ref(x, params)
    assert out.shape == (2, 10)
    err = float(jnp.max(jnp.abs(out - ref)))
    assert jnp.allclose(out, ref, atol=1e-2, rtol=1e-2), f"max abs err {err}"
    print("KERNEL_OK")
</pallas_src>

<mosaic_0001>
module attributes {stable_mosaic.version = 11 : i64} {
  func.func @kernel(%arg0: i32, %arg1: memref<1x68x17x3xbf16, #tpu.memory_space<vmem>>, %arg2: memref<9x3x128xbf16, #tpu.memory_space<vmem>>, %arg3: memref<1x128xf32, #tpu.memory_space<vmem>>, %arg4: memref<1x16x16x128xbf16, #tpu.memory_space<vmem>>) attributes {dimension_semantics = [#tpu.dimension_semantics<parallel>], iteration_bounds = array<i64: 2>, scalar_prefetch = 0 : i64, scratch_operands = 0 : i64, tpu.core_type = #tpu.core_type<tc>, window_params = [{transform_indices = @transform_0, window_bounds = array<i64: 1, 68, 17, 3>}, {pipeline_mode = #tpu.pipeline_mode<synchronous>, transform_indices = @transform_1, window_bounds = array<i64: 9, 3, 128>}, {pipeline_mode = #tpu.pipeline_mode<synchronous>, transform_indices = @transform_2, window_bounds = array<i64: 1, 128>}, {transform_indices = @transform_3, window_bounds = array<i64: 1, 16, 16, 128>}]} {
    %c0 = arith.constant 0 : index
    %c0_0 = arith.constant 0 : index
    %c0_1 = arith.constant 0 : index
    %c0_2 = arith.constant 0 : index
    %0 = vector.load %arg1[%c0, %c0_0, %c0_1, %c0_2] : memref<1x68x17x3xbf16, #tpu.memory_space<vmem>>, vector<1x68x17x3xbf16>
    %1 = vector.shape_cast %0 : vector<1x68x17x3xbf16> to vector<68x17x3xbf16>
    %cst = arith.constant 0.000000e+00 : f32
    %2 = vector.broadcast %cst : f32 to vector<256x128xf32>
    %3 = vector.extract_strided_slice %1 {offsets = [0, 0, 0], sizes = [16, 16, 3], strides = [1, 1, 1]} : vector<68x17x3xbf16> to vector<16x16x3xbf16>
    %4 = vector.shape_cast %3 : vector<16x16x3xbf16> to vector<256x3xbf16>
    %c0_3 = arith.constant 0 : index
    %c0_4 = arith.constant 0 : index
    %c0_5 = arith.constant 0 : index
    %5 = vector.load %arg2[%c0_3, %c0_4, %c0_5] : memref<9x3x128xbf16, #tpu.memory_space<vmem>>, vector<1x3x128xbf16>
    %6 = vector.shape_cast %5 : vector<1x3x128xbf16> to vector<3x128xbf16>
    %cst_6 = arith.constant dense<0.000000e+00> : vector<256x128xf32>
    %7 = tpu.matmul %4, %6, %cst_6 {dimension_numbers = #tpu.dot_dimension_numbers<[1], [0], [0], [1], [0, 0, 1, 1], [], []>} : vector<256x3xbf16>, vector<3x128xbf16>, vector<256x128xf32> -> vector<256x128xf32>
    %8 = arith.addf %2, %7 : vector<256x128xf32>
    %9 = vector.extract_strided_slice %1 {offsets = [17, 0, 0], sizes = [16, 16, 3], strides = [1, 1, 1]} : vector<68x17x3xbf16> to vector<16x16x3xbf16>
    %10 = vector.shape_cast %9 : vector<16x16x3xbf16> to vector<256x3xbf16>
    %c1 = arith.constant 1 : index
    %c0_7 = arith.constant 0 : index
    %c0_8 = arith.constant 0 : index
    %11 = vector.load %arg2[%c1, %c0_7, %c0_8] : memref<9x3x128xbf16, #tpu.memory_space<vmem>>, vector<1x3x128xbf16>
    %12 = vector.shape_cast %11 : vector<1x3x128xbf16> to vector<3x128xbf16>
    %cst_9 = arith.constant dense<0.000000e+00> : vector<256x128xf32>
    %13 = tpu.matmul %10, %12, %cst_9 {dimension_numbers = #tpu.dot_dimension_numbers<[1], [0], [0], [1], [0, 0, 1, 1], [], []>} : vector<256x3xbf16>, vector<3x128xbf16>, vector<256x128xf32> -> vector<256x128xf32>
    %14 = arith.addf %8, %13 : vector<256x128xf32>
    %15 = vector.extract_strided_slice %1 {offsets = [0, 1, 0], sizes = [16, 16, 3], strides = [1, 1, 1]} : vector<68x17x3xbf16> to vector<16x16x3xbf16>
    %16 = vector.shape_cast %15 : vector<16x16x3xbf16> to vector<256x3xbf16>
    %c2 = arith.constant 2 : index
    %c0_10 = arith.constant 0 : index
    %c0_11 = arith.constant 0 : index
    %17 = vector.load %arg2[%c2, %c0_10, %c0_11] : memref<9x3x128xbf16, #tpu.memory_space<vmem>>, vector<1x3x128xbf16>
    %18 = vector.shape_cast %17 : vector<1x3x128xbf16> to vector<3x128xbf16>
    %cst_12 = arith.constant dense<0.000000e+00> : vector<256x128xf32>
    %19 = tpu.matmul %16, %18, %cst_12 {dimension_numbers = #tpu.dot_dimension_numbers<[1], [0], [0], [1], [0, 0, 1, 1], [], []>} : vector<256x3xbf16>, vector<3x128xbf16>, vector<256x128xf32> -> vector<256x128xf32>
    %20 = arith.addf %14, %19 : vector<256x128xf32>
    %21 = vector.extract_strided_slice %1 {offsets = [34, 0, 0], sizes = [16, 16, 3], strides = [1, 1, 1]} : vector<68x17x3xbf16> to vector<16x16x3xbf16>
    %22 = vector.shape_cast %21 : vector<16x16x3xbf16> to vector<256x3xbf16>
    %c3 = arith.constant 3 : index
    %c0_13 = arith.constant 0 : index
    %c0_14 = arith.constant 0 : index
    %23 = vector.load %arg2[%c3, %c0_13, %c0_14] : memref<9x3x128xbf16, #tpu.memory_space<vmem>>, vector<1x3x128xbf16>
    %24 = vector.shape_cast %23 : vector<1x3x128xbf16> to vector<3x128xbf16>
    %cst_15 = arith.constant dense<0.000000e+00> : vector<256x128xf32>
    %25 = tpu.matmul %22, %24, %cst_15 {dimension_numbers = #tpu.dot_dimension_numbers<[1], [0], [0], [1], [0, 0, 1, 1], [], []>} : vector<256x3xbf16>, vector<3x128xbf16>, vector<256x128xf32> -> vector<256x128xf32>
    %26 = arith.addf %20, %25 : vector<256x128xf32>
    %27 = vector.extract_strided_slice %1 {offsets = [51, 0, 0], sizes = [16, 16, 3], strides = [1, 1, 1]} : vector<68x17x3xbf16> to vector<16x16x3xbf16>
    %28 = vector.shape_cast %27 : vector<16x16x3xbf16> to vector<256x3xbf16>
    %c4 = arith.constant 4 : index
    %c0_16 = arith.constant 0 : index
    %c0_17 = arith.constant 0 : index
    %29 = vector.load %arg2[%c4, %c0_16, %c0_17] : memref<9x3x128xbf16, #tpu.memory_space<vmem>>, vector<1x3x128xbf16>
    %30 = vector.shape_cast %29 : vector<1x3x128xbf16> to vector<3x128xbf16>
    %cst_18 = arith.constant dense<0.000000e+00> : vector<256x128xf32>
    %31 = tpu.matmul %28, %30, %cst_18 {dimension_numbers = #tpu.dot_dimension_numbers<[1], [0], [0], [1], [0, 0, 1, 1], [], []>} : vector<256x3xbf16>, vector<3x128xbf16>, vector<256x128xf32> -> vector<256x128xf32>
    %32 = arith.addf %26, %31 : vector<256x128xf32>
    %33 = vector.extract_strided_slice %1 {offsets = [34, 1, 0], sizes = [16, 16, 3], strides = [1, 1, 1]} : vector<68x17x3xbf16> to vector<16x16x3xbf16>
    %34 = vector.shape_cast %33 : vector<16x16x3xbf16> to vector<256x3xbf16>
    %c5 = arith.constant 5 : index
    %c0_19 = arith.constant 0 : index
    %c0_20 = arith.constant 0 : index
    %35 = vector.load %arg2[%c5, %c0_19, %c0_20] : memref<9x3x128xbf16, #tpu.memory_space<vmem>>, vector<1x3x128xbf16>
    %36 = vector.shape_cast %35 : vector<1x3x128xbf16> to vector<3x128xbf16>
    %cst_21 = arith.constant dense<0.000000e+00> : vector<256x128xf32>
    %37 = tpu.matmul %34, %36, %cst_21 {dimension_numbers = #tpu.dot_dimension_numbers<[1], [0], [0], [1], [0, 0, 1, 1], [], []>} : vector<256x3xbf16>, vector<3x128xbf16>, vector<256x128xf32> -> vector<256x128xf32>
    %38 = arith.addf %32, %37 : vector<256x128xf32>
    %39 = vector.extract_strided_slice %1 {offsets = [1, 0, 0], sizes = [16, 16, 3], strides = [1, 1, 1]} : vector<68x17x3xbf16> to vector<16x16x3xbf16>
    %40 = vector.shape_cast %39 : vector<16x16x3xbf16> to vector<256x3xbf16>
    %c6 = arith.constant 6 : index
    %c0_22 = arith.constant 0 : index
    %c0_23 = arith.constant 0 : index
    %41 = vector.load %arg2[%c6, %c0_22, %c0_23] : memref<9x3x128xbf16, #tpu.memory_space<vmem>>, vector<1x3x128xbf16>
    %42 = vector.shape_cast %41 : vector<1x3x128xbf16> to vector<3x128xbf16>
    %cst_24 = arith.constant dense<0.000000e+00> : vector<256x128xf32>
    %43 = tpu.matmul %40, %42, %cst_24 {dimension_numbers = #tpu.dot_dimension_numbers<[1], [0], [0], [1], [0, 0, 1, 1], [], []>} : vector<256x3xbf16>, vector<3x128xbf16>, vector<256x128xf32> -> vector<256x128xf32>
    %44 = arith.addf %38, %43 : vector<256x128xf32>
    %45 = vector.extract_strided_slice %1 {offsets = [18, 0, 0], sizes = [16, 16, 3], strides = [1, 1, 1]} : vector<68x17x3xbf16> to vector<16x16x3xbf16>
    %46 = vector.shape_cast %45 : vector<16x16x3xbf16> to vector<256x3xbf16>
    %c7 = arith.constant 7 : index
    %c0_25 = arith.constant 0 : index
    %c0_26 = arith.constant 0 : index
    %47 = vector.load %arg2[%c7, %c0_25, %c0_26] : memref<9x3x128xbf16, #tpu.memory_space<vmem>>, vector<1x3x128xbf16>
    %48 = vector.shape_cast %47 : vector<1x3x128xbf16> to vector<3x128xbf16>
    %cst_27 = arith.constant dense<0.000000e+00> : vector<256x128xf32>
    %49 = tpu.matmul %46, %48, %cst_27 {dimension_numbers = #tpu.dot_dimension_numbers<[1], [0], [0], [1], [0, 0, 1, 1], [], []>} : vector<256x3xbf16>, vector<3x128xbf16>, vector<256x128xf32> -> vector<256x128xf32>
    %50 = arith.addf %44, %49 : vector<256x128xf32>
    %51 = vector.extract_strided_slice %1 {offsets = [1, 1, 0], sizes = [16, 16, 3], strides = [1, 1, 1]} : vector<68x17x3xbf16> to vector<16x16x3xbf16>
    %52 = vector.shape_cast %51 : vector<16x16x3xbf16> to vector<256x3xbf16>
    %c8 = arith.constant 8 : index
    %c0_28 = arith.constant 0 : index
    %c0_29 = arith.constant 0 : index
    %53 = vector.load %arg2[%c8, %c0_28, %c0_29] : memref<9x3x128xbf16, #tpu.memory_space<vmem>>, vector<1x3x128xbf16>
    %54 = vector.shape_cast %53 : vector<1x3x128xbf16> to vector<3x128xbf16>
    %cst_30 = arith.constant dense<0.000000e+00> : vector<256x128xf32>
    %55 = tpu.matmul %52, %54, %cst_30 {dimension_numbers = #tpu.dot_dimension_numbers<[1], [0], [0], [1], [0, 0, 1, 1], [], []>} : vector<256x3xbf16>, vector<3x128xbf16>, vector<256x128xf32> -> vector<256x128xf32>
    %56 = arith.addf %50, %55 : vector<256x128xf32>
    %c0_31 = arith.constant 0 : index
    %c0_32 = arith.constant 0 : index
    %57 = vector.load %arg3[%c0_31, %c0_32] : memref<1x128xf32, #tpu.memory_space<vmem>>, vector<1x128xf32>
    %58 = vector.broadcast %57 : vector<1x128xf32> to vector<256x128xf32>
    %59 = arith.addf %56, %58 : vector<256x128xf32>
    %cst_33 = arith.constant 0.000000e+00 : f32
    %60 = vector.broadcast %cst_33 : f32 to vector<256x128xf32>
    %61 = arith.maximumf %59, %60 : vector<256x128xf32>
    %62 = vector.shape_cast %61 : vector<256x128xf32> to vector<16x16x128xf32>
    %63 = arith.truncf %62 : vector<16x16x128xf32> to vector<16x16x128xbf16>
    %c0_34 = arith.constant 0 : index
    %c0_35 = arith.constant 0 : index
    %c0_36 = arith.constant 0 : index
    %c0_37 = arith.constant 0 : index
    %64 = vector.load %arg4[%c0_34, %c0_35, %c0_36, %c0_37] : memref<1x16x16x128xbf16, #tpu.memory_space<vmem>>, vector<1x16x16x128xbf16>
    %65 = vector.shape_cast %64 : vector<1x16x16x128xbf16> to vector<16x16x128xbf16>
    %66 = vector.shape_cast %63 : vector<16x16x128xbf16> to vector<1x16x16x128xbf16>
    tpu.vector_store %arg4[%c0_34, %c0_35, %c0_36, %c0_37], %66 {strides = array<i32>} : memref<1x16x16x128xbf16, #tpu.memory_space<vmem>>, vector<1x16x16x128xbf16>,
    return
  }
  func.func @transform_0(%arg0: i32) -> (i32, i32, i32, i32) {
    %c0_i32 = arith.constant 0 : i32
    %c0_i32_0 = arith.constant 0 : i32
    %c0_i32_1 = arith.constant 0 : i32
    %c0_i32_2 = arith.constant 0 : i32
    return %arg0, %c0_i32, %c0_i32_0, %c0_i32_1 : i32, i32, i32, i32
  }
  func.func @transform_1(%arg0: i32) -> (i32, i32, i32) {
    %c0_i32 = arith.constant 0 : i32
    %c0_i32_0 = arith.constant 0 : i32
    %c0_i32_1 = arith.constant 0 : i32
    %c0_i32_2 = arith.constant 0 : i32
    return %c0_i32, %c0_i32_0, %c0_i32_1 : i32, i32, i32
  }
  func.func @transform_2(%arg0: i32) -> (i32, i32) {
    %c0_i32 = arith.constant 0 : i32
    %c0_i32_0 = arith.constant 0 : i32
    %c0_i32_1 = arith.constant 0 : i32
    return %c0_i32, %c0_i32_0 : i32, i32
  }
  func.func @transform_3(%arg0: i32) -> (i32, i32, i32, i32) {
    %c0_i32 = arith.constant 0 : i32
    %c0_i32_0 = arith.constant 0 : i32
    %c0_i32_1 = arith.constant 0 : i32
    %c0_i32_2 = arith.constant 0 : i32
    return %arg0, %c0_i32, %c0_i32_0, %c0_i32_1 : i32, i32, i32, i32
  }
}

module attributes {stable_mosaic.version = 11 : i64} {
  func.func @kernel(%arg0: i32, %arg1: memref<1x36x9x128xbf16, #tpu.memory_space<vmem>>, %arg2: memref<9x128x128xbf16, #tpu.memory_space<vmem>>, %arg3: memref<1x128xf32, #tpu.memory_space<vmem>>, %arg4: memref<1x8x8x128xbf16, #tpu.memory_space<vmem>>) attributes {dimension_semantics = [#tpu.dimension_semantics<parallel>], iteration_bounds = array<i64: 2>, scalar_prefetch = 0 : i64, scratch_operands = 0 : i64, tpu.core_type = #tpu.core_type<tc>, window_params = [{transform_indices = @transform_0, window_bounds = array<i64: 1, 36, 9, 128>}, {pipeline_mode = #tpu.pipeline_mode<synchronous>, transform_indices = @transform_1, window_bounds = array<i64: 9, 128, 128>}, {pipeline_mode = #tpu.pipeline_mode<synchronous>, transform_indices = @transform_2, window_bounds = array<i64: 1, 128>}, {transform_indices = @transform_3, window_bounds = array<i64: 1, 8, 8, 128>}]} {
    %c0 = arith.constant 0 : index
    %c0_0 = arith.constant 0 : index
    %c0_1 = arith.constant 0 : index
    %c0_2 = arith.constant 0 : index
    %0 = vector.load %arg1[%c0, %c0_0, %c0_1, %c0_2] : memref<1x36x9x128xbf16, #tpu.memory_space<vmem>>, vector<1x36x9x128xbf16>
    %1 = vector.shape_cast %0 : vector<1x36x9x128xbf16> to vector<36x9x128xbf16>
    %cst = arith.constant 0.000000e+00 : f32
    %2 = vector.broadcast %cst : f32 to vector<64x128xf32>
    %3 = vector.extract_strided_slice %1 {offsets = [0, 0, 0], sizes = [8, 8, 128], strides = [1, 1, 1]} : vector<36x9x128xbf16> to vector<8x8x128xbf16>
    %4 = vector.shape_cast %3 : vector<8x8x128xbf16> to vector<64x128xbf16>
    %c0_3 = arith.constant 0 : index
    %c0_4 = arith.constant 0 : index
    %c0_5 = arith.constant 0 : index
    %5 = vector.load %arg2[%c0_3, %c0_4, %c0_5] : memref<9x128x128xbf16, #tpu.memory_space<vmem>>, vector<1x128x128xbf16>
    %6 = vector.shape_cast %5 : vector<1x128x128xbf16> to vector<128x128xbf16>
    %cst_6 = arith.constant dense<0.000000e+00> : vector<64x128xf32>
    %7 = tpu.matmul %4, %6, %cst_6 {dimension_numbers = #tpu.dot_dimension_numbers<[1], [0], [0], [1], [0, 0, 1, 1], [], []>} : vector<64x128xbf16>, vector<128x128xbf16>, vector<64x128xf32> -> vector<64x128xf32>
    %8 = arith.addf %2, %7 : vector<64x128xf32>
    %9 = vector.extract_strided_slice %1 {offsets = [9, 0, 0], sizes = [8, 8, 128], strides = [1, 1, 1]} : vector<36x9x128xbf16> to vector<8x8x128xbf16>
    %10 = vector.shape_cast %9 : vector<8x8x128xbf16> to vector<64x128xbf16>
    %c1 = arith.constant 1 : index
    %c0_7 = arith.constant 0 : index
    %c0_8 = arith.constant 0 : index
    %11 = vector.load %arg2[%c1, %c0_7, %c0_8] : memref<9x128x128xbf16, #tpu.memory_space<vmem>>, vector<1x128x128xbf16>
    %12 = vector.shape_cast %11 : vector<1x128x128xbf16> to vector<128x128xbf16>
    %cst_9 = arith.constant dense<0.000000e+00> : vector<64x128xf32>
    %13 = tpu.matmul %10, %12, %cst_9 {dimension_numbers = #tpu.dot_dimension_numbers<[1], [0], [0], [1], [0, 0, 1, 1], [], []>} : vector<64x128xbf16>, vector<128x128xbf16>, vector<64x128xf32> -> vector<64x128xf32>
    %14 = arith.addf %8, %13 : vector<64x128xf32>
    %15 = vector.extract_strided_slice %1 {offsets = [0, 1, 0], sizes = [8, 8, 128], strides = [1, 1, 1]} : vector<36x9x128xbf16> to vector<8x8x128xbf16>
    %16 = vector.shape_cast %15 : vector<8x8x128xbf16> to vector<64x128xbf16>
    %c2 = arith.constant 2 : index
    %c0_10 = arith.constant 0 : index
    %c0_11 = arith.constant 0 : index
    %17 = vector.load %arg2[%c2, %c0_10, %c0_11] : memref<9x128x128xbf16, #tpu.memory_space<vmem>>, vector<1x128x128xbf16>
    %18 = vector.shape_cast %17 : vector<1x128x128xbf16> to vector<128x128xbf16>
    %cst_12 = arith.constant dense<0.000000e+00> : vector<64x128xf32>
    %19 = tpu.matmul %16, %18, %cst_12 {dimension_numbers = #tpu.dot_dimension_numbers<[1], [0], [0], [1], [0, 0, 1, 1], [], []>} : vector<64x128xbf16>, vector<128x128xbf16>, vector<64x128xf32> -> vector<64x128xf32>
    %20 = arith.addf %14, %19 : vector<64x128xf32>
    %21 = vector.extract_strided_slice %1 {offsets = [18, 0, 0], sizes = [8, 8, 128], strides = [1, 1, 1]} : vector<36x9x128xbf16> to vector<8x8x128xbf16>
    %22 = vector.shape_cast %21 : vector<8x8x128xbf16> to vector<64x128xbf16>
    %c3 = arith.constant 3 : index
    %c0_13 = arith.constant 0 : index
    %c0_14 = arith.constant 0 : index
    %23 = vector.load %arg2[%c3, %c0_13, %c0_14] : memref<9x128x128xbf16, #tpu.memory_space<vmem>>, vector<1x128x128xbf16>
    %24 = vector.shape_cast %23 : vector<1x128x128xbf16> to vector<128x128xbf16>
    %cst_15 = arith.constant dense<0.000000e+00> : vector<64x128xf32>
    %25 = tpu.matmul %22, %24, %cst_15 {dimension_numbers = #tpu.dot_dimension_numbers<[1], [0], [0], [1], [0, 0, 1, 1], [], []>} : vector<64x128xbf16>, vector<128x128xbf16>, vector<64x128xf32> -> vector<64x128xf32>
    %26 = arith.addf %20, %25 : vector<64x128xf32>
    %27 = vector.extract_strided_slice %1 {offsets = [27, 0, 0], sizes = [8, 8, 128], strides = [1, 1, 1]} : vector<36x9x128xbf16> to vector<8x8x128xbf16>
    %28 = vector.shape_cast %27 : vector<8x8x128xbf16> to vector<64x128xbf16>
    %c4 = arith.constant 4 : index
    %c0_16 = arith.constant 0 : index
    %c0_17 = arith.constant 0 : index
    %29 = vector.load %arg2[%c4, %c0_16, %c0_17] : memref<9x128x128xbf16, #tpu.memory_space<vmem>>, vector<1x128x128xbf16>
    %30 = vector.shape_cast %29 : vector<1x128x128xbf16> to vector<128x128xbf16>
    %cst_18 = arith.constant dense<0.000000e+00> : vector<64x128xf32>
    %31 = tpu.matmul %28, %30, %cst_18 {dimension_numbers = #tpu.dot_dimension_numbers<[1], [0], [0], [1], [0, 0, 1, 1], [], []>} : vector<64x128xbf16>, vector<128x128xbf16>, vector<64x128xf32> -> vector<64x128xf32>
    %32 = arith.addf %26, %31 : vector<64x128xf32>
    %33 = vector.extract_strided_slice %1 {offsets = [18, 1, 0], sizes = [8, 8, 128], strides = [1, 1, 1]} : vector<36x9x128xbf16> to vector<8x8x128xbf16>
    %34 = vector.shape_cast %33 : vector<8x8x128xbf16> to vector<64x128xbf16>
    %c5 = arith.constant 5 : index
    %c0_19 = arith.constant 0 : index
    %c0_20 = arith.constant 0 : index
    %35 = vector.load %arg2[%c5, %c0_19, %c0_20] : memref<9x128x128xbf16, #tpu.memory_space<vmem>>, vector<1x128x128xbf16>
    %36 = vector.shape_cast %35 : vector<1x128x128xbf16> to vector<128x128xbf16>
    %cst_21 = arith.constant dense<0.000000e+00> : vector<64x128xf32>
    %37 = tpu.matmul %34, %36, %cst_21 {dimension_numbers = #tpu.dot_dimension_numbers<[1], [0], [0], [1], [0, 0, 1, 1], [], []>} : vector<64x128xbf16>, vector<128x128xbf16>, vector<64x128xf32> -> vector<64x128xf32>
    %38 = arith.addf %32, %37 : vector<64x128xf32>
    %39 = vector.extract_strided_slice %1 {offsets = [1, 0, 0], sizes = [8, 8, 128], strides = [1, 1, 1]} : vector<36x9x128xbf16> to vector<8x8x128xbf16>
    %40 = vector.shape_cast %39 : vector<8x8x128xbf16> to vector<64x128xbf16>
    %c6 = arith.constant 6 : index
    %c0_22 = arith.constant 0 : index
    %c0_23 = arith.constant 0 : index
    %41 = vector.load %arg2[%c6, %c0_22, %c0_23] : memref<9x128x128xbf16, #tpu.memory_space<vmem>>, vector<1x128x128xbf16>
    %42 = vector.shape_cast %41 : vector<1x128x128xbf16> to vector<128x128xbf16>
    %cst_24 = arith.constant dense<0.000000e+00> : vector<64x128xf32>
    %43 = tpu.matmul %40, %42, %cst_24 {dimension_numbers = #tpu.dot_dimension_numbers<[1], [0], [0], [1], [0, 0, 1, 1], [], []>} : vector<64x128xbf16>, vector<128x128xbf16>, vector<64x128xf32> -> vector<64x128xf32>
    %44 = arith.addf %38, %43 : vector<64x128xf32>
    %45 = vector.extract_strided_slice %1 {offsets = [10, 0, 0], sizes = [8, 8, 128], strides = [1, 1, 1]} : vector<36x9x128xbf16> to vector<8x8x128xbf16>
    %46 = vector.shape_cast %45 : vector<8x8x128xbf16> to vector<64x128xbf16>
    %c7 = arith.constant 7 : index
    %c0_25 = arith.constant 0 : index
    %c0_26 = arith.constant 0 : index
    %47 = vector.load %arg2[%c7, %c0_25, %c0_26] : memref<9x128x128xbf16, #tpu.memory_space<vmem>>, vector<1x128x128xbf16>
    %48 = vector.shape_cast %47 : vector<1x128x128xbf16> to vector<128x128xbf16>
    %cst_27 = arith.constant dense<0.000000e+00> : vector<64x128xf32>
    %49 = tpu.matmul %46, %48, %cst_27 {dimension_numbers = #tpu.dot_dimension_numbers<[1], [0], [0], [1], [0, 0, 1, 1], [], []>} : vector<64x128xbf16>, vector<128x128xbf16>, vector<64x128xf32> -> vector<64x128xf32>
    %50 = arith.addf %44, %49 : vector<64x128xf32>
    %51 = vector.extract_strided_slice %1 {offsets = [1, 1, 0], sizes = [8, 8, 128], strides = [1, 1, 1]} : vector<36x9x128xbf16> to vector<8x8x128xbf16>
    %52 = vector.shape_cast %51 : vector<8x8x128xbf16> to vector<64x128xbf16>
    %c8 = arith.constant 8 : index
    %c0_28 = arith.constant 0 : index
    %c0_29 = arith.constant 0 : index
    %53 = vector.load %arg2[%c8, %c0_28, %c0_29] : memref<9x128x128xbf16, #tpu.memory_space<vmem>>, vector<1x128x128xbf16>
    %54 = vector.shape_cast %53 : vector<1x128x128xbf16> to vector<128x128xbf16>
    %cst_30 = arith.constant dense<0.000000e+00> : vector<64x128xf32>
    %55 = tpu.matmul %52, %54, %cst_30 {dimension_numbers = #tpu.dot_dimension_numbers<[1], [0], [0], [1], [0, 0, 1, 1], [], []>} : vector<64x128xbf16>, vector<128x128xbf16>, vector<64x128xf32> -> vector<64x128xf32>
    %56 = arith.addf %50, %55 : vector<64x128xf32>
    %c0_31 = arith.constant 0 : index
    %c0_32 = arith.constant 0 : index
    %57 = vector.load %arg3[%c0_31, %c0_32] : memref<1x128xf32, #tpu.memory_space<vmem>>, vector<1x128xf32>
    %58 = vector.broadcast %57 : vector<1x128xf32> to vector<64x128xf32>
    %59 = arith.addf %56, %58 : vector<64x128xf32>
    %cst_33 = arith.constant 0.000000e+00 : f32
    %60 = vector.broadcast %cst_33 : f32 to vector<64x128xf32>
    %61 = arith.maximumf %59, %60 : vector<64x128xf32>
    %62 = vector.shape_cast %61 : vector<64x128xf32> to vector<8x8x128xf32>
    %63 = arith.truncf %62 : vector<8x8x128xf32> to vector<8x8x128xbf16>
    %c0_34 = arith.constant 0 : index
    %c0_35 = arith.constant 0 : index
    %c0_36 = arith.constant 0 : index
    %c0_37 = arith.constant 0 : index
    %64 = vector.load %arg4[%c0_34, %c0_35, %c0_36, %c0_37] : memref<1x8x8x128xbf16, #tpu.memory_space<vmem>>, vector<1x8x8x128xbf16>
    %65 = vector.shape_cast %64 : vector<1x8x8x128xbf16> to vector<8x8x128xbf16>
    %66 = vector.shape_cast %63 : vector<8x8x128xbf16> to vector<1x8x8x128xbf16>
    tpu.vector_store %arg4[%c0_34, %c0_35, %c0_36, %c0_37], %66 {strides = array<i32>} : memref<1x8x8x128xbf16, #tpu.memory_space<vmem>>, vector<1x8x8x128xbf16>,
    return
  }
  func.func @transform_0(%arg0: i32) -> (i32, i32, i32, i32) {
    %c0_i32 = arith.constant 0 : i32
    %c0_i32_0 = arith.constant 0 : i32
    %c0_i32_1 = arith.constant 0 : i32
    %c0_i32_2 = arith.constant 0 : i32
    return %arg0, %c0_i32, %c0_i32_0, %c0_i32_1 : i32, i32, i32, i32
  }
  func.func @transform_1(%arg0: i32) -> (i32, i32, i32) {
    %c0_i32 = arith.constant 0 : i32
    %c0_i32_0 = arith.constant 0 : i32
    %c0_i32_1 = arith.constant 0 : i32
    %c0_i32_2 = arith.constant 0 : i32
    return %c0_i32, %c0_i32_0, %c0_i32_1 : i32, i32, i32
  }
  func.func @transform_2(%arg0: i32) -> (i32, i32) {
    %c0_i32 = arith.constant 0 : i32
    %c0_i32_0 = arith.constant 0 : i32
    %c0_i32_1 = arith.constant 0 : i32
    return %c0_i32, %c0_i32_0 : i32, i32
  }
  func.func @transform_3(%arg0: i32) -> (i32, i32, i32, i32) {
    %c0_i32 = arith.constant 0 : i32
    %c0_i32_0 = arith.constant 0 : i32
    %c0_i32_1 = arith.constant 0 : i32
    %c0_i32_2 = arith.constant 0 : i32
    return %arg0, %c0_i32, %c0_i32_0, %c0_i32_1 : i32, i32, i32, i32
  }
}

module attributes {stable_mosaic.version = 11 : i64} {
  func.func @kernel(%arg0: i32, %arg1: memref<1x10x10x128xbf16, #tpu.memory_space<vmem>>, %arg2: memref<9x128x128xbf16, #tpu.memory_space<vmem>>, %arg3: memref<1x128xf32, #tpu.memory_space<vmem>>, %arg4: memref<1x8x8x128xbf16, #tpu.memory_space<vmem>>) attributes {dimension_semantics = [#tpu.dimension_semantics<parallel>], iteration_bounds = array<i64: 2>, scalar_prefetch = 0 : i64, scratch_operands = 0 : i64, tpu.core_type = #tpu.core_type<tc>, window_params = [{transform_indices = @transform_0, window_bounds = array<i64: 1, 10, 10, 128>}, {pipeline_mode = #tpu.pipeline_mode<synchronous>, transform_indices = @transform_1, window_bounds = array<i64: 9, 128, 128>}, {pipeline_mode = #tpu.pipeline_mode<synchronous>, transform_indices = @transform_2, window_bounds = array<i64: 1, 128>}, {transform_indices = @transform_3, window_bounds = array<i64: 1, 8, 8, 128>}]} {
    %c0 = arith.constant 0 : index
    %c0_0 = arith.constant 0 : index
    %c0_1 = arith.constant 0 : index
    %c0_2 = arith.constant 0 : index
    %0 = vector.load %arg1[%c0, %c0_0, %c0_1, %c0_2] : memref<1x10x10x128xbf16, #tpu.memory_space<vmem>>, vector<1x10x10x128xbf16>
    %1 = vector.shape_cast %0 : vector<1x10x10x128xbf16> to vector<10x10x128xbf16>
    %cst = arith.constant 0.000000e+00 : f32
    %2 = vector.broadcast %cst : f32 to vector<64x128xf32>
    %3 = vector.extract_strided_slice %1 {offsets = [0, 0, 0], sizes = [8, 8, 128], strides = [1, 1, 1]} : vector<10x10x128xbf16> to vector<8x8x128xbf16>
    %4 = vector.shape_cast %3 : vector<8x8x128xbf16> to vector<64x128xbf16>
    %c0_3 = arith.constant 0 : index
    %c0_4 = arith.constant 0 : index
    %c0_5 = arith.constant 0 : index
    %5 = vector.load %arg2[%c0_3, %c0_4, %c0_5] : memref<9x128x128xbf16, #tpu.memory_space<vmem>>, vector<1x128x128xbf16>
    %6 = vector.shape_cast %5 : vector<1x128x128xbf16> to vector<128x128xbf16>
    %cst_6 = arith.constant dense<0.000000e+00> : vector<64x128xf32>
    %7 = tpu.matmul %4, %6, %cst_6 {dimension_numbers = #tpu.dot_dimension_numbers<[1], [0], [0], [1], [0, 0, 1, 1], [], []>} : vector<64x128xbf16>, vector<128x128xbf16>, vector<64x128xf32> -> vector<64x128xf32>
    %8 = arith.addf %2, %7 : vector<64x128xf32>
    %9 = vector.extract_strided_slice %1 {offsets = [0, 1, 0], sizes = [8, 8, 128], strides = [1, 1, 1]} : vector<10x10x128xbf16> to vector<8x8x128xbf16>
    %10 = vector.shape_cast %9 : vector<8x8x128xbf16> to vector<64x128xbf16>
    %c1 = arith.constant 1 : index
    %c0_7 = arith.constant 0 : index
    %c0_8 = arith.constant 0 : index
    %11 = vector.load %arg2[%c1, %c0_7, %c0_8] : memref<9x128x128xbf16, #tpu.memory_space<vmem>>, vector<1x128x128xbf16>
    %12 = vector.shape_cast %11 : vector<1x128x128xbf16> to vector<128x128xbf16>
    %cst_9 = arith.constant dense<0.000000e+00> : vector<64x128xf32>
    %13 = tpu.matmul %10, %12, %cst_9 {dimension_numbers = #tpu.dot_dimension_numbers<[1], [0], [0], [1], [0, 0, 1, 1], [], []>} : vector<64x128xbf16>, vector<128x128xbf16>, vector<64x128xf32> -> vector<64x128xf32>
    %14 = arith.addf %8, %13 : vector<64x128xf32>
    %15 = vector.extract_strided_slice %1 {offsets = [0, 2, 0], sizes = [8, 8, 128], strides = [1, 1, 1]} : vector<10x10x128xbf16> to vector<8x8x128xbf16>
    %16 = vector.shape_cast %15 : vector<8x8x128xbf16> to vector<64x128xbf16>
    %c2 = arith.constant 2 : index
    %c0_10 = arith.constant 0 : index
    %c0_11 = arith.constant 0 : index
    %17 = vector.load %arg2[%c2, %c0_10, %c0_11] : memref<9x128x128xbf16, #tpu.memory_space<vmem>>, vector<1x128x128xbf16>
    %18 = vector.shape_cast %17 : vector<1x128x128xbf16> to vector<128x128xbf16>
    %cst_12 = arith.constant dense<0.000000e+00> : vector<64x128xf32>
    %19 = tpu.matmul %16, %18, %cst_12 {dimension_numbers = #tpu.dot_dimension_numbers<[1], [0], [0], [1], [0, 0, 1, 1], [], []>} : vector<64x128xbf16>, vector<128x128xbf16>, vector<64x128xf32> -> vector<64x128xf32>
    %20 = arith.addf %14, %19 : vector<64x128xf32>
    %21 = vector.extract_strided_slice %1 {offsets = [1, 0, 0], sizes = [8, 8, 128], strides = [1, 1, 1]} : vector<10x10x128xbf16> to vector<8x8x128xbf16>
    %22 = vector.shape_cast %21 : vector<8x8x128xbf16> to vector<64x128xbf16>
    %c3 = arith.constant 3 : index
    %c0_13 = arith.constant 0 : index
    %c0_14 = arith.constant 0 : index
    %23 = vector.load %arg2[%c3, %c0_13, %c0_14] : memref<9x128x128xbf16, #tpu.memory_space<vmem>>, vector<1x128x128xbf16>
    %24 = vector.shape_cast %23 : vector<1x128x128xbf16> to vector<128x128xbf16>
    %cst_15 = arith.constant dense<0.000000e+00> : vector<64x128xf32>
    %25 = tpu.matmul %22, %24, %cst_15 {dimension_numbers = #tpu.dot_dimension_numbers<[1], [0], [0], [1], [0, 0, 1, 1], [], []>} : vector<64x128xbf16>, vector<128x128xbf16>, vector<64x128xf32> -> vector<64x128xf32>
    %26 = arith.addf %20, %25 : vector<64x128xf32>
    %27 = vector.extract_strided_slice %1 {offsets = [1, 1, 0], sizes = [8, 8, 128], strides = [1, 1, 1]} : vector<10x10x128xbf16> to vector<8x8x128xbf16>
    %28 = vector.shape_cast %27 : vector<8x8x128xbf16> to vector<64x128xbf16>
    %c4 = arith.constant 4 : index
    %c0_16 = arith.constant 0 : index
    %c0_17 = arith.constant 0 : index
    %29 = vector.load %arg2[%c4, %c0_16, %c0_17] : memref<9x128x128xbf16, #tpu.memory_space<vmem>>, vector<1x128x128xbf16>
    %30 = vector.shape_cast %29 : vector<1x128x128xbf16> to vector<128x128xbf16>
    %cst_18 = arith.constant dense<0.000000e+00> : vector<64x128xf32>
    %31 = tpu.matmul %28, %30, %cst_18 {dimension_numbers = #tpu.dot_dimension_numbers<[1], [0], [0], [1], [0, 0, 1, 1], [], []>} : vector<64x128xbf16>, vector<128x128xbf16>, vector<64x128xf32> -> vector<64x128xf32>
    %32 = arith.addf %26, %31 : vector<64x128xf32>
    %33 = vector.extract_strided_slice %1 {offsets = [1, 2, 0], sizes = [8, 8, 128], strides = [1, 1, 1]} : vector<10x10x128xbf16> to vector<8x8x128xbf16>
    %34 = vector.shape_cast %33 : vector<8x8x128xbf16> to vector<64x128xbf16>
    %c5 = arith.constant 5 : index
    %c0_19 = arith.constant 0 : index
    %c0_20 = arith.constant 0 : index
    %35 = vector.load %arg2[%c5, %c0_19, %c0_20] : memref<9x128x128xbf16, #tpu.memory_space<vmem>>, vector<1x128x128xbf16>
    %36 = vector.shape_cast %35 : vector<1x128x128xbf16> to vector<128x128xbf16>
    %cst_21 = arith.constant dense<0.000000e+00> : vector<64x128xf32>
    %37 = tpu.matmul %34, %36, %cst_21 {dimension_numbers = #tpu.dot_dimension_numbers<[1], [0], [0], [1], [0, 0, 1, 1], [], []>} : vector<64x128xbf16>, vector<128x128xbf16>, vector<64x128xf32> -> vector<64x128xf32>
    %38 = arith.addf %32, %37 : vector<64x128xf32>
    %39 = vector.extract_strided_slice %1 {offsets = [2, 0, 0], sizes = [8, 8, 128], strides = [1, 1, 1]} : vector<10x10x128xbf16> to vector<8x8x128xbf16>
    %40 = vector.shape_cast %39 : vector<8x8x128xbf16> to vector<64x128xbf16>
    %c6 = arith.constant 6 : index
    %c0_22 = arith.constant 0 : index
    %c0_23 = arith.constant 0 : index
    %41 = vector.load %arg2[%c6, %c0_22, %c0_23] : memref<9x128x128xbf16, #tpu.memory_space<vmem>>, vector<1x128x128xbf16>
    %42 = vector.shape_cast %41 : vector<1x128x128xbf16> to vector<128x128xbf16>
    %cst_24 = arith.constant dense<0.000000e+00> : vector<64x128xf32>
    %43 = tpu.matmul %40, %42, %cst_24 {dimension_numbers = #tpu.dot_dimension_numbers<[1], [0], [0], [1], [0, 0, 1, 1], [], []>} : vector<64x128xbf16>, vector<128x128xbf16>, vector<64x128xf32> -> vector<64x128xf32>
    %44 = arith.addf %38, %43 : vector<64x128xf32>
    %45 = vector.extract_strided_slice %1 {offsets = [2, 1, 0], sizes = [8, 8, 128], strides = [1, 1, 1]} : vector<10x10x128xbf16> to vector<8x8x128xbf16>
    %46 = vector.shape_cast %45 : vector<8x8x128xbf16> to vector<64x128xbf16>
    %c7 = arith.constant 7 : index
    %c0_25 = arith.constant 0 : index
    %c0_26 = arith.constant 0 : index
    %47 = vector.load %arg2[%c7, %c0_25, %c0_26] : memref<9x128x128xbf16, #tpu.memory_space<vmem>>, vector<1x128x128xbf16>
    %48 = vector.shape_cast %47 : vector<1x128x128xbf16> to vector<128x128xbf16>
    %cst_27 = arith.constant dense<0.000000e+00> : vector<64x128xf32>
    %49 = tpu.matmul %46, %48, %cst_27 {dimension_numbers = #tpu.dot_dimension_numbers<[1], [0], [0], [1], [0, 0, 1, 1], [], []>} : vector<64x128xbf16>, vector<128x128xbf16>, vector<64x128xf32> -> vector<64x128xf32>
    %50 = arith.addf %44, %49 : vector<64x128xf32>
    %51 = vector.extract_strided_slice %1 {offsets = [2, 2, 0], sizes = [8, 8, 128], strides = [1, 1, 1]} : vector<10x10x128xbf16> to vector<8x8x128xbf16>
    %52 = vector.shape_cast %51 : vector<8x8x128xbf16> to vector<64x128xbf16>
    %c8 = arith.constant 8 : index
    %c0_28 = arith.constant 0 : index
    %c0_29 = arith.constant 0 : index
    %53 = vector.load %arg2[%c8, %c0_28, %c0_29] : memref<9x128x128xbf16, #tpu.memory_space<vmem>>, vector<1x128x128xbf16>
    %54 = vector.shape_cast %53 : vector<1x128x128xbf16> to vector<128x128xbf16>
    %cst_30 = arith.constant dense<0.000000e+00> : vector<64x128xf32>
    %55 = tpu.matmul %52, %54, %cst_30 {dimension_numbers = #tpu.dot_dimension_numbers<[1], [0], [0], [1], [0, 0, 1, 1], [], []>} : vector<64x128xbf16>, vector<128x128xbf16>, vector<64x128xf32> -> vector<64x128xf32>
    %56 = arith.addf %50, %55 : vector<64x128xf32>
    %c0_31 = arith.constant 0 : index
    %c0_32 = arith.constant 0 : index
    %57 = vector.load %arg3[%c0_31, %c0_32] : memref<1x128xf32, #tpu.memory_space<vmem>>, vector<1x128xf32>
    %58 = vector.broadcast %57 : vector<1x128xf32> to vector<64x128xf32>
    %59 = arith.addf %56, %58 : vector<64x128xf32>
    %cst_33 = arith.constant 0.000000e+00 : f32
    %60 = vector.broadcast %cst_33 : f32 to vector<64x128xf32>
    %61 = arith.maximumf %59, %60 : vector<64x128xf32>
    %62 = vector.shape_cast %61 : vector<64x128xf32> to vector<8x8x128xf32>
    %63 = arith.truncf %62 : vector<8x8x128xf32> to vector<8x8x128xbf16>
    %c0_34 = arith.constant 0 : index
    %c0_35 = arith.constant 0 : index
    %c0_36 = arith.constant 0 : index
    %c0_37 = arith.constant 0 : index
    %64 = vector.load %arg4[%c0_34, %c0_35, %c0_36, %c0_37] : memref<1x8x8x128xbf16, #tpu.memory_space<vmem>>, vector<1x8x8x128xbf16>
    %65 = vector.shape_cast %64 : vector<1x8x8x128xbf16> to vector<8x8x128xbf16>
    %66 = vector.shape_cast %63 : vector<8x8x128xbf16> to vector<1x8x8x128xbf16>
    tpu.vector_store %arg4[%c0_34, %c0_35, %c0_36, %c0_37], %66 {strides = array<i32>} : memref<1x8x8x128xbf16, #tpu.memory_space<vmem>>, vector<1x8x8x128xbf16>,
    return
  }
  func.func @transform_0(%arg0: i32) -> (i32, i32, i32, i32) {
    %c0_i32 = arith.constant 0 : i32
    %c0_i32_0 = arith.constant 0 : i32
    %c0_i32_1 = arith.constant 0 : i32
    %c0_i32_2 = arith.constant 0 : i32
    return %arg0, %c0_i32, %c0_i32_0, %c0_i32_1 : i32, i32, i32, i32
  }
  func.func @transform_1(%arg0: i32) -> (i32, i32, i32) {
    %c0_i32 = arith.constant 0 : i32
    %c0_i32_0 = arith.constant 0 : i32
    %c0_i32_1 = arith.constant 0 : i32
    %c0_i32_2 = arith.constant 0 : i32
    return %c0_i32, %c0_i32_0, %c0_i32_1 : i32, i32, i32
  }
  func.func @transform_2(%arg0: i32) -> (i32, i32) {
    %c0_i32 = arith.constant 0 : i32
    %c0_i32_0 = arith.constant 0 : i32
    %c0_i32_1 = arith.constant 0 : i32
    return %c0_i32, %c0_i32_0 : i32, i32
  }
  func.func @transform_3(%arg0: i32) -> (i32, i32, i32, i32) {
    %c0_i32 = arith.constant 0 : i32
    %c0_i32_0 = arith.constant 0 : i32
    %c0_i32_1 = arith.constant 0 : i32
    %c0_i32_2 = arith.constant 0 : i32
    return %arg0, %c0_i32, %c0_i32_0, %c0_i32_1 : i32, i32, i32, i32
  }
}

module attributes {stable_mosaic.version = 11 : i64} {
  func.func @kernel(%arg0: i32, %arg1: memref<1x20x5x128xbf16, #tpu.memory_space<vmem>>, %arg2: memref<9x128x128xbf16, #tpu.memory_space<vmem>>, %arg3: memref<1x128xf32, #tpu.memory_space<vmem>>, %arg4: memref<1x4x4x128xbf16, #tpu.memory_space<vmem>>) attributes {dimension_semantics = [#tpu.dimension_semantics<parallel>], iteration_bounds = array<i64: 2>, scalar_prefetch = 0 : i64, scratch_operands = 0 : i64, tpu.core_type = #tpu.core_type<tc>, window_params = [{transform_indices = @transform_0, window_bounds = array<i64: 1, 20, 5, 128>}, {pipeline_mode = #tpu.pipeline_mode<synchronous>, transform_indices = @transform_1, window_bounds = array<i64: 9, 128, 128>}, {pipeline_mode = #tpu.pipeline_mode<synchronous>, transform_indices = @transform_2, window_bounds = array<i64: 1, 128>}, {transform_indices = @transform_3, window_bounds = array<i64: 1, 4, 4, 128>}]} {
    %c0 = arith.constant 0 : index
    %c0_0 = arith.constant 0 : index
    %c0_1 = arith.constant 0 : index
    %c0_2 = arith.constant 0 : index
    %0 = vector.load %arg1[%c0, %c0_0, %c0_1, %c0_2] : memref<1x20x5x128xbf16, #tpu.memory_space<vmem>>, vector<1x20x5x128xbf16>
    %1 = vector.shape_cast %0 : vector<1x20x5x128xbf16> to vector<20x5x128xbf16>
    %cst = arith.constant 0.000000e+00 : f32
    %2 = vector.broadcast %cst : f32 to vector<16x128xf32>
    %3 = vector.extract_strided_slice %1 {offsets = [0, 0, 0], sizes = [4, 4, 128], strides = [1, 1, 1]} : vector<20x5x128xbf16> to vector<4x4x128xbf16>
    %4 = vector.shape_cast %3 : vector<4x4x128xbf16> to vector<16x128xbf16>
    %c0_3 = arith.constant 0 : index
    %c0_4 = arith.constant 0 : index
    %c0_5 = arith.constant 0 : index
    %5 = vector.load %arg2[%c0_3, %c0_4, %c0_5] : memref<9x128x128xbf16, #tpu.memory_space<vmem>>, vector<1x128x128xbf16>
    %6 = vector.shape_cast %5 : vector<1x128x128xbf16> to vector<128x128xbf16>
    %cst_6 = arith.constant dense<0.000000e+00> : vector<16x128xf32>
    %7 = tpu.matmul %4, %6, %cst_6 {dimension_numbers = #tpu.dot_dimension_numbers<[1], [0], [0], [1], [0, 0, 1, 1], [], []>} : vector<16x128xbf16>, vector<128x128xbf16>, vector<16x128xf32> -> vector<16x128xf32>
    %8 = arith.addf %2, %7 : vector<16x128xf32>
    %9 = vector.extract_strided_slice %1 {offsets = [5, 0, 0], sizes = [4, 4, 128], strides = [1, 1, 1]} : vector<20x5x128xbf16> to vector<4x4x128xbf16>
    %10 = vector.shape_cast %9 : vector<4x4x128xbf16> to vector<16x128xbf16>
    %c1 = arith.constant 1 : index
    %c0_7 = arith.constant 0 : index
    %c0_8 = arith.constant 0 : index
    %11 = vector.load %arg2[%c1, %c0_7, %c0_8] : memref<9x128x128xbf16, #tpu.memory_space<vmem>>, vector<1x128x128xbf16>
    %12 = vector.shape_cast %11 : vector<1x128x128xbf16> to vector<128x128xbf16>
    %cst_9 = arith.constant dense<0.000000e+00> : vector<16x128xf32>
    %13 = tpu.matmul %10, %12, %cst_9 {dimension_numbers = #tpu.dot_dimension_numbers<[1], [0], [0], [1], [0, 0, 1, 1], [], []>} : vector<16x128xbf16>, vector<128x128xbf16>, vector<16x128xf32> -> vector<16x128xf32>
    %14 = arith.addf %8, %13 : vector<16x128xf32>
    %15 = vector.extract_strided_slice %1 {offsets = [0, 1, 0], sizes = [4, 4, 128], strides = [1, 1, 1]} : vector<20x5x128xbf16> to vector<4x4x128xbf16>
    %16 = vector.shape_cast %15 : vector<4x4x128xbf16> to vector<16x128xbf16>
    %c2 = arith.constant 2 : index
    %c0_10 = arith.constant 0 : index
    %c0_11 = arith.constant 0 : index
    %17 = vector.load %arg2[%c2, %c0_10, %c0_11] : memref<9x128x128xbf16, #tpu.memory_space<vmem>>, vector<1x128x128xbf16>
    %18 = vector.shape_cast %17 : vector<1x128x128xbf16> to vector<128x128xbf16>
    %cst_12 = arith.constant dense<0.000000e+00> : vector<16x128xf32>
    %19 = tpu.matmul %16, %18, %cst_12 {dimension_numbers = #tpu.dot_dimension_numbers<[1], [0], [0], [1], [0, 0, 1, 1], [], []>} : vector<16x128xbf16>, vector<128x128xbf16>, vector<16x128xf32> -> vector<16x128xf32>
    %20 = arith.addf %14, %19 : vector<16x128xf32>
    %21 = vector.extract_strided_slice %1 {offsets = [10, 0, 0], sizes = [4, 4, 128], strides = [1, 1, 1]} : vector<20x5x128xbf16> to vector<4x4x128xbf16>
    %22 = vector.shape_cast %21 : vector<4x4x128xbf16> to vector<16x128xbf16>
    %c3 = arith.constant 3 : index
    %c0_13 = arith.constant 0 : index
    %c0_14 = arith.constant 0 : index
    %23 = vector.load %arg2[%c3, %c0_13, %c0_14] : memref<9x128x128xbf16, #tpu.memory_space<vmem>>, vector<1x128x128xbf16>
    %24 = vector.shape_cast %23 : vector<1x128x128xbf16> to vector<128x128xbf16>
    %cst_15 = arith.constant dense<0.000000e+00> : vector<16x128xf32>
    %25 = tpu.matmul %22, %24, %cst_15 {dimension_numbers = #tpu.dot_dimension_numbers<[1], [0], [0], [1], [0, 0, 1, 1], [], []>} : vector<16x128xbf16>, vector<128x128xbf16>, vector<16x128xf32> -> vector<16x128xf32>
    %26 = arith.addf %20, %25 : vector<16x128xf32>
    %27 = vector.extract_strided_slice %1 {offsets = [15, 0, 0], sizes = [4, 4, 128], strides = [1, 1, 1]} : vector<20x5x128xbf16> to vector<4x4x128xbf16>
    %28 = vector.shape_cast %27 : vector<4x4x128xbf16> to vector<16x128xbf16>
    %c4 = arith.constant 4 : index
    %c0_16 = arith.constant 0 : index
    %c0_17 = arith.constant 0 : index
    %29 = vector.load %arg2[%c4, %c0_16, %c0_17] : memref<9x128x128xbf16, #tpu.memory_space<vmem>>, vector<1x128x128xbf16>
    %30 = vector.shape_cast %29 : vector<1x128x128xbf16> to vector<128x128xbf16>
    %cst_18 = arith.constant dense<0.000000e+00> : vector<16x128xf32>
    %31 = tpu.matmul %28, %30, %cst_18 {dimension_numbers = #tpu.dot_dimension_numbers<[1], [0], [0], [1], [0, 0, 1, 1], [], []>} : vector<16x128xbf16>, vector<128x128xbf16>, vector<16x128xf32> -> vector<16x128xf32>
    %32 = arith.addf %26, %31 : vector<16x128xf32>
    %33 = vector.extract_strided_slice %1 {offsets = [10, 1, 0], sizes = [4, 4, 128], strides = [1, 1, 1]} : vector<20x5x128xbf16> to vector<4x4x128xbf16>
    %34 = vector.shape_cast %33 : vector<4x4x128xbf16> to vector<16x128xbf16>
    %c5 = arith.constant 5 : index
    %c0_19 = arith.constant 0 : index
    %c0_20 = arith.constant 0 : index
    %35 = vector.load %arg2[%c5, %c0_19, %c0_20] : memref<9x128x128xbf16, #tpu.memory_space<vmem>>, vector<1x128x128xbf16>
    %36 = vector.shape_cast %35 : vector<1x128x128xbf16> to vector<128x128xbf16>
    %cst_21 = arith.constant dense<0.000000e+00> : vector<16x128xf32>
    %37 = tpu.matmul %34, %36, %cst_21 {dimension_numbers = #tpu.dot_dimension_numbers<[1], [0], [0], [1], [0, 0, 1, 1], [], []>} : vector<16x128xbf16>, vector<128x128xbf16>, vector<16x128xf32> -> vector<16x128xf32>
    %38 = arith.addf %32, %37 : vector<16x128xf32>
    %39 = vector.extract_strided_slice %1 {offsets = [1, 0, 0], sizes = [4, 4, 128], strides = [1, 1, 1]} : vector<20x5x128xbf16> to vector<4x4x128xbf16>
    %40 = vector.shape_cast %39 : vector<4x4x128xbf16> to vector<16x128xbf16>
    %c6 = arith.constant 6 : index
    %c0_22 = arith.constant 0 : index
    %c0_23 = arith.constant 0 : index
    %41 = vector.load %arg2[%c6, %c0_22, %c0_23] : memref<9x128x128xbf16, #tpu.memory_space<vmem>>, vector<1x128x128xbf16>
    %42 = vector.shape_cast %41 : vector<1x128x128xbf16> to vector<128x128xbf16>
    %cst_24 = arith.constant dense<0.000000e+00> : vector<16x128xf32>
    %43 = tpu.matmul %40, %42, %cst_24 {dimension_numbers = #tpu.dot_dimension_numbers<[1], [0], [0], [1], [0, 0, 1, 1], [], []>} : vector<16x128xbf16>, vector<128x128xbf16>, vector<16x128xf32> -> vector<16x128xf32>
    %44 = arith.addf %38, %43 : vector<16x128xf32>
    %45 = vector.extract_strided_slice %1 {offsets = [6, 0, 0], sizes = [4, 4, 128], strides = [1, 1, 1]} : vector<20x5x128xbf16> to vector<4x4x128xbf16>
    %46 = vector.shape_cast %45 : vector<4x4x128xbf16> to vector<16x128xbf16>
    %c7 = arith.constant 7 : index
    %c0_25 = arith.constant 0 : index
    %c0_26 = arith.constant 0 : index
    %47 = vector.load %arg2[%c7, %c0_25, %c0_26] : memref<9x128x128xbf16, #tpu.memory_space<vmem>>, vector<1x128x128xbf16>
    %48 = vector.shape_cast %47 : vector<1x128x128xbf16> to vector<128x128xbf16>
    %cst_27 = arith.constant dense<0.000000e+00> : vector<16x128xf32>
    %49 = tpu.matmul %46, %48, %cst_27 {dimension_numbers = #tpu.dot_dimension_numbers<[1], [0], [0], [1], [0, 0, 1, 1], [], []>} : vector<16x128xbf16>, vector<128x128xbf16>, vector<16x128xf32> -> vector<16x128xf32>
    %50 = arith.addf %44, %49 : vector<16x128xf32>
    %51 = vector.extract_strided_slice %1 {offsets = [1, 1, 0], sizes = [4, 4, 128], strides = [1, 1, 1]} : vector<20x5x128xbf16> to vector<4x4x128xbf16>
    %52 = vector.shape_cast %51 : vector<4x4x128xbf16> to vector<16x128xbf16>
    %c8 = arith.constant 8 : index
    %c0_28 = arith.constant 0 : index
    %c0_29 = arith.constant 0 : index
    %53 = vector.load %arg2[%c8, %c0_28, %c0_29] : memref<9x128x128xbf16, #tpu.memory_space<vmem>>, vector<1x128x128xbf16>
    %54 = vector.shape_cast %53 : vector<1x128x128xbf16> to vector<128x128xbf16>
    %cst_30 = arith.constant dense<0.000000e+00> : vector<16x128xf32>
    %55 = tpu.matmul %52, %54, %cst_30 {dimension_numbers = #tpu.dot_dimension_numbers<[1], [0], [0], [1], [0, 0, 1, 1], [], []>} : vector<16x128xbf16>, vector<128x128xbf16>, vector<16x128xf32> -> vector<16x128xf32>
    %56 = arith.addf %50, %55 : vector<16x128xf32>
    %c0_31 = arith.constant 0 : index
    %c0_32 = arith.constant 0 : index
    %57 = vector.load %arg3[%c0_31, %c0_32] : memref<1x128xf32, #tpu.memory_space<vmem>>, vector<1x128xf32>
    %58 = vector.broadcast %57 : vector<1x128xf32> to vector<16x128xf32>
    %59 = arith.addf %56, %58 : vector<16x128xf32>
    %cst_33 = arith.constant 0.000000e+00 : f32
    %60 = vector.broadcast %cst_33 : f32 to vector<16x128xf32>
    %61 = arith.maximumf %59, %60 : vector<16x128xf32>
    %62 = vector.shape_cast %61 : vector<16x128xf32> to vector<4x4x128xf32>
    %63 = arith.truncf %62 : vector<4x4x128xf32> to vector<4x4x128xbf16>
    %c0_34 = arith.constant 0 : index
    %c0_35 = arith.constant 0 : index
    %c0_36 = arith.constant 0 : index
    %c0_37 = arith.constant 0 : index
    %64 = vector.load %arg4[%c0_34, %c0_35, %c0_36, %c0_37] : memref<1x4x4x128xbf16, #tpu.memory_space<vmem>>, vector<1x4x4x128xbf16>
    %65 = vector.shape_cast %64 : vector<1x4x4x128xbf16> to vector<4x4x128xbf16>
    %66 = vector.shape_cast %63 : vector<4x4x128xbf16> to vector<1x4x4x128xbf16>
    tpu.vector_store %arg4[%c0_34, %c0_35, %c0_36, %c0_37], %66 {strides = array<i32>} : memref<1x4x4x128xbf16, #tpu.memory_space<vmem>>, vector<1x4x4x128xbf16>,
    return
  }
  func.func @transform_0(%arg0: i32) -> (i32, i32, i32, i32) {
    %c0_i32 = arith.constant 0 : i32
    %c0_i32_0 = arith.constant 0 : i32
    %c0_i32_1 = arith.constant 0 : i32
    %c0_i32_2 = arith.constant 0 : i32
    return %arg0, %c0_i32, %c0_i32_0, %c0_i32_1 : i32, i32, i32, i32
  }
  func.func @transform_1(%arg0: i32) -> (i32, i32, i32) {
    %c0_i32 = arith.constant 0 : i32
    %c0_i32_0 = arith.constant 0 : i32
    %c0_i32_1 = arith.constant 0 : i32
    %c0_i32_2 = arith.constant 0 : i32
    return %c0_i32, %c0_i32_0, %c0_i32_1 : i32, i32, i32
  }
  func.func @transform_2(%arg0: i32) -> (i32, i32) {
    %c0_i32 = arith.constant 0 : i32
    %c0_i32_0 = arith.constant 0 : i32
    %c0_i32_1 = arith.constant 0 : i32
    return %c0_i32, %c0_i32_0 : i32, i32
  }
  func.func @transform_3(%arg0: i32) -> (i32, i32, i32, i32) {
    %c0_i32 = arith.constant 0 : i32
    %c0_i32_0 = arith.constant 0 : i32
    %c0_i32_1 = arith.constant 0 : i32
    %c0_i32_2 = arith.constant 0 : i32
    return %arg0, %c0_i32, %c0_i32_0, %c0_i32_1 : i32, i32, i32, i32
  }
}

module attributes {stable_mosaic.version = 11 : i64} {
  func.func @kernel(%arg0: i32, %arg1: memref<1x12x3x128xbf16, #tpu.memory_space<vmem>>, %arg2: memref<9x128x128xbf16, #tpu.memory_space<vmem>>, %arg3: memref<1x128xf32, #tpu.memory_space<vmem>>, %arg4: memref<1x2x2x128xbf16, #tpu.memory_space<vmem>>) attributes {dimension_semantics = [#tpu.dimension_semantics<parallel>], iteration_bounds = array<i64: 2>, scalar_prefetch = 0 : i64, scratch_operands = 0 : i64, tpu.core_type = #tpu.core_type<tc>, window_params = [{transform_indices = @transform_0, window_bounds = array<i64: 1, 12, 3, 128>}, {pipeline_mode = #tpu.pipeline_mode<synchronous>, transform_indices = @transform_1, window_bounds = array<i64: 9, 128, 128>}, {pipeline_mode = #tpu.pipeline_mode<synchronous>, transform_indices = @transform_2, window_bounds = array<i64: 1, 128>}, {transform_indices = @transform_3, window_bounds = array<i64: 1, 2, 2, 128>}]} {
    %c0 = arith.constant 0 : index
    %c0_0 = arith.constant 0 : index
    %c0_1 = arith.constant 0 : index
    %c0_2 = arith.constant 0 : index
    %0 = vector.load %arg1[%c0, %c0_0, %c0_1, %c0_2] : memref<1x12x3x128xbf16, #tpu.memory_space<vmem>>, vector<1x12x3x128xbf16>
    %1 = vector.shape_cast %0 : vector<1x12x3x128xbf16> to vector<12x3x128xbf16>
    %cst = arith.constant 0.000000e+00 : f32
    %2 = vector.broadcast %cst : f32 to vector<4x128xf32>
    %3 = vector.extract_strided_slice %1 {offsets = [0, 0, 0], sizes = [2, 2, 128], strides = [1, 1, 1]} : vector<12x3x128xbf16> to vector<2x2x128xbf16>
    %4 = vector.shape_cast %3 : vector<2x2x128xbf16> to vector<4x128xbf16>
    %c0_3 = arith.constant 0 : index
    %c0_4 = arith.constant 0 : index
    %c0_5 = arith.constant 0 : index
    %5 = vector.load %arg2[%c0_3, %c0_4, %c0_5] : memref<9x128x128xbf16, #tpu.memory_space<vmem>>, vector<1x128x128xbf16>
    %6 = vector.shape_cast %5 : vector<1x128x128xbf16> to vector<128x128xbf16>
    %cst_6 = arith.constant dense<0.000000e+00> : vector<4x128xf32>
    %7 = tpu.matmul %4, %6, %cst_6 {dimension_numbers = #tpu.dot_dimension_numbers<[1], [0], [0], [1], [0, 0, 1, 1], [], []>} : vector<4x128xbf16>, vector<128x128xbf16>, vector<4x128xf32> -> vector<4x128xf32>
    %8 = arith.addf %2, %7 : vector<4x128xf32>
    %9 = vector.extract_strided_slice %1 {offsets = [3, 0, 0], sizes = [2, 2, 128], strides = [1, 1, 1]} : vector<12x3x128xbf16> to vector<2x2x128xbf16>
    %10 = vector.shape_cast %9 : vector<2x2x128xbf16> to vector<4x128xbf16>
    %c1 = arith.constant 1 : index
    %c0_7 = arith.constant 0 : index
    %c0_8 = arith.constant 0 : index
    %11 = vector.load %arg2[%c1, %c0_7, %c0_8] : memref<9x128x128xbf16, #tpu.memory_space<vmem>>, vector<1x128x128xbf16>
    %12 = vector.shape_cast %11 : vector<1x128x128xbf16> to vector<128x128xbf16>
    %cst_9 = arith.constant dense<0.000000e+00> : vector<4x128xf32>
    %13 = tpu.matmul %10, %12, %cst_9 {dimension_numbers = #tpu.dot_dimension_numbers<[1], [0], [0], [1], [0, 0, 1, 1], [], []>} : vector<4x128xbf16>, vector<128x128xbf16>, vector<4x128xf32> -> vector<4x128xf32>
    %14 = arith.addf %8, %13 : vector<4x128xf32>
    %15 = vector.extract_strided_slice %1 {offsets = [0, 1, 0], sizes = [2, 2, 128], strides = [1, 1, 1]} : vector<12x3x128xbf16> to vector<2x2x128xbf16>
    %16 = vector.shape_cast %15 : vector<2x2x128xbf16> to vector<4x128xbf16>
    %c2 = arith.constant 2 : index
    %c0_10 = arith.constant 0 : index
    %c0_11 = arith.constant 0 : index
    %17 = vector.load %arg2[%c2, %c0_10, %c0_11] : memref<9x128x128xbf16, #tpu.memory_space<vmem>>, vector<1x128x128xbf16>
    %18 = vector.shape_cast %17 : vector<1x128x128xbf16> to vector<128x128xbf16>
    %cst_12 = arith.constant dense<0.000000e+00> : vector<4x128xf32>
    %19 = tpu.matmul %16, %18, %cst_12 {dimension_numbers = #tpu.dot_dimension_numbers<[1], [0], [0], [1], [0, 0, 1, 1], [], []>} : vector<4x128xbf16>, vector<128x128xbf16>, vector<4x128xf32> -> vector<4x128xf32>
    %20 = arith.addf %14, %19 : vector<4x128xf32>
    %21 = vector.extract_strided_slice %1 {offsets = [6, 0, 0], sizes = [2, 2, 128], strides = [1, 1, 1]} : vector<12x3x128xbf16> to vector<2x2x128xbf16>
    %22 = vector.shape_cast %21 : vector<2x2x128xbf16> to vector<4x128xbf16>
    %c3 = arith.constant 3 : index
    %c0_13 = arith.constant 0 : index
    %c0_14 = arith.constant 0 : index
    %23 = vector.load %arg2[%c3, %c0_13, %c0_14] : memref<9x128x128xbf16, #tpu.memory_space<vmem>>, vector<1x128x128xbf16>
    %24 = vector.shape_cast %23 : vector<1x128x128xbf16> to vector<128x128xbf16>
    %cst_15 = arith.constant dense<0.000000e+00> : vector<4x128xf32>
    %25 = tpu.matmul %22, %24, %cst_15 {dimension_numbers = #tpu.dot_dimension_numbers<[1], [0], [0], [1], [0, 0, 1, 1], [], []>} : vector<4x128xbf16>, vector<128x128xbf16>, vector<4x128xf32> -> vector<4x128xf32>
    %26 = arith.addf %20, %25 : vector<4x128xf32>
    %27 = vector.extract_strided_slice %1 {offsets = [9, 0, 0], sizes = [2, 2, 128], strides = [1, 1, 1]} : vector<12x3x128xbf16> to vector<2x2x128xbf16>
    %28 = vector.shape_cast %27 : vector<2x2x128xbf16> to vector<4x128xbf16>
    %c4 = arith.constant 4 : index
    %c0_16 = arith.constant 0 : index
    %c0_17 = arith.constant 0 : index
    %29 = vector.load %arg2[%c4, %c0_16, %c0_17] : memref<9x128x128xbf16, #tpu.memory_space<vmem>>, vector<1x128x128xbf16>
    %30 = vector.shape_cast %29 : vector<1x128x128xbf16> to vector<128x128xbf16>
    %cst_18 = arith.constant dense<0.000000e+00> : vector<4x128xf32>
    %31 = tpu.matmul %28, %30, %cst_18 {dimension_numbers = #tpu.dot_dimension_numbers<[1], [0], [0], [1], [0, 0, 1, 1], [], []>} : vector<4x128xbf16>, vector<128x128xbf16>, vector<4x128xf32> -> vector<4x128xf32>
    %32 = arith.addf %26, %31 : vector<4x128xf32>
    %33 = vector.extract_strided_slice %1 {offsets = [6, 1, 0], sizes = [2, 2, 128], strides = [1, 1, 1]} : vector<12x3x128xbf16> to vector<2x2x128xbf16>
    %34 = vector.shape_cast %33 : vector<2x2x128xbf16> to vector<4x128xbf16>
    %c5 = arith.constant 5 : index
    %c0_19 = arith.constant 0 : index
    %c0_20 = arith.constant 0 : index
    %35 = vector.load %arg2[%c5, %c0_19, %c0_20] : memref<9x128x128xbf16, #tpu.memory_space<vmem>>, vector<1x128x128xbf16>
    %36 = vector.shape_cast %35 : vector<1x128x128xbf16> to vector<128x128xbf16>
    %cst_21 = arith.constant dense<0.000000e+00> : vector<4x128xf32>
    %37 = tpu.matmul %34, %36, %cst_21 {dimension_numbers = #tpu.dot_dimension_numbers<[1], [0], [0], [1], [0, 0, 1, 1], [], []>} : vector<4x128xbf16>, vector<128x128xbf16>, vector<4x128xf32> -> vector<4x128xf32>
    %38 = arith.addf %32, %37 : vector<4x128xf32>
    %39 = vector.extract_strided_slice %1 {offsets = [1, 0, 0], sizes = [2, 2, 128], strides = [1, 1, 1]} : vector<12x3x128xbf16> to vector<2x2x128xbf16>
    %40 = vector.shape_cast %39 : vector<2x2x128xbf16> to vector<4x128xbf16>
    %c6 = arith.constant 6 : index
    %c0_22 = arith.constant 0 : index
    %c0_23 = arith.constant 0 : index
    %41 = vector.load %arg2[%c6, %c0_22, %c0_23] : memref<9x128x128xbf16, #tpu.memory_space<vmem>>, vector<1x128x128xbf16>
    %42 = vector.shape_cast %41 : vector<1x128x128xbf16> to vector<128x128xbf16>
    %cst_24 = arith.constant dense<0.000000e+00> : vector<4x128xf32>
    %43 = tpu.matmul %40, %42, %cst_24 {dimension_numbers = #tpu.dot_dimension_numbers<[1], [0], [0], [1], [0, 0, 1, 1], [], []>} : vector<4x128xbf16>, vector<128x128xbf16>, vector<4x128xf32> -> vector<4x128xf32>
    %44 = arith.addf %38, %43 : vector<4x128xf32>
    %45 = vector.extract_strided_slice %1 {offsets = [4, 0, 0], sizes = [2, 2, 128], strides = [1, 1, 1]} : vector<12x3x128xbf16> to vector<2x2x128xbf16>
    %46 = vector.shape_cast %45 : vector<2x2x128xbf16> to vector<4x128xbf16>
    %c7 = arith.constant 7 : index
    %c0_25 = arith.constant 0 : index
    %c0_26 = arith.constant 0 : index
    %47 = vector.load %arg2[%c7, %c0_25, %c0_26] : memref<9x128x128xbf16, #tpu.memory_space<vmem>>, vector<1x128x128xbf16>
    %48 = vector.shape_cast %47 : vector<1x128x128xbf16> to vector<128x128xbf16>
    %cst_27 = arith.constant dense<0.000000e+00> : vector<4x128xf32>
    %49 = tpu.matmul %46, %48, %cst_27 {dimension_numbers = #tpu.dot_dimension_numbers<[1], [0], [0], [1], [0, 0, 1, 1], [], []>} : vector<4x128xbf16>, vector<128x128xbf16>, vector<4x128xf32> -> vector<4x128xf32>
    %50 = arith.addf %44, %49 : vector<4x128xf32>
    %51 = vector.extract_strided_slice %1 {offsets = [1, 1, 0], sizes = [2, 2, 128], strides = [1, 1, 1]} : vector<12x3x128xbf16> to vector<2x2x128xbf16>
    %52 = vector.shape_cast %51 : vector<2x2x128xbf16> to vector<4x128xbf16>
    %c8 = arith.constant 8 : index
    %c0_28 = arith.constant 0 : index
    %c0_29 = arith.constant 0 : index
    %53 = vector.load %arg2[%c8, %c0_28, %c0_29] : memref<9x128x128xbf16, #tpu.memory_space<vmem>>, vector<1x128x128xbf16>
    %54 = vector.shape_cast %53 : vector<1x128x128xbf16> to vector<128x128xbf16>
    %cst_30 = arith.constant dense<0.000000e+00> : vector<4x128xf32>
    %55 = tpu.matmul %52, %54, %cst_30 {dimension_numbers = #tpu.dot_dimension_numbers<[1], [0], [0], [1], [0, 0, 1, 1], [], []>} : vector<4x128xbf16>, vector<128x128xbf16>, vector<4x128xf32> -> vector<4x128xf32>
    %56 = arith.addf %50, %55 : vector<4x128xf32>
    %c0_31 = arith.constant 0 : index
    %c0_32 = arith.constant 0 : index
    %57 = vector.load %arg3[%c0_31, %c0_32] : memref<1x128xf32, #tpu.memory_space<vmem>>, vector<1x128xf32>
    %58 = vector.broadcast %57 : vector<1x128xf32> to vector<4x128xf32>
    %59 = arith.addf %56, %58 : vector<4x128xf32>
    %cst_33 = arith.constant 0.000000e+00 : f32
    %60 = vector.broadcast %cst_33 : f32 to vector<4x128xf32>
    %61 = arith.maximumf %59, %60 : vector<4x128xf32>
    %62 = vector.shape_cast %61 : vector<4x128xf32> to vector<2x2x128xf32>
    %63 = arith.truncf %62 : vector<2x2x128xf32> to vector<2x2x128xbf16>
    %c0_34 = arith.constant 0 : index
    %c0_35 = arith.constant 0 : index
    %c0_36 = arith.constant 0 : index
    %c0_37 = arith.constant 0 : index
    %64 = vector.load %arg4[%c0_34, %c0_35, %c0_36, %c0_37] : memref<1x2x2x128xbf16, #tpu.memory_space<vmem>>, vector<1x2x2x128xbf16>
    %65 = vector.shape_cast %64 : vector<1x2x2x128xbf16> to vector<2x2x128xbf16>
    %66 = vector.shape_cast %63 : vector<2x2x128xbf16> to vector<1x2x2x128xbf16>
    tpu.vector_store %arg4[%c0_34, %c0_35, %c0_36, %c0_37], %66 {strides = array<i32>} : memref<1x2x2x128xbf16, #tpu.memory_space<vmem>>, vector<1x2x2x128xbf16>,
    return
  }
  func.func @transform_0(%arg0: i32) -> (i32, i32, i32, i32) {
    %c0_i32 = arith.constant 0 : i32
    %c0_i32_0 = arith.constant 0 : i32
    %c0_i32_1 = arith.constant 0 : i32
    %c0_i32_2 = arith.constant 0 : i32
    return %arg0, %c0_i32, %c0_i32_0, %c0_i32_1 : i32, i32, i32, i32
  }
  func.func @transform_1(%arg0: i32) -> (i32, i32, i32) {
    %c0_i32 = arith.constant 0 : i32
    %c0_i32_0 = arith.constant 0 : i32
    %c0_i32_1 = arith.constant 0 : i32
    %c0_i32_2 = arith.constant 0 : i32
    return %c0_i32, %c0_i32_0, %c0_i32_1 : i32, i32, i32
  }
  func.func @transform_2(%arg0: i32) -> (i32, i32) {
    %c0_i32 = arith.constant 0 : i32
    %c0_i32_0 = arith.constant 0 : i32
    %c0_i32_1 = arith.constant 0 : i32
    return %c0_i32, %c0_i32_0 : i32, i32
  }
  func.func @transform_3(%arg0: i32) -> (i32, i32, i32, i32) {
    %c0_i32 = arith.constant 0 : i32
    %c0_i32_0 = arith.constant 0 : i32
    %c0_i32_1 = arith.constant 0 : i32
    %c0_i32_2 = arith.constant 0 : i32
    return %arg0, %c0_i32, %c0_i32_0, %c0_i32_1 : i32, i32, i32, i32
  }
}

module attributes {stable_mosaic.version = 11 : i64} {
  func.func @kernel(%arg0: i32, %arg1: memref<1x8x2x128xbf16, #tpu.memory_space<vmem>>, %arg2: memref<9x128x128xbf16, #tpu.memory_space<vmem>>, %arg3: memref<1x128xf32, #tpu.memory_space<vmem>>, %arg4: memref<128x128xf32, #tpu.memory_space<vmem>>, %arg5: memref<1x128xf32, #tpu.memory_space<vmem>>, %arg6: memref<1x1x128xf32, #tpu.memory_space<vmem>>) attributes {dimension_semantics = [#tpu.dimension_semantics<parallel>], iteration_bounds = array<i64: 2>, scalar_prefetch = 0 : i64, scratch_operands = 0 : i64, tpu.core_type = #tpu.core_type<tc>, window_params = [{transform_indices = @transform_0, window_bounds = array<i64: 1, 8, 2, 128>}, {pipeline_mode = #tpu.pipeline_mode<synchronous>, transform_indices = @transform_1, window_bounds = array<i64: 9, 128, 128>}, {pipeline_mode = #tpu.pipeline_mode<synchronous>, transform_indices = @transform_2, window_bounds = array<i64: 1, 128>}, {pipeline_mode = #tpu.pipeline_mode<synchronous>, transform_indices = @transform_3, window_bounds = array<i64: 128, 128>}, {pipeline_mode = #tpu.pipeline_mode<synchronous>, transform_indices = @transform_4, window_bounds = array<i64: 1, 128>}, {transform_indices = @transform_5, window_bounds = array<i64: 1, 1, 128>}]} {
    %c0 = arith.constant 0 : index
    %c0_0 = arith.constant 0 : index
    %c0_1 = arith.constant 0 : index
    %c0_2 = arith.constant 0 : index
    %0 = vector.load %arg1[%c0, %c0_0, %c0_1, %c0_2] : memref<1x8x2x128xbf16, #tpu.memory_space<vmem>>, vector<1x8x2x128xbf16>
    %1 = vector.shape_cast %0 : vector<1x8x2x128xbf16> to vector<8x2x128xbf16>
    %cst = arith.constant 0.000000e+00 : f32
    %2 = vector.broadcast %cst : f32 to vector<1x128xf32>
    %3 = vector.extract_strided_slice %1 {offsets = [0, 0, 0], sizes = [1, 1, 128], strides = [1, 1, 1]} : vector<8x2x128xbf16> to vector<1x1x128xbf16>
    %4 = vector.shape_cast %3 : vector<1x1x128xbf16> to vector<1x128xbf16>
    %c0_3 = arith.constant 0 : index
    %c0_4 = arith.constant 0 : index
    %c0_5 = arith.constant 0 : index
    %5 = vector.load %arg2[%c0_3, %c0_4, %c0_5] : memref<9x128x128xbf16, #tpu.memory_space<vmem>>, vector<1x128x128xbf16>
    %6 = vector.shape_cast %5 : vector<1x128x128xbf16> to vector<128x128xbf16>
    %cst_6 = arith.constant dense<0.000000e+00> : vector<1x128xf32>
    %7 = tpu.matmul %4, %6, %cst_6 {dimension_numbers = #tpu.dot_dimension_numbers<[1], [0], [0], [1], [0, 0, 1, 1], [], []>} : vector<1x128xbf16>, vector<128x128xbf16>, vector<1x128xf32> -> vector<1x128xf32>
    %8 = arith.addf %2, %7 : vector<1x128xf32>
    %9 = vector.extract_strided_slice %1 {offsets = [2, 0, 0], sizes = [1, 1, 128], strides = [1, 1, 1]} : vector<8x2x128xbf16> to vector<1x1x128xbf16>
    %10 = vector.shape_cast %9 : vector<1x1x128xbf16> to vector<1x128xbf16>
    %c1 = arith.constant 1 : index
    %c0_7 = arith.constant 0 : index
    %c0_8 = arith.constant 0 : index
    %11 = vector.load %arg2[%c1, %c0_7, %c0_8] : memref<9x128x128xbf16, #tpu.memory_space<vmem>>, vector<1x128x128xbf16>
    %12 = vector.shape_cast %11 : vector<1x128x128xbf16> to vector<128x128xbf16>
    %cst_9 = arith.constant dense<0.000000e+00> : vector<1x128xf32>
    %13 = tpu.matmul %10, %12, %cst_9 {dimension_numbers = #tpu.dot_dimension_numbers<[1], [0], [0], [1], [0, 0, 1, 1], [], []>} : vector<1x128xbf16>, vector<128x128xbf16>, vector<1x128xf32> -> vector<1x128xf32>
    %14 = arith.addf %8, %13 : vector<1x128xf32>
    %15 = vector.extract_strided_slice %1 {offsets = [0, 1, 0], sizes = [1, 1, 128], strides = [1, 1, 1]} : vector<8x2x128xbf16> to vector<1x1x128xbf16>
    %16 = vector.shape_cast %15 : vector<1x1x128xbf16> to vector<1x128xbf16>
    %c2 = arith.constant 2 : index
    %c0_10 = arith.constant 0 : index
    %c0_11 = arith.constant 0 : index
    %17 = vector.load %arg2[%c2, %c0_10, %c0_11] : memref<9x128x128xbf16, #tpu.memory_space<vmem>>, vector<1x128x128xbf16>
    %18 = vector.shape_cast %17 : vector<1x128x128xbf16> to vector<128x128xbf16>
    %cst_12 = arith.constant dense<0.000000e+00> : vector<1x128xf32>
    %19 = tpu.matmul %16, %18, %cst_12 {dimension_numbers = #tpu.dot_dimension_numbers<[1], [0], [0], [1], [0, 0, 1, 1], [], []>} : vector<1x128xbf16>, vector<128x128xbf16>, vector<1x128xf32> -> vector<1x128xf32>
    %20 = arith.addf %14, %19 : vector<1x128xf32>
    %21 = vector.extract_strided_slice %1 {offsets = [4, 0, 0], sizes = [1, 1, 128], strides = [1, 1, 1]} : vector<8x2x128xbf16> to vector<1x1x128xbf16>
    %22 = vector.shape_cast %21 : vector<1x1x128xbf16> to vector<1x128xbf16>
    %c3 = arith.constant 3 : index
    %c0_13 = arith.constant 0 : index
    %c0_14 = arith.constant 0 : index
    %23 = vector.load %arg2[%c3, %c0_13, %c0_14] : memref<9x128x128xbf16, #tpu.memory_space<vmem>>, vector<1x128x128xbf16>
    %24 = vector.shape_cast %23 : vector<1x128x128xbf16> to vector<128x128xbf16>
    %cst_15 = arith.constant dense<0.000000e+00> : vector<1x128xf32>
    %25 = tpu.matmul %22, %24, %cst_15 {dimension_numbers = #tpu.dot_dimension_numbers<[1], [0], [0], [1], [0, 0, 1, 1], [], []>} : vector<1x128xbf16>, vector<128x128xbf16>, vector<1x128xf32> -> vector<1x128xf32>
    %26 = arith.addf %20, %25 : vector<1x128xf32>
    %27 = vector.extract_strided_slice %1 {offsets = [6, 0, 0], sizes = [1, 1, 128], strides = [1, 1, 1]} : vector<8x2x128xbf16> to vector<1x1x128xbf16>
    %28 = vector.shape_cast %27 : vector<1x1x128xbf16> to vector<1x128xbf16>
    %c4 = arith.constant 4 : index
    %c0_16 = arith.constant 0 : index
    %c0_17 = arith.constant 0 : index
    %29 = vector.load %arg2[%c4, %c0_16, %c0_17] : memref<9x128x128xbf16, #tpu.memory_space<vmem>>, vector<1x128x128xbf16>
    %30 = vector.shape_cast %29 : vector<1x128x128xbf16> to vector<128x128xbf16>
    %cst_18 = arith.constant dense<0.000000e+00> : vector<1x128xf32>
    %31 = tpu.matmul %28, %30, %cst_18 {dimension_numbers = #tpu.dot_dimension_numbers<[1], [0], [0], [1], [0, 0, 1, 1], [], []>} : vector<1x128xbf16>, vector<128x128xbf16>, vector<1x128xf32> -> vector<1x128xf32>
    %32 = arith.addf %26, %31 : vector<1x128xf32>
    %33 = vector.extract_strided_slice %1 {offsets = [4, 1, 0], sizes = [1, 1, 128], strides = [1, 1, 1]} : vector<8x2x128xbf16> to vector<1x1x128xbf16>
    %34 = vector.shape_cast %33 : vector<1x1x128xbf16> to vector<1x128xbf16>
    %c5 = arith.constant 5 : index
    %c0_19 = arith.constant 0 : index
    %c0_20 = arith.constant 0 : index
    %35 = vector.load %arg2[%c5, %c0_19, %c0_20] : memref<9x128x128xbf16, #tpu.memory_space<vmem>>, vector<1x128x128xbf16>
    %36 = vector.shape_cast %35 : vector<1x128x128xbf16> to vector<128x128xbf16>
    %cst_21 = arith.constant dense<0.000000e+00> : vector<1x128xf32>
    %37 = tpu.matmul %34, %36, %cst_21 {dimension_numbers = #tpu.dot_dimension_numbers<[1], [0], [0], [1], [0, 0, 1, 1], [], []>} : vector<1x128xbf16>, vector<128x128xbf16>, vector<1x128xf32> -> vector<1x128xf32>
    %38 = arith.addf %32, %37 : vector<1x128xf32>
    %39 = vector.extract_strided_slice %1 {offsets = [1, 0, 0], sizes = [1, 1, 128], strides = [1, 1, 1]} : vector<8x2x128xbf16> to vector<1x1x128xbf16>
    %40 = vector.shape_cast %39 : vector<1x1x128xbf16> to vector<1x128xbf16>
    %c6 = arith.constant 6 : index
    %c0_22 = arith.constant 0 : index
    %c0_23 = arith.constant 0 : index
    %41 = vector.load %arg2[%c6, %c0_22, %c0_23] : memref<9x128x128xbf16, #tpu.memory_space<vmem>>, vector<1x128x128xbf16>
    %42 = vector.shape_cast %41 : vector<1x128x128xbf16> to vector<128x128xbf16>
    %cst_24 = arith.constant dense<0.000000e+00> : vector<1x128xf32>
    %43 = tpu.matmul %40, %42, %cst_24 {dimension_numbers = #tpu.dot_dimension_numbers<[1], [0], [0], [1], [0, 0, 1, 1], [], []>} : vector<1x128xbf16>, vector<128x128xbf16>, vector<1x128xf32> -> vector<1x128xf32>
    %44 = arith.addf %38, %43 : vector<1x128xf32>
    %45 = vector.extract_strided_slice %1 {offsets = [3, 0, 0], sizes = [1, 1, 128], strides = [1, 1, 1]} : vector<8x2x128xbf16> to vector<1x1x128xbf16>
    %46 = vector.shape_cast %45 : vector<1x1x128xbf16> to vector<1x128xbf16>
    %c7 = arith.constant 7 : index
    %c0_25 = arith.constant 0 : index
    %c0_26 = arith.constant 0 : index
    %47 = vector.load %arg2[%c7, %c0_25, %c0_26] : memref<9x128x128xbf16, #tpu.memory_space<vmem>>, vector<1x128x128xbf16>
    %48 = vector.shape_cast %47 : vector<1x128x128xbf16> to vector<128x128xbf16>
    %cst_27 = arith.constant dense<0.000000e+00> : vector<1x128xf32>
    %49 = tpu.matmul %46, %48, %cst_27 {dimension_numbers = #tpu.dot_dimension_numbers<[1], [0], [0], [1], [0, 0, 1, 1], [], []>} : vector<1x128xbf16>, vector<128x128xbf16>, vector<1x128xf32> -> vector<1x128xf32>
    %50 = arith.addf %44, %49 : vector<1x128xf32>
    %51 = vector.extract_strided_slice %1 {offsets = [1, 1, 0], sizes = [1, 1, 128], strides = [1, 1, 1]} : vector<8x2x128xbf16> to vector<1x1x128xbf16>
    %52 = vector.shape_cast %51 : vector<1x1x128xbf16> to vector<1x128xbf16>
    %c8 = arith.constant 8 : index
    %c0_28 = arith.constant 0 : index
    %c0_29 = arith.constant 0 : index
    %53 = vector.load %arg2[%c8, %c0_28, %c0_29] : memref<9x128x128xbf16, #tpu.memory_space<vmem>>, vector<1x128x128xbf16>
    %54 = vector.shape_cast %53 : vector<1x128x128xbf16> to vector<128x128xbf16>
    %cst_30 = arith.constant dense<0.000000e+00> : vector<1x128xf32>
    %55 = tpu.matmul %52, %54, %cst_30 {dimension_numbers = #tpu.dot_dimension_numbers<[1], [0], [0], [1], [0, 0, 1, 1], [], []>} : vector<1x128xbf16>, vector<128x128xbf16>, vector<1x128xf32> -> vector<1x128xf32>
    %56 = arith.addf %50, %55 : vector<1x128xf32>
    %c0_31 = arith.constant 0 : index
    %c0_32 = arith.constant 0 : index
    %57 = vector.load %arg3[%c0_31, %c0_32] : memref<1x128xf32, #tpu.memory_space<vmem>>, vector<1x128xf32>
    %58 = arith.addf %56, %57 : vector<1x128xf32>
    %cst_33 = arith.constant 0.000000e+00 : f32
    %59 = vector.broadcast %cst_33 : f32 to vector<1x128xf32>
    %60 = arith.maximumf %58, %59 : vector<1x128xf32>
    %cst_34 = arith.constant dense<0.000000e+00> : vector<128xf32>
    %61 = vector.multi_reduction <add>, %60, %cst_34 [0] : vector<1x128xf32> to vector<128xf32>
    %62 = vector.shape_cast %61 : vector<128xf32> to vector<1x128xf32>
    %cst_35 = arith.constant 1.000000e+00 : f32
    %63 = vector.broadcast %cst_35 : f32 to vector<1x128xf32>
    %64 = arith.mulf %62, %63 : vector<1x128xf32>
    %c0_36 = arith.constant 0 : index
    %c0_37 = arith.constant 0 : index
    %65 = vector.load %arg4[%c0_36, %c0_37] : memref<128x128xf32, #tpu.memory_space<vmem>>, vector<128x128xf32>
    %cst_38 = arith.constant dense<0.000000e+00> : vector<1x128xf32>
    %66 = tpu.matmul %64, %65, %cst_38 {dimension_numbers = #tpu.dot_dimension_numbers<[1], [0], [0], [1], [0, 0, 1, 1], [], []>} : vector<1x128xf32>, vector<128x128xf32>, vector<1x128xf32> -> vector<1x128xf32>
    %c0_39 = arith.constant 0 : index
    %c0_40 = arith.constant 0 : index
    %67 = vector.load %arg5[%c0_39, %c0_40] : memref<1x128xf32, #tpu.memory_space<vmem>>, vector<1x128xf32>
    %68 = arith.addf %66, %67 : vector<1x128xf32>
    %c0_41 = arith.constant 0 : index
    %c0_42 = arith.constant 0 : index
    %c0_43 = arith.constant 0 : index
    %69 = vector.load %arg6[%c0_41, %c0_42, %c0_43] : memref<1x1x128xf32, #tpu.memory_space<vmem>>, vector<1x1x128xf32>
    %70 = vector.shape_cast %69 : vector<1x1x128xf32> to vector<1x128xf32>
    %71 = vector.shape_cast %68 : vector<1x128xf32> to vector<1x1x128xf32>
    tpu.vector_store %arg6[%c0_41, %c0_42, %c0_43], %71 {strides = array<i32>} : memref<1x1x128xf32, #tpu.memory_space<vmem>>, vector<1x1x128xf32>,
    return
  }
  func.func @transform_0(%arg0: i32) -> (i32, i32, i32, i32) {
    %c0_i32 = arith.constant 0 : i32
    %c0_i32_0 = arith.constant 0 : i32
    %c0_i32_1 = arith.constant 0 : i32
    %c0_i32_2 = arith.constant 0 : i32
    return %arg0, %c0_i32, %c0_i32_0, %c0_i32_1 : i32, i32, i32, i32
  }
  func.func @transform_1(%arg0: i32) -> (i32, i32, i32) {
    %c0_i32 = arith.constant 0 : i32
    %c0_i32_0 = arith.constant 0 : i32
    %c0_i32_1 = arith.constant 0 : i32
    %c0_i32_2 = arith.constant 0 : i32
    return %c0_i32, %c0_i32_0, %c0_i32_1 : i32, i32, i32
  }
  func.func @transform_2(%arg0: i32) -> (i32, i32) {
    %c0_i32 = arith.constant 0 : i32
    %c0_i32_0 = arith.constant 0 : i32
    %c0_i32_1 = arith.constant 0 : i32
    return %c0_i32, %c0_i32_0 : i32, i32
  }
  func.func @transform_3(%arg0: i32) -> (i32, i32) {
    %c0_i32 = arith.constant 0 : i32
    %c0_i32_0 = arith.constant 0 : i32
    %c0_i32_1 = arith.constant 0 : i32
    return %c0_i32, %c0_i32_0 : i32, i32
  }
  func.func @transform_4(%arg0: i32) -> (i32, i32) {
    %c0_i32 = arith.constant 0 : i32
    %c0_i32_0 = arith.constant 0 : i32
    %c0_i32_1 = arith.constant 0 : i32
    return %c0_i32, %c0_i32_0 : i32, i32
  }
  func.func @transform_5(%arg0: i32) -> (i32, i32, i32) {
    %c0_i32 = arith.constant 0 : i32
    %c0_i32_0 = arith.constant 0 : i32
    %c0_i32_1 = arith.constant 0 : i32
    return %arg0, %c0_i32, %c0_i32_0 : i32, i32, i32
  }
}

</mosaic_0001>

<llo_original>
// kernel: _lambda_.6
$region0: #{_lambda_.6}
  #allocation0 [shape = 'u32[]', space=smem, size = 0x4, offset = 0x4, fixed_abs, tag = 'smem constant byte address 0x4 - core index']
  #allocation1 [shape = 'u32[72,128]{1,0:T(1,128)}', space=vmem, size = 0x9000, scoped, tag = 'internal scratch']
  %s0 = inlined_call_operand.vmem [shape: bf16[2,68,17,3], index: 0, kind: input, shape index: {}]
  %s1 = inlined_call_operand.vmem [shape: bf16[9,3,128], index: 1, kind: input, shape index: {}]
  %s2 = inlined_call_operand.vmem [shape: f32[1,128], index: 2, kind: input, shape index: {}]
  %s3 = inlined_call_operand.vmem [shape: bf16[2,16,16,128], index: 3, kind: output, shape index: {}]
  %s4 = sld [smem:[#allocation0]]
  $region45: #{_lambda_.6} parent=0
    _
  %s6 = ssub.s32 1, %s4
  %s7 = scalar_select 0, %s6, %s4
  loop: start=0, step=1, limit=4
  $region2: #{_lambda_.6} parent=0 // loop_pre_header
    _
  $region3: #{_lambda_.6} parent=0 // loop_header
    %s9 = sphi 0, %s13
    %p10 = scmp.ge.s32.totalorder %s9, 4
    %s19 = sphi 0, %s21
    %s22 = sphi 0, %s19
    %s23 = sphi 0, %s22
    %s39 = sphi 0, %s23
    %s43 = sphi 0, %s43
    %s45 = sphi 0, %s43
    %s46 = sphi 0, %s45
    %s60 = sphi 0, %s46
    %s64 = sphi 0, %s64
    %s66 = sphi 0, %s64
    %s67 = sphi 0, %s66
    %s81 = sphi 0, %s67
    %s87 = sphi 0, %s89
    %s90 = sphi 0, %s87
    %s91 = sphi 0, %s90
    %s107 = sphi 0, %s91
  $region4: #{_lambda_.6} parent=0 // loop_header_branch
    %12 = sbr.rel (%p10) target = $region8
  $region5: #{_lambda_.6} parent=0 // loop_body
    %s14 = ssub.s32 %s9, 1
    %s15 = ssub.s32 %s9, 2
    %s16 = sadd.s32 %s9, 1
    %s17 = ssub.s32 %s9, %s16
    %p18 = scmp.eq.s32.totalorder %s17, 0
    %s20 = sadd.s32 %s19, 1
    %s21 = scalar_select %p18, %s19, %s20
    %p24 = pneg %p18
    %p25 = scmp.eq.s32.totalorder %s9, 1
    %p26 = por %p24, %p25
    %p27 = scmp.ne.s32.totalorder %s19, %s22
    %p28 = scmp.eq.s32.totalorder %s9, 0
    %p29 = por %p27, %p28
    %p30 = scmp.ne.s32.totalorder %s19, %s22
    %p31 = scmp.eq.s32.totalorder %s14, 1
    %p32 = por %p30, %p31
    %p33 = scmp.ne.s32.totalorder %s22, %s23
    %p34 = scmp.eq.s32.totalorder %s14, 0
    %p35 = por %p33, %p34
    %p36 = scmp.ne.s32.totalorder %s22, %s23
    %p37 = scmp.eq.s32.totalorder %s15, 1
    %p38 = por %p36, %p37
    %p40 = scmp.ne.s32.totalorder %s23, %s39
    %p41 = scmp.eq.s32.totalorder %s15, 0
    %p42 = por %p40, %p41
    %s44 = sadd.s32 %s43, 1
    %p47 = scmp.eq.s32.totalorder %s9, 1
    %p48 = scmp.ne.s32.totalorder %s43, %s45
    %p49 = scmp.eq.s32.totalorder %s9, 0
    %p50 = por %p48, %p49
    %p51 = scmp.ne.s32.totalorder %s43, %s45
    %p52 = scmp.eq.s32.totalorder %s14, 1
    %p53 = por %p51, %p52
    %p54 = scmp.ne.s32.totalorder %s45, %s46
    %p55 = scmp.eq.s32.totalorder %s14, 0
    %p56 = por %p54, %p55
    %p57 = scmp.ne.s32.totalorder %s45, %s46
    %p58 = scmp.eq.s32.totalorder %s15, 1
    %p59 = por %p57, %p58
    %p61 = scmp.ne.s32.totalorder %s46, %s60
    %p62 = scmp.eq.s32.totalorder %s15, 0
    %p63 = por %p61, %p62
    %s65 = sadd.s32 %s64, 1
    %p68 = scmp.eq.s32.totalorder %s9, 1
    %p69 = scmp.ne.s32.totalorder %s64, %s66
    %p70 = scmp.eq.s32.totalorder %s9, 0
    %p71 = por %p69, %p70
    %p72 = scmp.ne.s32.totalorder %s64, %s66
    %p73 = scmp.eq.s32.totalorder %s14, 1
    %p74 = por %p72, %p73
    %p75 = scmp.ne.s32.totalorder %s66, %s67
    %p76 = scmp.eq.s32.totalorder %s14, 0
    %p77 = por %p75, %p76
    %p78 = scmp.ne.s32.totalorder %s66, %s67
    %p79 = scmp.eq.s32.totalorder %s15, 1
    %p80 = por %p78, %p79
    %p82 = scmp.ne.s32.totalorder %s67, %s81
    %p83 = scmp.eq.s32.totalorder %s15, 0
    %p84 = por %p82, %p83
    %s85 = ssub.s32 %s9, %s16
    %p86 = scmp.eq.s32.totalorder %s85, 0
    %s88 = sadd.s32 %s87, 1
    %s89 = scalar_select %p86, %s87, %s88
    %p92 = pneg %p86
    %p93 = scmp.eq.s32.totalorder %s9, 1
    %p94 = por %p92, %p93
    %p95 = scmp.ne.s32.totalorder %s87, %s90
    %p96 = scmp.eq.s32.totalorder %s9, 0
    %p97 = por %p95, %p96
    %p98 = scmp.ne.s32.totalorder %s87, %s90
    %p99 = scmp.eq.s32.totalorder %s14, 1
    %p100 = por %p98, %p99
    %p101 = scmp.ne.s32.totalorder %s90, %s91
    %p102 = scmp.eq.s32.totalorder %s14, 0
    %p103 = por %p101, %p102
    %p104 = scmp.ne.s32.totalorder %s90, %s91
    %p105 = scmp.eq.s32.totalorder %s15, 1
    %p106 = por %p104, %p105
    %p108 = scmp.ne.s32.totalorder %s91, %s107
    %p109 = scmp.eq.s32.totalorder %s15, 0
    %p110 = por %p108, %p109
    %p111 = scmp.le.s32.totalorder 1, %s9
    %p112 = scmp.lt.s32.totalorder %s9, 3
    %p113 = pnand %p111, %p112
    %p114 = pneg %p113
    // Predicated region
    $region9: #{_lambda_.6} parent=5 // pred_check
      _
    $region10: #{_lambda_.6} parent=5 // pred_check_branch
      %116 = sbr.rel (%p113) target = $region12
    $region11: #{_lambda_.6} parent=5 // pred_region
      %s117 = ssub.s32 %s9, 1
      // Predicated region
      $region13: #{_lambda_.6} parent=11 // pred_check
        %p118 = pneg %p56
      $region14: #{_lambda_.6} parent=11 // pred_check_branch
        %120 = sbr.rel (%p118) target = $region16
      $region15: #{_lambda_.6} parent=11 // pred_region
        _
      $region16: #{_lambda_.6} parent=11 // pred_fallthru
        _
      // Predicated region
      $region17: #{_lambda_.6} parent=11 // pred_check
        %p121 = pneg %p77
      $region18: #{_lambda_.6} parent=11 // pred_check_branch
        %123 = sbr.rel (%p121) target = $region20
      $region19: #{_lambda_.6} parent=11 // pred_region
        _
      $region20: #{_lambda_.6} parent=11 // pred_fallthru
        _
    $region12: #{_lambda_.6} parent=5 // pred_fallthru
      _
    %p124 = scmp.lt.s32.totalorder %s9, 2
    // Predicated region
    $region21: #{_lambda_.6} parent=5 // pred_check
      %p125 = pneg %p124
    $region22: #{_lambda_.6} parent=5 // pred_check_branch
      %127 = sbr.rel (%p125) target = $region24
    $region23: #{_lambda_.6} parent=5 // pred_region
      // Predicated region
      $region25: #{_lambda_.6} parent=23 // pred_check
        %p128 = pneg %p29
      $region26: #{_lambda_.6} parent=23 // pred_check_branch
        %130 = sbr.rel (%p128) target = $region28
      $region27: #{_lambda_.6} parent=23 // pred_region
        %p131 = scmp.lt.s32.totalorder %s9, 1
        %s132 = scalar_select %p131, %s9, 1
        %s133 = smul.addr %s132, 204
        %s134 = smul.addr %s133, 4
        %s135 = scalar_lea.vmem %s0, %s134
      $region28: #{_lambda_.6} parent=23 // pred_fallthru
        _
    $region24: #{_lambda_.6} parent=5 // pred_fallthru
      _
    %p136 = scmp.le.s32.totalorder 1, %s9
    %p137 = scmp.lt.s32.totalorder %s9, 3
    %p138 = pnand %p136, %p137
    %p139 = pneg %p138
    // Predicated region
    $region29: #{_lambda_.6} parent=5 // pred_check
      _
    $region30: #{_lambda_.6} parent=5 // pred_check_branch
      %141 = sbr.rel (%p138) target = $region32
    $region31: #{_lambda_.6} parent=5 // pred_region
      %s142 = ssub.s32 %s9, 1
      %p143 = scmp.lt.s32.totalorder %s14, 1
      %s144 = scalar_select %p143, %s14, 1
      %s145 = smul.addr %s144, 204
      %s146 = smul.addr %s145, 4
      %s147 = scalar_lea.vmem %s0, %s146
      %p148 = pneg %p35
      %p149 = pneg %p32
      %p150 = pneg %p56
      %p151 = pneg %p53
      %p152 = pneg %p77
      %p153 = pneg %p74
      %p154 = pneg %p103
      %p155 = pneg %p100
      %p156 = scmp.lt.s32.totalorder %s14, 1
      %s157 = scalar_select %p156, %s14, 1
      %s158 = smul.addr %s157, 32
      %s159 = smul.addr %s158, 4
      %s160 = scalar_lea.vmem %s3, %s159
      %p161 = scmp.lt.s32.totalorder %s14, 1
      %s162 = scalar_select %p161, %s14, 1
      %s163 = smul.addr %s162, 204
      %s164 = smul.addr %s163, 4
      %s165 = scalar_lea.vmem %s0, %s164
      %p166 = scmp.lt.s32.totalorder %s14, 1
      %s167 = scalar_select %p166, %s14, 1
      %s168 = smul.addr %s167, 32
      %s169 = smul.addr %s168, 4
      %s170 = scalar_lea.vmem %s3, %s169
      %v172 = vld [vmem:[%s165] sm:$0xf]
      %v173 = vld [vmem:[%s165 + $0x4] sm:$0xf]
      %v174 = vld [vmem:[%s165 + $0x8] sm:$0x1]
      %v175 = vld [vmem:[%s165 + $0xc] sm:$0xf]
      %v176 = vld [vmem:[%s165 + $0x10] sm:$0xf]
      %v177 = vld [vmem:[%s165 + $0x14] sm:$0x1]
      %v178 = vld [vmem:[%s165 + $0x18] sm:$0xf]
      %v179 = vld [vmem:[%s165 + $0x1c] sm:$0xf]
      %v180 = vld [vmem:[%s165 + $0x20] sm:$0x1]
      %v181 = vld [vmem:[%s165 + $0x24] sm:$0xf]
      %v182 = vld [vmem:[%s165 + $0x28] sm:$0xf]
      %v183 = vld [vmem:[%s165 + $0x2c] sm:$0x1]
      %v184 = vld [vmem:[%s165 + $0x30] sm:$0xf]
      %v185 = vld [vmem:[%s165 + $0x34] sm:$0xf]
      %v186 = vld [vmem:[%s165 + $0x38] sm:$0x1]
      %v187 = vld [vmem:[%s165 + $0x3c] sm:$0xf]
      %v188 = vld [vmem:[%s165 + $0x40] sm:$0xf]
      %v189 = vld [vmem:[%s165 + $0x44] sm:$0x1]
      %v190 = vld [vmem:[%s165 + $0x48] sm:$0xf]
      %v191 = vld [vmem:[%s165 + $0x4c] sm:$0xf]
      %v192 = vld [vmem:[%s165 + $0x50] sm:$0x1]
      %v193 = vld [vmem:[%s165 + $0x54] sm:$0xf]
      %v194 = vld [vmem:[%s165 + $0x58] sm:$0xf]
      %v195 = vld [vmem:[%s165 + $0x5c] sm:$0x1]
      %v196 = vld [vmem:[%s165 + $0x60] sm:$0xf]
      %v197 = vld [vmem:[%s165 + $0x64] sm:$0xf]
      %v198 = vld [vmem:[%s165 + $0x68] sm:$0x1]
      %v199 = vld [vmem:[%s165 + $0x6c] sm:$0xf]
      %v200 = vld [vmem:[%s165 + $0x70] sm:$0xf]
      %v201 = vld [vmem:[%s165 + $0x74] sm:$0x1]
      %v202 = vld [vmem:[%s165 + $0x78] sm:$0xf]
      %v203 = vld [vmem:[%s165 + $0x7c] sm:$0xf]
      %v204 = vld [vmem:[%s165 + $0x80] sm:$0x1]
      %v205 = vld [vmem:[%s165 + $0x84] sm:$0xf]
      %v206 = vld [vmem:[%s165 + $0x88] sm:$0xf]
      %v207 = vld [vmem:[%s165 + $0x8c] sm:$0x1]
      %v208 = vld [vmem:[%s165 + $0x90] sm:$0xf]
      %v209 = vld [vmem:[%s165 + $0x94] sm:$0xf]
      %v210 = vld [vmem:[%s165 + $0x98] sm:$0x1]
      %v211 = vld [vmem:[%s165 + $0x9c] sm:$0xf]
      %v212 = vld [vmem:[%s165 + $0xa0] sm:$0xf]
      %v213 = vld [vmem:[%s165 + $0xa4] sm:$0x1]
      %v214 = vld [vmem:[%s165 + $0xa8] sm:$0xf]
      %v215 = vld [vmem:[%s165 + $0xac] sm:$0xf]
      %v216 = vld [vmem:[%s165 + $0xb0] sm:$0x1]
      %v217 = vld [vmem:[%s165 + $0xb4] sm:$0xf]
      %v218 = vld [vmem:[%s165 + $0xb8] sm:$0xf]
      %v219 = vld [vmem:[%s165 + $0xbc] sm:$0x1]
      %v220 = vld [vmem:[%s165 + $0xc0] sm:$0xf]
      %v221 = vld [vmem:[%s165 + $0xc4] sm:$0xf]
      %v222 = vld [vmem:[%s165 + $0xc8] sm:$0x1]
      %v223 = vld [vmem:[%s165 + $0xcc] sm:$0xf]
      %v224 = vld [vmem:[%s165 + $0xd0] sm:$0xf]
      %v225 = vld [vmem:[%s165 + $0xd8] sm:$0xf]
      %v226 = vld [vmem:[%s165 + $0xdc] sm:$0xf]
      %v227 = vld [vmem:[%s165 + $0xe4] sm:$0xf]
      %v228 = vld [vmem:[%s165 + $0xe8] sm:$0xf]
      %v229 = vld [vmem:[%s165 + $0xf0] sm:$0xf]
      %v230 = vld [vmem:[%s165 + $0xf4] sm:$0xf]
      %v231 = vld [vmem:[%s165 + $0xfc] sm:$0xf]
      %v232 = vld [vmem:[%s165 + $0x100] sm:$0xf]
      %v233 = vld [vmem:[%s165 + $0x108] sm:$0xf]
      %v234 = vld [vmem:[%s165 + $0x10c] sm:$0xf]
      %v235 = vld [vmem:[%s165 + $0x114] sm:$0xf]
      %v236 = vld [vmem:[%s165 + $0x118] sm:$0xf]
      %v237 = vld [vmem:[%s165 + $0x120] sm:$0xf]
      %v238 = vld [vmem:[%s165 + $0x124] sm:$0xf]
      %v239 = vld [vmem:[%s165 + $0x12c] sm:$0xf]
      %v240 = vld [vmem:[%s165 + $0x130] sm:$0xf]
      %v241 = vld [vmem:[%s165 + $0x138] sm:$0xf]
      %v242 = vld [vmem:[%s165 + $0x13c] sm:$0xf]
      %v243 = vld [vmem:[%s165 + $0x144] sm:$0xf]
      %v244 = vld [vmem:[%s165 + $0x148] sm:$0xf]
      %v245 = vld [vmem:[%s165 + $0x150] sm:$0xf]
      %v246 = vld [vmem:[%s165 + $0x154] sm:$0xf]
      %v247 = vld [vmem:[%s165 + $0x15c] sm:$0xf]
      %v248 = vld [vmem:[%s165 + $0x160] sm:$0xf]
      %v249 = vld [vmem:[%s165 + $0x168] sm:$0xf]
      %v250 = vld [vmem:[%s165 + $0x16c] sm:$0xf]
      %v251 = vld [vmem:[%s165 + $0x174] sm:$0xf]
      %v252 = vld [vmem:[%s165 + $0x178] sm:$0xf]
      %v253 = vld [vmem:[%s165 + $0x180] sm:$0xf]
      %v254 = vld [vmem:[%s165 + $0x184] sm:$0xf]
      %v255 = vld [vmem:[%s165 + $0x18c] sm:$0xf]
      %v256 = vld [vmem:[%s165 + $0x190] sm:$0xf]
      %v257 = vld [vmem:[%s165 + $0x198] sm:$0xf]
      %v258 = vld [vmem:[%s165 + $0x19c] sm:$0xf]
      %v259 = vld [vmem:[%s165 + $0x1a0] sm:$0x1]
      %v260 = vld [vmem:[%s165 + $0x1a4] sm:$0xf]
      %v261 = vld [vmem:[%s165 + $0x1a8] sm:$0xf]
      %v262 = vld [vmem:[%s165 + $0x1ac] sm:$0x1]
      %v263 = vld [vmem:[%s165 + $0x1b0] sm:$0xf]
      %v264 = vld [vmem:[%s165 + $0x1b4] sm:$0xf]
      %v265 = vld [vmem:[%s165 + $0x1b8] sm:$0x1]
      %v266 = vld [vmem:[%s165 + $0x1bc] sm:$0xf]
      %v267 = vld [vmem:[%s165 + $0x1c0] sm:$0xf]
      %v268 = vld [vmem:[%s165 + $0x1c4] sm:$0x1]
      %v269 = vld [vmem:[%s165 + $0x1c8] sm:$0xf]
      %v270 = vld [vmem:[%s165 + $0x1cc] sm:$0xf]
      %v271 = vld [vmem:[%s165 + $0x1d0] sm:$0x1]
      %v272 = vld [vmem:[%s165 + $0x1d4] sm:$0xf]
      %v273 = vld [vmem:[%s165 + $0x1d8] sm:$0xf]
      %v274 = vld [vmem:[%s165 + $0x1dc] sm:$0x1]
      %v275 = vld [vmem:[%s165 + $0x1e0] sm:$0xf]
      %v276 = vld [vmem:[%s165 + $0x1e4] sm:$0xf]
      %v277 = vld [vmem:[%s165 + $0x1e8] sm:$0x1]
      %v278 = vld [vmem:[%s165 + $0x1ec] sm:$0xf]
      %v279 = vld [vmem:[%s165 + $0x1f0] sm:$0xf]
      %v280 = vld [vmem:[%s165 + $0x1f4] sm:$0x1]
      %v281 = vld [vmem:[%s165 + $0x1f8] sm:$0xf]
      %v282 = vld [vmem:[%s165 + $0x1fc] sm:$0xf]
      %v283 = vld [vmem:[%s165 + $0x200] sm:$0x1]
      %v284 = vld [vmem:[%s165 + $0x204] sm:$0xf]
      %v285 = vld [vmem:[%s165 + $0x208] sm:$0xf]
      %v286 = vld [vmem:[%s165 + $0x20c] sm:$0x1]
      %v287 = vld [vmem:[%s165 + $0x210] sm:$0xf]
      %v288 = vld [vmem:[%s165 + $0x214] sm:$0xf]
      %v289 = vld [vmem:[%s165 + $0x218] sm:$0x1]
      %v290 = vld [vmem:[%s165 + $0x21c] sm:$0xf]
      %v291 = vld [vmem:[%s165 + $0x220] sm:$0xf]
      %v292 = vld [vmem:[%s165 + $0x224] sm:$0x1]
      %v293 = vld [vmem:[%s165 + $0x228] sm:$0xf]
      %v294 = vld [vmem:[%s165 + $0x22c] sm:$0xf]
      %v295 = vld [vmem:[%s165 + $0x230] sm:$0x1]
      %v296 = vld [vmem:[%s165 + $0x234] sm:$0xf]
      %v297 = vld [vmem:[%s165 + $0x238] sm:$0xf]
      %v298 = vld [vmem:[%s165 + $0x23c] sm:$0x1]
      %v299 = vld [vmem:[%s165 + $0x240] sm:$0xf]
      %v300 = vld [vmem:[%s165 + $0x244] sm:$0xf]
      %v301 = vld [vmem:[%s165 + $0x248] sm:$0x1]
      %v302 = vld [vmem:[%s165 + $0x24c] sm:$0xf]
      %v303 = vld [vmem:[%s165 + $0x250] sm:$0xf]
      %v304 = vld [vmem:[%s165 + $0x254] sm:$0x1]
      %v305 = vld [vmem:[%s165 + $0x264] sm:$0xf]
      %v306 = vld [vmem:[%s165 + $0x268] sm:$0xf]
      %v307 = vld [vmem:[%s165 + $0x270] sm:$0xf]
      %v308 = vld [vmem:[%s165 + $0x274] sm:$0xf]
      %v309 = vld [vmem:[%s165 + $0x27c] sm:$0xf]
      %v310 = vld [vmem:[%s165 + $0x280] sm:$0xf]
      %v311 = vld [vmem:[%s165 + $0x288] sm:$0xf]
      %v312 = vld [vmem:[%s165 + $0x28c] sm:$0xf]
      %v313 = vld [vmem:[%s165 + $0x294] sm:$0xf]
      %v314 = vld [vmem:[%s165 + $0x298] sm:$0xf]
      %v315 = vld [vmem:[%s165 + $0x2a0] sm:$0xf]
      %v316 = vld [vmem:[%s165 + $0x2a4] sm:$0xf]
      %v317 = vld [vmem:[%s165 + $0x2ac] sm:$0xf]
      %v318 = vld [vmem:[%s165 + $0x2b0] sm:$0xf]
      %v319 = vld [vmem:[%s165 + $0x2b8] sm:$0xf]
      %v320 = vld [vmem:[%s165 + $0x2bc] sm:$0xf]
      %v321 = vld [vmem:[%s165 + $0x2c4] sm:$0xf]
      %v322 = vld [vmem:[%s165 + $0x2c8] sm:$0xf]
      %v323 = vld [vmem:[%s165 + $0x2d0] sm:$0xf]
      %v324 = vld [vmem:[%s165 + $0x2d4] sm:$0xf]
      %v325 = vld [vmem:[%s165 + $0x2dc] sm:$0xf]
      %v326 = vld [vmem:[%s165 + $0x2e0] sm:$0xf]
      %v327 = vld [vmem:[%s165 + $0x2e8] sm:$0xf]
      %v328 = vld [vmem:[%s165 + $0x2ec] sm:$0xf]
      %v329 = vld [vmem:[%s165 + $0x2f4] sm:$0xf]
      %v330 = vld [vmem:[%s165 + $0x2f8] sm:$0xf]
      %v331 = vld [vmem:[%s165 + $0x300] sm:$0xf]
      %v332 = vld [vmem:[%s165 + $0x304] sm:$0xf]
      %v333 = vld [vmem:[%s165 + $0x30c] sm:$0xf]
      %v334 = vld [vmem:[%s165 + $0x310] sm:$0xf]
      %v335 = vld [vmem:[%s165 + $0x318] sm:$0xf]
      %v336 = vld [vmem:[%s165 + $0x31c] sm:$0xf]
      %v337 = vld [vmem:[%s1] sm:$0x3]
      %s338 = scalar_lea.vmem %s1, 2
      %v339 = vld [vmem:[%s338] sm:$0x3]
      %v372 = vunpack.c.l.b16 %v223
      %v373 = vunpack.c.l.b16 %v224
      %v374 = vunpack.c.l.b16 %v225
      %v375 = vunpack.c.l.b16 %v226
      %v376 = vunpack.c.l.b16 %v227
      %v377 = vunpack.c.l.b16 %v228
      %v378 = vunpack.c.l.b16 %v229
      %v379 = vunpack.c.l.b16 %v230
      %v380 = vunpack.c.l.b16 %v231
      %v381 = vunpack.c.l.b16 %v232
      %v382 = vunpack.c.l.b16 %v233
      %v383 = vunpack.c.l.b16 %v234
      %v384 = vunpack.c.l.b16 %v235
      %v385 = vunpack.c.l.b16 %v236
      %v386 = vunpack.c.l.b16 %v237
      %v387 = vunpack.c.l.b16 %v238
      %v388 = vunpack.c.l.b16 %v239
      %v389 = vunpack.c.l.b16 %v240
      %v390 = vunpack.c.l.b16 %v241
      %v391 = vunpack.c.l.b16 %v242
      %v392 = vunpack.c.l.b16 %v243
      %v393 = vunpack.c.l.b16 %v244
      %v394 = vunpack.c.l.b16 %v245
      %v395 = vunpack.c.l.b16 %v246
      %v396 = vunpack.c.l.b16 %v247
      %v397 = vunpack.c.l.b16 %v248
      %v398 = vunpack.c.l.b16 %v249
      %v399 = vunpack.c.l.b16 %v250
      %v400 = vunpack.c.l.b16 %v251
      %v401 = vunpack.c.l.b16 %v252
      %v402 = vunpack.c.l.b16 %v253
      %v403 = vunpack.c.l.b16 %v254
      %v404 = vpack.c.b16 %v373, %v372
      %v405 = vpack.c.b16 %v375, %v374
      %v406 = vpack.c.b16 %v377, %v376
      %v407 = vpack.c.b16 %v379, %v378
      %v408 = vpack.c.b16 %v381, %v380
      %v409 = vpack.c.b16 %v383, %v382
      %v410 = vpack.c.b16 %v385, %v384
      %v411 = vpack.c.b16 %v387, %v386
      %v412 = vpack.c.b16 %v389, %v388
      %v413 = vpack.c.b16 %v391, %v390
      %v414 = vpack.c.b16 %v393, %v392
      %v415 = vpack.c.b16 %v395, %v394
      %v416 = vpack.c.b16 %v397, %v396
      %v417 = vpack.c.b16 %v399, %v398
      %v418 = vpack.c.b16 %v401, %v400
      %v419 = vpack.c.b16 %v403, %v402
      %vm420 = vcmask 23552
      %v422 = vsel %vm420, %v404, 0
      %v425 = vsel %vm420, %v405, 0
      %v428 = vsel %vm420, %v406, 0
      %v431 = vsel %vm420, %v407, 0
      %v434 = vsel %vm420, %v408, 0
      %v437 = vsel %vm420, %v409, 0
      %v440 = vsel %vm420, %v410, 0
      %v443 = vsel %vm420, %v411, 0
      %v446 = vsel %vm420, %v412, 0
      %v449 = vsel %vm420, %v413, 0
      %v452 = vsel %vm420, %v414, 0
      %v455 = vsel %vm420, %v415, 0
      %v458 = vsel %vm420, %v416, 0
      %v461 = vsel %vm420, %v417, 0
      %v464 = vsel %vm420, %v418, 0
      %v467 = vsel %vm420, %v419, 0
      %vm469 = vcmask 1040384
      %vm470 = vcmask 1041408
      %v471 = vsel %vm469, 4294967295, 65535
      %v472 = vsel %vm470, %v471, 0
      %v474 = vand.u32 %v339, %v472
      %476 = vmatpush.bf16.msra.mxu0 0
      %477 = vmatpush.bf16.msra.mxu0 0
      %478 = vmatpush.bf16.msra.mxu0 0
      %479 = vmatpush.bf16.msra.mxu0 0
      %480 = vmatpush.bf16.msra.mxu0 0
      %481 = vmatpush.bf16.msra.mxu0 0
      %482 = vmatpush.bf16.msra.mxu0 0
      %483 = vmatpush.bf16.msra.mxu0 %v474
      %484 = vmatmul.bf16.gmra.mxu0 %v422
      %v485 = vpop.f32.mrf.mxu0
      %v486 = vadd.f32 0.0, %v485
      %v487 = vpop.f32.mrf.mxu0
      %v488 = vadd.f32 0.0, %v487
      %489 = vmatmul.bf16.gmra.mxu0 %v425
      %v490 = vpop.f32.mrf.mxu0
      %v491 = vadd.f32 0.0, %v490
      %v492 = vpop.f32.mrf.mxu0
      %v493 = vadd.f32 0.0, %v492
      %494 = vmatmul.bf16.gmra.mxu0 %v428
      %v495 = vpop.f32.mrf.mxu0
      %v496 = vadd.f32 0.0, %v495
      %v497 = vpop.f32.mrf.mxu0
      %v498 = vadd.f32 0.0, %v497
      %499 = vmatmul.bf16.gmra.mxu0 %v431
      %v500 = vpop.f32.mrf.mxu0
      %v501 = vadd.f32 0.0, %v500
      %v502 = vpop.f32.mrf.mxu0
      %v503 = vadd.f32 0.0, %v502
      %504 = vmatmul.bf16.gmra.mxu0 %v434
      %v505 = vpop.f32.mrf.mxu0
      %v506 = vadd.f32 0.0, %v505
      %v507 = vpop.f32.mrf.mxu0
      %v508 = vadd.f32 0.0, %v507
      %509 = vmatmul.bf16.gmra.mxu0 %v437
      %v510 = vpop.f32.mrf.mxu0
      %v511 = vadd.f32 0.0, %v510
      %v512 = vpop.f32.mrf.mxu0
      %v513 = vadd.f32 0.0, %v512
      %514 = vmatmul.bf16.gmra.mxu0 %v440
      %v515 = vpop.f32.mrf.mxu0
      %v516 = vadd.f32 0.0, %v515
      %v517 = vpop.f32.mrf.mxu0
      %v518 = vadd.f32 0.0, %v517
      %519 = vmatmul.bf16.gmra.mxu0 %v443
      %v520 = vpop.f32.mrf.mxu0
      %v521 = vadd.f32 0.0, %v520
      %v522 = vpop.f32.mrf.mxu0
      %v523 = vadd.f32 0.0, %v522
      %524 = vmatmul.bf16.gmra.mxu0 %v446
      %v525 = vpop.f32.mrf.mxu0
      %v526 = vadd.f32 0.0, %v525
      %v527 = vpop.f32.mrf.mxu0
      %v528 = vadd.f32 0.0, %v527
      %529 = vmatmul.bf16.gmra.mxu0 %v449
      %v530 = vpop.f32.mrf.mxu0
      %v531 = vadd.f32 0.0, %v530
      %v532 = vpop.f32.mrf.mxu0
      %v533 = vadd.f32 0.0, %v532
      %534 = vmatmul.bf16.gmra.mxu0 %v452
      %v535 = vpop.f32.mrf.mxu0
      %v536 = vadd.f32 0.0, %v535
      %v537 = vpop.f32.mrf.mxu0
      %v538 = vadd.f32 0.0, %v537
      %539 = vmatmul.bf16.gmra.mxu0 %v455
      %v540 = vpop.f32.mrf.mxu0
      %v541 = vadd.f32 0.0, %v540
      %v542 = vpop.f32.mrf.mxu0
      %v543 = vadd.f32 0.0, %v542
      %544 = vmatmul.bf16.gmra.mxu0 %v458
      %v545 = vpop.f32.mrf.mxu0
      %v546 = vadd.f32 0.0, %v545
      %v547 = vpop.f32.mrf.mxu0
      %v548 = vadd.f32 0.0, %v547
      %549 = vmatmul.bf16.gmra.mxu0 %v461
      %v550 = vpop.f32.mrf.mxu0
      %v551 = vadd.f32 0.0, %v550
      %v552 = vpop.f32.mrf.mxu0
      %v553 = vadd.f32 0.0, %v552
      %554 = vmatmul.bf16.gmra.mxu0 %v464
      %v555 = vpop.f32.mrf.mxu0
      %v556 = vadd.f32 0.0, %v555
      %v557 = vpop.f32.mrf.mxu0
      %v558 = vadd.f32 0.0, %v557
      %559 = vmatmul.bf16.gmra.mxu0 %v467
      %v560 = vpop.f32.mrf.mxu0
      %v561 = vadd.f32 0.0, %v560
      %v562 = vpop.f32.mrf.mxu0
      %v563 = vadd.f32 0.0, %v562
      %564 = vdwg.mxu0
      %v597 = vunpack.c.l.b16 %v172
      %v598 = vunpack.c.l.b16 %v173
      %v599 = vunpack.c.l.b16 %v175
      %v600 = vunpack.c.l.b16 %v176
      %v601 = vunpack.c.l.b16 %v178
      %v602 = vunpack.c.l.b16 %v179
      %v603 = vunpack.c.l.b16 %v181
      %v604 = vunpack.c.l.b16 %v182
      %v605 = vunpack.c.l.b16 %v184
      %v606 = vunpack.c.l.b16 %v185
      %v607 = vunpack.c.l.b16 %v187
      %v608 = vunpack.c.l.b16 %v188
      %v609 = vunpack.c.l.b16 %v190
      %v610 = vunpack.c.l.b16 %v191
      %v611 = vunpack.c.l.b16 %v193
      %v612 = vunpack.c.l.b16 %v194
      %v613 = vunpack.c.l.b16 %v196
      %v614 = vunpack.c.l.b16 %v197
      %v615 = vunpack.c.l.b16 %v199
      %v616 = vunpack.c.l.b16 %v200
      %v617 = vunpack.c.l.b16 %v202
      %v618 = vunpack.c.l.b16 %v203
      %v619 = vunpack.c.l.b16 %v205
      %v620 = vunpack.c.l.b16 %v206
      %v621 = vunpack.c.l.b16 %v208
      %v622 = vunpack.c.l.b16 %v209
      %v623 = vunpack.c.l.b16 %v211
      %v624 = vunpack.c.l.b16 %v212
      %v625 = vunpack.c.l.b16 %v214
      %v626 = vunpack.c.l.b16 %v215
      %v627 = vunpack.c.l.b16 %v217
      %v628 = vunpack.c.l.b16 %v218
      %v629 = vpack.c.b16 %v598, %v597
      %v630 = vpack.c.b16 %v600, %v599
      %v631 = vpack.c.b16 %v602, %v601
      %v632 = vpack.c.b16 %v604, %v603
      %v633 = vpack.c.b16 %v606, %v605
      %v634 = vpack.c.b16 %v608, %v607
      %v635 = vpack.c.b16 %v610, %v609
      %v636 = vpack.c.b16 %v612, %v611
      %v637 = vpack.c.b16 %v614, %v613
      %v638 = vpack.c.b16 %v616, %v615
      %v639 = vpack.c.b16 %v618, %v617
      %v640 = vpack.c.b16 %v620, %v619
      %v641 = vpack.c.b16 %v622, %v621
      %v642 = vpack.c.b16 %v624, %v623
      %v643 = vpack.c.b16 %v626, %v625
      %v644 = vpack.c.b16 %v628, %v627
      %v646 = vsel %vm420, %v629, 0
      %v649 = vsel %vm420, %v630, 0
      %v652 = vsel %vm420, %v631, 0
      %v655 = vsel %vm420, %v632, 0
      %v658 = vsel %vm420, %v633, 0
      %v661 = vsel %vm420, %v634, 0
      %v664 = vsel %vm420, %v635, 0
      %v667 = vsel %vm420, %v636, 0
      %v670 = vsel %vm420, %v637, 0
      %v673 = vsel %vm420, %v638, 0
      %v676 = vsel %vm420, %v639, 0
      %v679 = vsel %vm420, %v640, 0
      %v682 = vsel %vm420, %v641, 0
      %v685 = vsel %vm420, %v642, 0
      %v688 = vsel %vm420, %v643, 0
      %v691 = vsel %vm420, %v644, 0
      %v694 = vand.u32 %v337, %v472
      %696 = vmatpush.bf16.msra.mxu0 0
      %697 = vmatpush.bf16.msra.mxu0 0
      %698 = vmatpush.bf16.msra.mxu0 0
      %699 = vmatpush.bf16.msra.mxu0 0
      %700 = vmatpush.bf16.msra.mxu0 0
      %701 = vmatpush.bf16.msra.mxu0 0
      %702 = vmatpush.bf16.msra.mxu0 0
      %703 = vmatpush.bf16.msra.mxu0 %v694
      %704 = vmatmul.bf16.gmra.mxu0 %v646
      %v705 = vpop.f32.mrf.mxu0
      %v706 = vadd.f32 %v486, %v705
      %v707 = vpop.f32.mrf.mxu0
      %v708 = vadd.f32 %v488, %v707
      %709 = vmatmul.bf16.gmra.mxu0 %v649
      %v710 = vpop.f32.mrf.mxu0
      %v711 = vadd.f32 %v491, %v710
      %v712 = vpop.f32.mrf.mxu0
      %v713 = vadd.f32 %v493, %v712
      %714 = vmatmul.bf16.gmra.mxu0 %v652
      %v715 = vpop.f32.mrf.mxu0
      %v716 = vadd.f32 %v496, %v715
      %v717 = vpop.f32.mrf.mxu0
      %v718 = vadd.f32 %v498, %v717
      %719 = vmatmul.bf16.gmra.mxu0 %v655
      %v720 = vpop.f32.mrf.mxu0
      %v721 = vadd.f32 %v501, %v720
      %v722 = vpop.f32.mrf.mxu0
      %v723 = vadd.f32 %v503, %v722
      %724 = vmatmul.bf16.gmra.mxu0 %v658
      %v725 = vpop.f32.mrf.mxu0
      %v726 = vadd.f32 %v506, %v725
      %v727 = vpop.f32.mrf.mxu0
      %v728 = vadd.f32 %v508, %v727
      %729 = vmatmul.bf16.gmra.mxu0 %v661
      %v730 = vpop.f32.mrf.mxu0
      %v731 = vadd.f32 %v511, %v730
      %v732 = vpop.f32.mrf.mxu0
      %v733 = vadd.f32 %v513, %v732
      %734 = vmatmul.bf16.gmra.mxu0 %v664
      %v735 = vpop.f32.mrf.mxu0
      %v736 = vadd.f32 %v516, %v735
      %v737 = vpop.f32.mrf.mxu0
      %v738 = vadd.f32 %v518, %v737
      %739 = vmatmul.bf16.gmra.mxu0 %v667
      %v740 = vpop.f32.mrf.mxu0
      %v741 = vadd.f32 %v521, %v740
      %v742 = vpop.f32.mrf.mxu0
      %v743 = vadd.f32 %v523, %v742
      %744 = vmatmul.bf16.gmra.mxu0 %v670
      %v745 = vpop.f32.mrf.mxu0
      %v746 = vadd.f32 %v526, %v745
      %v747 = vpop.f32.mrf.mxu0
      %v748 = vadd.f32 %v528, %v747
      %749 = vmatmul.bf16.gmra.mxu0 %v673
      %v750 = vpop.f32.mrf.mxu0
      %v751 = vadd.f32 %v531, %v750
      %v752 = vpop.f32.mrf.mxu0
      %v753 = vadd.f32 %v533, %v752
      %754 = vmatmul.bf16.gmra.mxu0 %v676
      %v755 = vpop.f32.mrf.mxu0
      %v756 = vadd.f32 %v536, %v755
      %v757 = vpop.f32.mrf.mxu0
      %v758 = vadd.f32 %v538, %v757
      %759 = vmatmul.bf16.gmra.mxu0 %v679
      %v760 = vpop.f32.mrf.mxu0
      %v761 = vadd.f32 %v541, %v760
      %v762 = vpop.f32.mrf.mxu0
      %v763 = vadd.f32 %v543, %v762
      %764 = vmatmul.bf16.gmra.mxu0 %v682
      %v765 = vpop.f32.mrf.mxu0
      %v766 = vadd.f32 %v546, %v765
      %v767 = vpop.f32.mrf.mxu0
      %v768 = vadd.f32 %v548, %v767
      %769 = vmatmul.bf16.gmra.mxu0 %v685
      %v770 = vpop.f32.mrf.mxu0
      %v771 = vadd.f32 %v551, %v770
      %v772 = vpop.f32.mrf.mxu0
      %v773 = vadd.f32 %v553, %v772
      %774 = vmatmul.bf16.gmra.mxu0 %v688
      %v775 = vpop.f32.mrf.mxu0
      %v776 = vadd.f32 %v556, %v775
      %v777 = vpop.f32.mrf.mxu0
      %v778 = vadd.f32 %v558, %v777
      %779 = vmatmul.bf16.gmra.mxu0 %v691
      %v780 = vpop.f32.mrf.mxu0
      %v781 = vadd.f32 %v561, %v780
      %v782 = vpop.f32.mrf.mxu0
      %v783 = vadd.f32 %v563, %v782
      %784 = vdwg.mxu0
      %vm785 = vsmask.f32 3328
      %vm786 = vsmask.f32 7440
      %vm787 = vmor %vm785, %vm786
      %v789 = vshrl.u32 %v172, 16
      %v791 = vrot.slane %v789, 4
      %v792 = vshll.u32 %v172, 16
      %v794 = vrot.slane %v792, 5
      %v795 = vor.u32 %v791, %v794
      %v796 = vrot.slane %v795, 4
      %v798 = vshll.u32 %v173, 16
      %v800 = vrot.slane %v798, 5
      %v801 = vsel %vm787, %v796, %v800
      %v802 = vshrl.u32 %v173, 16
      %v804 = vrot.slane %v802, 4
      %v805 = vor.u32 %v804, %v800
      %v806 = vrot.slane %v805, 4
      %v808 = vshll.u32 %v174, 16
      %v810 = vrot.slane %v808, 5
      %v811 = vsel %vm787, %v806, %v810
      %v813 = vshrl.u32 %v175, 16
      %v815 = vrot.slane %v813, 4
      %v816 = vshll.u32 %v175, 16
      %v818 = vrot.slane %v816, 5
      %v819 = vor.u32 %v815, %v818
      %v820 = vrot.slane %v819, 4
      %v822 = vshll.u32 %v176, 16
      %v824 = vrot.slane %v822, 5
      %v825 = vsel %vm787, %v820, %v824
      %v826 = vshrl.u32 %v176, 16
      %v828 = vrot.slane %v826, 4
      %v829 = vor.u32 %v828, %v824
      %v830 = vrot.slane %v829, 4
      %v832 = vshll.u32 %v177, 16
      %v834 = vrot.slane %v832, 5
      %v835 = vsel %vm787, %v830, %v834
      %v837 = vshrl.u32 %v178, 16
      %v839 = vrot.slane %v837, 4
      %v840 = vshll.u32 %v178, 16
      %v842 = vrot.slane %v840, 5
      %v843 = vor.u32 %v839, %v842
      %v844 = vrot.slane %v843, 4
      %v846 = vshll.u32 %v179, 16
      %v848 = vrot.slane %v846, 5
      %v849 = vsel %vm787, %v844, %v848
      %v850 = vshrl.u32 %v179, 16
      %v852 = vrot.slane %v850, 4
      %v853 = vor.u32 %v852, %v848
      %v854 = vrot.slane %v853, 4
      %v856 = vshll.u32 %v180, 16
      %v858 = vrot.slane %v856, 5
      %v859 = vsel %vm787, %v854, %v858
      %v861 = vshrl.u32 %v181, 16
      %v863 = vrot.slane %v861, 4
      %v864 = vshll.u32 %v181, 16
      %v866 = vrot.slane %v864, 5
      %v867 = vor.u32 %v863, %v866
      %v868 = vrot.slane %v867, 4
      %v870 = vshll.u32 %v182, 16
      %v872 = vrot.slane %v870, 5
      %v873 = vsel %vm787, %v868, %v872
      %v874 = vshrl.u32 %v182, 16
      %v876 = vrot.slane %v874, 4
      %v877 = vor.u32 %v876, %v872
      %v878 = vrot.slane %v877, 4
      %v880 = vshll.u32 %v183, 16
      %v882 = vrot.slane %v880, 5
      %v883 = vsel %vm787, %v878, %v882
      %v885 = vshrl.u32 %v184, 16
      %v887 = vrot.slane %v885, 4
      %v888 = vshll.u32 %v184, 16
      %v890 = vrot.slane %v888, 5
      %v891 = vor.u32 %v887, %v890
      %v892 = vrot.slane %v891, 4
      %v894 = vshll.u32 %v185, 16
      %v896 = vrot.slane %v894, 5
      %v897 = vsel %vm787, %v892, %v896
      %v898 = vshrl.u32 %v185, 16
      %v900 = vrot.slane %v898, 4
      %v901 = vor.u32 %v900, %v896
      %v902 = vrot.slane %v901, 4
      %v904 = vshll.u32 %v186, 16
      %v906 = vrot.slane %v904, 5
      %v907 = vsel %vm787, %v902, %v906
      %v909 = vshrl.u32 %v187, 16
      %v911 = vrot.slane %v909, 4
      %v912 = vshll.u32 %v187, 16
      %v914 = vrot.slane %v912, 5
      %v915 = vor.u32 %v911, %v914
      %v916 = vrot.slane %v915, 4
      %v918 = vshll.u32 %v188, 16
      %v920 = vrot.slane %v918, 5
      %v921 = vsel %vm787, %v916, %v920
      %v922 = vshrl.u32 %v188, 16
      %v924 = vrot.slane %v922, 4
      %v925 = vor.u32 %v924, %v920
      %v926 = vrot.slane %v925, 4
      %v928 = vshll.u32 %v189, 16
      %v930 = vrot.slane %v928, 5
      %v931 = vsel %vm787, %v926, %v930
      %v933 = vshrl.u32 %v190, 16
      %v935 = vrot.slane %v933, 4
      %v936 = vshll.u32 %v190, 16
      %v938 = vrot.slane %v936, 5
      %v939 = vor.u32 %v935, %v938
      %v940 = vrot.slane %v939, 4
      %v942 = vshll.u32 %v191, 16
      %v944 = vrot.slane %v942, 5
      %v945 = vsel %vm787, %v940, %v944
      %v946 = vshrl.u32 %v191, 16
      %v948 = vrot.slane %v946, 4
      %v949 = vor.u32 %v948, %v944
      %v950 = vrot.slane %v949, 4
      %v952 = vshll.u32 %v192, 16
      %v954 = vrot.slane %v952, 5
      %v955 = vsel %vm787, %v950, %v954
      %v957 = vshrl.u32 %v193, 16
      %v959 = vrot.slane %v957, 4
      %v960 = vshll.u32 %v193, 16
      %v962 = vrot.slane %v960, 5
      %v963 = vor.u32 %v959, %v962
      %v964 = vrot.slane %v963, 4
      %v966 = vshll.u32 %v194, 16
      %v968 = vrot.slane %v966, 5
      %v969 = vsel %vm787, %v964, %v968
      %v970 = vshrl.u32 %v194, 16
      %v972 = vrot.slane %v970, 4
      %v973 = vor.u32 %v972, %v968
      %v974 = vrot.slane %v973, 4
      %v976 = vshll.u32 %v195, 16
      %v978 = vrot.slane %v976, 5
      %v979 = vsel %vm787, %v974, %v978
      %v981 = vshrl.u32 %v196, 16
      %v983 = vrot.slane %v981, 4
      %v984 = vshll.u32 %v196, 16
      %v986 = vrot.slane %v984, 5
      %v987 = vor.u32 %v983, %v986
      %v988 = vrot.slane %v987, 4
      %v990 = vshll.u32 %v197, 16
      %v992 = vrot.slane %v990, 5
      %v993 = vsel %vm787, %v988, %v992
      %v994 = vshrl.u32 %v197, 16
      %v996 = vrot.slane %v994, 4
      %v997 = vor.u32 %v996, %v992
      %v998 = vrot.slane %v997, 4
      %v1000 = vshll.u32 %v198, 16
      %v1002 = vrot.slane %v1000, 5
      %v1003 = vsel %vm787, %v998, %v1002
      %v1005 = vshrl.u32 %v199, 16
      %v1007 = vrot.slane %v1005, 4
      %v1008 = vshll.u32 %v199, 16
      %v1010 = vrot.slane %v1008, 5
      %v1011 = vor.u32 %v1007, %v1010
      %v1012 = vrot.slane %v1011, 4
      %v1014 = vshll.u32 %v200, 16
      %v1016 = vrot.slane %v1014, 5
      %v1017 = vsel %vm787, %v1012, %v1016
      %v1018 = vshrl.u32 %v200, 16
      %v1020 = vrot.slane %v1018, 4
      %v1021 = vor.u32 %v1020, %v1016
      %v1022 = vrot.slane %v1021, 4
      %v1024 = vshll.u32 %v201, 16
      %v1026 = vrot.slane %v1024, 5
      %v1027 = vsel %vm787, %v1022, %v1026
      %v1029 = vshrl.u32 %v202, 16
      %v1031 = vrot.slane %v1029, 4
      %v1032 = vshll.u32 %v202, 16
      %v1034 = vrot.slane %v1032, 5
      %v1035 = vor.u32 %v1031, %v1034
      %v1036 = vrot.slane %v1035, 4
      %v1038 = vshll.u32 %v203, 16
      %v1040 = vrot.slane %v1038, 5
      %v1041 = vsel %vm787, %v1036, %v1040
      %v1042 = vshrl.u32 %v203, 16
      %v1044 = vrot.slane %v1042, 4
      %v1045 = vor.u32 %v1044, %v1040
      %v1046 = vrot.slane %v1045, 4
      %v1048 = vshll.u32 %v204, 16
      %v1050 = vrot.slane %v1048, 5
      %v1051 = vsel %vm787, %v1046, %v1050
      %v1053 = vshrl.u32 %v205, 16
      %v1055 = vrot.slane %v1053, 4
      %v1056 = vshll.u32 %v205, 16
      %v1058 = vrot.slane %v1056, 5
      %v1059 = vor.u32 %v1055, %v1058
      %v1060 = vrot.slane %v1059, 4
      %v1062 = vshll.u32 %v206, 16
      %v1064 = vrot.slane %v1062, 5
      %v1065 = vsel %vm787, %v1060, %v1064
      %v1066 = vshrl.u32 %v206, 16
      %v1068 = vrot.slane %v1066, 4
      %v1069 = vor.u32 %v1068, %v1064
      %v1070 = vrot.slane %v1069, 4
      %v1072 = vshll.u32 %v207, 16
      %v1074 = vrot.slane %v1072, 5
      %v1075 = vsel %vm787, %v1070, %v1074
      %v1077 = vshrl.u32 %v208, 16
      %v1079 = vrot.slane %v1077, 4
      %v1080 = vshll.u32 %v208, 16
      %v1082 = vrot.slane %v1080, 5
      %v1083 = vor.u32 %v1079, %v1082
      %v1084 = vrot.slane %v1083, 4
      %v1086 = vshll.u32 %v209, 16
      %v1088 = vrot.slane %v1086, 5
      %v1089 = vsel %vm787, %v1084, %v1088
      %v1090 = vshrl.u32 %v209, 16
      %v1092 = vrot.slane %v1090, 4
      %v1093 = vor.u32 %v1092, %v1088
      %v1094 = vrot.slane %v1093, 4
      %v1096 = vshll.u32 %v210, 16
      %v1098 = vrot.slane %v1096, 5
      %v1099 = vsel %vm787, %v1094, %v1098
      %v1101 = vshrl.u32 %v211, 16
      %v1103 = vrot.slane %v1101, 4
      %v1104 = vshll.u32 %v211, 16
      %v1106 = vrot.slane %v1104, 5
      %v1107 = vor.u32 %v1103, %v1106
      %v1108 = vrot.slane %v1107, 4
      %v1110 = vshll.u32 %v212, 16
      %v1112 = vrot.slane %v1110, 5
      %v1113 = vsel %vm787, %v1108, %v1112
      %v1114 = vshrl.u32 %v212, 16
      %v1116 = vrot.slane %v1114, 4
      %v1117 = vor.u32 %v1116, %v1112
      %v1118 = vrot.slane %v1117, 4
      %v1120 = vshll.u32 %v213, 16
      %v1122 = vrot.slane %v1120, 5
      %v1123 = vsel %vm787, %v1118, %v1122
      %v1125 = vshrl.u32 %v214, 16
      %v1127 = vrot.slane %v1125, 4
      %v1128 = vshll.u32 %v214, 16
      %v1130 = vrot.slane %v1128, 5
      %v1131 = vor.u32 %v1127, %v1130
      %v1132 = vrot.slane %v1131, 4
      %v1134 = vshll.u32 %v215, 16
      %v1136 = vrot.slane %v1134, 5
      %v1137 = vsel %vm787, %v1132, %v1136
      %v1138 = vshrl.u32 %v215, 16
      %v1140 = vrot.slane %v1138, 4
      %v1141 = vor.u32 %v1140, %v1136
      %v1142 = vrot.slane %v1141, 4
      %v1144 = vshll.u32 %v216, 16
      %v1146 = vrot.slane %v1144, 5
      %v1147 = vsel %vm787, %v1142, %v1146
      %v1149 = vshrl.u32 %v217, 16
      %v1151 = vrot.slane %v1149, 4
      %v1152 = vshll.u32 %v217, 16
      %v1154 = vrot.slane %v1152, 5
      %v1155 = vor.u32 %v1151, %v1154
      %v1156 = vrot.slane %v1155, 4
      %v1158 = vshll.u32 %v218, 16
      %v1160 = vrot.slane %v1158, 5
      %v1161 = vsel %vm787, %v1156, %v1160
      %v1162 = vshrl.u32 %v218, 16
      %v1164 = vrot.slane %v1162, 4
      %v1165 = vor.u32 %v1164, %v1160
      %v1166 = vrot.slane %v1165, 4
      %v1168 = vshll.u32 %v219, 16
      %v1170 = vrot.slane %v1168, 5
      %v1171 = vsel %vm787, %v1166, %v1170
      %s1172 = scalar_lea.vmem %s1, 4
      %v1173 = vld [vmem:[%s1172] sm:$0x3]
      %v1174 = vunpack.c.l.b16 %v801
      %v1175 = vunpack.c.l.b16 %v811
      %v1176 = vunpack.c.l.b16 %v825
      %v1177 = vunpack.c.l.b16 %v835
      %v1178 = vunpack.c.l.b16 %v849
      %v1179 = vunpack.c.l.b16 %v859
      %v1180 = vunpack.c.l.b16 %v873
      %v1181 = vunpack.c.l.b16 %v883
      %v1182 = vunpack.c.l.b16 %v897
      %v1183 = vunpack.c.l.b16 %v907
      %v1184 = vunpack.c.l.b16 %v921
      %v1185 = vunpack.c.l.b16 %v931
      %v1186 = vunpack.c.l.b16 %v945
      %v1187 = vunpack.c.l.b16 %v955
      %v1188 = vunpack.c.l.b16 %v969
      %v1189 = vunpack.c.l.b16 %v979
      %v1190 = vunpack.c.l.b16 %v993
      %v1191 = vunpack.c.l.b16 %v1003
      %v1192 = vunpack.c.l.b16 %v1017
      %v1193 = vunpack.c.l.b16 %v1027
      %v1194 = vunpack.c.l.b16 %v1041
      %v1195 = vunpack.c.l.b16 %v1051
      %v1196 = vunpack.c.l.b16 %v1065
      %v1197 = vunpack.c.l.b16 %v1075
      %v1198 = vunpack.c.l.b16 %v1089
      %v1199 = vunpack.c.l.b16 %v1099
      %v1200 = vunpack.c.l.b16 %v1113
      %v1201 = vunpack.c.l.b16 %v1123
      %v1202 = vunpack.c.l.b16 %v1137
      %v1203 = vunpack.c.l.b16 %v1147
      %v1204 = vunpack.c.l.b16 %v1161
      %v1205 = vunpack.c.l.b16 %v1171
      %v1206 = vpack.c.b16 %v1175, %v1174
      %v1207 = vpack.c.b16 %v1177, %v1176
      %v1208 = vpack.c.b16 %v1179, %v1178
      %v1209 = vpack.c.b16 %v1181, %v1180
      %v1210 = vpack.c.b16 %v1183, %v1182
      %v1211 = vpack.c.b16 %v1185, %v1184
      %v1212 = vpack.c.b16 %v1187, %v1186
      %v1213 = vpack.c.b16 %v1189, %v1188
      %v1214 = vpack.c.b16 %v1191, %v1190
      %v1215 = vpack.c.b16 %v1193, %v1192
      %v1216 = vpack.c.b16 %v1195, %v1194
      %v1217 = vpack.c.b16 %v1197, %v1196
      %v1218 = vpack.c.b16 %v1199, %v1198
      %v1219 = vpack.c.b16 %v1201, %v1200
      %v1220 = vpack.c.b16 %v1203, %v1202
      %v1221 = vpack.c.b16 %v1205, %v1204
      %v1223 = vsel %vm420, %v1206, 0
      %v1226 = vsel %vm420, %v1207, 0
      %v1229 = vsel %vm420, %v1208, 0
      %v1232 = vsel %vm420, %v1209, 0
      %v1235 = vsel %vm420, %v1210, 0
      %v1238 = vsel %vm420, %v1211, 0
      %v1241 = vsel %vm420, %v1212, 0
      %v1244 = vsel %vm420, %v1213, 0
      %v1247 = vsel %vm420, %v1214, 0
      %v1250 = vsel %vm420, %v1215, 0
      %v1253 = vsel %vm420, %v1216, 0
      %v1256 = vsel %vm420, %v1217, 0
      %v1259 = vsel %vm420, %v1218, 0
      %v1262 = vsel %vm420, %v1219, 0
      %v1265 = vsel %vm420, %v1220, 0
      %v1268 = vsel %vm420, %v1221, 0
      %v1271 = vand.u32 %v1173, %v472
      %1273 = vmatpush.bf16.msra.mxu0 0
      %1274 = vmatpush.bf16.msra.mxu0 0
      %1275 = vmatpush.bf16.msra.mxu0 0
      %1276 = vmatpush.bf16.msra.mxu0 0
      %1277 = vmatpush.bf16.msra.mxu0 0
      %1278 = vmatpush.bf16.msra.mxu0 0
      %1279 = vmatpush.bf16.msra.mxu0 0
      %1280 = vmatpush.bf16.msra.mxu0 %v1271
      %1281 = vmatmul.bf16.gmra.mxu0 %v1223
      %v1282 = vpop.f32.mrf.mxu0
      %v1283 = vadd.f32 0.0, %v1282
      %v1284 = vpop.f32.mrf.mxu0
      %v1285 = vadd.f32 0.0, %v1284
      %1286 = vmatmul.bf16.gmra.mxu0 %v1226
      %v1287 = vpop.f32.mrf.mxu0
      %v1288 = vadd.f32 0.0, %v1287
      %v1289 = vpop.f32.mrf.mxu0
      %v1290 = vadd.f32 0.0, %v1289
      %1291 = vmatmul.bf16.gmra.mxu0 %v1229
      %v1292 = vpop.f32.mrf.mxu0
      %v1293 = vadd.f32 0.0, %v1292
      %v1294 = vpop.f32.mrf.mxu0
      %v1295 = vadd.f32 0.0, %v1294
      %1296 = vmatmul.bf16.gmra.mxu0 %v1232
      %v1297 = vpop.f32.mrf.mxu0
      %v1298 = vadd.f32 0.0, %v1297
      %v1299 = vpop.f32.mrf.mxu0
      %v1300 = vadd.f32 0.0, %v1299
      %1301 = vmatmul.bf16.gmra.mxu0 %v1235
      %v1302 = vpop.f32.mrf.mxu0
      %v1303 = vadd.f32 0.0, %v1302
      %v1304 = vpop.f32.mrf.mxu0
      %v1305 = vadd.f32 0.0, %v1304
      %1306 = vmatmul.bf16.gmra.mxu0 %v1238
      %v1307 = vpop.f32.mrf.mxu0
      %v1308 = vadd.f32 0.0, %v1307
      %v1309 = vpop.f32.mrf.mxu0
      %v1310 = vadd.f32 0.0, %v1309
      %1311 = vmatmul.bf16.gmra.mxu0 %v1241
      %v1312 = vpop.f32.mrf.mxu0
      %v1313 = vadd.f32 0.0, %v1312
      %v1314 = vpop.f32.mrf.mxu0
      %v1315 = vadd.f32 0.0, %v1314
      %1316 = vmatmul.bf16.gmra.mxu0 %v1244
      %v1317 = vpop.f32.mrf.mxu0
      %v1318 = vadd.f32 0.0, %v1317
      %v1319 = vpop.f32.mrf.mxu0
      %v1320 = vadd.f32 0.0, %v1319
      %1321 = vmatmul.bf16.gmra.mxu0 %v1247
      %v1322 = vpop.f32.mrf.mxu0
      %v1323 = vadd.f32 0.0, %v1322
      %v1324 = vpop.f32.mrf.mxu0
      %v1325 = vadd.f32 0.0, %v1324
      %1326 = vmatmul.bf16.gmra.mxu0 %v1250
      %v1327 = vpop.f32.mrf.mxu0
      %v1328 = vadd.f32 0.0, %v1327
      %v1329 = vpop.f32.mrf.mxu0
      %v1330 = vadd.f32 0.0, %v1329
      %1331 = vmatmul.bf16.gmra.mxu0 %v1253
      %v1332 = vpop.f32.mrf.mxu0
      %v1333 = vadd.f32 0.0, %v1332
      %v1334 = vpop.f32.mrf.mxu0
      %v1335 = vadd.f32 0.0, %v1334
      %1336 = vmatmul.bf16.gmra.mxu0 %v1256
      %v1337 = vpop.f32.mrf.mxu0
      %v1338 = vadd.f32 0.0, %v1337
      %v1339 = vpop.f32.mrf.mxu0
      %v1340 = vadd.f32 0.0, %v1339
      %1341 = vmatmul.bf16.gmra.mxu0 %v1259
      %v1342 = vpop.f32.mrf.mxu0
      %v1343 = vadd.f32 0.0, %v1342
      %v1344 = vpop.f32.mrf.mxu0
      %v1345 = vadd.f32 0.0, %v1344
      %1346 = vmatmul.bf16.gmra.mxu0 %v1262
      %v1347 = vpop.f32.mrf.mxu0
      %v1348 = vadd.f32 0.0, %v1347
      %v1349 = vpop.f32.mrf.mxu0
      %v1350 = vadd.f32 0.0, %v1349
      %1351 = vmatmul.bf16.gmra.mxu0 %v1265
      %v1352 = vpop.f32.mrf.mxu0
      %v1353 = vadd.f32 0.0, %v1352
      %v1354 = vpop.f32.mrf.mxu0
      %v1355 = vadd.f32 0.0, %v1354
      %1356 = vmatmul.bf16.gmra.mxu0 %v1268
      %v1357 = vpop.f32.mrf.mxu0
      %v1358 = vadd.f32 0.0, %v1357
      %v1359 = vpop.f32.mrf.mxu0
      %v1360 = vadd.f32 0.0, %v1359
      %1361 = vdwg.mxu0
      %v1362 = vadd.f32 %v706, %v1283
      %v1363 = vadd.f32 %v708, %v1285
      %v1364 = vadd.f32 %v711, %v1288
      %v1365 = vadd.f32 %v713, %v1290
      %v1366 = vadd.f32 %v716, %v1293
      %v1367 = vadd.f32 %v718, %v1295
      %v1368 = vadd.f32 %v721, %v1298
      %v1369 = vadd.f32 %v723, %v1300
      %v1370 = vadd.f32 %v726, %v1303
      %v1371 = vadd.f32 %v728, %v1305
      %v1372 = vadd.f32 %v731, %v1308
      %v1373 = vadd.f32 %v733, %v1310
      %v1374 = vadd.f32 %v736, %v1313
      %v1375 = vadd.f32 %v738, %v1315
      %v1376 = vadd.f32 %v741, %v1318
      %v1377 = vadd.f32 %v743, %v1320
      %v1378 = vadd.f32 %v746, %v1323
      %v1379 = vadd.f32 %v748, %v1325
      %v1380 = vadd.f32 %v751, %v1328
      %v1381 = vadd.f32 %v753, %v1330
      %v1382 = vadd.f32 %v756, %v1333
      %v1383 = vadd.f32 %v758, %v1335
      %v1384 = vadd.f32 %v761, %v1338
      %v1385 = vadd.f32 %v763, %v1340
      %v1386 = vadd.f32 %v766, %v1343
      %v1387 = vadd.f32 %v768, %v1345
      %v1388 = vadd.f32 %v771, %v1348
      %v1389 = vadd.f32 %v773, %v1350
      %v1390 = vadd.f32 %v776, %v1353
      %v1391 = vadd.f32 %v778, %v1355
      %v1392 = vadd.f32 %v781, %v1358
      %v1393 = vadd.f32 %v783, %v1360
      %s1394 = scalar_lea.vmem %s1, 6
      %v1395 = vld [vmem:[%s1394] sm:$0x3]
      %v1428 = vunpack.c.l.b16 %v257
      %v1429 = vunpack.c.l.b16 %v258
      %v1430 = vunpack.c.l.b16 %v260
      %v1431 = vunpack.c.l.b16 %v261
      %v1432 = vunpack.c.l.b16 %v263
      %v1433 = vunpack.c.l.b16 %v264
      %v1434 = vunpack.c.l.b16 %v266
      %v1435 = vunpack.c.l.b16 %v267
      %v1436 = vunpack.c.l.b16 %v269
      %v1437 = vunpack.c.l.b16 %v270
      %v1438 = vunpack.c.l.b16 %v272
      %v1439 = vunpack.c.l.b16 %v273
      %v1440 = vunpack.c.l.b16 %v275
      %v1441 = vunpack.c.l.b16 %v276
      %v1442 = vunpack.c.l.b16 %v278
      %v1443 = vunpack.c.l.b16 %v279
      %v1444 = vunpack.c.l.b16 %v281
      %v1445 = vunpack.c.l.b16 %v282
      %v1446 = vunpack.c.l.b16 %v284
      %v1447 = vunpack.c.l.b16 %v285
      %v1448 = vunpack.c.l.b16 %v287
      %v1449 = vunpack.c.l.b16 %v288
      %v1450 = vunpack.c.l.b16 %v290
      %v1451 = vunpack.c.l.b16 %v291
      %v1452 = vunpack.c.l.b16 %v293
      %v1453 = vunpack.c.l.b16 %v294
      %v1454 = vunpack.c.l.b16 %v296
      %v1455 = vunpack.c.l.b16 %v297
      %v1456 = vunpack.c.l.b16 %v299
      %v1457 = vunpack.c.l.b16 %v300
      %v1458 = vunpack.c.l.b16 %v302
      %v1459 = vunpack.c.l.b16 %v303
      %v1460 = vpack.c.b16 %v1429, %v1428
      %v1461 = vpack.c.b16 %v1431, %v1430
      %v1462 = vpack.c.b16 %v1433, %v1432
      %v1463 = vpack.c.b16 %v1435, %v1434
      %v1464 = vpack.c.b16 %v1437, %v1436
      %v1465 = vpack.c.b16 %v1439, %v1438
      %v1466 = vpack.c.b16 %v1441, %v1440
      %v1467 = vpack.c.b16 %v1443, %v1442
      %v1468 = vpack.c.b16 %v1445, %v1444
      %v1469 = vpack.c.b16 %v1447, %v1446
      %v1470 = vpack.c.b16 %v1449, %v1448
      %v1471 = vpack.c.b16 %v1451, %v1450
      %v1472 = vpack.c.b16 %v1453, %v1452
      %v1473 = vpack.c.b16 %v1455, %v1454
      %v1474 = vpack.c.b16 %v1457, %v1456
      %v1475 = vpack.c.b16 %v1459, %v1458
      %v1477 = vsel %vm420, %v1460, 0
      %v1480 = vsel %vm420, %v1461, 0
      %v1483 = vsel %vm420, %v1462, 0
      %v1486 = vsel %vm420, %v1463, 0
      %v1489 = vsel %vm420, %v1464, 0
      %v1492 = vsel %vm420, %v1465, 0
      %v1495 = vsel %vm420, %v1466, 0
      %v1498 = vsel %vm420, %v1467, 0
      %v1501 = vsel %vm420, %v1468, 0
      %v1504 = vsel %vm420, %v1469, 0
      %v1507 = vsel %vm420, %v1470, 0
      %v1510 = vsel %vm420, %v1471, 0
      %v1513 = vsel %vm420, %v1472, 0
      %v1516 = vsel %vm420, %v1473, 0
      %v1519 = vsel %vm420, %v1474, 0
      %v1522 = vsel %vm420, %v1475, 0
      %v1525 = vand.u32 %v1395, %v472
      %1527 = vmatpush.bf16.msra.mxu0 0
      %1528 = vmatpush.bf16.msra.mxu0 0
      %1529 = vmatpush.bf16.msra.mxu0 0
      %1530 = vmatpush.bf16.msra.mxu0 0
      %1531 = vmatpush.bf16.msra.mxu0 0
      %1532 = vmatpush.bf16.msra.mxu0 0
      %1533 = vmatpush.bf16.msra.mxu0 0
      %1534 = vmatpush.bf16.msra.mxu0 %v1525
      %1535 = vmatmul.bf16.gmra.mxu0 %v1477
      %v1536 = vpop.f32.mrf.mxu0
      %v1537 = vadd.f32 0.0, %v1536
      %v1538 = vpop.f32.mrf.mxu0
      %v1539 = vadd.f32 0.0, %v1538
      %1540 = vmatmul.bf16.gmra.mxu0 %v1480
      %v1541 = vpop.f32.mrf.mxu0
      %v1542 = vadd.f32 0.0, %v1541
      %v1543 = vpop.f32.mrf.mxu0
      %v1544 = vadd.f32 0.0, %v1543
      %1545 = vmatmul.bf16.gmra.mxu0 %v1483
      %v1546 = vpop.f32.mrf.mxu0
      %v1547 = vadd.f32 0.0, %v1546
      %v1548 = vpop.f32.mrf.mxu0
      %v1549 = vadd.f32 0.0, %v1548
      %1550 = vmatmul.bf16.gmra.mxu0 %v1486
      %v1551 = vpop.f32.mrf.mxu0
      %v1552 = vadd.f32 0.0, %v1551
      %v1553 = vpop.f32.mrf.mxu0
      %v1554 = vadd.f32 0.0, %v1553
      %1555 = vmatmul.bf16.gmra.mxu0 %v1489
      %v1556 = vpop.f32.mrf.mxu0
      %v1557 = vadd.f32 0.0, %v1556
      %v1558 = vpop.f32.mrf.mxu0
      %v1559 = vadd.f32 0.0, %v1558
      %1560 = vmatmul.bf16.gmra.mxu0 %v1492
      %v1561 = vpop.f32.mrf.mxu0
      %v1562 = vadd.f32 0.0, %v1561
      %v1563 = vpop.f32.mrf.mxu0
      %v1564 = vadd.f32 0.0, %v1563
      %1565 = vmatmul.bf16.gmra.mxu0 %v1495
      %v1566 = vpop.f32.mrf.mxu0
      %v1567 = vadd.f32 0.0, %v1566
      %v1568 = vpop.f32.mrf.mxu0
      %v1569 = vadd.f32 0.0, %v1568
      %1570 = vmatmul.bf16.gmra.mxu0 %v1498
      %v1571 = vpop.f32.mrf.mxu0
      %v1572 = vadd.f32 0.0, %v1571
      %v1573 = vpop.f32.mrf.mxu0
      %v1574 = vadd.f32 0.0, %v1573
      %1575 = vmatmul.bf16.gmra.mxu0 %v1501
      %v1576 = vpop.f32.mrf.mxu0
      %v1577 = vadd.f32 0.0, %v1576
      %v1578 = vpop.f32.mrf.mxu0
      %v1579 = vadd.f32 0.0, %v1578
      %1580 = vmatmul.bf16.gmra.mxu0 %v1504
      %v1581 = vpop.f32.mrf.mxu0
      %v1582 = vadd.f32 0.0, %v1581
      %v1583 = vpop.f32.mrf.mxu0
      %v1584 = vadd.f32 0.0, %v1583
      %1585 = vmatmul.bf16.gmra.mxu0 %v1507
      %v1586 = vpop.f32.mrf.mxu0
      %v1587 = vadd.f32 0.0, %v1586
      %v1588 = vpop.f32.mrf.mxu0
      %v1589 = vadd.f32 0.0, %v1588
      %1590 = vmatmul.bf16.gmra.mxu0 %v1510
      %v1591 = vpop.f32.mrf.mxu0
      %v1592 = vadd.f32 0.0, %v1591
      %v1593 = vpop.f32.mrf.mxu0
      %v1594 = vadd.f32 0.0, %v1593
      %1595 = vmatmul.bf16.gmra.mxu0 %v1513
      %v1596 = vpop.f32.mrf.mxu0
      %v1597 = vadd.f32 0.0, %v1596
      %v1598 = vpop.f32.mrf.mxu0
      %v1599 = vadd.f32 0.0, %v1598
      %1600 = vmatmul.bf16.gmra.mxu0 %v1516
      %v1601 = vpop.f32.mrf.mxu0
      %v1602 = vadd.f32 0.0, %v1601
      %v1603 = vpop.f32.mrf.mxu0
      %v1604 = vadd.f32 0.0, %v1603
      %1605 = vmatmul.bf16.gmra.mxu0 %v1519
      %v1606 = vpop.f32.mrf.mxu0
      %v1607 = vadd.f32 0.0, %v1606
      %v1608 = vpop.f32.mrf.mxu0
      %v1609 = vadd.f32 0.0, %v1608
      %1610 = vmatmul.bf16.gmra.mxu0 %v1522
      %v1611 = vpop.f32.mrf.mxu0
      %v1612 = vadd.f32 0.0, %v1611
      %v1613 = vpop.f32.mrf.mxu0
      %v1614 = vadd.f32 0.0, %v1613
      %1615 = vdwg.mxu0
      %v1616 = vadd.f32 %v1362, %v1537
      %v1617 = vadd.f32 %v1363, %v1539
      %v1618 = vadd.f32 %v1364, %v1542
      %v1619 = vadd.f32 %v1365, %v1544
      %v1620 = vadd.f32 %v1366, %v1547
      %v1621 = vadd.f32 %v1367, %v1549
      %v1622 = vadd.f32 %v1368, %v1552
      %v1623 = vadd.f32 %v1369, %v1554
      %v1624 = vadd.f32 %v1370, %v1557
      %v1625 = vadd.f32 %v1371, %v1559
      %v1626 = vadd.f32 %v1372, %v1562
      %v1627 = vadd.f32 %v1373, %v1564
      %v1628 = vadd.f32 %v1374, %v1567
      %v1629 = vadd.f32 %v1375, %v1569
      %v1630 = vadd.f32 %v1376, %v1572
      %v1631 = vadd.f32 %v1377, %v1574
      %v1632 = vadd.f32 %v1378, %v1577
      %v1633 = vadd.f32 %v1379, %v1579
      %v1634 = vadd.f32 %v1380, %v1582
      %v1635 = vadd.f32 %v1381, %v1584
      %v1636 = vadd.f32 %v1382, %v1587
      %v1637 = vadd.f32 %v1383, %v1589
      %v1638 = vadd.f32 %v1384, %v1592
      %v1639 = vadd.f32 %v1385, %v1594
      %v1640 = vadd.f32 %v1386, %v1597
      %v1641 = vadd.f32 %v1387, %v1599
      %v1642 = vadd.f32 %v1388, %v1602
      %v1643 = vadd.f32 %v1389, %v1604
      %v1644 = vadd.f32 %v1390, %v1607
      %v1645 = vadd.f32 %v1391, %v1609
      %v1646 = vadd.f32 %v1392, %v1612
      %v1647 = vadd.f32 %v1393, %v1614
      %s1648 = scalar_lea.vmem %s1, 8
      %v1649 = vld [vmem:[%s1648] sm:$0x3]
      %v1682 = vunpack.c.l.b16 %v305
      %v1683 = vunpack.c.l.b16 %v306
      %v1684 = vunpack.c.l.b16 %v307
      %v1685 = vunpack.c.l.b16 %v308
      %v1686 = vunpack.c.l.b16 %v309
      %v1687 = vunpack.c.l.b16 %v310
      %v1688 = vunpack.c.l.b16 %v311
      %v1689 = vunpack.c.l.b16 %v312
      %v1690 = vunpack.c.l.b16 %v313
      %v1691 = vunpack.c.l.b16 %v314
      %v1692 = vunpack.c.l.b16 %v315
      %v1693 = vunpack.c.l.b16 %v316
      %v1694 = vunpack.c.l.b16 %v317
      %v1695 = vunpack.c.l.b16 %v318
      %v1696 = vunpack.c.l.b16 %v319
      %v1697 = vunpack.c.l.b16 %v320
      %v1698 = vunpack.c.l.b16 %v321
      %v1699 = vunpack.c.l.b16 %v322
      %v1700 = vunpack.c.l.b16 %v323
      %v1701 = vunpack.c.l.b16 %v324
      %v1702 = vunpack.c.l.b16 %v325
      %v1703 = vunpack.c.l.b16 %v326
      %v1704 = vunpack.c.l.b16 %v327
      %v1705 = vunpack.c.l.b16 %v328
      %v1706 = vunpack.c.l.b16 %v329
      %v1707 = vunpack.c.l.b16 %v330
      %v1708 = vunpack.c.l.b16 %v331
      %v1709 = vunpack.c.l.b16 %v332
      %v1710 = vunpack.c.l.b16 %v333
      %v1711 = vunpack.c.l.b16 %v334
      %v1712 = vunpack.c.l.b16 %v335
      %v1713 = vunpack.c.l.b16 %v336
      %v1714 = vpack.c.b16 %v1683, %v1682
      %v1715 = vpack.c.b16 %v1685, %v1684
      %v1716 = vpack.c.b16 %v1687, %v1686
      %v1717 = vpack.c.b16 %v1689, %v1688
      %v1718 = vpack.c.b16 %v1691, %v1690
      %v1719 = vpack.c.b16 %v1693, %v1692
      %v1720 = vpack.c.b16 %v1695, %v1694
      %v1721 = vpack.c.b16 %v1697, %v1696
      %v1722 = vpack.c.b16 %v1699, %v1698
      %v1723 = vpack.c.b16 %v1701, %v1700
      %v1724 = vpack.c.b16 %v1703, %v1702
      %v1725 = vpack.c.b16 %v1705, %v1704
      %v1726 = vpack.c.b16 %v1707, %v1706
      %v1727 = vpack.c.b16 %v1709, %v1708
      %v1728 = vpack.c.b16 %v1711, %v1710
      %v1729 = vpack.c.b16 %v1713, %v1712
      %v1731 = vsel %vm420, %v1714, 0
      %v1734 = vsel %vm420, %v1715, 0
      %v1737 = vsel %vm420, %v1716, 0
      %v1740 = vsel %vm420, %v1717, 0
      %v1743 = vsel %vm420, %v1718, 0
      %v1746 = vsel %vm420, %v1719, 0
      %v1749 = vsel %vm420, %v1720, 0
      %v1752 = vsel %vm420, %v1721, 0
      %v1755 = vsel %vm420, %v1722, 0
      %v1758 = vsel %vm420, %v1723, 0
      %v1761 = vsel %vm420, %v1724, 0
      %v1764 = vsel %vm420, %v1725, 0
      %v1767 = vsel %vm420, %v1726, 0
      %v1770 = vsel %vm420, %v1727, 0
      %v1773 = vsel %vm420, %v1728, 0
      %v1776 = vsel %vm420, %v1729, 0
      %v1779 = vand.u32 %v1649, %v472
      %1781 = vmatpush.bf16.msra.mxu0 0
      %1782 = vmatpush.bf16.msra.mxu0 0
      %1783 = vmatpush.bf16.msra.mxu0 0
      %1784 = vmatpush.bf16.msra.mxu0 0
      %1785 = vmatpush.bf16.msra.mxu0 0
      %1786 = vmatpush.bf16.msra.mxu0 0
      %1787 = vmatpush.bf16.msra.mxu0 0
      %1788 = vmatpush.bf16.msra.mxu0 %v1779
      %1789 = vmatmul.bf16.gmra.mxu0 %v1731
      %v1790 = vpop.f32.mrf.mxu0
      %v1791 = vadd.f32 0.0, %v1790
      %v1792 = vpop.f32.mrf.mxu0
      %v1793 = vadd.f32 0.0, %v1792
      %1794 = vmatmul.bf16.gmra.mxu0 %v1734
      %v1795 = vpop.f32.mrf.mxu0
      %v1796 = vadd.f32 0.0, %v1795
      %v1797 = vpop.f32.mrf.mxu0
      %v1798 = vadd.f32 0.0, %v1797
      %1799 = vmatmul.bf16.gmra.mxu0 %v1737
      %v1800 = vpop.f32.mrf.mxu0
      %v1801 = vadd.f32 0.0, %v1800
      %v1802 = vpop.f32.mrf.mxu0
      %v1803 = vadd.f32 0.0, %v1802
      %1804 = vmatmul.bf16.gmra.mxu0 %v1740
      %v1805 = vpop.f32.mrf.mxu0
      %v1806 = vadd.f32 0.0, %v1805
      %v1807 = vpop.f32.mrf.mxu0
      %v1808 = vadd.f32 0.0, %v1807
      %1809 = vmatmul.bf16.gmra.mxu0 %v1743
      %v1810 = vpop.f32.mrf.mxu0
      %v1811 = vadd.f32 0.0, %v1810
      %v1812 = vpop.f32.mrf.mxu0
      %v1813 = vadd.f32 0.0, %v1812
      %1814 = vmatmul.bf16.gmra.mxu0 %v1746
      %v1815 = vpop.f32.mrf.mxu0
      %v1816 = vadd.f32 0.0, %v1815
      %v1817 = vpop.f32.mrf.mxu0
      %v1818 = vadd.f32 0.0, %v1817
      %1819 = vmatmul.bf16.gmra.mxu0 %v1749
      %v1820 = vpop.f32.mrf.mxu0
      %v1821 = vadd.f32 0.0, %v1820
      %v1822 = vpop.f32.mrf.mxu0
      %v1823 = vadd.f32 0.0, %v1822
      %1824 = vmatmul.bf16.gmra.mxu0 %v1752
      %v1825 = vpop.f32.mrf.mxu0
      %v1826 = vadd.f32 0.0, %v1825
      %v1827 = vpop.f32.mrf.mxu0
      %v1828 = vadd.f32 0.0, %v1827
      %1829 = vmatmul.bf16.gmra.mxu0 %v1755
      %v1830 = vpop.f32.mrf.mxu0
      %v1831 = vadd.f32 0.0, %v1830
      %v1832 = vpop.f32.mrf.mxu0
      %v1833 = vadd.f32 0.0, %v1832
      %1834 = vmatmul.bf16.gmra.mxu0 %v1758
      %v1835 = vpop.f32.mrf.mxu0
      %v1836 = vadd.f32 0.0, %v1835
      %v1837 = vpop.f32.mrf.mxu0
      %v1838 = vadd.f32 0.0, %v1837
      %1839 = vmatmul.bf16.gmra.mxu0 %v1761
      %v1840 = vpop.f32.mrf.mxu0
      %v1841 = vadd.f32 0.0, %v1840
      %v1842 = vpop.f32.mrf.mxu0
      %v1843 = vadd.f32 0.0, %v1842
      %1844 = vmatmul.bf16.gmra.mxu0 %v1764
      %v1845 = vpop.f32.mrf.mxu0
      %v1846 = vadd.f32 0.0, %v1845
      %v1847 = vpop.f32.mrf.mxu0
      %v1848 = vadd.f32 0.0, %v1847
      %1849 = vmatmul.bf16.gmra.mxu0 %v1767
      %v1850 = vpop.f32.mrf.mxu0
      %v1851 = vadd.f32 0.0, %v1850
      %v1852 = vpop.f32.mrf.mxu0
      %v1853 = vadd.f32 0.0, %v1852
      %1854 = vmatmul.bf16.gmra.mxu0 %v1770
      %v1855 = vpop.f32.mrf.mxu0
      %v1856 = vadd.f32 0.0, %v1855
      %v1857 = vpop.f32.mrf.mxu0
      %v1858 = vadd.f32 0.0, %v1857
      %1859 = vmatmul.bf16.gmra.mxu0 %v1773
      %v1860 = vpop.f32.mrf.mxu0
      %v1861 = vadd.f32 0.0, %v1860
      %v1862 = vpop.f32.mrf.mxu0
      %v1863 = vadd.f32 0.0, %v1862
      %1864 = vmatmul.bf16.gmra.mxu0 %v1776
      %v1865 = vpop.f32.mrf.mxu0
      %v1866 = vadd.f32 0.0, %v1865
      %v1867 = vpop.f32.mrf.mxu0
      %v1868 = vadd.f32 0.0, %v1867
      %1869 = vdwg.mxu0
      %v1870 = vadd.f32 %v1616, %v1791
      %v1871 = vadd.f32 %v1617, %v1793
      %v1872 = vadd.f32 %v1618, %v1796
      %v1873 = vadd.f32 %v1619, %v1798
      %v1874 = vadd.f32 %v1620, %v1801
      %v1875 = vadd.f32 %v1621, %v1803
      %v1876 = vadd.f32 %v1622, %v1806
      %v1877 = vadd.f32 %v1623, %v1808
      %v1878 = vadd.f32 %v1624, %v1811
      %v1879 = vadd.f32 %v1625, %v1813
      %v1880 = vadd.f32 %v1626, %v1816
      %v1881 = vadd.f32 %v1627, %v1818
      %v1882 = vadd.f32 %v1628, %v1821
      %v1883 = vadd.f32 %v1629, %v1823
      %v1884 = vadd.f32 %v1630, %v1826
      %v1885 = vadd.f32 %v1631, %v1828
      %v1886 = vadd.f32 %v1632, %v1831
      %v1887 = vadd.f32 %v1633, %v1833
      %v1888 = vadd.f32 %v1634, %v1836
      %v1889 = vadd.f32 %v1635, %v1838
      %v1890 = vadd.f32 %v1636, %v1841
      %v1891 = vadd.f32 %v1637, %v1843
      %v1892 = vadd.f32 %v1638, %v1846
      %v1893 = vadd.f32 %v1639, %v1848
      %v1894 = vadd.f32 %v1640, %v1851
      %v1895 = vadd.f32 %v1641, %v1853
      %v1896 = vadd.f32 %v1642, %v1856
      %v1897 = vadd.f32 %v1643, %v1858
      %v1898 = vadd.f32 %v1644, %v1861
      %v1899 = vadd.f32 %v1645, %v1863
      %v1900 = vadd.f32 %v1646, %v1866
      %v1901 = vadd.f32 %v1647, %v1868
      %v1903 = vshrl.u32 %v257, 16
      %v1905 = vrot.slane %v1903, 4
      %v1906 = vshll.u32 %v257, 16
      %v1908 = vrot.slane %v1906, 5
      %v1909 = vor.u32 %v1905, %v1908
      %v1910 = vrot.slane %v1909, 4
      %v1912 = vshll.u32 %v258, 16
      %v1914 = vrot.slane %v1912, 5
      %v1915 = vsel %vm787, %v1910, %v1914
      %v1916 = vshrl.u32 %v258, 16
      %v1918 = vrot.slane %v1916, 4
      %v1919 = vor.u32 %v1918, %v1914
      %v1920 = vrot.slane %v1919, 4
      %v1922 = vshll.u32 %v259, 16
      %v1924 = vrot.slane %v1922, 5
      %v1925 = vsel %vm787, %v1920, %v1924
      %v1927 = vshrl.u32 %v260, 16
      %v1929 = vrot.slane %v1927, 4
      %v1930 = vshll.u32 %v260, 16
      %v1932 = vrot.slane %v1930, 5
      %v1933 = vor.u32 %v1929, %v1932
      %v1934 = vrot.slane %v1933, 4
      %v1936 = vshll.u32 %v261, 16
      %v1938 = vrot.slane %v1936, 5
      %v1939 = vsel %vm787, %v1934, %v1938
      %v1940 = vshrl.u32 %v261, 16
      %v1942 = vrot.slane %v1940, 4
      %v1943 = vor.u32 %v1942, %v1938
      %v1944 = vrot.slane %v1943, 4
      %v1946 = vshll.u32 %v262, 16
      %v1948 = vrot.slane %v1946, 5
      %v1949 = vsel %vm787, %v1944, %v1948
      %v1951 = vshrl.u32 %v263, 16
      %v1953 = vrot.slane %v1951, 4
      %v1954 = vshll.u32 %v263, 16
      %v1956 = vrot.slane %v1954, 5
      %v1957 = vor.u32 %v1953, %v1956
      %v1958 = vrot.slane %v1957, 4
      %v1960 = vshll.u32 %v264, 16
      %v1962 = vrot.slane %v1960, 5
      %v1963 = vsel %vm787, %v1958, %v1962
      %v1964 = vshrl.u32 %v264, 16
      %v1966 = vrot.slane %v1964, 4
      %v1967 = vor.u32 %v1966, %v1962
      %v1968 = vrot.slane %v1967, 4
      %v1970 = vshll.u32 %v265, 16
      %v1972 = vrot.slane %v1970, 5
      %v1973 = vsel %vm787, %v1968, %v1972
      %v1975 = vshrl.u32 %v266, 16
      %v1977 = vrot.slane %v1975, 4
      %v1978 = vshll.u32 %v266, 16
      %v1980 = vrot.slane %v1978, 5
      %v1981 = vor.u32 %v1977, %v1980
      %v1982 = vrot.slane %v1981, 4
      %v1984 = vshll.u32 %v267, 16
      %v1986 = vrot.slane %v1984, 5
      %v1987 = vsel %vm787, %v1982, %v1986
      %v1988 = vshrl.u32 %v267, 16
      %v1990 = vrot.slane %v1988, 4
      %v1991 = vor.u32 %v1990, %v1986
      %v1992 = vrot.slane %v1991, 4
      %v1994 = vshll.u32 %v268, 16
      %v1996 = vrot.slane %v1994, 5
      %v1997 = vsel %vm787, %v1992, %v1996
      %v1999 = vshrl.u32 %v269, 16
      %v2001 = vrot.slane %v1999, 4
      %v2002 = vshll.u32 %v269, 16
      %v2004 = vrot.slane %v2002, 5
      %v2005 = vor.u32 %v2001, %v2004
      %v2006 = vrot.slane %v2005, 4
      %v2008 = vshll.u32 %v270, 16
      %v2010 = vrot.slane %v2008, 5
      %v2011 = vsel %vm787, %v2006, %v2010
      %v2012 = vshrl.u32 %v270, 16
      %v2014 = vrot.slane %v2012, 4
      %v2015 = vor.u32 %v2014, %v2010
      %v2016 = vrot.slane %v2015, 4
      %v2018 = vshll.u32 %v271, 16
      %v2020 = vrot.slane %v2018, 5
      %v2021 = vsel %vm787, %v2016, %v2020
      %v2023 = vshrl.u32 %v272, 16
      %v2025 = vrot.slane %v2023, 4
      %v2026 = vshll.u32 %v272, 16
      %v2028 = vrot.slane %v2026, 5
      %v2029 = vor.u32 %v2025, %v2028
      %v2030 = vrot.slane %v2029, 4
      %v2032 = vshll.u32 %v273, 16
      %v2034 = vrot.slane %v2032, 5
      %v2035 = vsel %vm787, %v2030, %v2034
      %v2036 = vshrl.u32 %v273, 16
      %v2038 = vrot.slane %v2036, 4
      %v2039 = vor.u32 %v2038, %v2034
      %v2040 = vrot.slane %v2039, 4
      %v2042 = vshll.u32 %v274, 16
      %v2044 = vrot.slane %v2042, 5
      %v2045 = vsel %vm787, %v2040, %v2044
      %v2047 = vshrl.u32 %v275, 16
      %v2049 = vrot.slane %v2047, 4
      %v2050 = vshll.u32 %v275, 16
      %v2052 = vrot.slane %v2050, 5
      %v2053 = vor.u32 %v2049, %v2052
      %v2054 = vrot.slane %v2053, 4
      %v2056 = vshll.u32 %v276, 16
      %v2058 = vrot.slane %v2056, 5
      %v2059 = vsel %vm787, %v2054, %v2058
      %v2060 = vshrl.u32 %v276, 16
      %v2062 = vrot.slane %v2060, 4
      %v2063 = vor.u32 %v2062, %v2058
      %v2064 = vrot.slane %v2063, 4
      %v2066 = vshll.u32 %v277, 16
      %v2068 = vrot.slane %v2066, 5
      %v2069 = vsel %vm787, %v2064, %v2068
      %v2071 = vshrl.u32 %v278, 16
      %v2073 = vrot.slane %v2071, 4
      %v2074 = vshll.u32 %v278, 16
      %v2076 = vrot.slane %v2074, 5
      %v2077 = vor.u32 %v2073, %v2076
      %v2078 = vrot.slane %v2077, 4
      %v2080 = vshll.u32 %v279, 16
      %v2082 = vrot.slane %v2080, 5
      %v2083 = vsel %vm787, %v2078, %v2082
      %v2084 = vshrl.u32 %v279, 16
      %v2086 = vrot.slane %v2084, 4
      %v2087 = vor.u32 %v2086, %v2082
      %v2088 = vrot.slane %v2087, 4
      %v2090 = vshll.u32 %v280, 16
      %v2092 = vrot.slane %v2090, 5
      %v2093 = vsel %vm787, %v2088, %v2092
      %v2095 = vshrl.u32 %v281, 16
      %v2097 = vrot.slane %v2095, 4
      %v2098 = vshll.u32 %v281, 16
      %v2100 = vrot.slane %v2098, 5
      %v2101 = vor.u32 %v2097, %v2100
      %v2102 = vrot.slane %v2101, 4
      %v2104 = vshll.u32 %v282, 16
      %v2106 = vrot.slane %v2104, 5
      %v2107 = vsel %vm787, %v2102, %v2106
      %v2108 = vshrl.u32 %v282, 16
      %v2110 = vrot.slane %v2108, 4
      %v2111 = vor.u32 %v2110, %v2106
      %v2112 = vrot.slane %v2111, 4
      %v2114 = vshll.u32 %v283, 16
      %v2116 = vrot.slane %v2114, 5
      %v2117 = vsel %vm787, %v2112, %v2116
      %v2119 = vshrl.u32 %v284, 16
      %v2121 = vrot.slane %v2119, 4
      %v2122 = vshll.u32 %v284, 16
      %v2124 = vrot.slane %v2122, 5
      %v2125 = vor.u32 %v2121, %v2124
      %v2126 = vrot.slane %v2125, 4
      %v2128 = vshll.u32 %v285, 16
      %v2130 = vrot.slane %v2128, 5
      %v2131 = vsel %vm787, %v2126, %v2130
      %v2132 = vshrl.u32 %v285, 16
      %v2134 = vrot.slane %v2132, 4
      %v2135 = vor.u32 %v2134, %v2130
      %v2136 = vrot.slane %v2135, 4
      %v2138 = vshll.u32 %v286, 16
      %v2140 = vrot.slane %v2138, 5
      %v2141 = vsel %vm787, %v2136, %v2140
      %v2143 = vshrl.u32 %v287, 16
      %v2145 = vrot.slane %v2143, 4
      %v2146 = vshll.u32 %v287, 16
      %v2148 = vrot.slane %v2146, 5
      %v2149 = vor.u32 %v2145, %v2148
      %v2150 = vrot.slane %v2149, 4
      %v2152 = vshll.u32 %v288, 16
      %v2154 = vrot.slane %v2152, 5
      %v2155 = vsel %vm787, %v2150, %v2154
      %v2156 = vshrl.u32 %v288, 16
      %v2158 = vrot.slane %v2156, 4
      %v2159 = vor.u32 %v2158, %v2154
      %v2160 = vrot.slane %v2159, 4
      %v2162 = vshll.u32 %v289, 16
      %v2164 = vrot.slane %v2162, 5
      %v2165 = vsel %vm787, %v2160, %v2164
      %v2167 = vshrl.u32 %v290, 16
      %v2169 = vrot.slane %v2167, 4
      %v2170 = vshll.u32 %v290, 16
      %v2172 = vrot.slane %v2170, 5
      %v2173 = vor.u32 %v2169, %v2172
      %v2174 = vrot.slane %v2173, 4
      %v2176 = vshll.u32 %v291, 16
      %v2178 = vrot.slane %v2176, 5
      %v2179 = vsel %vm787, %v2174, %v2178
      %v2180 = vshrl.u32 %v291, 16
      %v2182 = vrot.slane %v2180, 4
      %v2183 = vor.u32 %v2182, %v2178
      %v2184 = vrot.slane %v2183, 4
      %v2186 = vshll.u32 %v292, 16
      %v2188 = vrot.slane %v2186, 5
      %v2189 = vsel %vm787, %v2184, %v2188
      %v2191 = vshrl.u32 %v293, 16
      %v2193 = vrot.slane %v2191, 4
      %v2194 = vshll.u32 %v293, 16
      %v2196 = vrot.slane %v2194, 5
      %v2197 = vor.u32 %v2193, %v2196
      %v2198 = vrot.slane %v2197, 4
      %v2200 = vshll.u32 %v294, 16
      %v2202 = vrot.slane %v2200, 5
      %v2203 = vsel %vm787, %v2198, %v2202
      %v2204 = vshrl.u32 %v294, 16
      %v2206 = vrot.slane %v2204, 4
      %v2207 = vor.u32 %v2206, %v2202
      %v2208 = vrot.slane %v2207, 4
      %v2210 = vshll.u32 %v295, 16
      %v2212 = vrot.slane %v2210, 5
      %v2213 = vsel %vm787, %v2208, %v2212
      %v2215 = vshrl.u32 %v296, 16
      %v2217 = vrot.slane %v2215, 4
      %v2218 = vshll.u32 %v296, 16
      %v2220 = vrot.slane %v2218, 5
      %v2221 = vor.u32 %v2217, %v2220
      %v2222 = vrot.slane %v2221, 4
      %v2224 = vshll.u32 %v297, 16
      %v2226 = vrot.slane %v2224, 5
      %v2227 = vsel %vm787, %v2222, %v2226
      %v2228 = vshrl.u32 %v297, 16
      %v2230 = vrot.slane %v2228, 4
      %v2231 = vor.u32 %v2230, %v2226
      %v2232 = vrot.slane %v2231, 4
      %v2234 = vshll.u32 %v298, 16
      %v2236 = vrot.slane %v2234, 5
      %v2237 = vsel %vm787, %v2232, %v2236
      %v2239 = vshrl.u32 %v299, 16
      %v2241 = vrot.slane %v2239, 4
      %v2242 = vshll.u32 %v299, 16
      %v2244 = vrot.slane %v2242, 5
      %v2245 = vor.u32 %v2241, %v2244
      %v2246 = vrot.slane %v2245, 4
      %v2248 = vshll.u32 %v300, 16
      %v2250 = vrot.slane %v2248, 5
      %v2251 = vsel %vm787, %v2246, %v2250
      %v2252 = vshrl.u32 %v300, 16
      %v2254 = vrot.slane %v2252, 4
      %v2255 = vor.u32 %v2254, %v2250
      %v2256 = vrot.slane %v2255, 4
      %v2258 = vshll.u32 %v301, 16
      %v2260 = vrot.slane %v2258, 5
      %v2261 = vsel %vm787, %v2256, %v2260
      %v2263 = vshrl.u32 %v302, 16
      %v2265 = vrot.slane %v2263, 4
      %v2266 = vshll.u32 %v302, 16
      %v2268 = vrot.slane %v2266, 5
      %v2269 = vor.u32 %v2265, %v2268
      %v2270 = vrot.slane %v2269, 4
      %v2272 = vshll.u32 %v303, 16
      %v2274 = vrot.slane %v2272, 5
      %v2275 = vsel %vm787, %v2270, %v2274
      %v2276 = vshrl.u32 %v303, 16
      %v2278 = vrot.slane %v2276, 4
      %v2279 = vor.u32 %v2278, %v2274
      %v2280 = vrot.slane %v2279, 4
      %v2282 = vshll.u32 %v304, 16
      %v2284 = vrot.slane %v2282, 5
      %v2285 = vsel %vm787, %v2280, %v2284
      %s2286 = scalar_lea.vmem %s1, 10
      %v2287 = vld [vmem:[%s2286] sm:$0x3]
      %v2288 = vunpack.c.l.b16 %v1915
      %v2289 = vunpack.c.l.b16 %v1925
      %v2290 = vunpack.c.l.b16 %v1939
      %v2291 = vunpack.c.l.b16 %v1949
      %v2292 = vunpack.c.l.b16 %v1963
      %v2293 = vunpack.c.l.b16 %v1973
      %v2294 = vunpack.c.l.b16 %v1987
      %v2295 = vunpack.c.l.b16 %v1997
      %v2296 = vunpack.c.l.b16 %v2011
      %v2297 = vunpack.c.l.b16 %v2021
      %v2298 = vunpack.c.l.b16 %v2035
      %v2299 = vunpack.c.l.b16 %v2045
      %v2300 = vunpack.c.l.b16 %v2059
      %v2301 = vunpack.c.l.b16 %v2069
      %v2302 = vunpack.c.l.b16 %v2083
      %v2303 = vunpack.c.l.b16 %v2093
      %v2304 = vunpack.c.l.b16 %v2107
      %v2305 = vunpack.c.l.b16 %v2117
      %v2306 = vunpack.c.l.b16 %v2131
      %v2307 = vunpack.c.l.b16 %v2141
      %v2308 = vunpack.c.l.b16 %v2155
      %v2309 = vunpack.c.l.b16 %v2165
      %v2310 = vunpack.c.l.b16 %v2179
      %v2311 = vunpack.c.l.b16 %v2189
      %v2312 = vunpack.c.l.b16 %v2203
      %v2313 = vunpack.c.l.b16 %v2213
      %v2314 = vunpack.c.l.b16 %v2227
      %v2315 = vunpack.c.l.b16 %v2237
      %v2316 = vunpack.c.l.b16 %v2251
      %v2317 = vunpack.c.l.b16 %v2261
      %v2318 = vunpack.c.l.b16 %v2275
      %v2319 = vunpack.c.l.b16 %v2285
      %v2320 = vpack.c.b16 %v2289, %v2288
      %v2321 = vpack.c.b16 %v2291, %v2290
      %v2322 = vpack.c.b16 %v2293, %v2292
      %v2323 = vpack.c.b16 %v2295, %v2294
      %v2324 = vpack.c.b16 %v2297, %v2296
      %v2325 = vpack.c.b16 %v2299, %v2298
      %v2326 = vpack.c.b16 %v2301, %v2300
      %v2327 = vpack.c.b16 %v2303, %v2302
      %v2328 = vpack.c.b16 %v2305, %v2304
      %v2329 = vpack.c.b16 %v2307, %v2306
      %v2330 = vpack.c.b16 %v2309, %v2308
      %v2331 = vpack.c.b16 %v2311, %v2310
      %v2332 = vpack.c.b16 %v2313, %v2312
      %v2333 = vpack.c.b16 %v2315, %v2314
      %v2334 = vpack.c.b16 %v2317, %v2316
      %v2335 = vpack.c.b16 %v2319, %v2318
      %v2337 = vsel %vm420, %v2320, 0
      %v2340 = vsel %vm420, %v2321, 0
      %v2343 = vsel %vm420, %v2322, 0
      %v2346 = vsel %vm420, %v2323, 0
      %v2349 = vsel %vm420, %v2324, 0
      %v2352 = vsel %vm420, %v2325, 0
      %v2355 = vsel %vm420, %v2326, 0
      %v2358 = vsel %vm420, %v2327, 0
      %v2361 = vsel %vm420, %v2328, 0
      %v2364 = vsel %vm420, %v2329, 0
      %v2367 = vsel %vm420, %v2330, 0
      %v2370 = vsel %vm420, %v2331, 0
      %v2373 = vsel %vm420, %v2332, 0
      %v2376 = vsel %vm420, %v2333, 0
      %v2379 = vsel %vm420, %v2334, 0
      %v2382 = vsel %vm420, %v2335, 0
      %v2385 = vand.u32 %v2287, %v472
      %2387 = vmatpush.bf16.msra.mxu0 0
      %2388 = vmatpush.bf16.msra.mxu0 0
      %2389 = vmatpush.bf16.msra.mxu0 0
      %2390 = vmatpush.bf16.msra.mxu0 0
      %2391 = vmatpush.bf16.msra.mxu0 0
      %2392 = vmatpush.bf16.msra.mxu0 0
      %2393 = vmatpush.bf16.msra.mxu0 0
      %2394 = vmatpush.bf16.msra.mxu0 %v2385
      %2395 = vmatmul.bf16.gmra.mxu0 %v2337
      %v2396 = vpop.f32.mrf.mxu0
      %v2397 = vadd.f32 0.0, %v2396
      %v2398 = vpop.f32.mrf.mxu0
      %v2399 = vadd.f32 0.0, %v2398
      %2400 = vmatmul.bf16.gmra.mxu0 %v2340
      %v2401 = vpop.f32.mrf.mxu0
      %v2402 = vadd.f32 0.0, %v2401
      %v2403 = vpop.f32.mrf.mxu0
      %v2404 = vadd.f32 0.0, %v2403
      %2405 = vmatmul.bf16.gmra.mxu0 %v2343
      %v2406 = vpop.f32.mrf.mxu0
      %v2407 = vadd.f32 0.0, %v2406
      %v2408 = vpop.f32.mrf.mxu0
      %v2409 = vadd.f32 0.0, %v2408
      %2410 = vmatmul.bf16.gmra.mxu0 %v2346
      %v2411 = vpop.f32.mrf.mxu0
      %v2412 = vadd.f32 0.0, %v2411
      %v2413 = vpop.f32.mrf.mxu0
      %v2414 = vadd.f32 0.0, %v2413
      %2415 = vmatmul.bf16.gmra.mxu0 %v2349
      %v2416 = vpop.f32.mrf.mxu0
      %v2417 = vadd.f32 0.0, %v2416
      %v2418 = vpop.f32.mrf.mxu0
      %v2419 = vadd.f32 0.0, %v2418
      %2420 = vmatmul.bf16.gmra.mxu0 %v2352
      %v2421 = vpop.f32.mrf.mxu0
      %v2422 = vadd.f32 0.0, %v2421
      %v2423 = vpop.f32.mrf.mxu0
      %v2424 = vadd.f32 0.0, %v2423
      %2425 = vmatmul.bf16.gmra.mxu0 %v2355
      %v2426 = vpop.f32.mrf.mxu0
      %v2427 = vadd.f32 0.0, %v2426
      %v2428 = vpop.f32.mrf.mxu0
      %v2429 = vadd.f32 0.0, %v2428
      %2430 = vmatmul.bf16.gmra.mxu0 %v2358
      %v2431 = vpop.f32.mrf.mxu0
      %v2432 = vadd.f32 0.0, %v2431
      %v2433 = vpop.f32.mrf.mxu0
      %v2434 = vadd.f32 0.0, %v2433
      %2435 = vmatmul.bf16.gmra.mxu0 %v2361
      %v2436 = vpop.f32.mrf.mxu0
      %v2437 = vadd.f32 0.0, %v2436
      %v2438 = vpop.f32.mrf.mxu0
      %v2439 = vadd.f32 0.0, %v2438
      %2440 = vmatmul.bf16.gmra.mxu0 %v2364
      %v2441 = vpop.f32.mrf.mxu0
      %v2442 = vadd.f32 0.0, %v2441
      %v2443 = vpop.f32.mrf.mxu0
      %v2444 = vadd.f32 0.0, %v2443
      %2445 = vmatmul.bf16.gmra.mxu0 %v2367
      %v2446 = vpop.f32.mrf.mxu0
      %v2447 = vadd.f32 0.0, %v2446
      %v2448 = vpop.f32.mrf.mxu0
      %v2449 = vadd.f32 0.0, %v2448
      %2450 = vmatmul.bf16.gmra.mxu0 %v2370
      %v2451 = vpop.f32.mrf.mxu0
      %v2452 = vadd.f32 0.0, %v2451
      %v2453 = vpop.f32.mrf.mxu0
      %v2454 = vadd.f32 0.0, %v2453
      %2455 = vmatmul.bf16.gmra.mxu0 %v2373
      %v2456 = vpop.f32.mrf.mxu0
      %v2457 = vadd.f32 0.0, %v2456
      %v2458 = vpop.f32.mrf.mxu0
      %v2459 = vadd.f32 0.0, %v2458
      %2460 = vmatmul.bf16.gmra.mxu0 %v2376
      %v2461 = vpop.f32.mrf.mxu0
      %v2462 = vadd.f32 0.0, %v2461
      %v2463 = vpop.f32.mrf.mxu0
      %v2464 = vadd.f32 0.0, %v2463
      %2465 = vmatmul.bf16.gmra.mxu0 %v2379
      %v2466 = vpop.f32.mrf.mxu0
      %v2467 = vadd.f32 0.0, %v2466
      %v2468 = vpop.f32.mrf.mxu0
      %v2469 = vadd.f32 0.0, %v2468
      %2470 = vmatmul.bf16.gmra.mxu0 %v2382
      %v2471 = vpop.f32.mrf.mxu0
      %v2472 = vadd.f32 0.0, %v2471
      %v2473 = vpop.f32.mrf.mxu0
      %v2474 = vadd.f32 0.0, %v2473
      %2475 = vdwg.mxu0
      %v2476 = vadd.f32 %v1870, %v2397
      %v2477 = vadd.f32 %v1871, %v2399
      %v2478 = vadd.f32 %v1872, %v2402
      %v2479 = vadd.f32 %v1873, %v2404
      %v2480 = vadd.f32 %v1874, %v2407
      %v2481 = vadd.f32 %v1875, %v2409
      %v2482 = vadd.f32 %v1876, %v2412
      %v2483 = vadd.f32 %v1877, %v2414
      %v2484 = vadd.f32 %v1878, %v2417
      %v2485 = vadd.f32 %v1879, %v2419
      %v2486 = vadd.f32 %v1880, %v2422
      %v2487 = vadd.f32 %v1881, %v2424
      %v2488 = vadd.f32 %v1882, %v2427
      %v2489 = vadd.f32 %v1883, %v2429
      %v2490 = vadd.f32 %v1884, %v2432
      %v2491 = vadd.f32 %v1885, %v2434
      %v2492 = vadd.f32 %v1886, %v2437
      %v2493 = vadd.f32 %v1887, %v2439
      %v2494 = vadd.f32 %v1888, %v2442
      %v2495 = vadd.f32 %v1889, %v2444
      %v2496 = vadd.f32 %v1890, %v2447
      %v2497 = vadd.f32 %v1891, %v2449
      %v2498 = vadd.f32 %v1892, %v2452
      %v2499 = vadd.f32 %v1893, %v2454
      %v2500 = vadd.f32 %v1894, %v2457
      %v2501 = vadd.f32 %v1895, %v2459
      %v2502 = vadd.f32 %v1896, %v2462
      %v2503 = vadd.f32 %v1897, %v2464
      %v2504 = vadd.f32 %v1898, %v2467
      %v2505 = vadd.f32 %v1899, %v2469
      %v2506 = vadd.f32 %v1900, %v2472
      %v2507 = vadd.f32 %v1901, %v2474
      %s2508 = scalar_lea.vmem %s1, 12
      %v2509 = vld [vmem:[%s2508] sm:$0x3]
      %v2512 = vunpack.c.l.b16 %v220
      %v2513 = vunpack.c.l.b16 %v221
      %v2514 = vpack.c.b16 %v2513, %v2512
      %v2516 = vsel %vm420, %v2514, 0
      %v2519 = vand.u32 %v2509, %v472
      %2521 = vmatpush.bf16.msra.mxu0 0
      %2522 = vmatpush.bf16.msra.mxu0 0
      %2523 = vmatpush.bf16.msra.mxu0 0
      %2524 = vmatpush.bf16.msra.mxu0 0
      %2525 = vmatpush.bf16.msra.mxu0 0
      %2526 = vmatpush.bf16.msra.mxu0 0
      %2527 = vmatpush.bf16.msra.mxu0 0
      %2528 = vmatpush.bf16.msra.mxu0 %v2519
      %2529 = vmatmul.bf16.gmra.mxu0 %v649
      %v2530 = vpop.f32.mrf.mxu0
      %v2531 = vadd.f32 0.0, %v2530
      %v2532 = vpop.f32.mrf.mxu0
      %v2533 = vadd.f32 0.0, %v2532
      %2534 = vmatmul.bf16.gmra.mxu0 %v652
      %v2535 = vpop.f32.mrf.mxu0
      %v2536 = vadd.f32 0.0, %v2535
      %v2537 = vpop.f32.mrf.mxu0
      %v2538 = vadd.f32 0.0, %v2537
      %2539 = vmatmul.bf16.gmra.mxu0 %v655
      %v2540 = vpop.f32.mrf.mxu0
      %v2541 = vadd.f32 0.0, %v2540
      %v2542 = vpop.f32.mrf.mxu0
      %v2543 = vadd.f32 0.0, %v2542
      %2544 = vmatmul.bf16.gmra.mxu0 %v658
      %v2545 = vpop.f32.mrf.mxu0
      %v2546 = vadd.f32 0.0, %v2545
      %v2547 = vpop.f32.mrf.mxu0
      %v2548 = vadd.f32 0.0, %v2547
      %2549 = vmatmul.bf16.gmra.mxu0 %v661
      %v2550 = vpop.f32.mrf.mxu0
      %v2551 = vadd.f32 0.0, %v2550
      %v2552 = vpop.f32.mrf.mxu0
      %v2553 = vadd.f32 0.0, %v2552
      %2554 = vmatmul.bf16.gmra.mxu0 %v664
      %v2555 = vpop.f32.mrf.mxu0
      %v2556 = vadd.f32 0.0, %v2555
      %v2557 = vpop.f32.mrf.mxu0
      %v2558 = vadd.f32 0.0, %v2557
      %2559 = vmatmul.bf16.gmra.mxu0 %v667
      %v2560 = vpop.f32.mrf.mxu0
      %v2561 = vadd.f32 0.0, %v2560
      %v2562 = vpop.f32.mrf.mxu0
      %v2563 = vadd.f32 0.0, %v2562
      %2564 = vmatmul.bf16.gmra.mxu0 %v670
      %v2565 = vpop.f32.mrf.mxu0
      %v2566 = vadd.f32 0.0, %v2565
      %v2567 = vpop.f32.mrf.mxu0
      %v2568 = vadd.f32 0.0, %v2567
      %2569 = vmatmul.bf16.gmra.mxu0 %v673
      %v2570 = vpop.f32.mrf.mxu0
      %v2571 = vadd.f32 0.0, %v2570
      %v2572 = vpop.f32.mrf.mxu0
      %v2573 = vadd.f32 0.0, %v2572
      %2574 = vmatmul.bf16.gmra.mxu0 %v676
      %v2575 = vpop.f32.mrf.mxu0
      %v2576 = vadd.f32 0.0, %v2575
      %v2577 = vpop.f32.mrf.mxu0
      %v2578 = vadd.f32 0.0, %v2577
      %2579 = vmatmul.bf16.gmra.mxu0 %v679
      %v2580 = vpop.f32.mrf.mxu0
      %v2581 = vadd.f32 0.0, %v2580
      %v2582 = vpop.f32.mrf.mxu0
      %v2583 = vadd.f32 0.0, %v2582
      %2584 = vmatmul.bf16.gmra.mxu0 %v682
      %v2585 = vpop.f32.mrf.mxu0
      %v2586 = vadd.f32 0.0, %v2585
      %v2587 = vpop.f32.mrf.mxu0
      %v2588 = vadd.f32 0.0, %v2587
      %2589 = vmatmul.bf16.gmra.mxu0 %v685
      %v2590 = vpop.f32.mrf.mxu0
      %v2591 = vadd.f32 0.0, %v2590
      %v2592 = vpop.f32.mrf.mxu0
      %v2593 = vadd.f32 0.0, %v2592
      %2594 = vmatmul.bf16.gmra.mxu0 %v688
      %v2595 = vpop.f32.mrf.mxu0
      %v2596 = vadd.f32 0.0, %v2595
      %v2597 = vpop.f32.mrf.mxu0
      %v2598 = vadd.f32 0.0, %v2597
      %2599 = vmatmul.bf16.gmra.mxu0 %v691
      %v2600 = vpop.f32.mrf.mxu0
      %v2601 = vadd.f32 0.0, %v2600
      %v2602 = vpop.f32.mrf.mxu0
      %v2603 = vadd.f32 0.0, %v2602
      %2604 = vmatmul.bf16.gmra.mxu0 %v2516
      %v2605 = vpop.f32.mrf.mxu0
      %v2606 = vadd.f32 0.0, %v2605
      %v2607 = vpop.f32.mrf.mxu0
      %v2608 = vadd.f32 0.0, %v2607
      %2609 = vdwg.mxu0
      %v2610 = vadd.f32 %v2476, %v2531
      %v2611 = vadd.f32 %v2477, %v2533
      %v2612 = vadd.f32 %v2478, %v2536
      %v2613 = vadd.f32 %v2479, %v2538
      %v2614 = vadd.f32 %v2480, %v2541
      %v2615 = vadd.f32 %v2481, %v2543
      %v2616 = vadd.f32 %v2482, %v2546
      %v2617 = vadd.f32 %v2483, %v2548
      %v2618 = vadd.f32 %v2484, %v2551
      %v2619 = vadd.f32 %v2485, %v2553
      %v2620 = vadd.f32 %v2486, %v2556
      %v2621 = vadd.f32 %v2487, %v2558
      %v2622 = vadd.f32 %v2488, %v2561
      %v2623 = vadd.f32 %v2489, %v2563
      %v2624 = vadd.f32 %v2490, %v2566
      %v2625 = vadd.f32 %v2491, %v2568
      %v2626 = vadd.f32 %v2492, %v2571
      %v2627 = vadd.f32 %v2493, %v2573
      %v2628 = vadd.f32 %v2494, %v2576
      %v2629 = vadd.f32 %v2495, %v2578
      %v2630 = vadd.f32 %v2496, %v2581
      %v2631 = vadd.f32 %v2497, %v2583
      %v2632 = vadd.f32 %v2498, %v2586
      %v2633 = vadd.f32 %v2499, %v2588
      %v2634 = vadd.f32 %v2500, %v2591
      %v2635 = vadd.f32 %v2501, %v2593
      %v2636 = vadd.f32 %v2502, %v2596
      %v2637 = vadd.f32 %v2503, %v2598
      %v2638 = vadd.f32 %v2504, %v2601
      %v2639 = vadd.f32 %v2505, %v2603
      %v2640 = vadd.f32 %v2506, %v2606
      %v2641 = vadd.f32 %v2507, %v2608
      %s2642 = scalar_lea.vmem %s1, 14
      %v2643 = vld [vmem:[%s2642] sm:$0x3]
      %v2646 = vunpack.c.l.b16 %v255
      %v2647 = vunpack.c.l.b16 %v256
      %v2648 = vpack.c.b16 %v2647, %v2646
      %v2650 = vsel %vm420, %v2648, 0
      %v2653 = vand.u32 %v2643, %v472
      %2655 = vmatpush.bf16.msra.mxu0 0
      %2656 = vmatpush.bf16.msra.mxu0 0
      %2657 = vmatpush.bf16.msra.mxu0 0
      %2658 = vmatpush.bf16.msra.mxu0 0
      %2659 = vmatpush.bf16.msra.mxu0 0
      %2660 = vmatpush.bf16.msra.mxu0 0
      %2661 = vmatpush.bf16.msra.mxu0 0
      %2662 = vmatpush.bf16.msra.mxu0 %v2653
      %2663 = vmatmul.bf16.gmra.mxu0 %v425
      %v2664 = vpop.f32.mrf.mxu0
      %v2665 = vadd.f32 0.0, %v2664
      %v2666 = vpop.f32.mrf.mxu0
      %v2667 = vadd.f32 0.0, %v2666
      %2668 = vmatmul.bf16.gmra.mxu0 %v428
      %v2669 = vpop.f32.mrf.mxu0
      %v2670 = vadd.f32 0.0, %v2669
      %v2671 = vpop.f32.mrf.mxu0
      %v2672 = vadd.f32 0.0, %v2671
      %2673 = vmatmul.bf16.gmra.mxu0 %v431
      %v2674 = vpop.f32.mrf.mxu0
      %v2675 = vadd.f32 0.0, %v2674
      %v2676 = vpop.f32.mrf.mxu0
      %v2677 = vadd.f32 0.0, %v2676
      %2678 = vmatmul.bf16.gmra.mxu0 %v434
      %v2679 = vpop.f32.mrf.mxu0
      %v2680 = vadd.f32 0.0, %v2679
      %v2681 = vpop.f32.mrf.mxu0
      %v2682 = vadd.f32 0.0, %v2681
      %2683 = vmatmul.bf16.gmra.mxu0 %v437
      %v2684 = vpop.f32.mrf.mxu0
      %v2685 = vadd.f32 0.0, %v2684
      %v2686 = vpop.f32.mrf.mxu0
      %v2687 = vadd.f32 0.0, %v2686
      %2688 = vmatmul.bf16.gmra.mxu0 %v440
      %v2689 = vpop.f32.mrf.mxu0
      %v2690 = vadd.f32 0.0, %v2689
      %v2691 = vpop.f32.mrf.mxu0
      %v2692 = vadd.f32 0.0, %v2691
      %2693 = vmatmul.bf16.gmra.mxu0 %v443
      %v2694 = vpop.f32.mrf.mxu0
      %v2695 = vadd.f32 0.0, %v2694
      %v2696 = vpop.f32.mrf.mxu0
      %v2697 = vadd.f32 0.0, %v2696
      %2698 = vmatmul.bf16.gmra.mxu0 %v446
      %v2699 = vpop.f32.mrf.mxu0
      %v2700 = vadd.f32 0.0, %v2699
      %v2701 = vpop.f32.mrf.mxu0
      %v2702 = vadd.f32 0.0, %v2701
      %2703 = vmatmul.bf16.gmra.mxu0 %v449
      %v2704 = vpop.f32.mrf.mxu0
      %v2705 = vadd.f32 0.0, %v2704
      %v2706 = vpop.f32.mrf.mxu0
      %v2707 = vadd.f32 0.0, %v2706
      %2708 = vmatmul.bf16.gmra.mxu0 %v452
      %v2709 = vpop.f32.mrf.mxu0
      %v2710 = vadd.f32 0.0, %v2709
      %v2711 = vpop.f32.mrf.mxu0
      %v2712 = vadd.f32 0.0, %v2711
      %2713 = vmatmul.bf16.gmra.mxu0 %v455
      %v2714 = vpop.f32.mrf.mxu0
      %v2715 = vadd.f32 0.0, %v2714
      %v2716 = vpop.f32.mrf.mxu0
      %v2717 = vadd.f32 0.0, %v2716
      %2718 = vmatmul.bf16.gmra.mxu0 %v458
      %v2719 = vpop.f32.mrf.mxu0
      %v2720 = vadd.f32 0.0, %v2719
      %v2721 = vpop.f32.mrf.mxu0
      %v2722 = vadd.f32 0.0, %v2721
      %2723 = vmatmul.bf16.gmra.mxu0 %v461
      %v2724 = vpop.f32.mrf.mxu0
      %v2725 = vadd.f32 0.0, %v2724
      %v2726 = vpop.f32.mrf.mxu0
      %v2727 = vadd.f32 0.0, %v2726
      %2728 = vmatmul.bf16.gmra.mxu0 %v464
      %v2729 = vpop.f32.mrf.mxu0
      %v2730 = vadd.f32 0.0, %v2729
      %v2731 = vpop.f32.mrf.mxu0
      %v2732 = vadd.f32 0.0, %v2731
      %2733 = vmatmul.bf16.gmra.mxu0 %v467
      %v2734 = vpop.f32.mrf.mxu0
      %v2735 = vadd.f32 0.0, %v2734
      %v2736 = vpop.f32.mrf.mxu0
      %v2737 = vadd.f32 0.0, %v2736
      %2738 = vmatmul.bf16.gmra.mxu0 %v2650
      %v2739 = vpop.f32.mrf.mxu0
      %v2740 = vadd.f32 0.0, %v2739
      %v2741 = vpop.f32.mrf.mxu0
      %v2742 = vadd.f32 0.0, %v2741
      %2743 = vdwg.mxu0
      %v2744 = vadd.f32 %v2610, %v2665
      %v2745 = vadd.f32 %v2611, %v2667
      %v2746 = vadd.f32 %v2612, %v2670
      %v2747 = vadd.f32 %v2613, %v2672
      %v2748 = vadd.f32 %v2614, %v2675
      %v2749 = vadd.f32 %v2615, %v2677
      %v2750 = vadd.f32 %v2616, %v2680
      %v2751 = vadd.f32 %v2617, %v2682
      %v2752 = vadd.f32 %v2618, %v2685
      %v2753 = vadd.f32 %v2619, %v2687
      %v2754 = vadd.f32 %v2620, %v2690
      %v2755 = vadd.f32 %v2621, %v2692
      %v2756 = vadd.f32 %v2622, %v2695
      %v2757 = vadd.f32 %v2623, %v2697
      %v2758 = vadd.f32 %v2624, %v2700
      %v2759 = vadd.f32 %v2625, %v2702
      %v2760 = vadd.f32 %v2626, %v2705
      %v2761 = vadd.f32 %v2627, %v2707
      %v2762 = vadd.f32 %v2628, %v2710
      %v2763 = vadd.f32 %v2629, %v2712
      %v2764 = vadd.f32 %v2630, %v2715
      %v2765 = vadd.f32 %v2631, %v2717
      %v2766 = vadd.f32 %v2632, %v2720
      %v2767 = vadd.f32 %v2633, %v2722
      %v2768 = vadd.f32 %v2634, %v2725
      %v2769 = vadd.f32 %v2635, %v2727
      %v2770 = vadd.f32 %v2636, %v2730
      %v2771 = vadd.f32 %v2637, %v2732
      %v2772 = vadd.f32 %v2638, %v2735
      %v2773 = vadd.f32 %v2639, %v2737
      %v2774 = vadd.f32 %v2640, %v2740
      %v2775 = vadd.f32 %v2641, %v2742
      %v2777 = vshrl.u32 %v220, 16
      %v2779 = vrot.slane %v2777, 4
      %v2780 = vshll.u32 %v220, 16
      %v2782 = vrot.slane %v2780, 5
      %v2783 = vor.u32 %v2779, %v2782
      %v2784 = vrot.slane %v2783, 4
      %v2786 = vshll.u32 %v221, 16
      %v2788 = vrot.slane %v2786, 5
      %v2789 = vsel %vm787, %v2784, %v2788
      %v2790 = vshrl.u32 %v221, 16
      %v2792 = vrot.slane %v2790, 4
      %v2793 = vor.u32 %v2792, %v2788
      %v2794 = vrot.slane %v2793, 4
      %v2796 = vshll.u32 %v222, 16
      %v2798 = vrot.slane %v2796, 5
      %v2799 = vsel %vm787, %v2794, %v2798
      %s2800 = scalar_lea.vmem %s1, 16
      %v2801 = vld [vmem:[%s2800] sm:$0x3]
      %v2802 = vunpack.c.l.b16 %v2789
      %v2803 = vunpack.c.l.b16 %v2799
      %v2804 = vpack.c.b16 %v2803, %v2802
      %v2806 = vsel %vm420, %v2804, 0
      %v2809 = vand.u32 %v2801, %v472
      %2811 = vmatpush.bf16.msra.mxu0 0
      %2812 = vmatpush.bf16.msra.mxu0 0
      %2813 = vmatpush.bf16.msra.mxu0 0
      %2814 = vmatpush.bf16.msra.mxu0 0
      %2815 = vmatpush.bf16.msra.mxu0 0
      %2816 = vmatpush.bf16.msra.mxu0 0
      %2817 = vmatpush.bf16.msra.mxu0 0
      %2818 = vmatpush.bf16.msra.mxu0 %v2809
      %2819 = vmatmul.bf16.gmra.mxu0 %v1226
      %v2820 = vpop.f32.mrf.mxu0
      %v2821 = vadd.f32 0.0, %v2820
      %v2822 = vpop.f32.mrf.mxu0
      %v2823 = vadd.f32 0.0, %v2822
      %2824 = vmatmul.bf16.gmra.mxu0 %v1229
      %v2825 = vpop.f32.mrf.mxu0
      %v2826 = vadd.f32 0.0, %v2825
      %v2827 = vpop.f32.mrf.mxu0
      %v2828 = vadd.f32 0.0, %v2827
      %2829 = vmatmul.bf16.gmra.mxu0 %v1232
      %v2830 = vpop.f32.mrf.mxu0
      %v2831 = vadd.f32 0.0, %v2830
      %v2832 = vpop.f32.mrf.mxu0
      %v2833 = vadd.f32 0.0, %v2832
      %2834 = vmatmul.bf16.gmra.mxu0 %v1235
      %v2835 = vpop.f32.mrf.mxu0
      %v2836 = vadd.f32 0.0, %v2835
      %v2837 = vpop.f32.mrf.mxu0
      %v2838 = vadd.f32 0.0, %v2837
      %2839 = vmatmul.bf16.gmra.mxu0 %v1238
      %v2840 = vpop.f32.mrf.mxu0
      %v2841 = vadd.f32 0.0, %v2840
      %v2842 = vpop.f32.mrf.mxu0
      %v2843 = vadd.f32 0.0, %v2842
      %2844 = vmatmul.bf16.gmra.mxu0 %v1241
      %v2845 = vpop.f32.mrf.mxu0
      %v2846 = vadd.f32 0.0, %v2845
      %v2847 = vpop.f32.mrf.mxu0
      %v2848 = vadd.f32 0.0, %v2847
      %2849 = vmatmul.bf16.gmra.mxu0 %v1244
      %v2850 = vpop.f32.mrf.mxu0
      %v2851 = vadd.f32 0.0, %v2850
      %v2852 = vpop.f32.mrf.mxu0
      %v2853 = vadd.f32 0.0, %v2852
      %2854 = vmatmul.bf16.gmra.mxu0 %v1247
      %v2855 = vpop.f32.mrf.mxu0
      %v2856 = vadd.f32 0.0, %v2855
      %v2857 = vpop.f32.mrf.mxu0
      %v2858 = vadd.f32 0.0, %v2857
      %2859 = vmatmul.bf16.gmra.mxu0 %v1250
      %v2860 = vpop.f32.mrf.mxu0
      %v2861 = vadd.f32 0.0, %v2860
      %v2862 = vpop.f32.mrf.mxu0
      %v2863 = vadd.f32 0.0, %v2862
      %2864 = vmatmul.bf16.gmra.mxu0 %v1253
      %v2865 = vpop.f32.mrf.mxu0
      %v2866 = vadd.f32 0.0, %v2865
      %v2867 = vpop.f32.mrf.mxu0
      %v2868 = vadd.f32 0.0, %v2867
      %2869 = vmatmul.bf16.gmra.mxu0 %v1256
      %v2870 = vpop.f32.mrf.mxu0
      %v2871 = vadd.f32 0.0, %v2870
      %v2872 = vpop.f32.mrf.mxu0
      %v2873 = vadd.f32 0.0, %v2872
      %2874 = vmatmul.bf16.gmra.mxu0 %v1259
      %v2875 = vpop.f32.mrf.mxu0
      %v2876 = vadd.f32 0.0, %v2875
      %v2877 = vpop.f32.mrf.mxu0
      %v2878 = vadd.f32 0.0, %v2877
      %2879 = vmatmul.bf16.gmra.mxu0 %v1262
      %v2880 = vpop.f32.mrf.mxu0
      %v2881 = vadd.f32 0.0, %v2880
      %v2882 = vpop.f32.mrf.mxu0
      %v2883 = vadd.f32 0.0, %v2882
      %2884 = vmatmul.bf16.gmra.mxu0 %v1265
      %v2885 = vpop.f32.mrf.mxu0
      %v2886 = vadd.f32 0.0, %v2885
      %v2887 = vpop.f32.mrf.mxu0
      %v2888 = vadd.f32 0.0, %v2887
      %2889 = vmatmul.bf16.gmra.mxu0 %v1268
      %v2890 = vpop.f32.mrf.mxu0
      %v2891 = vadd.f32 0.0, %v2890
      %v2892 = vpop.f32.mrf.mxu0
      %v2893 = vadd.f32 0.0, %v2892
      %2894 = vmatmul.bf16.gmra.mxu0 %v2806
      %v2895 = vpop.f32.mrf.mxu0
      %v2896 = vadd.f32 0.0, %v2895
      %v2897 = vpop.f32.mrf.mxu0
      %v2898 = vadd.f32 0.0, %v2897
      %2899 = vdwg.mxu0
      %v2900 = vadd.f32 %v2744, %v2821
      %v2901 = vadd.f32 %v2745, %v2823
      %v2902 = vadd.f32 %v2746, %v2826
      %v2903 = vadd.f32 %v2747, %v2828
      %v2904 = vadd.f32 %v2748, %v2831
      %v2905 = vadd.f32 %v2749, %v2833
      %v2906 = vadd.f32 %v2750, %v2836
      %v2907 = vadd.f32 %v2751, %v2838
      %v2908 = vadd.f32 %v2752, %v2841
      %v2909 = vadd.f32 %v2753, %v2843
      %v2910 = vadd.f32 %v2754, %v2846
      %v2911 = vadd.f32 %v2755, %v2848
      %v2912 = vadd.f32 %v2756, %v2851
      %v2913 = vadd.f32 %v2757, %v2853
      %v2914 = vadd.f32 %v2758, %v2856
      %v2915 = vadd.f32 %v2759, %v2858
      %v2916 = vadd.f32 %v2760, %v2861
      %v2917 = vadd.f32 %v2761, %v2863
      %v2918 = vadd.f32 %v2762, %v2866
      %v2919 = vadd.f32 %v2763, %v2868
      %v2920 = vadd.f32 %v2764, %v2871
      %v2921 = vadd.f32 %v2765, %v2873
      %v2922 = vadd.f32 %v2766, %v2876
      %v2923 = vadd.f32 %v2767, %v2878
      %v2924 = vadd.f32 %v2768, %v2881
      %v2925 = vadd.f32 %v2769, %v2883
      %v2926 = vadd.f32 %v2770, %v2886
      %v2927 = vadd.f32 %v2771, %v2888
      %v2928 = vadd.f32 %v2772, %v2891
      %v2929 = vadd.f32 %v2773, %v2893
      %v2930 = vadd.f32 %v2774, %v2896
      %v2931 = vadd.f32 %v2775, %v2898
      %v2932 = vld [vmem:[%s2] sm:$0x1]
      %v2934 = vperm.slane %v2932, 0
      %v2936 = vadd.f32 %v2900, %v2934
      %v2937 = vadd.f32 %v2901, %v2934
      %v2938 = vadd.f32 %v2902, %v2934
      %v2939 = vadd.f32 %v2903, %v2934
      %v2940 = vadd.f32 %v2904, %v2934
      %v2941 = vadd.f32 %v2905, %v2934
      %v2942 = vadd.f32 %v2906, %v2934
      %v2943 = vadd.f32 %v2907, %v2934
      %v2944 = vadd.f32 %v2908, %v2934
      %v2945 = vadd.f32 %v2909, %v2934
      %v2946 = vadd.f32 %v2910, %v2934
      %v2947 = vadd.f32 %v2911, %v2934
      %v2948 = vadd.f32 %v2912, %v2934
      %v2949 = vadd.f32 %v2913, %v2934
      %v2950 = vadd.f32 %v2914, %v2934
      %v2951 = vadd.f32 %v2915, %v2934
      %v2952 = vadd.f32 %v2916, %v2934
      %v2953 = vadd.f32 %v2917, %v2934
      %v2954 = vadd.f32 %v2918, %v2934
      %v2955 = vadd.f32 %v2919, %v2934
      %v2956 = vadd.f32 %v2920, %v2934
      %v2957 = vadd.f32 %v2921, %v2934
      %v2958 = vadd.f32 %v2922, %v2934
      %v2959 = vadd.f32 %v2923, %v2934
      %v2960 = vadd.f32 %v2924, %v2934
      %v2961 = vadd.f32 %v2925, %v2934
      %v2962 = vadd.f32 %v2926, %v2934
      %v2963 = vadd.f32 %v2927, %v2934
      %v2964 = vadd.f32 %v2928, %v2934
      %v2965 = vadd.f32 %v2929, %v2934
      %v2966 = vadd.f32 %v2930, %v2934
      %v2967 = vadd.f32 %v2931, %v2934
      %v2968 = vmax.f32 %v2936, 0.0
      %v2969 = vmax.f32 %v2937, 0.0
      %v2970 = vmax.f32 %v2938, 0.0
      %v2971 = vmax.f32 %v2939, 0.0
      %v2972 = vmax.f32 %v2940, 0.0
      %v2973 = vmax.f32 %v2941, 0.0
      %v2974 = vmax.f32 %v2942, 0.0
      %v2975 = vmax.f32 %v2943, 0.0
      %v2976 = vmax.f32 %v2944, 0.0
      %v2977 = vmax.f32 %v2945, 0.0
      %v2978 = vmax.f32 %v2946, 0.0
      %v2979 = vmax.f32 %v2947, 0.0
      %v2980 = vmax.f32 %v2948, 0.0
      %v2981 = vmax.f32 %v2949, 0.0
      %v2982 = vmax.f32 %v2950, 0.0
      %v2983 = vmax.f32 %v2951, 0.0
      %v2984 = vmax.f32 %v2952, 0.0
      %v2985 = vmax.f32 %v2953, 0.0
      %v2986 = vmax.f32 %v2954, 0.0
      %v2987 = vmax.f32 %v2955, 0.0
      %v2988 = vmax.f32 %v2956, 0.0
      %v2989 = vmax.f32 %v2957, 0.0
      %v2990 = vmax.f32 %v2958, 0.0
      %v2991 = vmax.f32 %v2959, 0.0
      %v2992 = vmax.f32 %v2960, 0.0
      %v2993 = vmax.f32 %v2961, 0.0
      %v2994 = vmax.f32 %v2962, 0.0
      %v2995 = vmax.f32 %v2963, 0.0
      %v2996 = vmax.f32 %v2964, 0.0
      %v2997 = vmax.f32 %v2965, 0.0
      %v2998 = vmax.f32 %v2966, 0.0
      %v2999 = vmax.f32 %v2967, 0.0
      %v3000 = vpack.c.bf16 %v2968, %v2968
      %v3001 = vpack.c.bf16 %v2969, %v2969
      %v3002 = vpack.c.bf16 %v2970, %v2970
      %v3003 = vpack.c.bf16 %v2971, %v2971
      %v3004 = vpack.c.bf16 %v2972, %v2972
      %v3005 = vpack.c.bf16 %v2973, %v2973
      %v3006 = vpack.c.bf16 %v2974, %v2974
      %v3007 = vpack.c.bf16 %v2975, %v2975
      %v3008 = vpack.c.bf16 %v2976, %v2976
      %v3009 = vpack.c.bf16 %v2977, %v2977
      %v3010 = vpack.c.bf16 %v2978, %v2978
      %v3011 = vpack.c.bf16 %v2979, %v2979
      %v3012 = vpack.c.bf16 %v2980, %v2980
      %v3013 = vpack.c.bf16 %v2981, %v2981
      %v3014 = vpack.c.bf16 %v2982, %v2982
      %v3015 = vpack.c.bf16 %v2983, %v2983
      %v3016 = vpack.c.bf16 %v2984, %v2984
      %v3017 = vpack.c.bf16 %v2985, %v2985
      %v3018 = vpack.c.bf16 %v2986, %v2986
      %v3019 = vpack.c.bf16 %v2987, %v2987
      %v3020 = vpack.c.bf16 %v2988, %v2988
      %v3021 = vpack.c.bf16 %v2989, %v2989
      %v3022 = vpack.c.bf16 %v2990, %v2990
      %v3023 = vpack.c.bf16 %v2991, %v2991
      %v3024 = vpack.c.bf16 %v2992, %v2992
      %v3025 = vpack.c.bf16 %v2993, %v2993
      %v3026 = vpack.c.bf16 %v2994, %v2994
      %v3027 = vpack.c.bf16 %v2995, %v2995
      %v3028 = vpack.c.bf16 %v2996, %v2996
      %v3029 = vpack.c.bf16 %v2997, %v2997
      %v3030 = vpack.c.bf16 %v2998, %v2998
      %v3031 = vpack.c.bf16 %v2999, %v2999
      %3032 = vst [vmem:[%s170] sm:$0xf] %v3000
      %3033 = vst [vmem:[%s170 + $0x4] sm:$0xf] %v3001
      %3034 = vst [vmem:[%s170 + $0x8] sm:$0xf] %v3002
      %3035 = vst [vmem:[%s170 + $0xc] sm:$0xf] %v3003
      %3036 = vst [vmem:[%s170 + $0x10] sm:$0xf] %v3004
      %3037 = vst [vmem:[%s170 + $0x14] sm:$0xf] %v3005
      %3038 = vst [vmem:[%s170 + $0x18] sm:$0xf] %v3006
      %3039 = vst [vmem:[%s170 + $0x1c] sm:$0xf] %v3007
      %3040 = vst [vmem:[%s170 + $0x20] sm:$0xf] %v3008
      %3041 = vst [vmem:[%s170 + $0x24] sm:$0xf] %v3009
      %3042 = vst [vmem:[%s170 + $0x28] sm:$0xf] %v3010
      %3043 = vst [vmem:[%s170 + $0x2c] sm:$0xf] %v3011
      %3044 = vst [vmem:[%s170 + $0x30] sm:$0xf] %v3012
      %3045 = vst [vmem:[%s170 + $0x34] sm:$0xf] %v3013
      %3046 = vst [vmem:[%s170 + $0x38] sm:$0xf] %v3014
      %3047 = vst [vmem:[%s170 + $0x3c] sm:$0xf] %v3015
      %3048 = vst [vmem:[%s170 + $0x40] sm:$0xf] %v3016
      %3049 = vst [vmem:[%s170 + $0x44] sm:$0xf] %v3017
      %3050 = vst [vmem:[%s170 + $0x48] sm:$0xf] %v3018
      %3051 = vst [vmem:[%s170 + $0x4c] sm:$0xf] %v3019
      %3052 = vst [vmem:[%s170 + $0x50] sm:$0xf] %v3020
      %3053 = vst [vmem:[%s170 + $0x54] sm:$0xf] %v3021
      %3054 = vst [vmem:[%s170 + $0x58] sm:$0xf] %v3022
      %3055 = vst [vmem:[%s170 + $0x5c] sm:$0xf] %v3023
      %3056 = vst [vmem:[%s170 + $0x60] sm:$0xf] %v3024
      %3057 = vst [vmem:[%s170 + $0x64] sm:$0xf] %v3025
      %3058 = vst [vmem:[%s170 + $0x68] sm:$0xf] %v3026
      %3059 = vst [vmem:[%s170 + $0x6c] sm:$0xf] %v3027
      %3060 = vst [vmem:[%s170 + $0x70] sm:$0xf] %v3028
      %3061 = vst [vmem:[%s170 + $0x74] sm:$0xf] %v3029
      %3062 = vst [vmem:[%s170 + $0x78] sm:$0xf] %v3030
      %3063 = vst [vmem:[%s170 + $0x7c] sm:$0xf] %v3031
      %p3064 = scmp.lt.s32.totalorder %s14, 1
      %s3065 = scalar_select %p3064, %s14, 1
      %s3066 = smul.addr %s3065, 32
      %s3067 = smul.addr %s3066, 4
      %s3068 = scalar_lea.vmem %s3, %s3067
      // Predicated region
      $region33: #{_lambda_.6} parent=31 // pred_check
        %p3069 = pneg %p100
      $region34: #{_lambda_.6} parent=31 // pred_check_branch
        %3071 = sbr.rel (%p3069) target = $region36
      $region35: #{_lambda_.6} parent=31 // pred_region
        _
      $region36: #{_lambda_.6} parent=31 // pred_fallthru
        _
    $region32: #{_lambda_.6} parent=5 // pred_fallthru
      _
    %p3072 = scmp.le.s32.totalorder 2, %s9
    // Predicated region
    $region37: #{_lambda_.6} parent=5 // pred_check
      %p3073 = pneg %p3072
    $region38: #{_lambda_.6} parent=5 // pred_check_branch
      %3075 = sbr.rel (%p3073) target = $region40
    $region39: #{_lambda_.6} parent=5 // pred_region
      %s3076 = ssub.s32 %s9, 2
      // Predicated region
      $region41: #{_lambda_.6} parent=39 // pred_check
        %p3077 = pneg %p106
      $region42: #{_lambda_.6} parent=39 // pred_check_branch
        %3079 = sbr.rel (%p3077) target = $region44
      $region43: #{_lambda_.6} parent=39 // pred_region
        %p3080 = scmp.lt.s32.totalorder %s15, 1
        %s3081 = scalar_select %p3080, %s15, 1
        %s3082 = smul.addr %s3081, 32
        %s3083 = smul.addr %s3082, 4
        %s3084 = scalar_lea.vmem %s3, %s3083
      $region44: #{_lambda_.6} parent=39 // pred_fallthru
        _
    $region40: #{_lambda_.6} parent=5 // pred_fallthru
      _
  $region6: #{_lambda_.6} parent=0 // loop_footer
    %s13 = sadd.s32 1, %s9
  $region7: #{_lambda_.6} parent=0 // loop_footer_branch
    %8 = sbr.rel target = $region3
  $region8: #{_lambda_.6} parent=0 // loop_exit
    _

// kernel: _lambda_.7
$region0: #{_lambda_.7}
  #allocation0 [shape = 'u32[]', space=smem, size = 0x4, offset = 0x4, fixed_abs, tag = 'smem constant byte address 0x4 - core index']
  #allocation1 [shape = 'u32[72,128]{1,0:T(1,128)}', space=vmem, size = 0x9000, scoped, tag = 'internal scratch']
  %s0 = inlined_call_operand.vmem [shape: bf16[2,36,9,128], index: 0, kind: input, shape index: {}]
  %s1 = inlined_call_operand.vmem [shape: bf16[9,128,128], index: 1, kind: input, shape index: {}]
  %s2 = inlined_call_operand.vmem [shape: f32[1,128], index: 2, kind: input, shape index: {}]
  %s3 = inlined_call_operand.vmem [shape: bf16[2,8,8,128], index: 3, kind: output, shape index: {}]
  %s4 = sld [smem:[#allocation0]]
  $region45: #{_lambda_.7} parent=0
    _
  %s6 = ssub.s32 1, %s4
  %s7 = scalar_select 0, %s6, %s4
  loop: start=0, step=1, limit=4
  $region2: #{_lambda_.7} parent=0 // loop_pre_header
    _
  $region3: #{_lambda_.7} parent=0 // loop_header
    %s9 = sphi 0, %s13
    %p10 = scmp.ge.s32.totalorder %s9, 4
    %s19 = sphi 0, %s21
    %s22 = sphi 0, %s19
    %s23 = sphi 0, %s22
    %s39 = sphi 0, %s23
    %s43 = sphi 0, %s43
    %s45 = sphi 0, %s43
    %s46 = sphi 0, %s45
    %s60 = sphi 0, %s46
    %s64 = sphi 0, %s64
    %s66 = sphi 0, %s64
    %s67 = sphi 0, %s66
    %s81 = sphi 0, %s67
    %s87 = sphi 0, %s89
    %s90 = sphi 0, %s87
    %s91 = sphi 0, %s90
    %s107 = sphi 0, %s91
  $region4: #{_lambda_.7} parent=0 // loop_header_branch
    %12 = sbr.rel (%p10) target = $region8
  $region5: #{_lambda_.7} parent=0 // loop_body
    %s14 = ssub.s32 %s9, 1
    %s15 = ssub.s32 %s9, 2
    %s16 = sadd.s32 %s9, 1
    %s17 = ssub.s32 %s9, %s16
    %p18 = scmp.eq.s32.totalorder %s17, 0
    %s20 = sadd.s32 %s19, 1
    %s21 = scalar_select %p18, %s19, %s20
    %p24 = pneg %p18
    %p25 = scmp.eq.s32.totalorder %s9, 1
    %p26 = por %p24, %p25
    %p27 = scmp.ne.s32.totalorder %s19, %s22
    %p28 = scmp.eq.s32.totalorder %s9, 0
    %p29 = por %p27, %p28
    %p30 = scmp.ne.s32.totalorder %s19, %s22
    %p31 = scmp.eq.s32.totalorder %s14, 1
    %p32 = por %p30, %p31
    %p33 = scmp.ne.s32.totalorder %s22, %s23
    %p34 = scmp.eq.s32.totalorder %s14, 0
    %p35 = por %p33, %p34
    %p36 = scmp.ne.s32.totalorder %s22, %s23
    %p37 = scmp.eq.s32.totalorder %s15, 1
    %p38 = por %p36, %p37
    %p40 = scmp.ne.s32.totalorder %s23, %s39
    %p41 = scmp.eq.s32.totalorder %s15, 0
    %p42 = por %p40, %p41
    %s44 = sadd.s32 %s43, 1
    %p47 = scmp.eq.s32.totalorder %s9, 1
    %p48 = scmp.ne.s32.totalorder %s43, %s45
    %p49 = scmp.eq.s32.totalorder %s9, 0
    %p50 = por %p48, %p49
    %p51 = scmp.ne.s32.totalorder %s43, %s45
    %p52 = scmp.eq.s32.totalorder %s14, 1
    %p53 = por %p51, %p52
    %p54 = scmp.ne.s32.totalorder %s45, %s46
    %p55 = scmp.eq.s32.totalorder %s14, 0
    %p56 = por %p54, %p55
    %p57 = scmp.ne.s32.totalorder %s45, %s46
    %p58 = scmp.eq.s32.totalorder %s15, 1
    %p59 = por %p57, %p58
    %p61 = scmp.ne.s32.totalorder %s46, %s60
    %p62 = scmp.eq.s32.totalorder %s15, 0
    %p63 = por %p61, %p62
    %s65 = sadd.s32 %s64, 1
    %p68 = scmp.eq.s32.totalorder %s9, 1
    %p69 = scmp.ne.s32.totalorder %s64, %s66
    %p70 = scmp.eq.s32.totalorder %s9, 0
    %p71 = por %p69, %p70
    %p72 = scmp.ne.s32.totalorder %s64, %s66
    %p73 = scmp.eq.s32.totalorder %s14, 1
    %p74 = por %p72, %p73
    %p75 = scmp.ne.s32.totalorder %s66, %s67
    %p76 = scmp.eq.s32.totalorder %s14, 0
    %p77 = por %p75, %p76
    %p78 = scmp.ne.s32.totalorder %s66, %s67
    %p79 = scmp.eq.s32.totalorder %s15, 1
    %p80 = por %p78, %p79
    %p82 = scmp.ne.s32.totalorder %s67, %s81
    %p83 = scmp.eq.s32.totalorder %s15, 0
    %p84 = por %p82, %p83
    %s85 = ssub.s32 %s9, %s16
    %p86 = scmp.eq.s32.totalorder %s85, 0
    %s88 = sadd.s32 %s87, 1
    %s89 = scalar_select %p86, %s87, %s88
    %p92 = pneg %p86
    %p93 = scmp.eq.s32.totalorder %s9, 1
    %p94 = por %p92, %p93
    %p95 = scmp.ne.s32.totalorder %s87, %s90
    %p96 = scmp.eq.s32.totalorder %s9, 0
    %p97 = por %p95, %p96
    %p98 = scmp.ne.s32.totalorder %s87, %s90
    %p99 = scmp.eq.s32.totalorder %s14, 1
    %p100 = por %p98, %p99
    %p101 = scmp.ne.s32.totalorder %s90, %s91
    %p102 = scmp.eq.s32.totalorder %s14, 0
    %p103 = por %p101, %p102
    %p104 = scmp.ne.s32.totalorder %s90, %s91
    %p105 = scmp.eq.s32.totalorder %s15, 1
    %p106 = por %p104, %p105
    %p108 = scmp.ne.s32.totalorder %s91, %s107
    %p109 = scmp.eq.s32.totalorder %s15, 0
    %p110 = por %p108, %p109
    %p111 = scmp.le.s32.totalorder 1, %s9
    %p112 = scmp.lt.s32.totalorder %s9, 3
    %p113 = pnand %p111, %p112
    %p114 = pneg %p113
    // Predicated region
    $region9: #{_lambda_.7} parent=5 // pred_check
      _
    $region10: #{_lambda_.7} parent=5 // pred_check_branch
      %116 = sbr.rel (%p113) target = $region12
    $region11: #{_lambda_.7} parent=5 // pred_region
      %s117 = ssub.s32 %s9, 1
      // Predicated region
      $region13: #{_lambda_.7} parent=11 // pred_check
        %p118 = pneg %p56
      $region14: #{_lambda_.7} parent=11 // pred_check_branch
        %120 = sbr.rel (%p118) target = $region16
      $region15: #{_lambda_.7} parent=11 // pred_region
        _
      $region16: #{_lambda_.7} parent=11 // pred_fallthru
        _
      // Predicated region
      $region17: #{_lambda_.7} parent=11 // pred_check
        %p121 = pneg %p77
      $region18: #{_lambda_.7} parent=11 // pred_check_branch
        %123 = sbr.rel (%p121) target = $region20
      $region19: #{_lambda_.7} parent=11 // pred_region
        _
      $region20: #{_lambda_.7} parent=11 // pred_fallthru
        _
    $region12: #{_lambda_.7} parent=5 // pred_fallthru
      _
    %p124 = scmp.lt.s32.totalorder %s9, 2
    // Predicated region
    $region21: #{_lambda_.7} parent=5 // pred_check
      %p125 = pneg %p124
    $region22: #{_lambda_.7} parent=5 // pred_check_branch
      %127 = sbr.rel (%p125) target = $region24
    $region23: #{_lambda_.7} parent=5 // pred_region
      // Predicated region
      $region25: #{_lambda_.7} parent=23 // pred_check
        %p128 = pneg %p29
      $region26: #{_lambda_.7} parent=23 // pred_check_branch
        %130 = sbr.rel (%p128) target = $region28
      $region27: #{_lambda_.7} parent=23 // pred_region
        %p131 = scmp.lt.s32.totalorder %s9, 1
        %s132 = scalar_select %p131, %s9, 1
        %s133 = smul.addr %s132, 72
        %s134 = smul.addr %s133, 4
        %s135 = scalar_lea.vmem %s0, %s134
      $region28: #{_lambda_.7} parent=23 // pred_fallthru
        _
    $region24: #{_lambda_.7} parent=5 // pred_fallthru
      _
    %p136 = scmp.le.s32.totalorder 1, %s9
    %p137 = scmp.lt.s32.totalorder %s9, 3
    %p138 = pnand %p136, %p137
    %p139 = pneg %p138
    // Predicated region
    $region29: #{_lambda_.7} parent=5 // pred_check
      _
    $region30: #{_lambda_.7} parent=5 // pred_check_branch
      %141 = sbr.rel (%p138) target = $region32
    $region31: #{_lambda_.7} parent=5 // pred_region
      %s142 = ssub.s32 %s9, 1
      %p143 = scmp.lt.s32.totalorder %s14, 1
      %s144 = scalar_select %p143, %s14, 1
      %s145 = smul.addr %s144, 72
      %s146 = smul.addr %s145, 4
      %s147 = scalar_lea.vmem %s0, %s146
      %p148 = pneg %p35
      %p149 = pneg %p32
      %p150 = pneg %p56
      %p151 = pneg %p53
      %p152 = pneg %p77
      %p153 = pneg %p74
      %p154 = pneg %p103
      %p155 = pneg %p100
      %p156 = scmp.lt.s32.totalorder %s14, 1
      %s157 = scalar_select %p156, %s14, 1
      %s158 = smul.addr %s157, 8
      %s159 = smul.addr %s158, 4
      %s160 = scalar_lea.vmem %s3, %s159
      %p161 = scmp.lt.s32.totalorder %s14, 1
      %s162 = scalar_select %p161, %s14, 1
      %s163 = smul.addr %s162, 72
      %s164 = smul.addr %s163, 4
      %s165 = scalar_lea.vmem %s0, %s164
      %p166 = scmp.lt.s32.totalorder %s14, 1
      %s167 = scalar_select %p166, %s14, 1
      %s168 = smul.addr %s167, 8
      %s169 = smul.addr %s168, 4
      %s170 = scalar_lea.vmem %s3, %s169
      %v171 = vld [vmem:[%s165] sm:$0xf]
      %v172 = vld [vmem:[%s165 + $0x4] sm:$0x1]
      %v173 = vld [vmem:[%s165 + $0x8] sm:$0xf]
      %v174 = vld [vmem:[%s165 + $0xc] sm:$0x1]
      %v175 = vld [vmem:[%s165 + $0x10] sm:$0xf]
      %v176 = vld [vmem:[%s165 + $0x14] sm:$0x1]
      %v177 = vld [vmem:[%s165 + $0x18] sm:$0xf]
      %v178 = vld [vmem:[%s165 + $0x1c] sm:$0x1]
      %v179 = vld [vmem:[%s165 + $0x20] sm:$0xf]
      %v180 = vld [vmem:[%s165 + $0x24] sm:$0x1]
      %v181 = vld [vmem:[%s165 + $0x28] sm:$0xf]
      %v182 = vld [vmem:[%s165 + $0x2c] sm:$0x1]
      %v183 = vld [vmem:[%s165 + $0x30] sm:$0xf]
      %v184 = vld [vmem:[%s165 + $0x34] sm:$0x1]
      %v185 = vld [vmem:[%s165 + $0x38] sm:$0xf]
      %v186 = vld [vmem:[%s165 + $0x3c] sm:$0x1]
      %v187 = vld [vmem:[%s165 + $0x40] sm:$0xf]
      %v188 = vld [vmem:[%s165 + $0x44] sm:$0x1]
      %v189 = vld [vmem:[%s165 + $0x48] sm:$0xf]
      %v190 = vld [vmem:[%s165 + $0x50] sm:$0xf]
      %v191 = vld [vmem:[%s165 + $0x58] sm:$0xf]
      %v192 = vld [vmem:[%s165 + $0x60] sm:$0xf]
      %v193 = vld [vmem:[%s165 + $0x68] sm:$0xf]
      %v194 = vld [vmem:[%s165 + $0x70] sm:$0xf]
      %v195 = vld [vmem:[%s165 + $0x78] sm:$0xf]
      %v196 = vld [vmem:[%s165 + $0x80] sm:$0xf]
      %v197 = vld [vmem:[%s165 + $0x88] sm:$0xf]
      %v198 = vld [vmem:[%s165 + $0x90] sm:$0xf]
      %v199 = vld [vmem:[%s165 + $0x94] sm:$0x1]
      %v200 = vld [vmem:[%s165 + $0x98] sm:$0xf]
      %v201 = vld [vmem:[%s165 + $0x9c] sm:$0x1]
      %v202 = vld [vmem:[%s165 + $0xa0] sm:$0xf]
      %v203 = vld [vmem:[%s165 + $0xa4] sm:$0x1]
      %v204 = vld [vmem:[%s165 + $0xa8] sm:$0xf]
      %v205 = vld [vmem:[%s165 + $0xac] sm:$0x1]
      %v206 = vld [vmem:[%s165 + $0xb0] sm:$0xf]
      %v207 = vld [vmem:[%s165 + $0xb4] sm:$0x1]
      %v208 = vld [vmem:[%s165 + $0xb8] sm:$0xf]
      %v209 = vld [vmem:[%s165 + $0xbc] sm:$0x1]
      %v210 = vld [vmem:[%s165 + $0xc0] sm:$0xf]
      %v211 = vld [vmem:[%s165 + $0xc4] sm:$0x1]
      %v212 = vld [vmem:[%s165 + $0xc8] sm:$0xf]
      %v213 = vld [vmem:[%s165 + $0xcc] sm:$0x1]
      %v214 = vld [vmem:[%s165 + $0xd8] sm:$0xf]
      %v215 = vld [vmem:[%s165 + $0xe0] sm:$0xf]
      %v216 = vld [vmem:[%s165 + $0xe8] sm:$0xf]
      %v217 = vld [vmem:[%s165 + $0xf0] sm:$0xf]
      %v218 = vld [vmem:[%s165 + $0xf8] sm:$0xf]
      %v219 = vld [vmem:[%s165 + $0x100] sm:$0xf]
      %v220 = vld [vmem:[%s165 + $0x108] sm:$0xf]
      %v221 = vld [vmem:[%s165 + $0x110] sm:$0xf]
      %v222 = vld [vmem:[%s1] sm:$0xf]
      %v223 = vld [vmem:[%s1 + $0x4] sm:$0xf]
      %v224 = vld [vmem:[%s1 + $0x8] sm:$0xf]
      %v225 = vld [vmem:[%s1 + $0xc] sm:$0xf]
      %v226 = vld [vmem:[%s1 + $0x10] sm:$0xf]
      %v227 = vld [vmem:[%s1 + $0x14] sm:$0xf]
      %v228 = vld [vmem:[%s1 + $0x18] sm:$0xf]
      %v229 = vld [vmem:[%s1 + $0x1c] sm:$0xf]
      %v230 = vld [vmem:[%s1 + $0x20] sm:$0xf]
      %v231 = vld [vmem:[%s1 + $0x24] sm:$0xf]
      %v232 = vld [vmem:[%s1 + $0x28] sm:$0xf]
      %v233 = vld [vmem:[%s1 + $0x2c] sm:$0xf]
      %v234 = vld [vmem:[%s1 + $0x30] sm:$0xf]
      %v235 = vld [vmem:[%s1 + $0x34] sm:$0xf]
      %v236 = vld [vmem:[%s1 + $0x38] sm:$0xf]
      %v237 = vld [vmem:[%s1 + $0x3c] sm:$0xf]
      %s238 = scalar_lea.vmem %s1, 64
      %v239 = vld [vmem:[%s238] sm:$0xf]
      %v240 = vld [vmem:[%s238 + $0x4] sm:$0xf]
      %v241 = vld [vmem:[%s238 + $0x8] sm:$0xf]
      %v242 = vld [vmem:[%s238 + $0xc] sm:$0xf]
      %v243 = vld [vmem:[%s238 + $0x10] sm:$0xf]
      %v244 = vld [vmem:[%s238 + $0x14] sm:$0xf]
      %v245 = vld [vmem:[%s238 + $0x18] sm:$0xf]
      %v246 = vld [vmem:[%s238 + $0x1c] sm:$0xf]
      %v247 = vld [vmem:[%s238 + $0x20] sm:$0xf]
      %v248 = vld [vmem:[%s238 + $0x24] sm:$0xf]
      %v249 = vld [vmem:[%s238 + $0x28] sm:$0xf]
      %v250 = vld [vmem:[%s238 + $0x2c] sm:$0xf]
      %v251 = vld [vmem:[%s238 + $0x30] sm:$0xf]
      %v252 = vld [vmem:[%s238 + $0x34] sm:$0xf]
      %v253 = vld [vmem:[%s238 + $0x38] sm:$0xf]
      %v254 = vld [vmem:[%s238 + $0x3c] sm:$0xf]
      %v263 = vunpack.c.l.b16 %v189
      %v264 = vunpack.c.l.b16 %v190
      %v265 = vunpack.c.l.b16 %v191
      %v266 = vunpack.c.l.b16 %v192
      %v267 = vunpack.c.l.b16 %v193
      %v268 = vunpack.c.l.b16 %v194
      %v269 = vunpack.c.l.b16 %v195
      %v270 = vunpack.c.l.b16 %v196
      %v271 = vpack.c.b16 %v264, %v263
      %v272 = vpack.c.b16 %v266, %v265
      %v273 = vpack.c.b16 %v268, %v267
      %v274 = vpack.c.b16 %v270, %v269
      %v295 = vunpack.c.l.b16 %v239
      %v296 = vunpack.c.l.b16 %v240
      %v297 = vunpack.c.l.b16 %v241
      %v298 = vunpack.c.l.b16 %v242
      %v299 = vunpack.c.l.b16 %v243
      %v300 = vunpack.c.l.b16 %v244
      %v301 = vunpack.c.l.b16 %v245
      %v302 = vunpack.c.l.b16 %v246
      %v303 = vunpack.c.l.b16 %v247
      %v304 = vunpack.c.l.b16 %v248
      %v305 = vunpack.c.l.b16 %v249
      %v306 = vunpack.c.l.b16 %v250
      %v307 = vunpack.c.l.b16 %v251
      %v308 = vunpack.c.l.b16 %v252
      %v309 = vunpack.c.l.b16 %v253
      %v310 = vunpack.c.l.b16 %v254
      %v311 = vpack.c.b16 %v296, %v295
      %v312 = vpack.c.b16 %v298, %v297
      %v313 = vpack.c.b16 %v300, %v299
      %v314 = vpack.c.b16 %v302, %v301
      %v315 = vpack.c.b16 %v304, %v303
      %v316 = vpack.c.b16 %v306, %v305
      %v317 = vpack.c.b16 %v308, %v307
      %v318 = vpack.c.b16 %v310, %v309
      %327 = vmatpush.bf16.msra.mxu0 %v318
      %328 = vmatpush.bf16.msra.mxu0 %v317
      %329 = vmatpush.bf16.msra.mxu0 %v316
      %330 = vmatpush.bf16.msra.mxu0 %v315
      %331 = vmatpush.bf16.msra.mxu0 %v314
      %332 = vmatpush.bf16.msra.mxu0 %v313
      %333 = vmatpush.bf16.msra.mxu0 %v312
      %334 = vmatpush.bf16.msra.mxu0 %v311
      %335 = vmatmul.bf16.gmra.mxu0 %v271
      %v336 = vpop.f32.mrf.mxu0
      %v337 = vadd.f32 0.0, %v336
      %v338 = vpop.f32.mrf.mxu0
      %v339 = vadd.f32 0.0, %v338
      %340 = vmatmul.bf16.gmra.mxu0 %v272
      %v341 = vpop.f32.mrf.mxu0
      %v342 = vadd.f32 0.0, %v341
      %v343 = vpop.f32.mrf.mxu0
      %v344 = vadd.f32 0.0, %v343
      %345 = vmatmul.bf16.gmra.mxu0 %v273
      %v346 = vpop.f32.mrf.mxu0
      %v347 = vadd.f32 0.0, %v346
      %v348 = vpop.f32.mrf.mxu0
      %v349 = vadd.f32 0.0, %v348
      %350 = vmatmul.bf16.gmra.mxu0 %v274
      %v351 = vpop.f32.mrf.mxu0
      %v352 = vadd.f32 0.0, %v351
      %v353 = vpop.f32.mrf.mxu0
      %v354 = vadd.f32 0.0, %v353
      %355 = vdwg.mxu0
      %v364 = vunpack.c.l.b16 %v171
      %v365 = vunpack.c.l.b16 %v173
      %v366 = vunpack.c.l.b16 %v175
      %v367 = vunpack.c.l.b16 %v177
      %v368 = vunpack.c.l.b16 %v179
      %v369 = vunpack.c.l.b16 %v181
      %v370 = vunpack.c.l.b16 %v183
      %v371 = vunpack.c.l.b16 %v185
      %v372 = vpack.c.b16 %v365, %v364
      %v373 = vpack.c.b16 %v367, %v366
      %v374 = vpack.c.b16 %v369, %v368
      %v375 = vpack.c.b16 %v371, %v370
      %v396 = vunpack.c.l.b16 %v222
      %v397 = vunpack.c.l.b16 %v223
      %v398 = vunpack.c.l.b16 %v224
      %v399 = vunpack.c.l.b16 %v225
      %v400 = vunpack.c.l.b16 %v226
      %v401 = vunpack.c.l.b16 %v227
      %v402 = vunpack.c.l.b16 %v228
      %v403 = vunpack.c.l.b16 %v229
      %v404 = vunpack.c.l.b16 %v230
      %v405 = vunpack.c.l.b16 %v231
      %v406 = vunpack.c.l.b16 %v232
      %v407 = vunpack.c.l.b16 %v233
      %v408 = vunpack.c.l.b16 %v234
      %v409 = vunpack.c.l.b16 %v235
      %v410 = vunpack.c.l.b16 %v236
      %v411 = vunpack.c.l.b16 %v237
      %v412 = vpack.c.b16 %v397, %v396
      %v413 = vpack.c.b16 %v399, %v398
      %v414 = vpack.c.b16 %v401, %v400
      %v415 = vpack.c.b16 %v403, %v402
      %v416 = vpack.c.b16 %v405, %v404
      %v417 = vpack.c.b16 %v407, %v406
      %v418 = vpack.c.b16 %v409, %v408
      %v419 = vpack.c.b16 %v411, %v410
      %428 = vmatpush.bf16.msra.mxu0 %v419
      %429 = vmatpush.bf16.msra.mxu0 %v418
      %430 = vmatpush.bf16.msra.mxu0 %v417
      %431 = vmatpush.bf16.msra.mxu0 %v416
      %432 = vmatpush.bf16.msra.mxu0 %v415
      %433 = vmatpush.bf16.msra.mxu0 %v414
      %434 = vmatpush.bf16.msra.mxu0 %v413
      %435 = vmatpush.bf16.msra.mxu0 %v412
      %436 = vmatmul.bf16.gmra.mxu0 %v372
      %v437 = vpop.f32.mrf.mxu0
      %v438 = vadd.f32 %v337, %v437
      %v439 = vpop.f32.mrf.mxu0
      %v440 = vadd.f32 %v339, %v439
      %441 = vmatmul.bf16.gmra.mxu0 %v373
      %v442 = vpop.f32.mrf.mxu0
      %v443 = vadd.f32 %v342, %v442
      %v444 = vpop.f32.mrf.mxu0
      %v445 = vadd.f32 %v344, %v444
      %446 = vmatmul.bf16.gmra.mxu0 %v374
      %v447 = vpop.f32.mrf.mxu0
      %v448 = vadd.f32 %v347, %v447
      %v449 = vpop.f32.mrf.mxu0
      %v450 = vadd.f32 %v349, %v449
      %451 = vmatmul.bf16.gmra.mxu0 %v375
      %v452 = vpop.f32.mrf.mxu0
      %v453 = vadd.f32 %v352, %v452
      %v454 = vpop.f32.mrf.mxu0
      %v455 = vadd.f32 %v354, %v454
      %456 = vdwg.mxu0
      %vm457 = vsmask.f32 3328
      %vm458 = vsmask.f32 7440
      %vm459 = vmor %vm457, %vm458
      %v461 = vshrl.u32 %v171, 16
      %v463 = vrot.slane %v461, 4
      %v464 = vshll.u32 %v171, 16
      %v466 = vrot.slane %v464, 5
      %v467 = vor.u32 %v463, %v466
      %v468 = vrot.slane %v467, 4
      %v470 = vshll.u32 %v172, 16
      %v472 = vrot.slane %v470, 5
      %v473 = vsel %vm459, %v468, %v472
      %v475 = vshrl.u32 %v173, 16
      %v477 = vrot.slane %v475, 4
      %v478 = vshll.u32 %v173, 16
      %v480 = vrot.slane %v478, 5
      %v481 = vor.u32 %v477, %v480
      %v482 = vrot.slane %v481, 4
      %v484 = vshll.u32 %v174, 16
      %v486 = vrot.slane %v484, 5
      %v487 = vsel %vm459, %v482, %v486
      %v489 = vshrl.u32 %v175, 16
      %v491 = vrot.slane %v489, 4
      %v492 = vshll.u32 %v175, 16
      %v494 = vrot.slane %v492, 5
      %v495 = vor.u32 %v491, %v494
      %v496 = vrot.slane %v495, 4
      %v498 = vshll.u32 %v176, 16
      %v500 = vrot.slane %v498, 5
      %v501 = vsel %vm459, %v496, %v500
      %v503 = vshrl.u32 %v177, 16
      %v505 = vrot.slane %v503, 4
      %v506 = vshll.u32 %v177, 16
      %v508 = vrot.slane %v506, 5
      %v509 = vor.u32 %v505, %v508
      %v510 = vrot.slane %v509, 4
      %v512 = vshll.u32 %v178, 16
      %v514 = vrot.slane %v512, 5
      %v515 = vsel %vm459, %v510, %v514
      %v517 = vshrl.u32 %v179, 16
      %v519 = vrot.slane %v517, 4
      %v520 = vshll.u32 %v179, 16
      %v522 = vrot.slane %v520, 5
      %v523 = vor.u32 %v519, %v522
      %v524 = vrot.slane %v523, 4
      %v526 = vshll.u32 %v180, 16
      %v528 = vrot.slane %v526, 5
      %v529 = vsel %vm459, %v524, %v528
      %v531 = vshrl.u32 %v181, 16
      %v533 = vrot.slane %v531, 4
      %v534 = vshll.u32 %v181, 16
      %v536 = vrot.slane %v534, 5
      %v537 = vor.u32 %v533, %v536
      %v538 = vrot.slane %v537, 4
      %v540 = vshll.u32 %v182, 16
      %v542 = vrot.slane %v540, 5
      %v543 = vsel %vm459, %v538, %v542
      %v545 = vshrl.u32 %v183, 16
      %v547 = vrot.slane %v545, 4
      %v548 = vshll.u32 %v183, 16
      %v550 = vrot.slane %v548, 5
      %v551 = vor.u32 %v547, %v550
      %v552 = vrot.slane %v551, 4
      %v554 = vshll.u32 %v184, 16
      %v556 = vrot.slane %v554, 5
      %v557 = vsel %vm459, %v552, %v556
      %v559 = vshrl.u32 %v185, 16
      %v561 = vrot.slane %v559, 4
      %v562 = vshll.u32 %v185, 16
      %v564 = vrot.slane %v562, 5
      %v565 = vor.u32 %v561, %v564
      %v566 = vrot.slane %v565, 4
      %v568 = vshll.u32 %v186, 16
      %v570 = vrot.slane %v568, 5
      %v571 = vsel %vm459, %v566, %v570
      %s572 = scalar_lea.vmem %s1, 128
      %v573 = vld [vmem:[%s572] sm:$0xf]
      %v574 = vld [vmem:[%s572 + $0x4] sm:$0xf]
      %v575 = vld [vmem:[%s572 + $0x8] sm:$0xf]
      %v576 = vld [vmem:[%s572 + $0xc] sm:$0xf]
      %v577 = vld [vmem:[%s572 + $0x10] sm:$0xf]
      %v578 = vld [vmem:[%s572 + $0x14] sm:$0xf]
      %v579 = vld [vmem:[%s572 + $0x18] sm:$0xf]
      %v580 = vld [vmem:[%s572 + $0x1c] sm:$0xf]
      %v581 = vld [vmem:[%s572 + $0x20] sm:$0xf]
      %v582 = vld [vmem:[%s572 + $0x24] sm:$0xf]
      %v583 = vld [vmem:[%s572 + $0x28] sm:$0xf]
      %v584 = vld [vmem:[%s572 + $0x2c] sm:$0xf]
      %v585 = vld [vmem:[%s572 + $0x30] sm:$0xf]
      %v586 = vld [vmem:[%s572 + $0x34] sm:$0xf]
      %v587 = vld [vmem:[%s572 + $0x38] sm:$0xf]
      %v588 = vld [vmem:[%s572 + $0x3c] sm:$0xf]
      %v589 = vunpack.c.l.b16 %v473
      %v590 = vunpack.c.l.b16 %v487
      %v591 = vunpack.c.l.b16 %v501
      %v592 = vunpack.c.l.b16 %v515
      %v593 = vunpack.c.l.b16 %v529
      %v594 = vunpack.c.l.b16 %v543
      %v595 = vunpack.c.l.b16 %v557
      %v596 = vunpack.c.l.b16 %v571
      %v597 = vpack.c.b16 %v590, %v589
      %v598 = vpack.c.b16 %v592, %v591
      %v599 = vpack.c.b16 %v594, %v593
      %v600 = vpack.c.b16 %v596, %v595
      %v621 = vunpack.c.l.b16 %v573
      %v622 = vunpack.c.l.b16 %v574
      %v623 = vunpack.c.l.b16 %v575
      %v624 = vunpack.c.l.b16 %v576
      %v625 = vunpack.c.l.b16 %v577
      %v626 = vunpack.c.l.b16 %v578
      %v627 = vunpack.c.l.b16 %v579
      %v628 = vunpack.c.l.b16 %v580
      %v629 = vunpack.c.l.b16 %v581
      %v630 = vunpack.c.l.b16 %v582
      %v631 = vunpack.c.l.b16 %v583
      %v632 = vunpack.c.l.b16 %v584
      %v633 = vunpack.c.l.b16 %v585
      %v634 = vunpack.c.l.b16 %v586
      %v635 = vunpack.c.l.b16 %v587
      %v636 = vunpack.c.l.b16 %v588
      %v637 = vpack.c.b16 %v622, %v621
      %v638 = vpack.c.b16 %v624, %v623
      %v639 = vpack.c.b16 %v626, %v625
      %v640 = vpack.c.b16 %v628, %v627
      %v641 = vpack.c.b16 %v630, %v629
      %v642 = vpack.c.b16 %v632, %v631
      %v643 = vpack.c.b16 %v634, %v633
      %v644 = vpack.c.b16 %v636, %v635
      %653 = vmatpush.bf16.msra.mxu0 %v644
      %654 = vmatpush.bf16.msra.mxu0 %v643
      %655 = vmatpush.bf16.msra.mxu0 %v642
      %656 = vmatpush.bf16.msra.mxu0 %v641
      %657 = vmatpush.bf16.msra.mxu0 %v640
      %658 = vmatpush.bf16.msra.mxu0 %v639
      %659 = vmatpush.bf16.msra.mxu0 %v638
      %660 = vmatpush.bf16.msra.mxu0 %v637
      %661 = vmatmul.bf16.gmra.mxu0 %v597
      %v662 = vpop.f32.mrf.mxu0
      %v663 = vadd.f32 0.0, %v662
      %v664 = vpop.f32.mrf.mxu0
      %v665 = vadd.f32 0.0, %v664
      %666 = vmatmul.bf16.gmra.mxu0 %v598
      %v667 = vpop.f32.mrf.mxu0
      %v668 = vadd.f32 0.0, %v667
      %v669 = vpop.f32.mrf.mxu0
      %v670 = vadd.f32 0.0, %v669
      %671 = vmatmul.bf16.gmra.mxu0 %v599
      %v672 = vpop.f32.mrf.mxu0
      %v673 = vadd.f32 0.0, %v672
      %v674 = vpop.f32.mrf.mxu0
      %v675 = vadd.f32 0.0, %v674
      %676 = vmatmul.bf16.gmra.mxu0 %v600
      %v677 = vpop.f32.mrf.mxu0
      %v678 = vadd.f32 0.0, %v677
      %v679 = vpop.f32.mrf.mxu0
      %v680 = vadd.f32 0.0, %v679
      %681 = vdwg.mxu0
      %v682 = vadd.f32 %v438, %v663
      %v683 = vadd.f32 %v440, %v665
      %v684 = vadd.f32 %v443, %v668
      %v685 = vadd.f32 %v445, %v670
      %v686 = vadd.f32 %v448, %v673
      %v687 = vadd.f32 %v450, %v675
      %v688 = vadd.f32 %v453, %v678
      %v689 = vadd.f32 %v455, %v680
      %s690 = scalar_lea.vmem %s1, 192
      %v691 = vld [vmem:[%s690] sm:$0xf]
      %v692 = vld [vmem:[%s690 + $0x4] sm:$0xf]
      %v693 = vld [vmem:[%s690 + $0x8] sm:$0xf]
      %v694 = vld [vmem:[%s690 + $0xc] sm:$0xf]
      %v695 = vld [vmem:[%s690 + $0x10] sm:$0xf]
      %v696 = vld [vmem:[%s690 + $0x14] sm:$0xf]
      %v697 = vld [vmem:[%s690 + $0x18] sm:$0xf]
      %v698 = vld [vmem:[%s690 + $0x1c] sm:$0xf]
      %v699 = vld [vmem:[%s690 + $0x20] sm:$0xf]
      %v700 = vld [vmem:[%s690 + $0x24] sm:$0xf]
      %v701 = vld [vmem:[%s690 + $0x28] sm:$0xf]
      %v702 = vld [vmem:[%s690 + $0x2c] sm:$0xf]
      %v703 = vld [vmem:[%s690 + $0x30] sm:$0xf]
      %v704 = vld [vmem:[%s690 + $0x34] sm:$0xf]
      %v705 = vld [vmem:[%s690 + $0x38] sm:$0xf]
      %v706 = vld [vmem:[%s690 + $0x3c] sm:$0xf]
      %v715 = vunpack.c.l.b16 %v198
      %v716 = vunpack.c.l.b16 %v200
      %v717 = vunpack.c.l.b16 %v202
      %v718 = vunpack.c.l.b16 %v204
      %v719 = vunpack.c.l.b16 %v206
      %v720 = vunpack.c.l.b16 %v208
      %v721 = vunpack.c.l.b16 %v210
      %v722 = vunpack.c.l.b16 %v212
      %v723 = vpack.c.b16 %v716, %v715
      %v724 = vpack.c.b16 %v718, %v717
      %v725 = vpack.c.b16 %v720, %v719
      %v726 = vpack.c.b16 %v722, %v721
      %v747 = vunpack.c.l.b16 %v691
      %v748 = vunpack.c.l.b16 %v692
      %v749 = vunpack.c.l.b16 %v693
      %v750 = vunpack.c.l.b16 %v694
      %v751 = vunpack.c.l.b16 %v695
      %v752 = vunpack.c.l.b16 %v696
      %v753 = vunpack.c.l.b16 %v697
      %v754 = vunpack.c.l.b16 %v698
      %v755 = vunpack.c.l.b16 %v699
      %v756 = vunpack.c.l.b16 %v700
      %v757 = vunpack.c.l.b16 %v701
      %v758 = vunpack.c.l.b16 %v702
      %v759 = vunpack.c.l.b16 %v703
      %v760 = vunpack.c.l.b16 %v704
      %v761 = vunpack.c.l.b16 %v705
      %v762 = vunpack.c.l.b16 %v706
      %v763 = vpack.c.b16 %v748, %v747
      %v764 = vpack.c.b16 %v750, %v749
      %v765 = vpack.c.b16 %v752, %v751
      %v766 = vpack.c.b16 %v754, %v753
      %v767 = vpack.c.b16 %v756, %v755
      %v768 = vpack.c.b16 %v758, %v757
      %v769 = vpack.c.b16 %v760, %v759
      %v770 = vpack.c.b16 %v762, %v761
      %779 = vmatpush.bf16.msra.mxu0 %v770
      %780 = vmatpush.bf16.msra.mxu0 %v769
      %781 = vmatpush.bf16.msra.mxu0 %v768
      %782 = vmatpush.bf16.msra.mxu0 %v767
      %783 = vmatpush.bf16.msra.mxu0 %v766
      %784 = vmatpush.bf16.msra.mxu0 %v765
      %785 = vmatpush.bf16.msra.mxu0 %v764
      %786 = vmatpush.bf16.msra.mxu0 %v763
      %787 = vmatmul.bf16.gmra.mxu0 %v723
      %v788 = vpop.f32.mrf.mxu0
      %v789 = vadd.f32 0.0, %v788
      %v790 = vpop.f32.mrf.mxu0
      %v791 = vadd.f32 0.0, %v790
      %792 = vmatmul.bf16.gmra.mxu0 %v724
      %v793 = vpop.f32.mrf.mxu0
      %v794 = vadd.f32 0.0, %v793
      %v795 = vpop.f32.mrf.mxu0
      %v796 = vadd.f32 0.0, %v795
      %797 = vmatmul.bf16.gmra.mxu0 %v725
      %v798 = vpop.f32.mrf.mxu0
      %v799 = vadd.f32 0.0, %v798
      %v800 = vpop.f32.mrf.mxu0
      %v801 = vadd.f32 0.0, %v800
      %802 = vmatmul.bf16.gmra.mxu0 %v726
      %v803 = vpop.f32.mrf.mxu0
      %v804 = vadd.f32 0.0, %v803
      %v805 = vpop.f32.mrf.mxu0
      %v806 = vadd.f32 0.0, %v805
      %807 = vdwg.mxu0
      %v808 = vadd.f32 %v682, %v789
      %v809 = vadd.f32 %v683, %v791
      %v810 = vadd.f32 %v684, %v794
      %v811 = vadd.f32 %v685, %v796
      %v812 = vadd.f32 %v686, %v799
      %v813 = vadd.f32 %v687, %v801
      %v814 = vadd.f32 %v688, %v804
      %v815 = vadd.f32 %v689, %v806
      %s816 = scalar_lea.vmem %s1, 256
      %v817 = vld [vmem:[%s816] sm:$0xf]
      %v818 = vld [vmem:[%s816 + $0x4] sm:$0xf]
      %v819 = vld [vmem:[%s816 + $0x8] sm:$0xf]
      %v820 = vld [vmem:[%s816 + $0xc] sm:$0xf]
      %v821 = vld [vmem:[%s816 + $0x10] sm:$0xf]
      %v822 = vld [vmem:[%s816 + $0x14] sm:$0xf]
      %v823 = vld [vmem:[%s816 + $0x18] sm:$0xf]
      %v824 = vld [vmem:[%s816 + $0x1c] sm:$0xf]
      %v825 = vld [vmem:[%s816 + $0x20] sm:$0xf]
      %v826 = vld [vmem:[%s816 + $0x24] sm:$0xf]
      %v827 = vld [vmem:[%s816 + $0x28] sm:$0xf]
      %v828 = vld [vmem:[%s816 + $0x2c] sm:$0xf]
      %v829 = vld [vmem:[%s816 + $0x30] sm:$0xf]
      %v830 = vld [vmem:[%s816 + $0x34] sm:$0xf]
      %v831 = vld [vmem:[%s816 + $0x38] sm:$0xf]
      %v832 = vld [vmem:[%s816 + $0x3c] sm:$0xf]
      %v841 = vunpack.c.l.b16 %v214
      %v842 = vunpack.c.l.b16 %v215
      %v843 = vunpack.c.l.b16 %v216
      %v844 = vunpack.c.l.b16 %v217
      %v845 = vunpack.c.l.b16 %v218
      %v846 = vunpack.c.l.b16 %v219
      %v847 = vunpack.c.l.b16 %v220
      %v848 = vunpack.c.l.b16 %v221
      %v849 = vpack.c.b16 %v842, %v841
      %v850 = vpack.c.b16 %v844, %v843
      %v851 = vpack.c.b16 %v846, %v845
      %v852 = vpack.c.b16 %v848, %v847
      %v873 = vunpack.c.l.b16 %v817
      %v874 = vunpack.c.l.b16 %v818
      %v875 = vunpack.c.l.b16 %v819
      %v876 = vunpack.c.l.b16 %v820
      %v877 = vunpack.c.l.b16 %v821
      %v878 = vunpack.c.l.b16 %v822
      %v879 = vunpack.c.l.b16 %v823
      %v880 = vunpack.c.l.b16 %v824
      %v881 = vunpack.c.l.b16 %v825
      %v882 = vunpack.c.l.b16 %v826
      %v883 = vunpack.c.l.b16 %v827
      %v884 = vunpack.c.l.b16 %v828
      %v885 = vunpack.c.l.b16 %v829
      %v886 = vunpack.c.l.b16 %v830
      %v887 = vunpack.c.l.b16 %v831
      %v888 = vunpack.c.l.b16 %v832
      %v889 = vpack.c.b16 %v874, %v873
      %v890 = vpack.c.b16 %v876, %v875
      %v891 = vpack.c.b16 %v878, %v877
      %v892 = vpack.c.b16 %v880, %v879
      %v893 = vpack.c.b16 %v882, %v881
      %v894 = vpack.c.b16 %v884, %v883
      %v895 = vpack.c.b16 %v886, %v885
      %v896 = vpack.c.b16 %v888, %v887
      %905 = vmatpush.bf16.msra.mxu0 %v896
      %906 = vmatpush.bf16.msra.mxu0 %v895
      %907 = vmatpush.bf16.msra.mxu0 %v894
      %908 = vmatpush.bf16.msra.mxu0 %v893
      %909 = vmatpush.bf16.msra.mxu0 %v892
      %910 = vmatpush.bf16.msra.mxu0 %v891
      %911 = vmatpush.bf16.msra.mxu0 %v890
      %912 = vmatpush.bf16.msra.mxu0 %v889
      %913 = vmatmul.bf16.gmra.mxu0 %v849
      %v914 = vpop.f32.mrf.mxu0
      %v915 = vadd.f32 0.0, %v914
      %v916 = vpop.f32.mrf.mxu0
      %v917 = vadd.f32 0.0, %v916
      %918 = vmatmul.bf16.gmra.mxu0 %v850
      %v919 = vpop.f32.mrf.mxu0
      %v920 = vadd.f32 0.0, %v919
      %v921 = vpop.f32.mrf.mxu0
      %v922 = vadd.f32 0.0, %v921
      %923 = vmatmul.bf16.gmra.mxu0 %v851
      %v924 = vpop.f32.mrf.mxu0
      %v925 = vadd.f32 0.0, %v924
      %v926 = vpop.f32.mrf.mxu0
      %v927 = vadd.f32 0.0, %v926
      %928 = vmatmul.bf16.gmra.mxu0 %v852
      %v929 = vpop.f32.mrf.mxu0
      %v930 = vadd.f32 0.0, %v929
      %v931 = vpop.f32.mrf.mxu0
      %v932 = vadd.f32 0.0, %v931
      %933 = vdwg.mxu0
      %v934 = vadd.f32 %v808, %v915
      %v935 = vadd.f32 %v809, %v917
      %v936 = vadd.f32 %v810, %v920
      %v937 = vadd.f32 %v811, %v922
      %v938 = vadd.f32 %v812, %v925
      %v939 = vadd.f32 %v813, %v927
      %v940 = vadd.f32 %v814, %v930
      %v941 = vadd.f32 %v815, %v932
      %v943 = vshrl.u32 %v198, 16
      %v945 = vrot.slane %v943, 4
      %v946 = vshll.u32 %v198, 16
      %v948 = vrot.slane %v946, 5
      %v949 = vor.u32 %v945, %v948
      %v950 = vrot.slane %v949, 4
      %v952 = vshll.u32 %v199, 16
      %v954 = vrot.slane %v952, 5
      %v955 = vsel %vm459, %v950, %v954
      %v957 = vshrl.u32 %v200, 16
      %v959 = vrot.slane %v957, 4
      %v960 = vshll.u32 %v200, 16
      %v962 = vrot.slane %v960, 5
      %v963 = vor.u32 %v959, %v962
      %v964 = vrot.slane %v963, 4
      %v966 = vshll.u32 %v201, 16
      %v968 = vrot.slane %v966, 5
      %v969 = vsel %vm459, %v964, %v968
      %v971 = vshrl.u32 %v202, 16
      %v973 = vrot.slane %v971, 4
      %v974 = vshll.u32 %v202, 16
      %v976 = vrot.slane %v974, 5
      %v977 = vor.u32 %v973, %v976
      %v978 = vrot.slane %v977, 4
      %v980 = vshll.u32 %v203, 16
      %v982 = vrot.slane %v980, 5
      %v983 = vsel %vm459, %v978, %v982
      %v985 = vshrl.u32 %v204, 16
      %v987 = vrot.slane %v985, 4
      %v988 = vshll.u32 %v204, 16
      %v990 = vrot.slane %v988, 5
      %v991 = vor.u32 %v987, %v990
      %v992 = vrot.slane %v991, 4
      %v994 = vshll.u32 %v205, 16
      %v996 = vrot.slane %v994, 5
      %v997 = vsel %vm459, %v992, %v996
      %v999 = vshrl.u32 %v206, 16
      %v1001 = vrot.slane %v999, 4
      %v1002 = vshll.u32 %v206, 16
      %v1004 = vrot.slane %v1002, 5
      %v1005 = vor.u32 %v1001, %v1004
      %v1006 = vrot.slane %v1005, 4
      %v1008 = vshll.u32 %v207, 16
      %v1010 = vrot.slane %v1008, 5
      %v1011 = vsel %vm459, %v1006, %v1010
      %v1013 = vshrl.u32 %v208, 16
      %v1015 = vrot.slane %v1013, 4
      %v1016 = vshll.u32 %v208, 16
      %v1018 = vrot.slane %v1016, 5
      %v1019 = vor.u32 %v1015, %v1018
      %v1020 = vrot.slane %v1019, 4
      %v1022 = vshll.u32 %v209, 16
      %v1024 = vrot.slane %v1022, 5
      %v1025 = vsel %vm459, %v1020, %v1024
      %v1027 = vshrl.u32 %v210, 16
      %v1029 = vrot.slane %v1027, 4
      %v1030 = vshll.u32 %v210, 16
      %v1032 = vrot.slane %v1030, 5
      %v1033 = vor.u32 %v1029, %v1032
      %v1034 = vrot.slane %v1033, 4
      %v1036 = vshll.u32 %v211, 16
      %v1038 = vrot.slane %v1036, 5
      %v1039 = vsel %vm459, %v1034, %v1038
      %v1041 = vshrl.u32 %v212, 16
      %v1043 = vrot.slane %v1041, 4
      %v1044 = vshll.u32 %v212, 16
      %v1046 = vrot.slane %v1044, 5
      %v1047 = vor.u32 %v1043, %v1046
      %v1048 = vrot.slane %v1047, 4
      %v1050 = vshll.u32 %v213, 16
      %v1052 = vrot.slane %v1050, 5
      %v1053 = vsel %vm459, %v1048, %v1052
      %s1054 = scalar_lea.vmem %s1, 320
      %v1055 = vld [vmem:[%s1054] sm:$0xf]
      %v1056 = vld [vmem:[%s1054 + $0x4] sm:$0xf]
      %v1057 = vld [vmem:[%s1054 + $0x8] sm:$0xf]
      %v1058 = vld [vmem:[%s1054 + $0xc] sm:$0xf]
      %v1059 = vld [vmem:[%s1054 + $0x10] sm:$0xf]
      %v1060 = vld [vmem:[%s1054 + $0x14] sm:$0xf]
      %v1061 = vld [vmem:[%s1054 + $0x18] sm:$0xf]
      %v1062 = vld [vmem:[%s1054 + $0x1c] sm:$0xf]
      %v1063 = vld [vmem:[%s1054 + $0x20] sm:$0xf]
      %v1064 = vld [vmem:[%s1054 + $0x24] sm:$0xf]
      %v1065 = vld [vmem:[%s1054 + $0x28] sm:$0xf]
      %v1066 = vld [vmem:[%s1054 + $0x2c] sm:$0xf]
      %v1067 = vld [vmem:[%s1054 + $0x30] sm:$0xf]
      %v1068 = vld [vmem:[%s1054 + $0x34] sm:$0xf]
      %v1069 = vld [vmem:[%s1054 + $0x38] sm:$0xf]
      %v1070 = vld [vmem:[%s1054 + $0x3c] sm:$0xf]
      %v1071 = vunpack.c.l.b16 %v955
      %v1072 = vunpack.c.l.b16 %v969
      %v1073 = vunpack.c.l.b16 %v983
      %v1074 = vunpack.c.l.b16 %v997
      %v1075 = vunpack.c.l.b16 %v1011
      %v1076 = vunpack.c.l.b16 %v1025
      %v1077 = vunpack.c.l.b16 %v1039
      %v1078 = vunpack.c.l.b16 %v1053
      %v1079 = vpack.c.b16 %v1072, %v1071
      %v1080 = vpack.c.b16 %v1074, %v1073
      %v1081 = vpack.c.b16 %v1076, %v1075
      %v1082 = vpack.c.b16 %v1078, %v1077
      %v1103 = vunpack.c.l.b16 %v1055
      %v1104 = vunpack.c.l.b16 %v1056
      %v1105 = vunpack.c.l.b16 %v1057
      %v1106 = vunpack.c.l.b16 %v1058
      %v1107 = vunpack.c.l.b16 %v1059
      %v1108 = vunpack.c.l.b16 %v1060
      %v1109 = vunpack.c.l.b16 %v1061
      %v1110 = vunpack.c.l.b16 %v1062
      %v1111 = vunpack.c.l.b16 %v1063
      %v1112 = vunpack.c.l.b16 %v1064
      %v1113 = vunpack.c.l.b16 %v1065
      %v1114 = vunpack.c.l.b16 %v1066
      %v1115 = vunpack.c.l.b16 %v1067
      %v1116 = vunpack.c.l.b16 %v1068
      %v1117 = vunpack.c.l.b16 %v1069
      %v1118 = vunpack.c.l.b16 %v1070
      %v1119 = vpack.c.b16 %v1104, %v1103
      %v1120 = vpack.c.b16 %v1106, %v1105
      %v1121 = vpack.c.b16 %v1108, %v1107
      %v1122 = vpack.c.b16 %v1110, %v1109
      %v1123 = vpack.c.b16 %v1112, %v1111
      %v1124 = vpack.c.b16 %v1114, %v1113
      %v1125 = vpack.c.b16 %v1116, %v1115
      %v1126 = vpack.c.b16 %v1118, %v1117
      %1135 = vmatpush.bf16.msra.mxu0 %v1126
      %1136 = vmatpush.bf16.msra.mxu0 %v1125
      %1137 = vmatpush.bf16.msra.mxu0 %v1124
      %1138 = vmatpush.bf16.msra.mxu0 %v1123
      %1139 = vmatpush.bf16.msra.mxu0 %v1122
      %1140 = vmatpush.bf16.msra.mxu0 %v1121
      %1141 = vmatpush.bf16.msra.mxu0 %v1120
      %1142 = vmatpush.bf16.msra.mxu0 %v1119
      %1143 = vmatmul.bf16.gmra.mxu0 %v1079
      %v1144 = vpop.f32.mrf.mxu0
      %v1145 = vadd.f32 0.0, %v1144
      %v1146 = vpop.f32.mrf.mxu0
      %v1147 = vadd.f32 0.0, %v1146
      %1148 = vmatmul.bf16.gmra.mxu0 %v1080
      %v1149 = vpop.f32.mrf.mxu0
      %v1150 = vadd.f32 0.0, %v1149
      %v1151 = vpop.f32.mrf.mxu0
      %v1152 = vadd.f32 0.0, %v1151
      %1153 = vmatmul.bf16.gmra.mxu0 %v1081
      %v1154 = vpop.f32.mrf.mxu0
      %v1155 = vadd.f32 0.0, %v1154
      %v1156 = vpop.f32.mrf.mxu0
      %v1157 = vadd.f32 0.0, %v1156
      %1158 = vmatmul.bf16.gmra.mxu0 %v1082
      %v1159 = vpop.f32.mrf.mxu0
      %v1160 = vadd.f32 0.0, %v1159
      %v1161 = vpop.f32.mrf.mxu0
      %v1162 = vadd.f32 0.0, %v1161
      %1163 = vdwg.mxu0
      %v1164 = vadd.f32 %v934, %v1145
      %v1165 = vadd.f32 %v935, %v1147
      %v1166 = vadd.f32 %v936, %v1150
      %v1167 = vadd.f32 %v937, %v1152
      %v1168 = vadd.f32 %v938, %v1155
      %v1169 = vadd.f32 %v939, %v1157
      %v1170 = vadd.f32 %v940, %v1160
      %v1171 = vadd.f32 %v941, %v1162
      %s1172 = scalar_lea.vmem %s1, 384
      %v1173 = vld [vmem:[%s1172] sm:$0xf]
      %v1174 = vld [vmem:[%s1172 + $0x4] sm:$0xf]
      %v1175 = vld [vmem:[%s1172 + $0x8] sm:$0xf]
      %v1176 = vld [vmem:[%s1172 + $0xc] sm:$0xf]
      %v1177 = vld [vmem:[%s1172 + $0x10] sm:$0xf]
      %v1178 = vld [vmem:[%s1172 + $0x14] sm:$0xf]
      %v1179 = vld [vmem:[%s1172 + $0x18] sm:$0xf]
      %v1180 = vld [vmem:[%s1172 + $0x1c] sm:$0xf]
      %v1181 = vld [vmem:[%s1172 + $0x20] sm:$0xf]
      %v1182 = vld [vmem:[%s1172 + $0x24] sm:$0xf]
      %v1183 = vld [vmem:[%s1172 + $0x28] sm:$0xf]
      %v1184 = vld [vmem:[%s1172 + $0x2c] sm:$0xf]
      %v1185 = vld [vmem:[%s1172 + $0x30] sm:$0xf]
      %v1186 = vld [vmem:[%s1172 + $0x34] sm:$0xf]
      %v1187 = vld [vmem:[%s1172 + $0x38] sm:$0xf]
      %v1188 = vld [vmem:[%s1172 + $0x3c] sm:$0xf]
      %v1190 = vunpack.c.l.b16 %v187
      %v1191 = vpack.c.b16 %v366, %v365
      %v1192 = vpack.c.b16 %v368, %v367
      %v1193 = vpack.c.b16 %v370, %v369
      %v1194 = vpack.c.b16 %v1190, %v371
      %v1215 = vunpack.c.l.b16 %v1173
      %v1216 = vunpack.c.l.b16 %v1174
      %v1217 = vunpack.c.l.b16 %v1175
      %v1218 = vunpack.c.l.b16 %v1176
      %v1219 = vunpack.c.l.b16 %v1177
      %v1220 = vunpack.c.l.b16 %v1178
      %v1221 = vunpack.c.l.b16 %v1179
      %v1222 = vunpack.c.l.b16 %v1180
      %v1223 = vunpack.c.l.b16 %v1181
      %v1224 = vunpack.c.l.b16 %v1182
      %v1225 = vunpack.c.l.b16 %v1183
      %v1226 = vunpack.c.l.b16 %v1184
      %v1227 = vunpack.c.l.b16 %v1185
      %v1228 = vunpack.c.l.b16 %v1186
      %v1229 = vunpack.c.l.b16 %v1187
      %v1230 = vunpack.c.l.b16 %v1188
      %v1231 = vpack.c.b16 %v1216, %v1215
      %v1232 = vpack.c.b16 %v1218, %v1217
      %v1233 = vpack.c.b16 %v1220, %v1219
      %v1234 = vpack.c.b16 %v1222, %v1221
      %v1235 = vpack.c.b16 %v1224, %v1223
      %v1236 = vpack.c.b16 %v1226, %v1225
      %v1237 = vpack.c.b16 %v1228, %v1227
      %v1238 = vpack.c.b16 %v1230, %v1229
      %1247 = vmatpush.bf16.msra.mxu0 %v1238
      %1248 = vmatpush.bf16.msra.mxu0 %v1237
      %1249 = vmatpush.bf16.msra.mxu0 %v1236
      %1250 = vmatpush.bf16.msra.mxu0 %v1235
      %1251 = vmatpush.bf16.msra.mxu0 %v1234
      %1252 = vmatpush.bf16.msra.mxu0 %v1233
      %1253 = vmatpush.bf16.msra.mxu0 %v1232
      %1254 = vmatpush.bf16.msra.mxu0 %v1231
      %1255 = vmatmul.bf16.gmra.mxu0 %v1191
      %v1256 = vpop.f32.mrf.mxu0
      %v1257 = vadd.f32 0.0, %v1256
      %v1258 = vpop.f32.mrf.mxu0
      %v1259 = vadd.f32 0.0, %v1258
      %1260 = vmatmul.bf16.gmra.mxu0 %v1192
      %v1261 = vpop.f32.mrf.mxu0
      %v1262 = vadd.f32 0.0, %v1261
      %v1263 = vpop.f32.mrf.mxu0
      %v1264 = vadd.f32 0.0, %v1263
      %1265 = vmatmul.bf16.gmra.mxu0 %v1193
      %v1266 = vpop.f32.mrf.mxu0
      %v1267 = vadd.f32 0.0, %v1266
      %v1268 = vpop.f32.mrf.mxu0
      %v1269 = vadd.f32 0.0, %v1268
      %1270 = vmatmul.bf16.gmra.mxu0 %v1194
      %v1271 = vpop.f32.mrf.mxu0
      %v1272 = vadd.f32 0.0, %v1271
      %v1273 = vpop.f32.mrf.mxu0
      %v1274 = vadd.f32 0.0, %v1273
      %1275 = vdwg.mxu0
      %v1276 = vadd.f32 %v1164, %v1257
      %v1277 = vadd.f32 %v1165, %v1259
      %v1278 = vadd.f32 %v1166, %v1262
      %v1279 = vadd.f32 %v1167, %v1264
      %v1280 = vadd.f32 %v1168, %v1267
      %v1281 = vadd.f32 %v1169, %v1269
      %v1282 = vadd.f32 %v1170, %v1272
      %v1283 = vadd.f32 %v1171, %v1274
      %s1284 = scalar_lea.vmem %s1, 448
      %v1285 = vld [vmem:[%s1284] sm:$0xf]
      %v1286 = vld [vmem:[%s1284 + $0x4] sm:$0xf]
      %v1287 = vld [vmem:[%s1284 + $0x8] sm:$0xf]
      %v1288 = vld [vmem:[%s1284 + $0xc] sm:$0xf]
      %v1289 = vld [vmem:[%s1284 + $0x10] sm:$0xf]
      %v1290 = vld [vmem:[%s1284 + $0x14] sm:$0xf]
      %v1291 = vld [vmem:[%s1284 + $0x18] sm:$0xf]
      %v1292 = vld [vmem:[%s1284 + $0x1c] sm:$0xf]
      %v1293 = vld [vmem:[%s1284 + $0x20] sm:$0xf]
      %v1294 = vld [vmem:[%s1284 + $0x24] sm:$0xf]
      %v1295 = vld [vmem:[%s1284 + $0x28] sm:$0xf]
      %v1296 = vld [vmem:[%s1284 + $0x2c] sm:$0xf]
      %v1297 = vld [vmem:[%s1284 + $0x30] sm:$0xf]
      %v1298 = vld [vmem:[%s1284 + $0x34] sm:$0xf]
      %v1299 = vld [vmem:[%s1284 + $0x38] sm:$0xf]
      %v1300 = vld [vmem:[%s1284 + $0x3c] sm:$0xf]
      %v1302 = vunpack.c.l.b16 %v197
      %v1303 = vpack.c.b16 %v265, %v264
      %v1304 = vpack.c.b16 %v267, %v266
      %v1305 = vpack.c.b16 %v269, %v268
      %v1306 = vpack.c.b16 %v1302, %v270
      %v1327 = vunpack.c.l.b16 %v1285
      %v1328 = vunpack.c.l.b16 %v1286
      %v1329 = vunpack.c.l.b16 %v1287
      %v1330 = vunpack.c.l.b16 %v1288
      %v1331 = vunpack.c.l.b16 %v1289
      %v1332 = vunpack.c.l.b16 %v1290
      %v1333 = vunpack.c.l.b16 %v1291
      %v1334 = vunpack.c.l.b16 %v1292
      %v1335 = vunpack.c.l.b16 %v1293
      %v1336 = vunpack.c.l.b16 %v1294
      %v1337 = vunpack.c.l.b16 %v1295
      %v1338 = vunpack.c.l.b16 %v1296
      %v1339 = vunpack.c.l.b16 %v1297
      %v1340 = vunpack.c.l.b16 %v1298
      %v1341 = vunpack.c.l.b16 %v1299
      %v1342 = vunpack.c.l.b16 %v1300
      %v1343 = vpack.c.b16 %v1328, %v1327
      %v1344 = vpack.c.b16 %v1330, %v1329
      %v1345 = vpack.c.b16 %v1332, %v1331
      %v1346 = vpack.c.b16 %v1334, %v1333
      %v1347 = vpack.c.b16 %v1336, %v1335
      %v1348 = vpack.c.b16 %v1338, %v1337
      %v1349 = vpack.c.b16 %v1340, %v1339
      %v1350 = vpack.c.b16 %v1342, %v1341
      %1359 = vmatpush.bf16.msra.mxu0 %v1350
      %1360 = vmatpush.bf16.msra.mxu0 %v1349
      %1361 = vmatpush.bf16.msra.mxu0 %v1348
      %1362 = vmatpush.bf16.msra.mxu0 %v1347
      %1363 = vmatpush.bf16.msra.mxu0 %v1346
      %1364 = vmatpush.bf16.msra.mxu0 %v1345
      %1365 = vmatpush.bf16.msra.mxu0 %v1344
      %1366 = vmatpush.bf16.msra.mxu0 %v1343
      %1367 = vmatmul.bf16.gmra.mxu0 %v1303
      %v1368 = vpop.f32.mrf.mxu0
      %v1369 = vadd.f32 0.0, %v1368
      %v1370 = vpop.f32.mrf.mxu0
      %v1371 = vadd.f32 0.0, %v1370
      %1372 = vmatmul.bf16.gmra.mxu0 %v1304
      %v1373 = vpop.f32.mrf.mxu0
      %v1374 = vadd.f32 0.0, %v1373
      %v1375 = vpop.f32.mrf.mxu0
      %v1376 = vadd.f32 0.0, %v1375
      %1377 = vmatmul.bf16.gmra.mxu0 %v1305
      %v1378 = vpop.f32.mrf.mxu0
      %v1379 = vadd.f32 0.0, %v1378
      %v1380 = vpop.f32.mrf.mxu0
      %v1381 = vadd.f32 0.0, %v1380
      %1382 = vmatmul.bf16.gmra.mxu0 %v1306
      %v1383 = vpop.f32.mrf.mxu0
      %v1384 = vadd.f32 0.0, %v1383
      %v1385 = vpop.f32.mrf.mxu0
      %v1386 = vadd.f32 0.0, %v1385
      %1387 = vdwg.mxu0
      %v1388 = vadd.f32 %v1276, %v1369
      %v1389 = vadd.f32 %v1277, %v1371
      %v1390 = vadd.f32 %v1278, %v1374
      %v1391 = vadd.f32 %v1279, %v1376
      %v1392 = vadd.f32 %v1280, %v1379
      %v1393 = vadd.f32 %v1281, %v1381
      %v1394 = vadd.f32 %v1282, %v1384
      %v1395 = vadd.f32 %v1283, %v1386
      %v1397 = vshrl.u32 %v187, 16
      %v1399 = vrot.slane %v1397, 4
      %v1400 = vshll.u32 %v187, 16
      %v1402 = vrot.slane %v1400, 5
      %v1403 = vor.u32 %v1399, %v1402
      %v1404 = vrot.slane %v1403, 4
      %v1406 = vshll.u32 %v188, 16
      %v1408 = vrot.slane %v1406, 5
      %v1409 = vsel %vm459, %v1404, %v1408
      %s1410 = scalar_lea.vmem %s1, 512
      %v1411 = vld [vmem:[%s1410] sm:$0xf]
      %v1412 = vld [vmem:[%s1410 + $0x4] sm:$0xf]
      %v1413 = vld [vmem:[%s1410 + $0x8] sm:$0xf]
      %v1414 = vld [vmem:[%s1410 + $0xc] sm:$0xf]
      %v1415 = vld [vmem:[%s1410 + $0x10] sm:$0xf]
      %v1416 = vld [vmem:[%s1410 + $0x14] sm:$0xf]
      %v1417 = vld [vmem:[%s1410 + $0x18] sm:$0xf]
      %v1418 = vld [vmem:[%s1410 + $0x1c] sm:$0xf]
      %v1419 = vld [vmem:[%s1410 + $0x20] sm:$0xf]
      %v1420 = vld [vmem:[%s1410 + $0x24] sm:$0xf]
      %v1421 = vld [vmem:[%s1410 + $0x28] sm:$0xf]
      %v1422 = vld [vmem:[%s1410 + $0x2c] sm:$0xf]
      %v1423 = vld [vmem:[%s1410 + $0x30] sm:$0xf]
      %v1424 = vld [vmem:[%s1410 + $0x34] sm:$0xf]
      %v1425 = vld [vmem:[%s1410 + $0x38] sm:$0xf]
      %v1426 = vld [vmem:[%s1410 + $0x3c] sm:$0xf]
      %v1427 = vunpack.c.l.b16 %v1409
      %v1428 = vpack.c.b16 %v591, %v590
      %v1429 = vpack.c.b16 %v593, %v592
      %v1430 = vpack.c.b16 %v595, %v594
      %v1431 = vpack.c.b16 %v1427, %v596
      %v1452 = vunpack.c.l.b16 %v1411
      %v1453 = vunpack.c.l.b16 %v1412
      %v1454 = vunpack.c.l.b16 %v1413
      %v1455 = vunpack.c.l.b16 %v1414
      %v1456 = vunpack.c.l.b16 %v1415
      %v1457 = vunpack.c.l.b16 %v1416
      %v1458 = vunpack.c.l.b16 %v1417
      %v1459 = vunpack.c.l.b16 %v1418
      %v1460 = vunpack.c.l.b16 %v1419
      %v1461 = vunpack.c.l.b16 %v1420
      %v1462 = vunpack.c.l.b16 %v1421
      %v1463 = vunpack.c.l.b16 %v1422
      %v1464 = vunpack.c.l.b16 %v1423
      %v1465 = vunpack.c.l.b16 %v1424
      %v1466 = vunpack.c.l.b16 %v1425
      %v1467 = vunpack.c.l.b16 %v1426
      %v1468 = vpack.c.b16 %v1453, %v1452
      %v1469 = vpack.c.b16 %v1455, %v1454
      %v1470 = vpack.c.b16 %v1457, %v1456
      %v1471 = vpack.c.b16 %v1459, %v1458
      %v1472 = vpack.c.b16 %v1461, %v1460
      %v1473 = vpack.c.b16 %v1463, %v1462
      %v1474 = vpack.c.b16 %v1465, %v1464
      %v1475 = vpack.c.b16 %v1467, %v1466
      %1484 = vmatpush.bf16.msra.mxu0 %v1475
      %1485 = vmatpush.bf16.msra.mxu0 %v1474
      %1486 = vmatpush.bf16.msra.mxu0 %v1473
      %1487 = vmatpush.bf16.msra.mxu0 %v1472
      %1488 = vmatpush.bf16.msra.mxu0 %v1471
      %1489 = vmatpush.bf16.msra.mxu0 %v1470
      %1490 = vmatpush.bf16.msra.mxu0 %v1469
      %1491 = vmatpush.bf16.msra.mxu0 %v1468
      %1492 = vmatmul.bf16.gmra.mxu0 %v1428
      %v1493 = vpop.f32.mrf.mxu0
      %v1494 = vadd.f32 0.0, %v1493
      %v1495 = vpop.f32.mrf.mxu0
      %v1496 = vadd.f32 0.0, %v1495
      %1497 = vmatmul.bf16.gmra.mxu0 %v1429
      %v1498 = vpop.f32.mrf.mxu0
      %v1499 = vadd.f32 0.0, %v1498
      %v1500 = vpop.f32.mrf.mxu0
      %v1501 = vadd.f32 0.0, %v1500
      %1502 = vmatmul.bf16.gmra.mxu0 %v1430
      %v1503 = vpop.f32.mrf.mxu0
      %v1504 = vadd.f32 0.0, %v1503
      %v1505 = vpop.f32.mrf.mxu0
      %v1506 = vadd.f32 0.0, %v1505
      %1507 = vmatmul.bf16.gmra.mxu0 %v1431
      %v1508 = vpop.f32.mrf.mxu0
      %v1509 = vadd.f32 0.0, %v1508
      %v1510 = vpop.f32.mrf.mxu0
      %v1511 = vadd.f32 0.0, %v1510
      %1512 = vdwg.mxu0
      %v1513 = vadd.f32 %v1388, %v1494
      %v1514 = vadd.f32 %v1389, %v1496
      %v1515 = vadd.f32 %v1390, %v1499
      %v1516 = vadd.f32 %v1391, %v1501
      %v1517 = vadd.f32 %v1392, %v1504
      %v1518 = vadd.f32 %v1393, %v1506
      %v1519 = vadd.f32 %v1394, %v1509
      %v1520 = vadd.f32 %v1395, %v1511
      %v1521 = vld [vmem:[%s2] sm:$0x1]
      %v1523 = vperm.slane %v1521, 0
      %v1525 = vadd.f32 %v1513, %v1523
      %v1526 = vadd.f32 %v1514, %v1523
      %v1527 = vadd.f32 %v1515, %v1523
      %v1528 = vadd.f32 %v1516, %v1523
      %v1529 = vadd.f32 %v1517, %v1523
      %v1530 = vadd.f32 %v1518, %v1523
      %v1531 = vadd.f32 %v1519, %v1523
      %v1532 = vadd.f32 %v1520, %v1523
      %v1533 = vmax.f32 %v1525, 0.0
      %v1534 = vmax.f32 %v1526, 0.0
      %v1535 = vmax.f32 %v1527, 0.0
      %v1536 = vmax.f32 %v1528, 0.0
      %v1537 = vmax.f32 %v1529, 0.0
      %v1538 = vmax.f32 %v1530, 0.0
      %v1539 = vmax.f32 %v1531, 0.0
      %v1540 = vmax.f32 %v1532, 0.0
      %v1541 = vpack.c.bf16 %v1533, %v1533
      %v1542 = vpack.c.bf16 %v1534, %v1534
      %v1543 = vpack.c.bf16 %v1535, %v1535
      %v1544 = vpack.c.bf16 %v1536, %v1536
      %v1545 = vpack.c.bf16 %v1537, %v1537
      %v1546 = vpack.c.bf16 %v1538, %v1538
      %v1547 = vpack.c.bf16 %v1539, %v1539
      %v1548 = vpack.c.bf16 %v1540, %v1540
      %1549 = vst [vmem:[%s170] sm:$0xf] %v1541
      %1550 = vst [vmem:[%s170 + $0x4] sm:$0xf] %v1542
      %1551 = vst [vmem:[%s170 + $0x8] sm:$0xf] %v1543
      %1552 = vst [vmem:[%s170 + $0xc] sm:$0xf] %v1544
      %1553 = vst [vmem:[%s170 + $0x10] sm:$0xf] %v1545
      %1554 = vst [vmem:[%s170 + $0x14] sm:$0xf] %v1546
      %1555 = vst [vmem:[%s170 + $0x18] sm:$0xf] %v1547
      %1556 = vst [vmem:[%s170 + $0x1c] sm:$0xf] %v1548
      %p1557 = scmp.lt.s32.totalorder %s14, 1
      %s1558 = scalar_select %p1557, %s14, 1
      %s1559 = smul.addr %s1558, 8
      %s1560 = smul.addr %s1559, 4
      %s1561 = scalar_lea.vmem %s3, %s1560
      // Predicated region
      $region33: #{_lambda_.7} parent=31 // pred_check
        %p1562 = pneg %p100
      $region34: #{_lambda_.7} parent=31 // pred_check_branch
        %1564 = sbr.rel (%p1562) target = $region36
      $region35: #{_lambda_.7} parent=31 // pred_region
        _
      $region36: #{_lambda_.7} parent=31 // pred_fallthru
        _
    $region32: #{_lambda_.7} parent=5 // pred_fallthru
      _
    %p1565 = scmp.le.s32.totalorder 2, %s9
    // Predicated region
    $region37: #{_lambda_.7} parent=5 // pred_check
      %p1566 = pneg %p1565
    $region38: #{_lambda_.7} parent=5 // pred_check_branch
      %1568 = sbr.rel (%p1566) target = $region40
    $region39: #{_lambda_.7} parent=5 // pred_region
      %s1569 = ssub.s32 %s9, 2
      // Predicated region
      $region41: #{_lambda_.7} parent=39 // pred_check
        %p1570 = pneg %p106
      $region42: #{_lambda_.7} parent=39 // pred_check_branch
        %1572 = sbr.rel (%p1570) target = $region44
      $region43: #{_lambda_.7} parent=39 // pred_region
        %p1573 = scmp.lt.s32.totalorder %s15, 1
        %s1574 = scalar_select %p1573, %s15, 1
        %s1575 = smul.addr %s1574, 8
        %s1576 = smul.addr %s1575, 4
        %s1577 = scalar_lea.vmem %s3, %s1576
      $region44: #{_lambda_.7} parent=39 // pred_fallthru
        _
    $region40: #{_lambda_.7} parent=5 // pred_fallthru
      _
  $region6: #{_lambda_.7} parent=0 // loop_footer
    %s13 = sadd.s32 1, %s9
  $region7: #{_lambda_.7} parent=0 // loop_footer_branch
    %8 = sbr.rel target = $region3
  $region8: #{_lambda_.7} parent=0 // loop_exit
    _

// kernel: _lambda_.8
$region0: #{_lambda_.8}
  #allocation0 [shape = 'u32[]', space=smem, size = 0x4, offset = 0x4, fixed_abs, tag = 'smem constant byte address 0x4 - core index']
  #allocation1 [shape = 'u32[72,128]{1,0:T(1,128)}', space=vmem, size = 0x9000, scoped, tag = 'internal scratch']
  %s0 = inlined_call_operand.vmem [shape: bf16[2,10,10,128], index: 0, kind: input, shape index: {}]
  %s1 = inlined_call_operand.vmem [shape: bf16[9,128,128], index: 1, kind: input, shape index: {}]
  %s2 = inlined_call_operand.vmem [shape: f32[1,128], index: 2, kind: input, shape index: {}]
  %s3 = inlined_call_operand.vmem [shape: bf16[2,8,8,128], index: 3, kind: output, shape index: {}]
  %s4 = sld [smem:[#allocation0]]
  $region45: #{_lambda_.8} parent=0
    _
  %s6 = ssub.s32 1, %s4
  %s7 = scalar_select 0, %s6, %s4
  loop: start=0, step=1, limit=4
  $region2: #{_lambda_.8} parent=0 // loop_pre_header
    _
  $region3: #{_lambda_.8} parent=0 // loop_header
    %s9 = sphi 0, %s13
    %p10 = scmp.ge.s32.totalorder %s9, 4
    %s19 = sphi 0, %s21
    %s22 = sphi 0, %s19
    %s23 = sphi 0, %s22
    %s39 = sphi 0, %s23
    %s43 = sphi 0, %s43
    %s45 = sphi 0, %s43
    %s46 = sphi 0, %s45
    %s60 = sphi 0, %s46
    %s64 = sphi 0, %s64
    %s66 = sphi 0, %s64
    %s67 = sphi 0, %s66
    %s81 = sphi 0, %s67
    %s87 = sphi 0, %s89
    %s90 = sphi 0, %s87
    %s91 = sphi 0, %s90
    %s107 = sphi 0, %s91
  $region4: #{_lambda_.8} parent=0 // loop_header_branch
    %12 = sbr.rel (%p10) target = $region8
  $region5: #{_lambda_.8} parent=0 // loop_body
    %s14 = ssub.s32 %s9, 1
    %s15 = ssub.s32 %s9, 2
    %s16 = sadd.s32 %s9, 1
    %s17 = ssub.s32 %s9, %s16
    %p18 = scmp.eq.s32.totalorder %s17, 0
    %s20 = sadd.s32 %s19, 1
    %s21 = scalar_select %p18, %s19, %s20
    %p24 = pneg %p18
    %p25 = scmp.eq.s32.totalorder %s9, 1
    %p26 = por %p24, %p25
    %p27 = scmp.ne.s32.totalorder %s19, %s22
    %p28 = scmp.eq.s32.totalorder %s9, 0
    %p29 = por %p27, %p28
    %p30 = scmp.ne.s32.totalorder %s19, %s22
    %p31 = scmp.eq.s32.totalorder %s14, 1
    %p32 = por %p30, %p31
    %p33 = scmp.ne.s32.totalorder %s22, %s23
    %p34 = scmp.eq.s32.totalorder %s14, 0
    %p35 = por %p33, %p34
    %p36 = scmp.ne.s32.totalorder %s22, %s23
    %p37 = scmp.eq.s32.totalorder %s15, 1
    %p38 = por %p36, %p37
    %p40 = scmp.ne.s32.totalorder %s23, %s39
    %p41 = scmp.eq.s32.totalorder %s15, 0
    %p42 = por %p40, %p41
    %s44 = sadd.s32 %s43, 1
    %p47 = scmp.eq.s32.totalorder %s9, 1
    %p48 = scmp.ne.s32.totalorder %s43, %s45
    %p49 = scmp.eq.s32.totalorder %s9, 0
    %p50 = por %p48, %p49
    %p51 = scmp.ne.s32.totalorder %s43, %s45
    %p52 = scmp.eq.s32.totalorder %s14, 1
    %p53 = por %p51, %p52
    %p54 = scmp.ne.s32.totalorder %s45, %s46
    %p55 = scmp.eq.s32.totalorder %s14, 0
    %p56 = por %p54, %p55
    %p57 = scmp.ne.s32.totalorder %s45, %s46
    %p58 = scmp.eq.s32.totalorder %s15, 1
    %p59 = por %p57, %p58
    %p61 = scmp.ne.s32.totalorder %s46, %s60
    %p62 = scmp.eq.s32.totalorder %s15, 0
    %p63 = por %p61, %p62
    %s65 = sadd.s32 %s64, 1
    %p68 = scmp.eq.s32.totalorder %s9, 1
    %p69 = scmp.ne.s32.totalorder %s64, %s66
    %p70 = scmp.eq.s32.totalorder %s9, 0
    %p71 = por %p69, %p70
    %p72 = scmp.ne.s32.totalorder %s64, %s66
    %p73 = scmp.eq.s32.totalorder %s14, 1
    %p74 = por %p72, %p73
    %p75 = scmp.ne.s32.totalorder %s66, %s67
    %p76 = scmp.eq.s32.totalorder %s14, 0
    %p77 = por %p75, %p76
    %p78 = scmp.ne.s32.totalorder %s66, %s67
    %p79 = scmp.eq.s32.totalorder %s15, 1
    %p80 = por %p78, %p79
    %p82 = scmp.ne.s32.totalorder %s67, %s81
    %p83 = scmp.eq.s32.totalorder %s15, 0
    %p84 = por %p82, %p83
    %s85 = ssub.s32 %s9, %s16
    %p86 = scmp.eq.s32.totalorder %s85, 0
    %s88 = sadd.s32 %s87, 1
    %s89 = scalar_select %p86, %s87, %s88
    %p92 = pneg %p86
    %p93 = scmp.eq.s32.totalorder %s9, 1
    %p94 = por %p92, %p93
    %p95 = scmp.ne.s32.totalorder %s87, %s90
    %p96 = scmp.eq.s32.totalorder %s9, 0
    %p97 = por %p95, %p96
    %p98 = scmp.ne.s32.totalorder %s87, %s90
    %p99 = scmp.eq.s32.totalorder %s14, 1
    %p100 = por %p98, %p99
    %p101 = scmp.ne.s32.totalorder %s90, %s91
    %p102 = scmp.eq.s32.totalorder %s14, 0
    %p103 = por %p101, %p102
    %p104 = scmp.ne.s32.totalorder %s90, %s91
    %p105 = scmp.eq.s32.totalorder %s15, 1
    %p106 = por %p104, %p105
    %p108 = scmp.ne.s32.totalorder %s91, %s107
    %p109 = scmp.eq.s32.totalorder %s15, 0
    %p110 = por %p108, %p109
    %p111 = scmp.le.s32.totalorder 1, %s9
    %p112 = scmp.lt.s32.totalorder %s9, 3
    %p113 = pnand %p111, %p112
    %p114 = pneg %p113
    // Predicated region
    $region9: #{_lambda_.8} parent=5 // pred_check
      _
    $region10: #{_lambda_.8} parent=5 // pred_check_branch
      %116 = sbr.rel (%p113) target = $region12
    $region11: #{_lambda_.8} parent=5 // pred_region
      %s117 = ssub.s32 %s9, 1
      // Predicated region
      $region13: #{_lambda_.8} parent=11 // pred_check
        %p118 = pneg %p56
      $region14: #{_lambda_.8} parent=11 // pred_check_branch
        %120 = sbr.rel (%p118) target = $region16
      $region15: #{_lambda_.8} parent=11 // pred_region
        _
      $region16: #{_lambda_.8} parent=11 // pred_fallthru
        _
      // Predicated region
      $region17: #{_lambda_.8} parent=11 // pred_check
        %p121 = pneg %p77
      $region18: #{_lambda_.8} parent=11 // pred_check_branch
        %123 = sbr.rel (%p121) target = $region20
      $region19: #{_lambda_.8} parent=11 // pred_region
        _
      $region20: #{_lambda_.8} parent=11 // pred_fallthru
        _
    $region12: #{_lambda_.8} parent=5 // pred_fallthru
      _
    %p124 = scmp.lt.s32.totalorder %s9, 2
    // Predicated region
    $region21: #{_lambda_.8} parent=5 // pred_check
      %p125 = pneg %p124
    $region22: #{_lambda_.8} parent=5 // pred_check_branch
      %127 = sbr.rel (%p125) target = $region24
    $region23: #{_lambda_.8} parent=5 // pred_region
      // Predicated region
      $region25: #{_lambda_.8} parent=23 // pred_check
        %p128 = pneg %p29
      $region26: #{_lambda_.8} parent=23 // pred_check_branch
        %130 = sbr.rel (%p128) target = $region28
      $region27: #{_lambda_.8} parent=23 // pred_region
        %p131 = scmp.lt.s32.totalorder %s9, 1
        %s132 = scalar_select %p131, %s9, 1
        %s133 = smul.addr %s132, 20
        %s134 = smul.addr %s133, 4
        %s135 = scalar_lea.vmem %s0, %s134
      $region28: #{_lambda_.8} parent=23 // pred_fallthru
        _
    $region24: #{_lambda_.8} parent=5 // pred_fallthru
      _
    %p136 = scmp.le.s32.totalorder 1, %s9
    %p137 = scmp.lt.s32.totalorder %s9, 3
    %p138 = pnand %p136, %p137
    %p139 = pneg %p138
    // Predicated region
    $region29: #{_lambda_.8} parent=5 // pred_check
      _
    $region30: #{_lambda_.8} parent=5 // pred_check_branch
      %141 = sbr.rel (%p138) target = $region32
    $region31: #{_lambda_.8} parent=5 // pred_region
      %s142 = ssub.s32 %s9, 1
      %p143 = scmp.lt.s32.totalorder %s14, 1
      %s144 = scalar_select %p143, %s14, 1
      %s145 = smul.addr %s144, 20
      %s146 = smul.addr %s145, 4
      %s147 = scalar_lea.vmem %s0, %s146
      %p148 = pneg %p35
      %p149 = pneg %p32
      %p150 = pneg %p56
      %p151 = pneg %p53
      %p152 = pneg %p77
      %p153 = pneg %p74
      %p154 = pneg %p103
      %p155 = pneg %p100
      %p156 = scmp.lt.s32.totalorder %s14, 1
      %s157 = scalar_select %p156, %s14, 1
      %s158 = smul.addr %s157, 8
      %s159 = smul.addr %s158, 4
      %s160 = scalar_lea.vmem %s3, %s159
      %p161 = scmp.lt.s32.totalorder %s14, 1
      %s162 = scalar_select %p161, %s14, 1
      %s163 = smul.addr %s162, 20
      %s164 = smul.addr %s163, 4
      %s165 = scalar_lea.vmem %s0, %s164
      %p166 = scmp.lt.s32.totalorder %s14, 1
      %s167 = scalar_select %p166, %s14, 1
      %s168 = smul.addr %s167, 8
      %s169 = smul.addr %s168, 4
      %s170 = scalar_lea.vmem %s3, %s169
      %v171 = vld [vmem:[%s165] sm:$0xf]
      %v172 = vld [vmem:[%s165 + $0x4] sm:$0x1]
      %v173 = vld [vmem:[%s165 + $0x8] sm:$0xf]
      %v174 = vld [vmem:[%s165 + $0xc] sm:$0x1]
      %v175 = vld [vmem:[%s165 + $0x10] sm:$0xf]
      %v176 = vld [vmem:[%s165 + $0x14] sm:$0x1]
      %v177 = vld [vmem:[%s165 + $0x18] sm:$0xf]
      %v178 = vld [vmem:[%s165 + $0x1c] sm:$0x1]
      %v179 = vld [vmem:[%s165 + $0x20] sm:$0xf]
      %v180 = vld [vmem:[%s165 + $0x24] sm:$0x1]
      %v181 = vld [vmem:[%s165 + $0x28] sm:$0xf]
      %v182 = vld [vmem:[%s165 + $0x2c] sm:$0x1]
      %v183 = vld [vmem:[%s165 + $0x30] sm:$0xf]
      %v184 = vld [vmem:[%s165 + $0x34] sm:$0x1]
      %v185 = vld [vmem:[%s165 + $0x38] sm:$0xf]
      %v186 = vld [vmem:[%s165 + $0x3c] sm:$0x1]
      %v187 = vld [vmem:[%s165 + $0x40] sm:$0xf]
      %v188 = vld [vmem:[%s165 + $0x44] sm:$0x1]
      %v189 = vld [vmem:[%s165 + $0x48] sm:$0xf]
      %v190 = vld [vmem:[%s165 + $0x4c] sm:$0x1]
      %v191 = vld [vmem:[%s1] sm:$0xf]
      %v192 = vld [vmem:[%s1 + $0x4] sm:$0xf]
      %v193 = vld [vmem:[%s1 + $0x8] sm:$0xf]
      %v194 = vld [vmem:[%s1 + $0xc] sm:$0xf]
      %v195 = vld [vmem:[%s1 + $0x10] sm:$0xf]
      %v196 = vld [vmem:[%s1 + $0x14] sm:$0xf]
      %v197 = vld [vmem:[%s1 + $0x18] sm:$0xf]
      %v198 = vld [vmem:[%s1 + $0x1c] sm:$0xf]
      %v199 = vld [vmem:[%s1 + $0x20] sm:$0xf]
      %v200 = vld [vmem:[%s1 + $0x24] sm:$0xf]
      %v201 = vld [vmem:[%s1 + $0x28] sm:$0xf]
      %v202 = vld [vmem:[%s1 + $0x2c] sm:$0xf]
      %v203 = vld [vmem:[%s1 + $0x30] sm:$0xf]
      %v204 = vld [vmem:[%s1 + $0x34] sm:$0xf]
      %v205 = vld [vmem:[%s1 + $0x38] sm:$0xf]
      %v206 = vld [vmem:[%s1 + $0x3c] sm:$0xf]
      %vm207 = vsmask.f32 3328
      %vm208 = vsmask.f32 7440
      %vm209 = vmor %vm207, %vm208
      %v211 = vshrl.u32 %v171, 16
      %v213 = vrot.slane %v211, 4
      %v214 = vshll.u32 %v171, 16
      %v216 = vrot.slane %v214, 5
      %v217 = vor.u32 %v213, %v216
      %v218 = vrot.slane %v217, 4
      %v220 = vshll.u32 %v172, 16
      %v222 = vrot.slane %v220, 5
      %v223 = vsel %vm209, %v218, %v222
      %v225 = vshrl.u32 %v173, 16
      %v227 = vrot.slane %v225, 4
      %v228 = vshll.u32 %v173, 16
      %v230 = vrot.slane %v228, 5
      %v231 = vor.u32 %v227, %v230
      %v232 = vrot.slane %v231, 4
      %v234 = vshll.u32 %v174, 16
      %v236 = vrot.slane %v234, 5
      %v237 = vsel %vm209, %v232, %v236
      %v239 = vshrl.u32 %v175, 16
      %v241 = vrot.slane %v239, 4
      %v242 = vshll.u32 %v175, 16
      %v244 = vrot.slane %v242, 5
      %v245 = vor.u32 %v241, %v244
      %v246 = vrot.slane %v245, 4
      %v248 = vshll.u32 %v176, 16
      %v250 = vrot.slane %v248, 5
      %v251 = vsel %vm209, %v246, %v250
      %v253 = vshrl.u32 %v177, 16
      %v255 = vrot.slane %v253, 4
      %v256 = vshll.u32 %v177, 16
      %v258 = vrot.slane %v256, 5
      %v259 = vor.u32 %v255, %v258
      %v260 = vrot.slane %v259, 4
      %v262 = vshll.u32 %v178, 16
      %v264 = vrot.slane %v262, 5
      %v265 = vsel %vm209, %v260, %v264
      %v267 = vshrl.u32 %v179, 16
      %v269 = vrot.slane %v267, 4
      %v270 = vshll.u32 %v179, 16
      %v272 = vrot.slane %v270, 5
      %v273 = vor.u32 %v269, %v272
      %v274 = vrot.slane %v273, 4
      %v276 = vshll.u32 %v180, 16
      %v278 = vrot.slane %v276, 5
      %v279 = vsel %vm209, %v274, %v278
      %v281 = vshrl.u32 %v181, 16
      %v283 = vrot.slane %v281, 4
      %v284 = vshll.u32 %v181, 16
      %v286 = vrot.slane %v284, 5
      %v287 = vor.u32 %v283, %v286
      %v288 = vrot.slane %v287, 4
      %v290 = vshll.u32 %v182, 16
      %v292 = vrot.slane %v290, 5
      %v293 = vsel %vm209, %v288, %v292
      %v295 = vshrl.u32 %v183, 16
      %v297 = vrot.slane %v295, 4
      %v298 = vshll.u32 %v183, 16
      %v300 = vrot.slane %v298, 5
      %v301 = vor.u32 %v297, %v300
      %v302 = vrot.slane %v301, 4
      %v304 = vshll.u32 %v184, 16
      %v306 = vrot.slane %v304, 5
      %v307 = vsel %vm209, %v302, %v306
      %v309 = vshrl.u32 %v185, 16
      %v311 = vrot.slane %v309, 4
      %v312 = vshll.u32 %v185, 16
      %v314 = vrot.slane %v312, 5
      %v315 = vor.u32 %v311, %v314
      %v316 = vrot.slane %v315, 4
      %v318 = vshll.u32 %v186, 16
      %v320 = vrot.slane %v318, 5
      %v321 = vsel %vm209, %v316, %v320
      %s322 = scalar_lea.vmem %s1, 64
      %v323 = vld [vmem:[%s322] sm:$0xf]
      %v324 = vld [vmem:[%s322 + $0x4] sm:$0xf]
      %v325 = vld [vmem:[%s322 + $0x8] sm:$0xf]
      %v326 = vld [vmem:[%s322 + $0xc] sm:$0xf]
      %v327 = vld [vmem:[%s322 + $0x10] sm:$0xf]
      %v328 = vld [vmem:[%s322 + $0x14] sm:$0xf]
      %v329 = vld [vmem:[%s322 + $0x18] sm:$0xf]
      %v330 = vld [vmem:[%s322 + $0x1c] sm:$0xf]
      %v331 = vld [vmem:[%s322 + $0x20] sm:$0xf]
      %v332 = vld [vmem:[%s322 + $0x24] sm:$0xf]
      %v333 = vld [vmem:[%s322 + $0x28] sm:$0xf]
      %v334 = vld [vmem:[%s322 + $0x2c] sm:$0xf]
      %v335 = vld [vmem:[%s322 + $0x30] sm:$0xf]
      %v336 = vld [vmem:[%s322 + $0x34] sm:$0xf]
      %v337 = vld [vmem:[%s322 + $0x38] sm:$0xf]
      %v338 = vld [vmem:[%s322 + $0x3c] sm:$0xf]
      %v339 = vunpack.c.l.b16 %v223
      %v340 = vunpack.c.l.b16 %v237
      %v341 = vunpack.c.l.b16 %v251
      %v342 = vunpack.c.l.b16 %v265
      %v343 = vunpack.c.l.b16 %v279
      %v344 = vunpack.c.l.b16 %v293
      %v345 = vunpack.c.l.b16 %v307
      %v346 = vunpack.c.l.b16 %v321
      %v347 = vpack.c.b16 %v340, %v339
      %v348 = vpack.c.b16 %v342, %v341
      %v349 = vpack.c.b16 %v344, %v343
      %v350 = vpack.c.b16 %v346, %v345
      %v371 = vunpack.c.l.b16 %v323
      %v372 = vunpack.c.l.b16 %v324
      %v373 = vunpack.c.l.b16 %v325
      %v374 = vunpack.c.l.b16 %v326
      %v375 = vunpack.c.l.b16 %v327
      %v376 = vunpack.c.l.b16 %v328
      %v377 = vunpack.c.l.b16 %v329
      %v378 = vunpack.c.l.b16 %v330
      %v379 = vunpack.c.l.b16 %v331
      %v380 = vunpack.c.l.b16 %v332
      %v381 = vunpack.c.l.b16 %v333
      %v382 = vunpack.c.l.b16 %v334
      %v383 = vunpack.c.l.b16 %v335
      %v384 = vunpack.c.l.b16 %v336
      %v385 = vunpack.c.l.b16 %v337
      %v386 = vunpack.c.l.b16 %v338
      %v387 = vpack.c.b16 %v372, %v371
      %v388 = vpack.c.b16 %v374, %v373
      %v389 = vpack.c.b16 %v376, %v375
      %v390 = vpack.c.b16 %v378, %v377
      %v391 = vpack.c.b16 %v380, %v379
      %v392 = vpack.c.b16 %v382, %v381
      %v393 = vpack.c.b16 %v384, %v383
      %v394 = vpack.c.b16 %v386, %v385
      %403 = vmatpush.bf16.msra.mxu0 %v394
      %404 = vmatpush.bf16.msra.mxu0 %v393
      %405 = vmatpush.bf16.msra.mxu0 %v392
      %406 = vmatpush.bf16.msra.mxu0 %v391
      %407 = vmatpush.bf16.msra.mxu0 %v390
      %408 = vmatpush.bf16.msra.mxu0 %v389
      %409 = vmatpush.bf16.msra.mxu0 %v388
      %410 = vmatpush.bf16.msra.mxu0 %v387
      %411 = vmatmul.bf16.gmra.mxu0 %v347
      %v412 = vpop.f32.mrf.mxu0
      %v413 = vadd.f32 0.0, %v412
      %v414 = vpop.f32.mrf.mxu0
      %v415 = vadd.f32 0.0, %v414
      %416 = vmatmul.bf16.gmra.mxu0 %v348
      %v417 = vpop.f32.mrf.mxu0
      %v418 = vadd.f32 0.0, %v417
      %v419 = vpop.f32.mrf.mxu0
      %v420 = vadd.f32 0.0, %v419
      %421 = vmatmul.bf16.gmra.mxu0 %v349
      %v422 = vpop.f32.mrf.mxu0
      %v423 = vadd.f32 0.0, %v422
      %v424 = vpop.f32.mrf.mxu0
      %v425 = vadd.f32 0.0, %v424
      %426 = vmatmul.bf16.gmra.mxu0 %v350
      %v427 = vpop.f32.mrf.mxu0
      %v428 = vadd.f32 0.0, %v427
      %v429 = vpop.f32.mrf.mxu0
      %v430 = vadd.f32 0.0, %v429
      %431 = vdwg.mxu0
      %v440 = vunpack.c.l.b16 %v171
      %v441 = vunpack.c.l.b16 %v173
      %v442 = vunpack.c.l.b16 %v175
      %v443 = vunpack.c.l.b16 %v177
      %v444 = vunpack.c.l.b16 %v179
      %v445 = vunpack.c.l.b16 %v181
      %v446 = vunpack.c.l.b16 %v183
      %v447 = vunpack.c.l.b16 %v185
      %v448 = vpack.c.b16 %v441, %v440
      %v449 = vpack.c.b16 %v443, %v442
      %v450 = vpack.c.b16 %v445, %v444
      %v451 = vpack.c.b16 %v447, %v446
      %v472 = vunpack.c.l.b16 %v191
      %v473 = vunpack.c.l.b16 %v192
      %v474 = vunpack.c.l.b16 %v193
      %v475 = vunpack.c.l.b16 %v194
      %v476 = vunpack.c.l.b16 %v195
      %v477 = vunpack.c.l.b16 %v196
      %v478 = vunpack.c.l.b16 %v197
      %v479 = vunpack.c.l.b16 %v198
      %v480 = vunpack.c.l.b16 %v199
      %v481 = vunpack.c.l.b16 %v200
      %v482 = vunpack.c.l.b16 %v201
      %v483 = vunpack.c.l.b16 %v202
      %v484 = vunpack.c.l.b16 %v203
      %v485 = vunpack.c.l.b16 %v204
      %v486 = vunpack.c.l.b16 %v205
      %v487 = vunpack.c.l.b16 %v206
      %v488 = vpack.c.b16 %v473, %v472
      %v489 = vpack.c.b16 %v475, %v474
      %v490 = vpack.c.b16 %v477, %v476
      %v491 = vpack.c.b16 %v479, %v478
      %v492 = vpack.c.b16 %v481, %v480
      %v493 = vpack.c.b16 %v483, %v482
      %v494 = vpack.c.b16 %v485, %v484
      %v495 = vpack.c.b16 %v487, %v486
      %504 = vmatpush.bf16.msra.mxu0 %v495
      %505 = vmatpush.bf16.msra.mxu0 %v494
      %506 = vmatpush.bf16.msra.mxu0 %v493
      %507 = vmatpush.bf16.msra.mxu0 %v492
      %508 = vmatpush.bf16.msra.mxu0 %v491
      %509 = vmatpush.bf16.msra.mxu0 %v490
      %510 = vmatpush.bf16.msra.mxu0 %v489
      %511 = vmatpush.bf16.msra.mxu0 %v488
      %512 = vmatmul.bf16.gmra.mxu0 %v448
      %v513 = vpop.f32.mrf.mxu0
      %v514 = vadd.f32 %v413, %v513
      %v515 = vpop.f32.mrf.mxu0
      %v516 = vadd.f32 %v415, %v515
      %517 = vmatmul.bf16.gmra.mxu0 %v449
      %v518 = vpop.f32.mrf.mxu0
      %v519 = vadd.f32 %v418, %v518
      %v520 = vpop.f32.mrf.mxu0
      %v521 = vadd.f32 %v420, %v520
      %522 = vmatmul.bf16.gmra.mxu0 %v450
      %v523 = vpop.f32.mrf.mxu0
      %v524 = vadd.f32 %v423, %v523
      %v525 = vpop.f32.mrf.mxu0
      %v526 = vadd.f32 %v425, %v525
      %527 = vmatmul.bf16.gmra.mxu0 %v451
      %v528 = vpop.f32.mrf.mxu0
      %v529 = vadd.f32 %v428, %v528
      %v530 = vpop.f32.mrf.mxu0
      %v531 = vadd.f32 %v430, %v530
      %532 = vdwg.mxu0
      %vm541 = vcmask 1042432
      %vm542 = vcmask 1046532
      %vm543 = vmor %vm541, %vm542
      %v544 = vrot.slane %v171, 5
      %v545 = vrot.slane %v544, 4
      %v546 = vrot.slane %v172, 5
      %v547 = vsel %vm543, %v545, %v546
      %v548 = vrot.slane %v173, 5
      %v549 = vrot.slane %v548, 4
      %v550 = vrot.slane %v174, 5
      %v551 = vsel %vm543, %v549, %v550
      %v552 = vrot.slane %v175, 5
      %v553 = vrot.slane %v552, 4
      %v554 = vrot.slane %v176, 5
      %v555 = vsel %vm543, %v553, %v554
      %v556 = vrot.slane %v177, 5
      %v557 = vrot.slane %v556, 4
      %v558 = vrot.slane %v178, 5
      %v559 = vsel %vm543, %v557, %v558
      %v560 = vrot.slane %v179, 5
      %v561 = vrot.slane %v560, 4
      %v562 = vrot.slane %v180, 5
      %v563 = vsel %vm543, %v561, %v562
      %v564 = vrot.slane %v181, 5
      %v565 = vrot.slane %v564, 4
      %v566 = vrot.slane %v182, 5
      %v567 = vsel %vm543, %v565, %v566
      %v568 = vrot.slane %v183, 5
      %v569 = vrot.slane %v568, 4
      %v570 = vrot.slane %v184, 5
      %v571 = vsel %vm543, %v569, %v570
      %v572 = vrot.slane %v185, 5
      %v573 = vrot.slane %v572, 4
      %v574 = vrot.slane %v186, 5
      %v575 = vsel %vm543, %v573, %v574
      %s576 = scalar_lea.vmem %s1, 128
      %v577 = vld [vmem:[%s576] sm:$0xf]
      %v578 = vld [vmem:[%s576 + $0x4] sm:$0xf]
      %v579 = vld [vmem:[%s576 + $0x8] sm:$0xf]
      %v580 = vld [vmem:[%s576 + $0xc] sm:$0xf]
      %v581 = vld [vmem:[%s576 + $0x10] sm:$0xf]
      %v582 = vld [vmem:[%s576 + $0x14] sm:$0xf]
      %v583 = vld [vmem:[%s576 + $0x18] sm:$0xf]
      %v584 = vld [vmem:[%s576 + $0x1c] sm:$0xf]
      %v585 = vld [vmem:[%s576 + $0x20] sm:$0xf]
      %v586 = vld [vmem:[%s576 + $0x24] sm:$0xf]
      %v587 = vld [vmem:[%s576 + $0x28] sm:$0xf]
      %v588 = vld [vmem:[%s576 + $0x2c] sm:$0xf]
      %v589 = vld [vmem:[%s576 + $0x30] sm:$0xf]
      %v590 = vld [vmem:[%s576 + $0x34] sm:$0xf]
      %v591 = vld [vmem:[%s576 + $0x38] sm:$0xf]
      %v592 = vld [vmem:[%s576 + $0x3c] sm:$0xf]
      %v593 = vunpack.c.l.b16 %v547
      %v594 = vunpack.c.l.b16 %v551
      %v595 = vunpack.c.l.b16 %v555
      %v596 = vunpack.c.l.b16 %v559
      %v597 = vunpack.c.l.b16 %v563
      %v598 = vunpack.c.l.b16 %v567
      %v599 = vunpack.c.l.b16 %v571
      %v600 = vunpack.c.l.b16 %v575
      %v601 = vpack.c.b16 %v594, %v593
      %v602 = vpack.c.b16 %v596, %v595
      %v603 = vpack.c.b16 %v598, %v597
      %v604 = vpack.c.b16 %v600, %v599
      %v625 = vunpack.c.l.b16 %v577
      %v626 = vunpack.c.l.b16 %v578
      %v627 = vunpack.c.l.b16 %v579
      %v628 = vunpack.c.l.b16 %v580
      %v629 = vunpack.c.l.b16 %v581
      %v630 = vunpack.c.l.b16 %v582
      %v631 = vunpack.c.l.b16 %v583
      %v632 = vunpack.c.l.b16 %v584
      %v633 = vunpack.c.l.b16 %v585
      %v634 = vunpack.c.l.b16 %v586
      %v635 = vunpack.c.l.b16 %v587
      %v636 = vunpack.c.l.b16 %v588
      %v637 = vunpack.c.l.b16 %v589
      %v638 = vunpack.c.l.b16 %v590
      %v639 = vunpack.c.l.b16 %v591
      %v640 = vunpack.c.l.b16 %v592
      %v641 = vpack.c.b16 %v626, %v625
      %v642 = vpack.c.b16 %v628, %v627
      %v643 = vpack.c.b16 %v630, %v629
      %v644 = vpack.c.b16 %v632, %v631
      %v645 = vpack.c.b16 %v634, %v633
      %v646 = vpack.c.b16 %v636, %v635
      %v647 = vpack.c.b16 %v638, %v637
      %v648 = vpack.c.b16 %v640, %v639
      %657 = vmatpush.bf16.msra.mxu0 %v648
      %658 = vmatpush.bf16.msra.mxu0 %v647
      %659 = vmatpush.bf16.msra.mxu0 %v646
      %660 = vmatpush.bf16.msra.mxu0 %v645
      %661 = vmatpush.bf16.msra.mxu0 %v644
      %662 = vmatpush.bf16.msra.mxu0 %v643
      %663 = vmatpush.bf16.msra.mxu0 %v642
      %664 = vmatpush.bf16.msra.mxu0 %v641
      %665 = vmatmul.bf16.gmra.mxu0 %v601
      %v666 = vpop.f32.mrf.mxu0
      %v667 = vadd.f32 0.0, %v666
      %v668 = vpop.f32.mrf.mxu0
      %v669 = vadd.f32 0.0, %v668
      %670 = vmatmul.bf16.gmra.mxu0 %v602
      %v671 = vpop.f32.mrf.mxu0
      %v672 = vadd.f32 0.0, %v671
      %v673 = vpop.f32.mrf.mxu0
      %v674 = vadd.f32 0.0, %v673
      %675 = vmatmul.bf16.gmra.mxu0 %v603
      %v676 = vpop.f32.mrf.mxu0
      %v677 = vadd.f32 0.0, %v676
      %v678 = vpop.f32.mrf.mxu0
      %v679 = vadd.f32 0.0, %v678
      %680 = vmatmul.bf16.gmra.mxu0 %v604
      %v681 = vpop.f32.mrf.mxu0
      %v682 = vadd.f32 0.0, %v681
      %v683 = vpop.f32.mrf.mxu0
      %v684 = vadd.f32 0.0, %v683
      %685 = vdwg.mxu0
      %v686 = vadd.f32 %v514, %v667
      %v687 = vadd.f32 %v516, %v669
      %v688 = vadd.f32 %v519, %v672
      %v689 = vadd.f32 %v521, %v674
      %v690 = vadd.f32 %v524, %v677
      %v691 = vadd.f32 %v526, %v679
      %v692 = vadd.f32 %v529, %v682
      %v693 = vadd.f32 %v531, %v684
      %s694 = scalar_lea.vmem %s1, 192
      %v695 = vld [vmem:[%s694] sm:$0xf]
      %v696 = vld [vmem:[%s694 + $0x4] sm:$0xf]
      %v697 = vld [vmem:[%s694 + $0x8] sm:$0xf]
      %v698 = vld [vmem:[%s694 + $0xc] sm:$0xf]
      %v699 = vld [vmem:[%s694 + $0x10] sm:$0xf]
      %v700 = vld [vmem:[%s694 + $0x14] sm:$0xf]
      %v701 = vld [vmem:[%s694 + $0x18] sm:$0xf]
      %v702 = vld [vmem:[%s694 + $0x1c] sm:$0xf]
      %v703 = vld [vmem:[%s694 + $0x20] sm:$0xf]
      %v704 = vld [vmem:[%s694 + $0x24] sm:$0xf]
      %v705 = vld [vmem:[%s694 + $0x28] sm:$0xf]
      %v706 = vld [vmem:[%s694 + $0x2c] sm:$0xf]
      %v707 = vld [vmem:[%s694 + $0x30] sm:$0xf]
      %v708 = vld [vmem:[%s694 + $0x34] sm:$0xf]
      %v709 = vld [vmem:[%s694 + $0x38] sm:$0xf]
      %v710 = vld [vmem:[%s694 + $0x3c] sm:$0xf]
      %v712 = vunpack.c.l.b16 %v187
      %v713 = vpack.c.b16 %v442, %v441
      %v714 = vpack.c.b16 %v444, %v443
      %v715 = vpack.c.b16 %v446, %v445
      %v716 = vpack.c.b16 %v712, %v447
      %v737 = vunpack.c.l.b16 %v695
      %v738 = vunpack.c.l.b16 %v696
      %v739 = vunpack.c.l.b16 %v697
      %v740 = vunpack.c.l.b16 %v698
      %v741 = vunpack.c.l.b16 %v699
      %v742 = vunpack.c.l.b16 %v700
      %v743 = vunpack.c.l.b16 %v701
      %v744 = vunpack.c.l.b16 %v702
      %v745 = vunpack.c.l.b16 %v703
      %v746 = vunpack.c.l.b16 %v704
      %v747 = vunpack.c.l.b16 %v705
      %v748 = vunpack.c.l.b16 %v706
      %v749 = vunpack.c.l.b16 %v707
      %v750 = vunpack.c.l.b16 %v708
      %v751 = vunpack.c.l.b16 %v709
      %v752 = vunpack.c.l.b16 %v710
      %v753 = vpack.c.b16 %v738, %v737
      %v754 = vpack.c.b16 %v740, %v739
      %v755 = vpack.c.b16 %v742, %v741
      %v756 = vpack.c.b16 %v744, %v743
      %v757 = vpack.c.b16 %v746, %v745
      %v758 = vpack.c.b16 %v748, %v747
      %v759 = vpack.c.b16 %v750, %v749
      %v760 = vpack.c.b16 %v752, %v751
      %769 = vmatpush.bf16.msra.mxu0 %v760
      %770 = vmatpush.bf16.msra.mxu0 %v759
      %771 = vmatpush.bf16.msra.mxu0 %v758
      %772 = vmatpush.bf16.msra.mxu0 %v757
      %773 = vmatpush.bf16.msra.mxu0 %v756
      %774 = vmatpush.bf16.msra.mxu0 %v755
      %775 = vmatpush.bf16.msra.mxu0 %v754
      %776 = vmatpush.bf16.msra.mxu0 %v753
      %777 = vmatmul.bf16.gmra.mxu0 %v713
      %v778 = vpop.f32.mrf.mxu0
      %v779 = vadd.f32 0.0, %v778
      %v780 = vpop.f32.mrf.mxu0
      %v781 = vadd.f32 0.0, %v780
      %782 = vmatmul.bf16.gmra.mxu0 %v714
      %v783 = vpop.f32.mrf.mxu0
      %v784 = vadd.f32 0.0, %v783
      %v785 = vpop.f32.mrf.mxu0
      %v786 = vadd.f32 0.0, %v785
      %787 = vmatmul.bf16.gmra.mxu0 %v715
      %v788 = vpop.f32.mrf.mxu0
      %v789 = vadd.f32 0.0, %v788
      %v790 = vpop.f32.mrf.mxu0
      %v791 = vadd.f32 0.0, %v790
      %792 = vmatmul.bf16.gmra.mxu0 %v716
      %v793 = vpop.f32.mrf.mxu0
      %v794 = vadd.f32 0.0, %v793
      %v795 = vpop.f32.mrf.mxu0
      %v796 = vadd.f32 0.0, %v795
      %797 = vdwg.mxu0
      %v798 = vadd.f32 %v686, %v779
      %v799 = vadd.f32 %v687, %v781
      %v800 = vadd.f32 %v688, %v784
      %v801 = vadd.f32 %v689, %v786
      %v802 = vadd.f32 %v690, %v789
      %v803 = vadd.f32 %v691, %v791
      %v804 = vadd.f32 %v692, %v794
      %v805 = vadd.f32 %v693, %v796
      %v807 = vshrl.u32 %v187, 16
      %v809 = vrot.slane %v807, 4
      %v810 = vshll.u32 %v187, 16
      %v812 = vrot.slane %v810, 5
      %v813 = vor.u32 %v809, %v812
      %v814 = vrot.slane %v813, 4
      %v816 = vshll.u32 %v188, 16
      %v818 = vrot.slane %v816, 5
      %v819 = vsel %vm209, %v814, %v818
      %s820 = scalar_lea.vmem %s1, 256
      %v821 = vld [vmem:[%s820] sm:$0xf]
      %v822 = vld [vmem:[%s820 + $0x4] sm:$0xf]
      %v823 = vld [vmem:[%s820 + $0x8] sm:$0xf]
      %v824 = vld [vmem:[%s820 + $0xc] sm:$0xf]
      %v825 = vld [vmem:[%s820 + $0x10] sm:$0xf]
      %v826 = vld [vmem:[%s820 + $0x14] sm:$0xf]
      %v827 = vld [vmem:[%s820 + $0x18] sm:$0xf]
      %v828 = vld [vmem:[%s820 + $0x1c] sm:$0xf]
      %v829 = vld [vmem:[%s820 + $0x20] sm:$0xf]
      %v830 = vld [vmem:[%s820 + $0x24] sm:$0xf]
      %v831 = vld [vmem:[%s820 + $0x28] sm:$0xf]
      %v832 = vld [vmem:[%s820 + $0x2c] sm:$0xf]
      %v833 = vld [vmem:[%s820 + $0x30] sm:$0xf]
      %v834 = vld [vmem:[%s820 + $0x34] sm:$0xf]
      %v835 = vld [vmem:[%s820 + $0x38] sm:$0xf]
      %v836 = vld [vmem:[%s820 + $0x3c] sm:$0xf]
      %v837 = vunpack.c.l.b16 %v819
      %v838 = vpack.c.b16 %v341, %v340
      %v839 = vpack.c.b16 %v343, %v342
      %v840 = vpack.c.b16 %v345, %v344
      %v841 = vpack.c.b16 %v837, %v346
      %v862 = vunpack.c.l.b16 %v821
      %v863 = vunpack.c.l.b16 %v822
      %v864 = vunpack.c.l.b16 %v823
      %v865 = vunpack.c.l.b16 %v824
      %v866 = vunpack.c.l.b16 %v825
      %v867 = vunpack.c.l.b16 %v826
      %v868 = vunpack.c.l.b16 %v827
      %v869 = vunpack.c.l.b16 %v828
      %v870 = vunpack.c.l.b16 %v829
      %v871 = vunpack.c.l.b16 %v830
      %v872 = vunpack.c.l.b16 %v831
      %v873 = vunpack.c.l.b16 %v832
      %v874 = vunpack.c.l.b16 %v833
      %v875 = vunpack.c.l.b16 %v834
      %v876 = vunpack.c.l.b16 %v835
      %v877 = vunpack.c.l.b16 %v836
      %v878 = vpack.c.b16 %v863, %v862
      %v879 = vpack.c.b16 %v865, %v864
      %v880 = vpack.c.b16 %v867, %v866
      %v881 = vpack.c.b16 %v869, %v868
      %v882 = vpack.c.b16 %v871, %v870
      %v883 = vpack.c.b16 %v873, %v872
      %v884 = vpack.c.b16 %v875, %v874
      %v885 = vpack.c.b16 %v877, %v876
      %894 = vmatpush.bf16.msra.mxu0 %v885
      %895 = vmatpush.bf16.msra.mxu0 %v884
      %896 = vmatpush.bf16.msra.mxu0 %v883
      %897 = vmatpush.bf16.msra.mxu0 %v882
      %898 = vmatpush.bf16.msra.mxu0 %v881
      %899 = vmatpush.bf16.msra.mxu0 %v880
      %900 = vmatpush.bf16.msra.mxu0 %v879
      %901 = vmatpush.bf16.msra.mxu0 %v878
      %902 = vmatmul.bf16.gmra.mxu0 %v838
      %v903 = vpop.f32.mrf.mxu0
      %v904 = vadd.f32 0.0, %v903
      %v905 = vpop.f32.mrf.mxu0
      %v906 = vadd.f32 0.0, %v905
      %907 = vmatmul.bf16.gmra.mxu0 %v839
      %v908 = vpop.f32.mrf.mxu0
      %v909 = vadd.f32 0.0, %v908
      %v910 = vpop.f32.mrf.mxu0
      %v911 = vadd.f32 0.0, %v910
      %912 = vmatmul.bf16.gmra.mxu0 %v840
      %v913 = vpop.f32.mrf.mxu0
      %v914 = vadd.f32 0.0, %v913
      %v915 = vpop.f32.mrf.mxu0
      %v916 = vadd.f32 0.0, %v915
      %917 = vmatmul.bf16.gmra.mxu0 %v841
      %v918 = vpop.f32.mrf.mxu0
      %v919 = vadd.f32 0.0, %v918
      %v920 = vpop.f32.mrf.mxu0
      %v921 = vadd.f32 0.0, %v920
      %922 = vdwg.mxu0
      %v923 = vadd.f32 %v798, %v904
      %v924 = vadd.f32 %v799, %v906
      %v925 = vadd.f32 %v800, %v909
      %v926 = vadd.f32 %v801, %v911
      %v927 = vadd.f32 %v802, %v914
      %v928 = vadd.f32 %v803, %v916
      %v929 = vadd.f32 %v804, %v919
      %v930 = vadd.f32 %v805, %v921
      %v932 = vrot.slane %v187, 5
      %v933 = vrot.slane %v932, 4
      %v934 = vrot.slane %v188, 5
      %v935 = vsel %vm543, %v933, %v934
      %s936 = scalar_lea.vmem %s1, 320
      %v937 = vld [vmem:[%s936] sm:$0xf]
      %v938 = vld [vmem:[%s936 + $0x4] sm:$0xf]
      %v939 = vld [vmem:[%s936 + $0x8] sm:$0xf]
      %v940 = vld [vmem:[%s936 + $0xc] sm:$0xf]
      %v941 = vld [vmem:[%s936 + $0x10] sm:$0xf]
      %v942 = vld [vmem:[%s936 + $0x14] sm:$0xf]
      %v943 = vld [vmem:[%s936 + $0x18] sm:$0xf]
      %v944 = vld [vmem:[%s936 + $0x1c] sm:$0xf]
      %v945 = vld [vmem:[%s936 + $0x20] sm:$0xf]
      %v946 = vld [vmem:[%s936 + $0x24] sm:$0xf]
      %v947 = vld [vmem:[%s936 + $0x28] sm:$0xf]
      %v948 = vld [vmem:[%s936 + $0x2c] sm:$0xf]
      %v949 = vld [vmem:[%s936 + $0x30] sm:$0xf]
      %v950 = vld [vmem:[%s936 + $0x34] sm:$0xf]
      %v951 = vld [vmem:[%s936 + $0x38] sm:$0xf]
      %v952 = vld [vmem:[%s936 + $0x3c] sm:$0xf]
      %v953 = vunpack.c.l.b16 %v935
      %v954 = vpack.c.b16 %v595, %v594
      %v955 = vpack.c.b16 %v597, %v596
      %v956 = vpack.c.b16 %v599, %v598
      %v957 = vpack.c.b16 %v953, %v600
      %v978 = vunpack.c.l.b16 %v937
      %v979 = vunpack.c.l.b16 %v938
      %v980 = vunpack.c.l.b16 %v939
      %v981 = vunpack.c.l.b16 %v940
      %v982 = vunpack.c.l.b16 %v941
      %v983 = vunpack.c.l.b16 %v942
      %v984 = vunpack.c.l.b16 %v943
      %v985 = vunpack.c.l.b16 %v944
      %v986 = vunpack.c.l.b16 %v945
      %v987 = vunpack.c.l.b16 %v946
      %v988 = vunpack.c.l.b16 %v947
      %v989 = vunpack.c.l.b16 %v948
      %v990 = vunpack.c.l.b16 %v949
      %v991 = vunpack.c.l.b16 %v950
      %v992 = vunpack.c.l.b16 %v951
      %v993 = vunpack.c.l.b16 %v952
      %v994 = vpack.c.b16 %v979, %v978
      %v995 = vpack.c.b16 %v981, %v980
      %v996 = vpack.c.b16 %v983, %v982
      %v997 = vpack.c.b16 %v985, %v984
      %v998 = vpack.c.b16 %v987, %v986
      %v999 = vpack.c.b16 %v989, %v988
      %v1000 = vpack.c.b16 %v991, %v990
      %v1001 = vpack.c.b16 %v993, %v992
      %1010 = vmatpush.bf16.msra.mxu0 %v1001
      %1011 = vmatpush.bf16.msra.mxu0 %v1000
      %1012 = vmatpush.bf16.msra.mxu0 %v999
      %1013 = vmatpush.bf16.msra.mxu0 %v998
      %1014 = vmatpush.bf16.msra.mxu0 %v997
      %1015 = vmatpush.bf16.msra.mxu0 %v996
      %1016 = vmatpush.bf16.msra.mxu0 %v995
      %1017 = vmatpush.bf16.msra.mxu0 %v994
      %1018 = vmatmul.bf16.gmra.mxu0 %v954
      %v1019 = vpop.f32.mrf.mxu0
      %v1020 = vadd.f32 0.0, %v1019
      %v1021 = vpop.f32.mrf.mxu0
      %v1022 = vadd.f32 0.0, %v1021
      %1023 = vmatmul.bf16.gmra.mxu0 %v955
      %v1024 = vpop.f32.mrf.mxu0
      %v1025 = vadd.f32 0.0, %v1024
      %v1026 = vpop.f32.mrf.mxu0
      %v1027 = vadd.f32 0.0, %v1026
      %1028 = vmatmul.bf16.gmra.mxu0 %v956
      %v1029 = vpop.f32.mrf.mxu0
      %v1030 = vadd.f32 0.0, %v1029
      %v1031 = vpop.f32.mrf.mxu0
      %v1032 = vadd.f32 0.0, %v1031
      %1033 = vmatmul.bf16.gmra.mxu0 %v957
      %v1034 = vpop.f32.mrf.mxu0
      %v1035 = vadd.f32 0.0, %v1034
      %v1036 = vpop.f32.mrf.mxu0
      %v1037 = vadd.f32 0.0, %v1036
      %1038 = vdwg.mxu0
      %v1039 = vadd.f32 %v923, %v1020
      %v1040 = vadd.f32 %v924, %v1022
      %v1041 = vadd.f32 %v925, %v1025
      %v1042 = vadd.f32 %v926, %v1027
      %v1043 = vadd.f32 %v927, %v1030
      %v1044 = vadd.f32 %v928, %v1032
      %v1045 = vadd.f32 %v929, %v1035
      %v1046 = vadd.f32 %v930, %v1037
      %s1047 = scalar_lea.vmem %s1, 384
      %v1048 = vld [vmem:[%s1047] sm:$0xf]
      %v1049 = vld [vmem:[%s1047 + $0x4] sm:$0xf]
      %v1050 = vld [vmem:[%s1047 + $0x8] sm:$0xf]
      %v1051 = vld [vmem:[%s1047 + $0xc] sm:$0xf]
      %v1052 = vld [vmem:[%s1047 + $0x10] sm:$0xf]
      %v1053 = vld [vmem:[%s1047 + $0x14] sm:$0xf]
      %v1054 = vld [vmem:[%s1047 + $0x18] sm:$0xf]
      %v1055 = vld [vmem:[%s1047 + $0x1c] sm:$0xf]
      %v1056 = vld [vmem:[%s1047 + $0x20] sm:$0xf]
      %v1057 = vld [vmem:[%s1047 + $0x24] sm:$0xf]
      %v1058 = vld [vmem:[%s1047 + $0x28] sm:$0xf]
      %v1059 = vld [vmem:[%s1047 + $0x2c] sm:$0xf]
      %v1060 = vld [vmem:[%s1047 + $0x30] sm:$0xf]
      %v1061 = vld [vmem:[%s1047 + $0x34] sm:$0xf]
      %v1062 = vld [vmem:[%s1047 + $0x38] sm:$0xf]
      %v1063 = vld [vmem:[%s1047 + $0x3c] sm:$0xf]
      %v1065 = vunpack.c.l.b16 %v189
      %v1066 = vpack.c.b16 %v1065, %v712
      %v1084 = vunpack.c.l.b16 %v1048
      %v1085 = vunpack.c.l.b16 %v1049
      %v1086 = vunpack.c.l.b16 %v1050
      %v1087 = vunpack.c.l.b16 %v1051
      %v1088 = vunpack.c.l.b16 %v1052
      %v1089 = vunpack.c.l.b16 %v1053
      %v1090 = vunpack.c.l.b16 %v1054
      %v1091 = vunpack.c.l.b16 %v1055
      %v1092 = vunpack.c.l.b16 %v1056
      %v1093 = vunpack.c.l.b16 %v1057
      %v1094 = vunpack.c.l.b16 %v1058
      %v1095 = vunpack.c.l.b16 %v1059
      %v1096 = vunpack.c.l.b16 %v1060
      %v1097 = vunpack.c.l.b16 %v1061
      %v1098 = vunpack.c.l.b16 %v1062
      %v1099 = vunpack.c.l.b16 %v1063
      %v1100 = vpack.c.b16 %v1085, %v1084
      %v1101 = vpack.c.b16 %v1087, %v1086
      %v1102 = vpack.c.b16 %v1089, %v1088
      %v1103 = vpack.c.b16 %v1091, %v1090
      %v1104 = vpack.c.b16 %v1093, %v1092
      %v1105 = vpack.c.b16 %v1095, %v1094
      %v1106 = vpack.c.b16 %v1097, %v1096
      %v1107 = vpack.c.b16 %v1099, %v1098
      %1116 = vmatpush.bf16.msra.mxu0 %v1107
      %1117 = vmatpush.bf16.msra.mxu0 %v1106
      %1118 = vmatpush.bf16.msra.mxu0 %v1105
      %1119 = vmatpush.bf16.msra.mxu0 %v1104
      %1120 = vmatpush.bf16.msra.mxu0 %v1103
      %1121 = vmatpush.bf16.msra.mxu0 %v1102
      %1122 = vmatpush.bf16.msra.mxu0 %v1101
      %1123 = vmatpush.bf16.msra.mxu0 %v1100
      %1124 = vmatmul.bf16.gmra.mxu0 %v449
      %v1125 = vpop.f32.mrf.mxu0
      %v1126 = vadd.f32 0.0, %v1125
      %v1127 = vpop.f32.mrf.mxu0
      %v1128 = vadd.f32 0.0, %v1127
      %1129 = vmatmul.bf16.gmra.mxu0 %v450
      %v1130 = vpop.f32.mrf.mxu0
      %v1131 = vadd.f32 0.0, %v1130
      %v1132 = vpop.f32.mrf.mxu0
      %v1133 = vadd.f32 0.0, %v1132
      %1134 = vmatmul.bf16.gmra.mxu0 %v451
      %v1135 = vpop.f32.mrf.mxu0
      %v1136 = vadd.f32 0.0, %v1135
      %v1137 = vpop.f32.mrf.mxu0
      %v1138 = vadd.f32 0.0, %v1137
      %1139 = vmatmul.bf16.gmra.mxu0 %v1066
      %v1140 = vpop.f32.mrf.mxu0
      %v1141 = vadd.f32 0.0, %v1140
      %v1142 = vpop.f32.mrf.mxu0
      %v1143 = vadd.f32 0.0, %v1142
      %1144 = vdwg.mxu0
      %v1145 = vadd.f32 %v1039, %v1126
      %v1146 = vadd.f32 %v1040, %v1128
      %v1147 = vadd.f32 %v1041, %v1131
      %v1148 = vadd.f32 %v1042, %v1133
      %v1149 = vadd.f32 %v1043, %v1136
      %v1150 = vadd.f32 %v1044, %v1138
      %v1151 = vadd.f32 %v1045, %v1141
      %v1152 = vadd.f32 %v1046, %v1143
      %v1154 = vshrl.u32 %v189, 16
      %v1156 = vrot.slane %v1154, 4
      %v1157 = vshll.u32 %v189, 16
      %v1159 = vrot.slane %v1157, 5
      %v1160 = vor.u32 %v1156, %v1159
      %v1161 = vrot.slane %v1160, 4
      %v1163 = vshll.u32 %v190, 16
      %v1165 = vrot.slane %v1163, 5
      %v1166 = vsel %vm209, %v1161, %v1165
      %s1167 = scalar_lea.vmem %s1, 448
      %v1168 = vld [vmem:[%s1167] sm:$0xf]
      %v1169 = vld [vmem:[%s1167 + $0x4] sm:$0xf]
      %v1170 = vld [vmem:[%s1167 + $0x8] sm:$0xf]
      %v1171 = vld [vmem:[%s1167 + $0xc] sm:$0xf]
      %v1172 = vld [vmem:[%s1167 + $0x10] sm:$0xf]
      %v1173 = vld [vmem:[%s1167 + $0x14] sm:$0xf]
      %v1174 = vld [vmem:[%s1167 + $0x18] sm:$0xf]
      %v1175 = vld [vmem:[%s1167 + $0x1c] sm:$0xf]
      %v1176 = vld [vmem:[%s1167 + $0x20] sm:$0xf]
      %v1177 = vld [vmem:[%s1167 + $0x24] sm:$0xf]
      %v1178 = vld [vmem:[%s1167 + $0x28] sm:$0xf]
      %v1179 = vld [vmem:[%s1167 + $0x2c] sm:$0xf]
      %v1180 = vld [vmem:[%s1167 + $0x30] sm:$0xf]
      %v1181 = vld [vmem:[%s1167 + $0x34] sm:$0xf]
      %v1182 = vld [vmem:[%s1167 + $0x38] sm:$0xf]
      %v1183 = vld [vmem:[%s1167 + $0x3c] sm:$0xf]
      %v1184 = vunpack.c.l.b16 %v1166
      %v1185 = vpack.c.b16 %v1184, %v837
      %v1203 = vunpack.c.l.b16 %v1168
      %v1204 = vunpack.c.l.b16 %v1169
      %v1205 = vunpack.c.l.b16 %v1170
      %v1206 = vunpack.c.l.b16 %v1171
      %v1207 = vunpack.c.l.b16 %v1172
      %v1208 = vunpack.c.l.b16 %v1173
      %v1209 = vunpack.c.l.b16 %v1174
      %v1210 = vunpack.c.l.b16 %v1175
      %v1211 = vunpack.c.l.b16 %v1176
      %v1212 = vunpack.c.l.b16 %v1177
      %v1213 = vunpack.c.l.b16 %v1178
      %v1214 = vunpack.c.l.b16 %v1179
      %v1215 = vunpack.c.l.b16 %v1180
      %v1216 = vunpack.c.l.b16 %v1181
      %v1217 = vunpack.c.l.b16 %v1182
      %v1218 = vunpack.c.l.b16 %v1183
      %v1219 = vpack.c.b16 %v1204, %v1203
      %v1220 = vpack.c.b16 %v1206, %v1205
      %v1221 = vpack.c.b16 %v1208, %v1207
      %v1222 = vpack.c.b16 %v1210, %v1209
      %v1223 = vpack.c.b16 %v1212, %v1211
      %v1224 = vpack.c.b16 %v1214, %v1213
      %v1225 = vpack.c.b16 %v1216, %v1215
      %v1226 = vpack.c.b16 %v1218, %v1217
      %1235 = vmatpush.bf16.msra.mxu0 %v1226
      %1236 = vmatpush.bf16.msra.mxu0 %v1225
      %1237 = vmatpush.bf16.msra.mxu0 %v1224
      %1238 = vmatpush.bf16.msra.mxu0 %v1223
      %1239 = vmatpush.bf16.msra.mxu0 %v1222
      %1240 = vmatpush.bf16.msra.mxu0 %v1221
      %1241 = vmatpush.bf16.msra.mxu0 %v1220
      %1242 = vmatpush.bf16.msra.mxu0 %v1219
      %1243 = vmatmul.bf16.gmra.mxu0 %v348
      %v1244 = vpop.f32.mrf.mxu0
      %v1245 = vadd.f32 0.0, %v1244
      %v1246 = vpop.f32.mrf.mxu0
      %v1247 = vadd.f32 0.0, %v1246
      %1248 = vmatmul.bf16.gmra.mxu0 %v349
      %v1249 = vpop.f32.mrf.mxu0
      %v1250 = vadd.f32 0.0, %v1249
      %v1251 = vpop.f32.mrf.mxu0
      %v1252 = vadd.f32 0.0, %v1251
      %1253 = vmatmul.bf16.gmra.mxu0 %v350
      %v1254 = vpop.f32.mrf.mxu0
      %v1255 = vadd.f32 0.0, %v1254
      %v1256 = vpop.f32.mrf.mxu0
      %v1257 = vadd.f32 0.0, %v1256
      %1258 = vmatmul.bf16.gmra.mxu0 %v1185
      %v1259 = vpop.f32.mrf.mxu0
      %v1260 = vadd.f32 0.0, %v1259
      %v1261 = vpop.f32.mrf.mxu0
      %v1262 = vadd.f32 0.0, %v1261
      %1263 = vdwg.mxu0
      %v1264 = vadd.f32 %v1145, %v1245
      %v1265 = vadd.f32 %v1146, %v1247
      %v1266 = vadd.f32 %v1147, %v1250
      %v1267 = vadd.f32 %v1148, %v1252
      %v1268 = vadd.f32 %v1149, %v1255
      %v1269 = vadd.f32 %v1150, %v1257
      %v1270 = vadd.f32 %v1151, %v1260
      %v1271 = vadd.f32 %v1152, %v1262
      %v1273 = vrot.slane %v189, 5
      %v1274 = vrot.slane %v1273, 4
      %v1275 = vrot.slane %v190, 5
      %v1276 = vsel %vm543, %v1274, %v1275
      %s1277 = scalar_lea.vmem %s1, 512
      %v1278 = vld [vmem:[%s1277] sm:$0xf]
      %v1279 = vld [vmem:[%s1277 + $0x4] sm:$0xf]
      %v1280 = vld [vmem:[%s1277 + $0x8] sm:$0xf]
      %v1281 = vld [vmem:[%s1277 + $0xc] sm:$0xf]
      %v1282 = vld [vmem:[%s1277 + $0x10] sm:$0xf]
      %v1283 = vld [vmem:[%s1277 + $0x14] sm:$0xf]
      %v1284 = vld [vmem:[%s1277 + $0x18] sm:$0xf]
      %v1285 = vld [vmem:[%s1277 + $0x1c] sm:$0xf]
      %v1286 = vld [vmem:[%s1277 + $0x20] sm:$0xf]
      %v1287 = vld [vmem:[%s1277 + $0x24] sm:$0xf]
      %v1288 = vld [vmem:[%s1277 + $0x28] sm:$0xf]
      %v1289 = vld [vmem:[%s1277 + $0x2c] sm:$0xf]
      %v1290 = vld [vmem:[%s1277 + $0x30] sm:$0xf]
      %v1291 = vld [vmem:[%s1277 + $0x34] sm:$0xf]
      %v1292 = vld [vmem:[%s1277 + $0x38] sm:$0xf]
      %v1293 = vld [vmem:[%s1277 + $0x3c] sm:$0xf]
      %v1294 = vunpack.c.l.b16 %v1276
      %v1295 = vpack.c.b16 %v1294, %v953
      %v1313 = vunpack.c.l.b16 %v1278
      %v1314 = vunpack.c.l.b16 %v1279
      %v1315 = vunpack.c.l.b16 %v1280
      %v1316 = vunpack.c.l.b16 %v1281
      %v1317 = vunpack.c.l.b16 %v1282
      %v1318 = vunpack.c.l.b16 %v1283
      %v1319 = vunpack.c.l.b16 %v1284
      %v1320 = vunpack.c.l.b16 %v1285
      %v1321 = vunpack.c.l.b16 %v1286
      %v1322 = vunpack.c.l.b16 %v1287
      %v1323 = vunpack.c.l.b16 %v1288
      %v1324 = vunpack.c.l.b16 %v1289
      %v1325 = vunpack.c.l.b16 %v1290
      %v1326 = vunpack.c.l.b16 %v1291
      %v1327 = vunpack.c.l.b16 %v1292
      %v1328 = vunpack.c.l.b16 %v1293
      %v1329 = vpack.c.b16 %v1314, %v1313
      %v1330 = vpack.c.b16 %v1316, %v1315
      %v1331 = vpack.c.b16 %v1318, %v1317
      %v1332 = vpack.c.b16 %v1320, %v1319
      %v1333 = vpack.c.b16 %v1322, %v1321
      %v1334 = vpack.c.b16 %v1324, %v1323
      %v1335 = vpack.c.b16 %v1326, %v1325
      %v1336 = vpack.c.b16 %v1328, %v1327
      %1345 = vmatpush.bf16.msra.mxu0 %v1336
      %1346 = vmatpush.bf16.msra.mxu0 %v1335
      %1347 = vmatpush.bf16.msra.mxu0 %v1334
      %1348 = vmatpush.bf16.msra.mxu0 %v1333
      %1349 = vmatpush.bf16.msra.mxu0 %v1332
      %1350 = vmatpush.bf16.msra.mxu0 %v1331
      %1351 = vmatpush.bf16.msra.mxu0 %v1330
      %1352 = vmatpush.bf16.msra.mxu0 %v1329
      %1353 = vmatmul.bf16.gmra.mxu0 %v602
      %v1354 = vpop.f32.mrf.mxu0
      %v1355 = vadd.f32 0.0, %v1354
      %v1356 = vpop.f32.mrf.mxu0
      %v1357 = vadd.f32 0.0, %v1356
      %1358 = vmatmul.bf16.gmra.mxu0 %v603
      %v1359 = vpop.f32.mrf.mxu0
      %v1360 = vadd.f32 0.0, %v1359
      %v1361 = vpop.f32.mrf.mxu0
      %v1362 = vadd.f32 0.0, %v1361
      %1363 = vmatmul.bf16.gmra.mxu0 %v604
      %v1364 = vpop.f32.mrf.mxu0
      %v1365 = vadd.f32 0.0, %v1364
      %v1366 = vpop.f32.mrf.mxu0
      %v1367 = vadd.f32 0.0, %v1366
      %1368 = vmatmul.bf16.gmra.mxu0 %v1295
      %v1369 = vpop.f32.mrf.mxu0
      %v1370 = vadd.f32 0.0, %v1369
      %v1371 = vpop.f32.mrf.mxu0
      %v1372 = vadd.f32 0.0, %v1371
      %1373 = vdwg.mxu0
      %v1374 = vadd.f32 %v1264, %v1355
      %v1375 = vadd.f32 %v1265, %v1357
      %v1376 = vadd.f32 %v1266, %v1360
      %v1377 = vadd.f32 %v1267, %v1362
      %v1378 = vadd.f32 %v1268, %v1365
      %v1379 = vadd.f32 %v1269, %v1367
      %v1380 = vadd.f32 %v1270, %v1370
      %v1381 = vadd.f32 %v1271, %v1372
      %v1382 = vld [vmem:[%s2] sm:$0x1]
      %v1384 = vperm.slane %v1382, 0
      %v1386 = vadd.f32 %v1374, %v1384
      %v1387 = vadd.f32 %v1375, %v1384
      %v1388 = vadd.f32 %v1376, %v1384
      %v1389 = vadd.f32 %v1377, %v1384
      %v1390 = vadd.f32 %v1378, %v1384
      %v1391 = vadd.f32 %v1379, %v1384
      %v1392 = vadd.f32 %v1380, %v1384
      %v1393 = vadd.f32 %v1381, %v1384
      %v1394 = vmax.f32 %v1386, 0.0
      %v1395 = vmax.f32 %v1387, 0.0
      %v1396 = vmax.f32 %v1388, 0.0
      %v1397 = vmax.f32 %v1389, 0.0
      %v1398 = vmax.f32 %v1390, 0.0
      %v1399 = vmax.f32 %v1391, 0.0
      %v1400 = vmax.f32 %v1392, 0.0
      %v1401 = vmax.f32 %v1393, 0.0
      %v1402 = vpack.c.bf16 %v1394, %v1394
      %v1403 = vpack.c.bf16 %v1395, %v1395
      %v1404 = vpack.c.bf16 %v1396, %v1396
      %v1405 = vpack.c.bf16 %v1397, %v1397
      %v1406 = vpack.c.bf16 %v1398, %v1398
      %v1407 = vpack.c.bf16 %v1399, %v1399
      %v1408 = vpack.c.bf16 %v1400, %v1400
      %v1409 = vpack.c.bf16 %v1401, %v1401
      %1410 = vst [vmem:[%s170] sm:$0xf] %v1402
      %1411 = vst [vmem:[%s170 + $0x4] sm:$0xf] %v1403
      %1412 = vst [vmem:[%s170 + $0x8] sm:$0xf] %v1404
      %1413 = vst [vmem:[%s170 + $0xc] sm:$0xf] %v1405
      %1414 = vst [vmem:[%s170 + $0x10] sm:$0xf] %v1406
      %1415 = vst [vmem:[%s170 + $0x14] sm:$0xf] %v1407
      %1416 = vst [vmem:[%s170 + $0x18] sm:$0xf] %v1408
      %1417 = vst [vmem:[%s170 + $0x1c] sm:$0xf] %v1409
      %p1418 = scmp.lt.s32.totalorder %s14, 1
      %s1419 = scalar_select %p1418, %s14, 1
      %s1420 = smul.addr %s1419, 8
      %s1421 = smul.addr %s1420, 4
      %s1422 = scalar_lea.vmem %s3, %s1421
      // Predicated region
      $region33: #{_lambda_.8} parent=31 // pred_check
        %p1423 = pneg %p100
      $region34: #{_lambda_.8} parent=31 // pred_check_branch
        %1425 = sbr.rel (%p1423) target = $region36
      $region35: #{_lambda_.8} parent=31 // pred_region
        _
      $region36: #{_lambda_.8} parent=31 // pred_fallthru
        _
    $region32: #{_lambda_.8} parent=5 // pred_fallthru
      _
    %p1426 = scmp.le.s32.totalorder 2, %s9
    // Predicated region
    $region37: #{_lambda_.8} parent=5 // pred_check
      %p1427 = pneg %p1426
    $region38: #{_lambda_.8} parent=5 // pred_check_branch
      %1429 = sbr.rel (%p1427) target = $region40
    $region39: #{_lambda_.8} parent=5 // pred_region
      %s1430 = ssub.s32 %s9, 2
      // Predicated region
      $region41: #{_lambda_.8} parent=39 // pred_check
        %p1431 = pneg %p106
      $region42: #{_lambda_.8} parent=39 // pred_check_branch
        %1433 = sbr.rel (%p1431) target = $region44
      $region43: #{_lambda_.8} parent=39 // pred_region
        %p1434 = scmp.lt.s32.totalorder %s15, 1
        %s1435 = scalar_select %p1434, %s15, 1
        %s1436 = smul.addr %s1435, 8
        %s1437 = smul.addr %s1436, 4
        %s1438 = scalar_lea.vmem %s3, %s1437
      $region44: #{_lambda_.8} parent=39 // pred_fallthru
        _
    $region40: #{_lambda_.8} parent=5 // pred_fallthru
      _
  $region6: #{_lambda_.8} parent=0 // loop_footer
    %s13 = sadd.s32 1, %s9
  $region7: #{_lambda_.8} parent=0 // loop_footer_branch
    %8 = sbr.rel target = $region3
  $region8: #{_lambda_.8} parent=0 // loop_exit
    _

// kernel: _lambda_.9
$region0: #{_lambda_.9}
  #allocation0 [shape = 'u32[]', space=smem, size = 0x4, offset = 0x4, fixed_abs, tag = 'smem constant byte address 0x4 - core index']
  #allocation1 [shape = 'u32[72,128]{1,0:T(1,128)}', space=vmem, size = 0x9000, scoped, tag = 'internal scratch']
  %s0 = inlined_call_operand.vmem [shape: bf16[2,20,5,128], index: 0, kind: input, shape index: {}]
  %s1 = inlined_call_operand.vmem [shape: bf16[9,128,128], index: 1, kind: input, shape index: {}]
  %s2 = inlined_call_operand.vmem [shape: f32[1,128], index: 2, kind: input, shape index: {}]
  %s3 = inlined_call_operand.vmem [shape: bf16[2,4,4,128], index: 3, kind: output, shape index: {}]
  %s4 = sld [smem:[#allocation0]]
  $region45: #{_lambda_.9} parent=0
    _
  %s6 = ssub.s32 1, %s4
  %s7 = scalar_select 0, %s6, %s4
  loop: start=0, step=1, limit=4
  $region2: #{_lambda_.9} parent=0 // loop_pre_header
    _
  $region3: #{_lambda_.9} parent=0 // loop_header
    %s9 = sphi 0, %s13
    %p10 = scmp.ge.s32.totalorder %s9, 4
    %s19 = sphi 0, %s21
    %s22 = sphi 0, %s19
    %s23 = sphi 0, %s22
    %s39 = sphi 0, %s23
    %s43 = sphi 0, %s43
    %s45 = sphi 0, %s43
    %s46 = sphi 0, %s45
    %s60 = sphi 0, %s46
    %s64 = sphi 0, %s64
    %s66 = sphi 0, %s64
    %s67 = sphi 0, %s66
    %s81 = sphi 0, %s67
    %s87 = sphi 0, %s89
    %s90 = sphi 0, %s87
    %s91 = sphi 0, %s90
    %s107 = sphi 0, %s91
  $region4: #{_lambda_.9} parent=0 // loop_header_branch
    %12 = sbr.rel (%p10) target = $region8
  $region5: #{_lambda_.9} parent=0 // loop_body
    %s14 = ssub.s32 %s9, 1
    %s15 = ssub.s32 %s9, 2
    %s16 = sadd.s32 %s9, 1
    %s17 = ssub.s32 %s9, %s16
    %p18 = scmp.eq.s32.totalorder %s17, 0
    %s20 = sadd.s32 %s19, 1
    %s21 = scalar_select %p18, %s19, %s20
    %p24 = pneg %p18
    %p25 = scmp.eq.s32.totalorder %s9, 1
    %p26 = por %p24, %p25
    %p27 = scmp.ne.s32.totalorder %s19, %s22
    %p28 = scmp.eq.s32.totalorder %s9, 0
    %p29 = por %p27, %p28
    %p30 = scmp.ne.s32.totalorder %s19, %s22
    %p31 = scmp.eq.s32.totalorder %s14, 1
    %p32 = por %p30, %p31
    %p33 = scmp.ne.s32.totalorder %s22, %s23
    %p34 = scmp.eq.s32.totalorder %s14, 0
    %p35 = por %p33, %p34
    %p36 = scmp.ne.s32.totalorder %s22, %s23
    %p37 = scmp.eq.s32.totalorder %s15, 1
    %p38 = por %p36, %p37
    %p40 = scmp.ne.s32.totalorder %s23, %s39
    %p41 = scmp.eq.s32.totalorder %s15, 0
    %p42 = por %p40, %p41
    %s44 = sadd.s32 %s43, 1
    %p47 = scmp.eq.s32.totalorder %s9, 1
    %p48 = scmp.ne.s32.totalorder %s43, %s45
    %p49 = scmp.eq.s32.totalorder %s9, 0
    %p50 = por %p48, %p49
    %p51 = scmp.ne.s32.totalorder %s43, %s45
    %p52 = scmp.eq.s32.totalorder %s14, 1
    %p53 = por %p51, %p52
    %p54 = scmp.ne.s32.totalorder %s45, %s46
    %p55 = scmp.eq.s32.totalorder %s14, 0
    %p56 = por %p54, %p55
    %p57 = scmp.ne.s32.totalorder %s45, %s46
    %p58 = scmp.eq.s32.totalorder %s15, 1
    %p59 = por %p57, %p58
    %p61 = scmp.ne.s32.totalorder %s46, %s60
    %p62 = scmp.eq.s32.totalorder %s15, 0
    %p63 = por %p61, %p62
    %s65 = sadd.s32 %s64, 1
    %p68 = scmp.eq.s32.totalorder %s9, 1
    %p69 = scmp.ne.s32.totalorder %s64, %s66
    %p70 = scmp.eq.s32.totalorder %s9, 0
    %p71 = por %p69, %p70
    %p72 = scmp.ne.s32.totalorder %s64, %s66
    %p73 = scmp.eq.s32.totalorder %s14, 1
    %p74 = por %p72, %p73
    %p75 = scmp.ne.s32.totalorder %s66, %s67
    %p76 = scmp.eq.s32.totalorder %s14, 0
    %p77 = por %p75, %p76
    %p78 = scmp.ne.s32.totalorder %s66, %s67
    %p79 = scmp.eq.s32.totalorder %s15, 1
    %p80 = por %p78, %p79
    %p82 = scmp.ne.s32.totalorder %s67, %s81
    %p83 = scmp.eq.s32.totalorder %s15, 0
    %p84 = por %p82, %p83
    %s85 = ssub.s32 %s9, %s16
    %p86 = scmp.eq.s32.totalorder %s85, 0
    %s88 = sadd.s32 %s87, 1
    %s89 = scalar_select %p86, %s87, %s88
    %p92 = pneg %p86
    %p93 = scmp.eq.s32.totalorder %s9, 1
    %p94 = por %p92, %p93
    %p95 = scmp.ne.s32.totalorder %s87, %s90
    %p96 = scmp.eq.s32.totalorder %s9, 0
    %p97 = por %p95, %p96
    %p98 = scmp.ne.s32.totalorder %s87, %s90
    %p99 = scmp.eq.s32.totalorder %s14, 1
    %p100 = por %p98, %p99
    %p101 = scmp.ne.s32.totalorder %s90, %s91
    %p102 = scmp.eq.s32.totalorder %s14, 0
    %p103 = por %p101, %p102
    %p104 = scmp.ne.s32.totalorder %s90, %s91
    %p105 = scmp.eq.s32.totalorder %s15, 1
    %p106 = por %p104, %p105
    %p108 = scmp.ne.s32.totalorder %s91, %s107
    %p109 = scmp.eq.s32.totalorder %s15, 0
    %p110 = por %p108, %p109
    %p111 = scmp.le.s32.totalorder 1, %s9
    %p112 = scmp.lt.s32.totalorder %s9, 3
    %p113 = pnand %p111, %p112
    %p114 = pneg %p113
    // Predicated region
    $region9: #{_lambda_.9} parent=5 // pred_check
      _
    $region10: #{_lambda_.9} parent=5 // pred_check_branch
      %116 = sbr.rel (%p113) target = $region12
    $region11: #{_lambda_.9} parent=5 // pred_region
      %s117 = ssub.s32 %s9, 1
      // Predicated region
      $region13: #{_lambda_.9} parent=11 // pred_check
        %p118 = pneg %p56
      $region14: #{_lambda_.9} parent=11 // pred_check_branch
        %120 = sbr.rel (%p118) target = $region16
      $region15: #{_lambda_.9} parent=11 // pred_region
        _
      $region16: #{_lambda_.9} parent=11 // pred_fallthru
        _
      // Predicated region
      $region17: #{_lambda_.9} parent=11 // pred_check
        %p121 = pneg %p77
      $region18: #{_lambda_.9} parent=11 // pred_check_branch
        %123 = sbr.rel (%p121) target = $region20
      $region19: #{_lambda_.9} parent=11 // pred_region
        _
      $region20: #{_lambda_.9} parent=11 // pred_fallthru
        _
    $region12: #{_lambda_.9} parent=5 // pred_fallthru
      _
    %p124 = scmp.lt.s32.totalorder %s9, 2
    // Predicated region
    $region21: #{_lambda_.9} parent=5 // pred_check
      %p125 = pneg %p124
    $region22: #{_lambda_.9} parent=5 // pred_check_branch
      %127 = sbr.rel (%p125) target = $region24
    $region23: #{_lambda_.9} parent=5 // pred_region
      // Predicated region
      $region25: #{_lambda_.9} parent=23 // pred_check
        %p128 = pneg %p29
      $region26: #{_lambda_.9} parent=23 // pred_check_branch
        %130 = sbr.rel (%p128) target = $region28
      $region27: #{_lambda_.9} parent=23 // pred_region
        %p131 = scmp.lt.s32.totalorder %s9, 1
        %s132 = scalar_select %p131, %s9, 1
        %s133 = smul.addr %s132, 20
        %s134 = smul.addr %s133, 4
        %s135 = scalar_lea.vmem %s0, %s134
      $region28: #{_lambda_.9} parent=23 // pred_fallthru
        _
    $region24: #{_lambda_.9} parent=5 // pred_fallthru
      _
    %p136 = scmp.le.s32.totalorder 1, %s9
    %p137 = scmp.lt.s32.totalorder %s9, 3
    %p138 = pnand %p136, %p137
    %p139 = pneg %p138
    // Predicated region
    $region29: #{_lambda_.9} parent=5 // pred_check
      _
    $region30: #{_lambda_.9} parent=5 // pred_check_branch
      %141 = sbr.rel (%p138) target = $region32
    $region31: #{_lambda_.9} parent=5 // pred_region
      %s142 = ssub.s32 %s9, 1
      %p143 = scmp.lt.s32.totalorder %s14, 1
      %s144 = scalar_select %p143, %s14, 1
      %s145 = smul.addr %s144, 20
      %s146 = smul.addr %s145, 4
      %s147 = scalar_lea.vmem %s0, %s146
      %p148 = pneg %p35
      %p149 = pneg %p32
      %p150 = pneg %p56
      %p151 = pneg %p53
      %p152 = pneg %p77
      %p153 = pneg %p74
      %p154 = pneg %p103
      %p155 = pneg %p100
      %p156 = scmp.lt.s32.totalorder %s14, 1
      %s157 = scalar_select %p156, %s14, 1
      %s158 = smul.addr %s157, 4
      %s159 = smul.addr %s158, 2
      %s160 = scalar_lea.vmem %s3, %s159
      %p161 = scmp.lt.s32.totalorder %s14, 1
      %s162 = scalar_select %p161, %s14, 1
      %s163 = smul.addr %s162, 20
      %s164 = smul.addr %s163, 4
      %s165 = scalar_lea.vmem %s0, %s164
      %p166 = scmp.lt.s32.totalorder %s14, 1
      %s167 = scalar_select %p166, %s14, 1
      %s168 = smul.addr %s167, 4
      %s169 = smul.addr %s168, 2
      %s170 = scalar_lea.vmem %s3, %s169
      %v171 = vld [vmem:[%s165] sm:$0x7]
      %v172 = vld [vmem:[%s165 + $0x4] sm:$0x7]
      %v173 = vld [vmem:[%s165 + $0x8] sm:$0x7]
      %v174 = vld [vmem:[%s165 + $0xc] sm:$0x7]
      %v175 = vld [vmem:[%s165 + $0x10] sm:$0x7]
      %v176 = vld [vmem:[%s165 + $0x14] sm:$0x7]
      %v177 = vld [vmem:[%s165 + $0x18] sm:$0x7]
      %v178 = vld [vmem:[%s165 + $0x1c] sm:$0x7]
      %v179 = vld [vmem:[%s165 + $0x20] sm:$0x7]
      %v180 = vld [vmem:[%s165 + $0x24] sm:$0x7]
      %v181 = vld [vmem:[%s165 + $0x28] sm:$0x7]
      %v182 = vld [vmem:[%s165 + $0x2c] sm:$0x7]
      %v183 = vld [vmem:[%s165 + $0x30] sm:$0x7]
      %v184 = vld [vmem:[%s165 + $0x34] sm:$0x7]
      %v185 = vld [vmem:[%s165 + $0x3c] sm:$0x7]
      %v186 = vld [vmem:[%s165 + $0x40] sm:$0x7]
      %v187 = vld [vmem:[%s165 + $0x44] sm:$0x7]
      %v188 = vld [vmem:[%s165 + $0x48] sm:$0x7]
      %v189 = vld [vmem:[%s1] sm:$0xf]
      %v190 = vld [vmem:[%s1 + $0x4] sm:$0xf]
      %v191 = vld [vmem:[%s1 + $0x8] sm:$0xf]
      %v192 = vld [vmem:[%s1 + $0xc] sm:$0xf]
      %v193 = vld [vmem:[%s1 + $0x10] sm:$0xf]
      %v194 = vld [vmem:[%s1 + $0x14] sm:$0xf]
      %v195 = vld [vmem:[%s1 + $0x18] sm:$0xf]
      %v196 = vld [vmem:[%s1 + $0x1c] sm:$0xf]
      %v197 = vld [vmem:[%s1 + $0x20] sm:$0xf]
      %v198 = vld [vmem:[%s1 + $0x24] sm:$0xf]
      %v199 = vld [vmem:[%s1 + $0x28] sm:$0xf]
      %v200 = vld [vmem:[%s1 + $0x2c] sm:$0xf]
      %v201 = vld [vmem:[%s1 + $0x30] sm:$0xf]
      %v202 = vld [vmem:[%s1 + $0x34] sm:$0xf]
      %v203 = vld [vmem:[%s1 + $0x38] sm:$0xf]
      %v204 = vld [vmem:[%s1 + $0x3c] sm:$0xf]
      %s205 = scalar_lea.vmem %s1, 64
      %v206 = vld [vmem:[%s205] sm:$0xf]
      %v207 = vld [vmem:[%s205 + $0x4] sm:$0xf]
      %v208 = vld [vmem:[%s205 + $0x8] sm:$0xf]
      %v209 = vld [vmem:[%s205 + $0xc] sm:$0xf]
      %v210 = vld [vmem:[%s205 + $0x10] sm:$0xf]
      %v211 = vld [vmem:[%s205 + $0x14] sm:$0xf]
      %v212 = vld [vmem:[%s205 + $0x18] sm:$0xf]
      %v213 = vld [vmem:[%s205 + $0x1c] sm:$0xf]
      %v214 = vld [vmem:[%s205 + $0x20] sm:$0xf]
      %v215 = vld [vmem:[%s205 + $0x24] sm:$0xf]
      %v216 = vld [vmem:[%s205 + $0x28] sm:$0xf]
      %v217 = vld [vmem:[%s205 + $0x2c] sm:$0xf]
      %v218 = vld [vmem:[%s205 + $0x30] sm:$0xf]
      %v219 = vld [vmem:[%s205 + $0x34] sm:$0xf]
      %v220 = vld [vmem:[%s205 + $0x38] sm:$0xf]
      %v221 = vld [vmem:[%s205 + $0x3c] sm:$0xf]
      %223 = vst [vmem:[#allocation1] ss:$4 sm:$0xff] %v176
      %s225 = scalar_lea.vmem [#allocation1], 1
      %226 = vst [vmem:[%s225] ss:$4 sm:$0xff] %v177
      %s228 = scalar_lea.vmem [#allocation1], 2
      %229 = vst [vmem:[%s228] ss:$4 sm:$0xff] %v178
      %s231 = scalar_lea.vmem [#allocation1], 3
      %232 = vst [vmem:[%s231] ss:$4 sm:$0xff] %v179
      %v233 = vld.sshfl [vmem:[#allocation1] sm:$0xff pattern:$0x73625140]
      %v251 = vunpack.c.l.b16 %v206
      %v252 = vunpack.c.l.b16 %v207
      %v253 = vunpack.c.l.b16 %v208
      %v254 = vunpack.c.l.b16 %v209
      %v255 = vunpack.c.l.b16 %v210
      %v256 = vunpack.c.l.b16 %v211
      %v257 = vunpack.c.l.b16 %v212
      %v258 = vunpack.c.l.b16 %v213
      %v259 = vunpack.c.l.b16 %v214
      %v260 = vunpack.c.l.b16 %v215
      %v261 = vunpack.c.l.b16 %v216
      %v262 = vunpack.c.l.b16 %v217
      %v263 = vunpack.c.l.b16 %v218
      %v264 = vunpack.c.l.b16 %v219
      %v265 = vunpack.c.l.b16 %v220
      %v266 = vunpack.c.l.b16 %v221
      %v267 = vpack.c.b16 %v252, %v251
      %v268 = vpack.c.b16 %v254, %v253
      %v269 = vpack.c.b16 %v256, %v255
      %v270 = vpack.c.b16 %v258, %v257
      %v271 = vpack.c.b16 %v260, %v259
      %v272 = vpack.c.b16 %v262, %v261
      %v273 = vpack.c.b16 %v264, %v263
      %v274 = vpack.c.b16 %v266, %v265
      %283 = vmatpush.bf16.msra.mxu0 %v274
      %284 = vmatpush.bf16.msra.mxu0 %v273
      %285 = vmatpush.bf16.msra.mxu0 %v272
      %286 = vmatpush.bf16.msra.mxu0 %v271
      %287 = vmatpush.bf16.msra.mxu0 %v270
      %288 = vmatpush.bf16.msra.mxu0 %v269
      %289 = vmatpush.bf16.msra.mxu0 %v268
      %290 = vmatpush.bf16.msra.mxu0 %v267
      %291 = vmatmul.bf16.gmra.mxu0 %v233
      %v292 = vpop.f32.mrf.mxu0
      %v293 = vadd.f32 0.0, %v292
      %v294 = vpop.f32.mrf.mxu0
      %v295 = vadd.f32 0.0, %v294
      %296 = vdwg.mxu0
      %298 = vst [vmem:[#allocation1] ss:$4 sm:$0xff] %v171
      %s300 = scalar_lea.vmem [#allocation1], 1
      %301 = vst [vmem:[%s300] ss:$4 sm:$0xff] %v172
      %s303 = scalar_lea.vmem [#allocation1], 2
      %304 = vst [vmem:[%s303] ss:$4 sm:$0xff] %v173
      %s306 = scalar_lea.vmem [#allocation1], 3
      %307 = vst [vmem:[%s306] ss:$4 sm:$0xff] %v174
      %v308 = vld.sshfl [vmem:[#allocation1] sm:$0xff pattern:$0x73625140]
      %v326 = vunpack.c.l.b16 %v189
      %v327 = vunpack.c.l.b16 %v190
      %v328 = vunpack.c.l.b16 %v191
      %v329 = vunpack.c.l.b16 %v192
      %v330 = vunpack.c.l.b16 %v193
      %v331 = vunpack.c.l.b16 %v194
      %v332 = vunpack.c.l.b16 %v195
      %v333 = vunpack.c.l.b16 %v196
      %v334 = vunpack.c.l.b16 %v197
      %v335 = vunpack.c.l.b16 %v198
      %v336 = vunpack.c.l.b16 %v199
      %v337 = vunpack.c.l.b16 %v200
      %v338 = vunpack.c.l.b16 %v201
      %v339 = vunpack.c.l.b16 %v202
      %v340 = vunpack.c.l.b16 %v203
      %v341 = vunpack.c.l.b16 %v204
      %v342 = vpack.c.b16 %v327, %v326
      %v343 = vpack.c.b16 %v329, %v328
      %v344 = vpack.c.b16 %v331, %v330
      %v345 = vpack.c.b16 %v333, %v332
      %v346 = vpack.c.b16 %v335, %v334
      %v347 = vpack.c.b16 %v337, %v336
      %v348 = vpack.c.b16 %v339, %v338
      %v349 = vpack.c.b16 %v341, %v340
      %358 = vmatpush.bf16.msra.mxu0 %v349
      %359 = vmatpush.bf16.msra.mxu0 %v348
      %360 = vmatpush.bf16.msra.mxu0 %v347
      %361 = vmatpush.bf16.msra.mxu0 %v346
      %362 = vmatpush.bf16.msra.mxu0 %v345
      %363 = vmatpush.bf16.msra.mxu0 %v344
      %364 = vmatpush.bf16.msra.mxu0 %v343
      %365 = vmatpush.bf16.msra.mxu0 %v342
      %366 = vmatmul.bf16.gmra.mxu0 %v308
      %v367 = vpop.f32.mrf.mxu0
      %v368 = vadd.f32 %v293, %v367
      %v369 = vpop.f32.mrf.mxu0
      %v370 = vadd.f32 %v295, %v369
      %371 = vdwg.mxu0
      %v376 = vrot.slane %v171, 2
      %v377 = vrot.slane %v172, 2
      %v378 = vrot.slane %v173, 2
      %v379 = vrot.slane %v174, 2
      %vm380 = vcmask 1041408
      %v382 = vsel %vm380, %v171, %v376
      %vm383 = vcmask 1043458
      %v384 = vsel %vm383, %v171, %v376
      %v386 = vrot.slane %v384, 2
      %v388 = vsel %vm380, %v172, %v377
      %v389 = vsel %vm383, %v172, %v377
      %v391 = vrot.slane %v389, 2
      %v393 = vsel %vm380, %v173, %v378
      %v394 = vsel %vm383, %v173, %v378
      %v396 = vrot.slane %v394, 2
      %v398 = vsel %vm380, %v174, %v379
      %v399 = vsel %vm383, %v174, %v379
      %v401 = vrot.slane %v399, 2
      %vm402 = vsmask.f32 1280
      %vm403 = vsmask.f32 3336
      %vm404 = vmor %vm402, %vm403
      %vm405 = vsmask.f32 5392
      %vm406 = vmor %vm404, %vm405
      %vm407 = vsmask.f32 7448
      %vm408 = vmor %vm406, %vm407
      %v409 = vshrl.u32 %v382, 16
      %v411 = vrot.slane %v409, 6
      %v412 = vshll.u32 %v382, 16
      %v414 = vrot.slane %v412, 7
      %v415 = vor.u32 %v411, %v414
      %v416 = vrot.slane %v415, 2
      %v418 = vshll.u32 %v386, 16
      %v420 = vrot.slane %v418, 7
      %v421 = vsel %vm408, %v416, %v420
      %v422 = vshrl.u32 %v388, 16
      %v424 = vrot.slane %v422, 6
      %v425 = vshll.u32 %v388, 16
      %v427 = vrot.slane %v425, 7
      %v428 = vor.u32 %v424, %v427
      %v429 = vrot.slane %v428, 2
      %v431 = vshll.u32 %v391, 16
      %v433 = vrot.slane %v431, 7
      %v434 = vsel %vm408, %v429, %v433
      %v435 = vshrl.u32 %v393, 16
      %v437 = vrot.slane %v435, 6
      %v438 = vshll.u32 %v393, 16
      %v440 = vrot.slane %v438, 7
      %v441 = vor.u32 %v437, %v440
      %v442 = vrot.slane %v441, 2
      %v444 = vshll.u32 %v396, 16
      %v446 = vrot.slane %v444, 7
      %v447 = vsel %vm408, %v442, %v446
      %v448 = vshrl.u32 %v398, 16
      %v450 = vrot.slane %v448, 6
      %v451 = vshll.u32 %v398, 16
      %v453 = vrot.slane %v451, 7
      %v454 = vor.u32 %v450, %v453
      %v455 = vrot.slane %v454, 2
      %v457 = vshll.u32 %v401, 16
      %v459 = vrot.slane %v457, 7
      %v460 = vsel %vm408, %v455, %v459
      %s461 = scalar_lea.vmem %s1, 128
      %v462 = vld [vmem:[%s461] sm:$0xf]
      %v463 = vld [vmem:[%s461 + $0x4] sm:$0xf]
      %v464 = vld [vmem:[%s461 + $0x8] sm:$0xf]
      %v465 = vld [vmem:[%s461 + $0xc] sm:$0xf]
      %v466 = vld [vmem:[%s461 + $0x10] sm:$0xf]
      %v467 = vld [vmem:[%s461 + $0x14] sm:$0xf]
      %v468 = vld [vmem:[%s461 + $0x18] sm:$0xf]
      %v469 = vld [vmem:[%s461 + $0x1c] sm:$0xf]
      %v470 = vld [vmem:[%s461 + $0x20] sm:$0xf]
      %v471 = vld [vmem:[%s461 + $0x24] sm:$0xf]
      %v472 = vld [vmem:[%s461 + $0x28] sm:$0xf]
      %v473 = vld [vmem:[%s461 + $0x2c] sm:$0xf]
      %v474 = vld [vmem:[%s461 + $0x30] sm:$0xf]
      %v475 = vld [vmem:[%s461 + $0x34] sm:$0xf]
      %v476 = vld [vmem:[%s461 + $0x38] sm:$0xf]
      %v477 = vld [vmem:[%s461 + $0x3c] sm:$0xf]
      %479 = vst [vmem:[#allocation1] ss:$4 sm:$0xff] %v421
      %s481 = scalar_lea.vmem [#allocation1], 1
      %482 = vst [vmem:[%s481] ss:$4 sm:$0xff] %v434
      %s484 = scalar_lea.vmem [#allocation1], 2
      %485 = vst [vmem:[%s484] ss:$4 sm:$0xff] %v447
      %s487 = scalar_lea.vmem [#allocation1], 3
      %488 = vst [vmem:[%s487] ss:$4 sm:$0xff] %v460
      %v489 = vld.sshfl [vmem:[#allocation1] sm:$0xff pattern:$0x73625140]
      %v507 = vunpack.c.l.b16 %v462
      %v508 = vunpack.c.l.b16 %v463
      %v509 = vunpack.c.l.b16 %v464
      %v510 = vunpack.c.l.b16 %v465
      %v511 = vunpack.c.l.b16 %v466
      %v512 = vunpack.c.l.b16 %v467
      %v513 = vunpack.c.l.b16 %v468
      %v514 = vunpack.c.l.b16 %v469
      %v515 = vunpack.c.l.b16 %v470
      %v516 = vunpack.c.l.b16 %v471
      %v517 = vunpack.c.l.b16 %v472
      %v518 = vunpack.c.l.b16 %v473
      %v519 = vunpack.c.l.b16 %v474
      %v520 = vunpack.c.l.b16 %v475
      %v521 = vunpack.c.l.b16 %v476
      %v522 = vunpack.c.l.b16 %v477
      %v523 = vpack.c.b16 %v508, %v507
      %v524 = vpack.c.b16 %v510, %v509
      %v525 = vpack.c.b16 %v512, %v511
      %v526 = vpack.c.b16 %v514, %v513
      %v527 = vpack.c.b16 %v516, %v515
      %v528 = vpack.c.b16 %v518, %v517
      %v529 = vpack.c.b16 %v520, %v519
      %v530 = vpack.c.b16 %v522, %v521
      %539 = vmatpush.bf16.msra.mxu0 %v530
      %540 = vmatpush.bf16.msra.mxu0 %v529
      %541 = vmatpush.bf16.msra.mxu0 %v528
      %542 = vmatpush.bf16.msra.mxu0 %v527
      %543 = vmatpush.bf16.msra.mxu0 %v526
      %544 = vmatpush.bf16.msra.mxu0 %v525
      %545 = vmatpush.bf16.msra.mxu0 %v524
      %546 = vmatpush.bf16.msra.mxu0 %v523
      %547 = vmatmul.bf16.gmra.mxu0 %v489
      %v548 = vpop.f32.mrf.mxu0
      %v549 = vadd.f32 0.0, %v548
      %v550 = vpop.f32.mrf.mxu0
      %v551 = vadd.f32 0.0, %v550
      %552 = vdwg.mxu0
      %v553 = vadd.f32 %v368, %v549
      %v554 = vadd.f32 %v370, %v551
      %s555 = scalar_lea.vmem %s1, 192
      %v556 = vld [vmem:[%s555] sm:$0xf]
      %v557 = vld [vmem:[%s555 + $0x4] sm:$0xf]
      %v558 = vld [vmem:[%s555 + $0x8] sm:$0xf]
      %v559 = vld [vmem:[%s555 + $0xc] sm:$0xf]
      %v560 = vld [vmem:[%s555 + $0x10] sm:$0xf]
      %v561 = vld [vmem:[%s555 + $0x14] sm:$0xf]
      %v562 = vld [vmem:[%s555 + $0x18] sm:$0xf]
      %v563 = vld [vmem:[%s555 + $0x1c] sm:$0xf]
      %v564 = vld [vmem:[%s555 + $0x20] sm:$0xf]
      %v565 = vld [vmem:[%s555 + $0x24] sm:$0xf]
      %v566 = vld [vmem:[%s555 + $0x28] sm:$0xf]
      %v567 = vld [vmem:[%s555 + $0x2c] sm:$0xf]
      %v568 = vld [vmem:[%s555 + $0x30] sm:$0xf]
      %v569 = vld [vmem:[%s555 + $0x34] sm:$0xf]
      %v570 = vld [vmem:[%s555 + $0x38] sm:$0xf]
      %v571 = vld [vmem:[%s555 + $0x3c] sm:$0xf]
      %573 = vst [vmem:[#allocation1] ss:$4 sm:$0xff] %v181
      %s575 = scalar_lea.vmem [#allocation1], 1
      %576 = vst [vmem:[%s575] ss:$4 sm:$0xff] %v182
      %s578 = scalar_lea.vmem [#allocation1], 2
      %579 = vst [vmem:[%s578] ss:$4 sm:$0xff] %v183
      %s581 = scalar_lea.vmem [#allocation1], 3
      %582 = vst [vmem:[%s581] ss:$4 sm:$0xff] %v184
      %v583 = vld.sshfl [vmem:[#allocation1] sm:$0xff pattern:$0x73625140]
      %v601 = vunpack.c.l.b16 %v556
      %v602 = vunpack.c.l.b16 %v557
      %v603 = vunpack.c.l.b16 %v558
      %v604 = vunpack.c.l.b16 %v559
      %v605 = vunpack.c.l.b16 %v560
      %v606 = vunpack.c.l.b16 %v561
      %v607 = vunpack.c.l.b16 %v562
      %v608 = vunpack.c.l.b16 %v563
      %v609 = vunpack.c.l.b16 %v564
      %v610 = vunpack.c.l.b16 %v565
      %v611 = vunpack.c.l.b16 %v566
      %v612 = vunpack.c.l.b16 %v567
      %v613 = vunpack.c.l.b16 %v568
      %v614 = vunpack.c.l.b16 %v569
      %v615 = vunpack.c.l.b16 %v570
      %v616 = vunpack.c.l.b16 %v571
      %v617 = vpack.c.b16 %v602, %v601
      %v618 = vpack.c.b16 %v604, %v603
      %v619 = vpack.c.b16 %v606, %v605
      %v620 = vpack.c.b16 %v608, %v607
      %v621 = vpack.c.b16 %v610, %v609
      %v622 = vpack.c.b16 %v612, %v611
      %v623 = vpack.c.b16 %v614, %v613
      %v624 = vpack.c.b16 %v616, %v615
      %633 = vmatpush.bf16.msra.mxu0 %v624
      %634 = vmatpush.bf16.msra.mxu0 %v623
      %635 = vmatpush.bf16.msra.mxu0 %v622
      %636 = vmatpush.bf16.msra.mxu0 %v621
      %637 = vmatpush.bf16.msra.mxu0 %v620
      %638 = vmatpush.bf16.msra.mxu0 %v619
      %639 = vmatpush.bf16.msra.mxu0 %v618
      %640 = vmatpush.bf16.msra.mxu0 %v617
      %641 = vmatmul.bf16.gmra.mxu0 %v583
      %v642 = vpop.f32.mrf.mxu0
      %v643 = vadd.f32 0.0, %v642
      %v644 = vpop.f32.mrf.mxu0
      %v645 = vadd.f32 0.0, %v644
      %646 = vdwg.mxu0
      %v647 = vadd.f32 %v553, %v643
      %v648 = vadd.f32 %v554, %v645
      %s649 = scalar_lea.vmem %s1, 256
      %v650 = vld [vmem:[%s649] sm:$0xf]
      %v651 = vld [vmem:[%s649 + $0x4] sm:$0xf]
      %v652 = vld [vmem:[%s649 + $0x8] sm:$0xf]
      %v653 = vld [vmem:[%s649 + $0xc] sm:$0xf]
      %v654 = vld [vmem:[%s649 + $0x10] sm:$0xf]
      %v655 = vld [vmem:[%s649 + $0x14] sm:$0xf]
      %v656 = vld [vmem:[%s649 + $0x18] sm:$0xf]
      %v657 = vld [vmem:[%s649 + $0x1c] sm:$0xf]
      %v658 = vld [vmem:[%s649 + $0x20] sm:$0xf]
      %v659 = vld [vmem:[%s649 + $0x24] sm:$0xf]
      %v660 = vld [vmem:[%s649 + $0x28] sm:$0xf]
      %v661 = vld [vmem:[%s649 + $0x2c] sm:$0xf]
      %v662 = vld [vmem:[%s649 + $0x30] sm:$0xf]
      %v663 = vld [vmem:[%s649 + $0x34] sm:$0xf]
      %v664 = vld [vmem:[%s649 + $0x38] sm:$0xf]
      %v665 = vld [vmem:[%s649 + $0x3c] sm:$0xf]
      %667 = vst [vmem:[#allocation1] ss:$4 sm:$0xff] %v185
      %s669 = scalar_lea.vmem [#allocation1], 1
      %670 = vst [vmem:[%s669] ss:$4 sm:$0xff] %v186
      %s672 = scalar_lea.vmem [#allocation1], 2
      %673 = vst [vmem:[%s672] ss:$4 sm:$0xff] %v187
      %s675 = scalar_lea.vmem [#allocation1], 3
      %676 = vst [vmem:[%s675] ss:$4 sm:$0xff] %v188
      %v677 = vld.sshfl [vmem:[#allocation1] sm:$0xff pattern:$0x73625140]
      %v695 = vunpack.c.l.b16 %v650
      %v696 = vunpack.c.l.b16 %v651
      %v697 = vunpack.c.l.b16 %v652
      %v698 = vunpack.c.l.b16 %v653
      %v699 = vunpack.c.l.b16 %v654
      %v700 = vunpack.c.l.b16 %v655
      %v701 = vunpack.c.l.b16 %v656
      %v702 = vunpack.c.l.b16 %v657
      %v703 = vunpack.c.l.b16 %v658
      %v704 = vunpack.c.l.b16 %v659
      %v705 = vunpack.c.l.b16 %v660
      %v706 = vunpack.c.l.b16 %v661
      %v707 = vunpack.c.l.b16 %v662
      %v708 = vunpack.c.l.b16 %v663
      %v709 = vunpack.c.l.b16 %v664
      %v710 = vunpack.c.l.b16 %v665
      %v711 = vpack.c.b16 %v696, %v695
      %v712 = vpack.c.b16 %v698, %v697
      %v713 = vpack.c.b16 %v700, %v699
      %v714 = vpack.c.b16 %v702, %v701
      %v715 = vpack.c.b16 %v704, %v703
      %v716 = vpack.c.b16 %v706, %v705
      %v717 = vpack.c.b16 %v708, %v707
      %v718 = vpack.c.b16 %v710, %v709
      %727 = vmatpush.bf16.msra.mxu0 %v718
      %728 = vmatpush.bf16.msra.mxu0 %v717
      %729 = vmatpush.bf16.msra.mxu0 %v716
      %730 = vmatpush.bf16.msra.mxu0 %v715
      %731 = vmatpush.bf16.msra.mxu0 %v714
      %732 = vmatpush.bf16.msra.mxu0 %v713
      %733 = vmatpush.bf16.msra.mxu0 %v712
      %734 = vmatpush.bf16.msra.mxu0 %v711
      %735 = vmatmul.bf16.gmra.mxu0 %v677
      %v736 = vpop.f32.mrf.mxu0
      %v737 = vadd.f32 0.0, %v736
      %v738 = vpop.f32.mrf.mxu0
      %v739 = vadd.f32 0.0, %v738
      %740 = vdwg.mxu0
      %v741 = vadd.f32 %v647, %v737
      %v742 = vadd.f32 %v648, %v739
      %v747 = vrot.slane %v181, 2
      %v748 = vrot.slane %v182, 2
      %v749 = vrot.slane %v183, 2
      %v750 = vrot.slane %v184, 2
      %v752 = vsel %vm380, %v181, %v747
      %v753 = vsel %vm383, %v181, %v747
      %v755 = vrot.slane %v753, 2
      %v757 = vsel %vm380, %v182, %v748
      %v758 = vsel %vm383, %v182, %v748
      %v760 = vrot.slane %v758, 2
      %v762 = vsel %vm380, %v183, %v749
      %v763 = vsel %vm383, %v183, %v749
      %v765 = vrot.slane %v763, 2
      %v767 = vsel %vm380, %v184, %v750
      %v768 = vsel %vm383, %v184, %v750
      %v770 = vrot.slane %v768, 2
      %v771 = vshrl.u32 %v752, 16
      %v773 = vrot.slane %v771, 6
      %v774 = vshll.u32 %v752, 16
      %v776 = vrot.slane %v774, 7
      %v777 = vor.u32 %v773, %v776
      %v778 = vrot.slane %v777, 2
      %v780 = vshll.u32 %v755, 16
      %v782 = vrot.slane %v780, 7
      %v783 = vsel %vm408, %v778, %v782
      %v784 = vshrl.u32 %v757, 16
      %v786 = vrot.slane %v784, 6
      %v787 = vshll.u32 %v757, 16
      %v789 = vrot.slane %v787, 7
      %v790 = vor.u32 %v786, %v789
      %v791 = vrot.slane %v790, 2
      %v793 = vshll.u32 %v760, 16
      %v795 = vrot.slane %v793, 7
      %v796 = vsel %vm408, %v791, %v795
      %v797 = vshrl.u32 %v762, 16
      %v799 = vrot.slane %v797, 6
      %v800 = vshll.u32 %v762, 16
      %v802 = vrot.slane %v800, 7
      %v803 = vor.u32 %v799, %v802
      %v804 = vrot.slane %v803, 2
      %v806 = vshll.u32 %v765, 16
      %v808 = vrot.slane %v806, 7
      %v809 = vsel %vm408, %v804, %v808
      %v810 = vshrl.u32 %v767, 16
      %v812 = vrot.slane %v810, 6
      %v813 = vshll.u32 %v767, 16
      %v815 = vrot.slane %v813, 7
      %v816 = vor.u32 %v812, %v815
      %v817 = vrot.slane %v816, 2
      %v819 = vshll.u32 %v770, 16
      %v821 = vrot.slane %v819, 7
      %v822 = vsel %vm408, %v817, %v821
      %s823 = scalar_lea.vmem %s1, 320
      %v824 = vld [vmem:[%s823] sm:$0xf]
      %v825 = vld [vmem:[%s823 + $0x4] sm:$0xf]
      %v826 = vld [vmem:[%s823 + $0x8] sm:$0xf]
      %v827 = vld [vmem:[%s823 + $0xc] sm:$0xf]
      %v828 = vld [vmem:[%s823 + $0x10] sm:$0xf]
      %v829 = vld [vmem:[%s823 + $0x14] sm:$0xf]
      %v830 = vld [vmem:[%s823 + $0x18] sm:$0xf]
      %v831 = vld [vmem:[%s823 + $0x1c] sm:$0xf]
      %v832 = vld [vmem:[%s823 + $0x20] sm:$0xf]
      %v833 = vld [vmem:[%s823 + $0x24] sm:$0xf]
      %v834 = vld [vmem:[%s823 + $0x28] sm:$0xf]
      %v835 = vld [vmem:[%s823 + $0x2c] sm:$0xf]
      %v836 = vld [vmem:[%s823 + $0x30] sm:$0xf]
      %v837 = vld [vmem:[%s823 + $0x34] sm:$0xf]
      %v838 = vld [vmem:[%s823 + $0x38] sm:$0xf]
      %v839 = vld [vmem:[%s823 + $0x3c] sm:$0xf]
      %841 = vst [vmem:[#allocation1] ss:$4 sm:$0xff] %v783
      %s843 = scalar_lea.vmem [#allocation1], 1
      %844 = vst [vmem:[%s843] ss:$4 sm:$0xff] %v796
      %s846 = scalar_lea.vmem [#allocation1], 2
      %847 = vst [vmem:[%s846] ss:$4 sm:$0xff] %v809
      %s849 = scalar_lea.vmem [#allocation1], 3
      %850 = vst [vmem:[%s849] ss:$4 sm:$0xff] %v822
      %v851 = vld.sshfl [vmem:[#allocation1] sm:$0xff pattern:$0x73625140]
      %v869 = vunpack.c.l.b16 %v824
      %v870 = vunpack.c.l.b16 %v825
      %v871 = vunpack.c.l.b16 %v826
      %v872 = vunpack.c.l.b16 %v827
      %v873 = vunpack.c.l.b16 %v828
      %v874 = vunpack.c.l.b16 %v829
      %v875 = vunpack.c.l.b16 %v830
      %v876 = vunpack.c.l.b16 %v831
      %v877 = vunpack.c.l.b16 %v832
      %v878 = vunpack.c.l.b16 %v833
      %v879 = vunpack.c.l.b16 %v834
      %v880 = vunpack.c.l.b16 %v835
      %v881 = vunpack.c.l.b16 %v836
      %v882 = vunpack.c.l.b16 %v837
      %v883 = vunpack.c.l.b16 %v838
      %v884 = vunpack.c.l.b16 %v839
      %v885 = vpack.c.b16 %v870, %v869
      %v886 = vpack.c.b16 %v872, %v871
      %v887 = vpack.c.b16 %v874, %v873
      %v888 = vpack.c.b16 %v876, %v875
      %v889 = vpack.c.b16 %v878, %v877
      %v890 = vpack.c.b16 %v880, %v879
      %v891 = vpack.c.b16 %v882, %v881
      %v892 = vpack.c.b16 %v884, %v883
      %901 = vmatpush.bf16.msra.mxu0 %v892
      %902 = vmatpush.bf16.msra.mxu0 %v891
      %903 = vmatpush.bf16.msra.mxu0 %v890
      %904 = vmatpush.bf16.msra.mxu0 %v889
      %905 = vmatpush.bf16.msra.mxu0 %v888
      %906 = vmatpush.bf16.msra.mxu0 %v887
      %907 = vmatpush.bf16.msra.mxu0 %v886
      %908 = vmatpush.bf16.msra.mxu0 %v885
      %909 = vmatmul.bf16.gmra.mxu0 %v851
      %v910 = vpop.f32.mrf.mxu0
      %v911 = vadd.f32 0.0, %v910
      %v912 = vpop.f32.mrf.mxu0
      %v913 = vadd.f32 0.0, %v912
      %914 = vdwg.mxu0
      %v915 = vadd.f32 %v741, %v911
      %v916 = vadd.f32 %v742, %v913
      %s917 = scalar_lea.vmem %s1, 384
      %v918 = vld [vmem:[%s917] sm:$0xf]
      %v919 = vld [vmem:[%s917 + $0x4] sm:$0xf]
      %v920 = vld [vmem:[%s917 + $0x8] sm:$0xf]
      %v921 = vld [vmem:[%s917 + $0xc] sm:$0xf]
      %v922 = vld [vmem:[%s917 + $0x10] sm:$0xf]
      %v923 = vld [vmem:[%s917 + $0x14] sm:$0xf]
      %v924 = vld [vmem:[%s917 + $0x18] sm:$0xf]
      %v925 = vld [vmem:[%s917 + $0x1c] sm:$0xf]
      %v926 = vld [vmem:[%s917 + $0x20] sm:$0xf]
      %v927 = vld [vmem:[%s917 + $0x24] sm:$0xf]
      %v928 = vld [vmem:[%s917 + $0x28] sm:$0xf]
      %v929 = vld [vmem:[%s917 + $0x2c] sm:$0xf]
      %v930 = vld [vmem:[%s917 + $0x30] sm:$0xf]
      %v931 = vld [vmem:[%s917 + $0x34] sm:$0xf]
      %v932 = vld [vmem:[%s917 + $0x38] sm:$0xf]
      %v933 = vld [vmem:[%s917 + $0x3c] sm:$0xf]
      %934 = vst [vmem:[#allocation1] ss:$4 sm:$0xff] %v172
      %s935 = scalar_lea.vmem [#allocation1], 1
      %936 = vst [vmem:[%s935] ss:$4 sm:$0xff] %v173
      %s937 = scalar_lea.vmem [#allocation1], 2
      %938 = vst [vmem:[%s937] ss:$4 sm:$0xff] %v174
      %s940 = scalar_lea.vmem [#allocation1], 3
      %941 = vst [vmem:[%s940] ss:$4 sm:$0xff] %v175
      %v942 = vld.sshfl [vmem:[#allocation1] sm:$0xff pattern:$0x73625140]
      %v960 = vunpack.c.l.b16 %v918
      %v961 = vunpack.c.l.b16 %v919
      %v962 = vunpack.c.l.b16 %v920
      %v963 = vunpack.c.l.b16 %v921
      %v964 = vunpack.c.l.b16 %v922
      %v965 = vunpack.c.l.b16 %v923
      %v966 = vunpack.c.l.b16 %v924
      %v967 = vunpack.c.l.b16 %v925
      %v968 = vunpack.c.l.b16 %v926
      %v969 = vunpack.c.l.b16 %v927
      %v970 = vunpack.c.l.b16 %v928
      %v971 = vunpack.c.l.b16 %v929
      %v972 = vunpack.c.l.b16 %v930
      %v973 = vunpack.c.l.b16 %v931
      %v974 = vunpack.c.l.b16 %v932
      %v975 = vunpack.c.l.b16 %v933
      %v976 = vpack.c.b16 %v961, %v960
      %v977 = vpack.c.b16 %v963, %v962
      %v978 = vpack.c.b16 %v965, %v964
      %v979 = vpack.c.b16 %v967, %v966
      %v980 = vpack.c.b16 %v969, %v968
      %v981 = vpack.c.b16 %v971, %v970
      %v982 = vpack.c.b16 %v973, %v972
      %v983 = vpack.c.b16 %v975, %v974
      %992 = vmatpush.bf16.msra.mxu0 %v983
      %993 = vmatpush.bf16.msra.mxu0 %v982
      %994 = vmatpush.bf16.msra.mxu0 %v981
      %995 = vmatpush.bf16.msra.mxu0 %v980
      %996 = vmatpush.bf16.msra.mxu0 %v979
      %997 = vmatpush.bf16.msra.mxu0 %v978
      %998 = vmatpush.bf16.msra.mxu0 %v977
      %999 = vmatpush.bf16.msra.mxu0 %v976
      %1000 = vmatmul.bf16.gmra.mxu0 %v942
      %v1001 = vpop.f32.mrf.mxu0
      %v1002 = vadd.f32 0.0, %v1001
      %v1003 = vpop.f32.mrf.mxu0
      %v1004 = vadd.f32 0.0, %v1003
      %1005 = vdwg.mxu0
      %v1006 = vadd.f32 %v915, %v1002
      %v1007 = vadd.f32 %v916, %v1004
      %s1008 = scalar_lea.vmem %s1, 448
      %v1009 = vld [vmem:[%s1008] sm:$0xf]
      %v1010 = vld [vmem:[%s1008 + $0x4] sm:$0xf]
      %v1011 = vld [vmem:[%s1008 + $0x8] sm:$0xf]
      %v1012 = vld [vmem:[%s1008 + $0xc] sm:$0xf]
      %v1013 = vld [vmem:[%s1008 + $0x10] sm:$0xf]
      %v1014 = vld [vmem:[%s1008 + $0x14] sm:$0xf]
      %v1015 = vld [vmem:[%s1008 + $0x18] sm:$0xf]
      %v1016 = vld [vmem:[%s1008 + $0x1c] sm:$0xf]
      %v1017 = vld [vmem:[%s1008 + $0x20] sm:$0xf]
      %v1018 = vld [vmem:[%s1008 + $0x24] sm:$0xf]
      %v1019 = vld [vmem:[%s1008 + $0x28] sm:$0xf]
      %v1020 = vld [vmem:[%s1008 + $0x2c] sm:$0xf]
      %v1021 = vld [vmem:[%s1008 + $0x30] sm:$0xf]
      %v1022 = vld [vmem:[%s1008 + $0x34] sm:$0xf]
      %v1023 = vld [vmem:[%s1008 + $0x38] sm:$0xf]
      %v1024 = vld [vmem:[%s1008 + $0x3c] sm:$0xf]
      %1025 = vst [vmem:[#allocation1] ss:$4 sm:$0xff] %v177
      %s1026 = scalar_lea.vmem [#allocation1], 1
      %1027 = vst [vmem:[%s1026] ss:$4 sm:$0xff] %v178
      %s1028 = scalar_lea.vmem [#allocation1], 2
      %1029 = vst [vmem:[%s1028] ss:$4 sm:$0xff] %v179
      %s1031 = scalar_lea.vmem [#allocation1], 3
      %1032 = vst [vmem:[%s1031] ss:$4 sm:$0xff] %v180
      %v1033 = vld.sshfl [vmem:[#allocation1] sm:$0xff pattern:$0x73625140]
      %v1051 = vunpack.c.l.b16 %v1009
      %v1052 = vunpack.c.l.b16 %v1010
      %v1053 = vunpack.c.l.b16 %v1011
      %v1054 = vunpack.c.l.b16 %v1012
      %v1055 = vunpack.c.l.b16 %v1013
      %v1056 = vunpack.c.l.b16 %v1014
      %v1057 = vunpack.c.l.b16 %v1015
      %v1058 = vunpack.c.l.b16 %v1016
      %v1059 = vunpack.c.l.b16 %v1017
      %v1060 = vunpack.c.l.b16 %v1018
      %v1061 = vunpack.c.l.b16 %v1019
      %v1062 = vunpack.c.l.b16 %v1020
      %v1063 = vunpack.c.l.b16 %v1021
      %v1064 = vunpack.c.l.b16 %v1022
      %v1065 = vunpack.c.l.b16 %v1023
      %v1066 = vunpack.c.l.b16 %v1024
      %v1067 = vpack.c.b16 %v1052, %v1051
      %v1068 = vpack.c.b16 %v1054, %v1053
      %v1069 = vpack.c.b16 %v1056, %v1055
      %v1070 = vpack.c.b16 %v1058, %v1057
      %v1071 = vpack.c.b16 %v1060, %v1059
      %v1072 = vpack.c.b16 %v1062, %v1061
      %v1073 = vpack.c.b16 %v1064, %v1063
      %v1074 = vpack.c.b16 %v1066, %v1065
      %1083 = vmatpush.bf16.msra.mxu0 %v1074
      %1084 = vmatpush.bf16.msra.mxu0 %v1073
      %1085 = vmatpush.bf16.msra.mxu0 %v1072
      %1086 = vmatpush.bf16.msra.mxu0 %v1071
      %1087 = vmatpush.bf16.msra.mxu0 %v1070
      %1088 = vmatpush.bf16.msra.mxu0 %v1069
      %1089 = vmatpush.bf16.msra.mxu0 %v1068
      %1090 = vmatpush.bf16.msra.mxu0 %v1067
      %1091 = vmatmul.bf16.gmra.mxu0 %v1033
      %v1092 = vpop.f32.mrf.mxu0
      %v1093 = vadd.f32 0.0, %v1092
      %v1094 = vpop.f32.mrf.mxu0
      %v1095 = vadd.f32 0.0, %v1094
      %1096 = vdwg.mxu0
      %v1097 = vadd.f32 %v1006, %v1093
      %v1098 = vadd.f32 %v1007, %v1095
      %v1100 = vrot.slane %v175, 2
      %v1102 = vsel %vm380, %v175, %v1100
      %v1103 = vsel %vm383, %v175, %v1100
      %v1105 = vrot.slane %v1103, 2
      %v1106 = vshrl.u32 %v1102, 16
      %v1108 = vrot.slane %v1106, 6
      %v1109 = vshll.u32 %v1102, 16
      %v1111 = vrot.slane %v1109, 7
      %v1112 = vor.u32 %v1108, %v1111
      %v1113 = vrot.slane %v1112, 2
      %v1115 = vshll.u32 %v1105, 16
      %v1117 = vrot.slane %v1115, 7
      %v1118 = vsel %vm408, %v1113, %v1117
      %s1119 = scalar_lea.vmem %s1, 512
      %v1120 = vld [vmem:[%s1119] sm:$0xf]
      %v1121 = vld [vmem:[%s1119 + $0x4] sm:$0xf]
      %v1122 = vld [vmem:[%s1119 + $0x8] sm:$0xf]
      %v1123 = vld [vmem:[%s1119 + $0xc] sm:$0xf]
      %v1124 = vld [vmem:[%s1119 + $0x10] sm:$0xf]
      %v1125 = vld [vmem:[%s1119 + $0x14] sm:$0xf]
      %v1126 = vld [vmem:[%s1119 + $0x18] sm:$0xf]
      %v1127 = vld [vmem:[%s1119 + $0x1c] sm:$0xf]
      %v1128 = vld [vmem:[%s1119 + $0x20] sm:$0xf]
      %v1129 = vld [vmem:[%s1119 + $0x24] sm:$0xf]
      %v1130 = vld [vmem:[%s1119 + $0x28] sm:$0xf]
      %v1131 = vld [vmem:[%s1119 + $0x2c] sm:$0xf]
      %v1132 = vld [vmem:[%s1119 + $0x30] sm:$0xf]
      %v1133 = vld [vmem:[%s1119 + $0x34] sm:$0xf]
      %v1134 = vld [vmem:[%s1119 + $0x38] sm:$0xf]
      %v1135 = vld [vmem:[%s1119 + $0x3c] sm:$0xf]
      %1136 = vst [vmem:[#allocation1] ss:$4 sm:$0xff] %v434
      %s1137 = scalar_lea.vmem [#allocation1], 1
      %1138 = vst [vmem:[%s1137] ss:$4 sm:$0xff] %v447
      %s1139 = scalar_lea.vmem [#allocation1], 2
      %1140 = vst [vmem:[%s1139] ss:$4 sm:$0xff] %v460
      %s1142 = scalar_lea.vmem [#allocation1], 3
      %1143 = vst [vmem:[%s1142] ss:$4 sm:$0xff] %v1118
      %v1144 = vld.sshfl [vmem:[#allocation1] sm:$0xff pattern:$0x73625140]
      %v1162 = vunpack.c.l.b16 %v1120
      %v1163 = vunpack.c.l.b16 %v1121
      %v1164 = vunpack.c.l.b16 %v1122
      %v1165 = vunpack.c.l.b16 %v1123
      %v1166 = vunpack.c.l.b16 %v1124
      %v1167 = vunpack.c.l.b16 %v1125
      %v1168 = vunpack.c.l.b16 %v1126
      %v1169 = vunpack.c.l.b16 %v1127
      %v1170 = vunpack.c.l.b16 %v1128
      %v1171 = vunpack.c.l.b16 %v1129
      %v1172 = vunpack.c.l.b16 %v1130
      %v1173 = vunpack.c.l.b16 %v1131
      %v1174 = vunpack.c.l.b16 %v1132
      %v1175 = vunpack.c.l.b16 %v1133
      %v1176 = vunpack.c.l.b16 %v1134
      %v1177 = vunpack.c.l.b16 %v1135
      %v1178 = vpack.c.b16 %v1163, %v1162
      %v1179 = vpack.c.b16 %v1165, %v1164
      %v1180 = vpack.c.b16 %v1167, %v1166
      %v1181 = vpack.c.b16 %v1169, %v1168
      %v1182 = vpack.c.b16 %v1171, %v1170
      %v1183 = vpack.c.b16 %v1173, %v1172
      %v1184 = vpack.c.b16 %v1175, %v1174
      %v1185 = vpack.c.b16 %v1177, %v1176
      %1194 = vmatpush.bf16.msra.mxu0 %v1185
      %1195 = vmatpush.bf16.msra.mxu0 %v1184
      %1196 = vmatpush.bf16.msra.mxu0 %v1183
      %1197 = vmatpush.bf16.msra.mxu0 %v1182
      %1198 = vmatpush.bf16.msra.mxu0 %v1181
      %1199 = vmatpush.bf16.msra.mxu0 %v1180
      %1200 = vmatpush.bf16.msra.mxu0 %v1179
      %1201 = vmatpush.bf16.msra.mxu0 %v1178
      %1202 = vmatmul.bf16.gmra.mxu0 %v1144
      %v1203 = vpop.f32.mrf.mxu0
      %v1204 = vadd.f32 0.0, %v1203
      %v1205 = vpop.f32.mrf.mxu0
      %v1206 = vadd.f32 0.0, %v1205
      %1207 = vdwg.mxu0
      %v1208 = vadd.f32 %v1097, %v1204
      %v1209 = vadd.f32 %v1098, %v1206
      %v1210 = vld [vmem:[%s2] sm:$0x1]
      %v1212 = vperm.slane %v1210, 0
      %v1214 = vadd.f32 %v1208, %v1212
      %v1215 = vadd.f32 %v1209, %v1212
      %v1216 = vmax.f32 %v1214, 0.0
      %v1217 = vmax.f32 %v1215, 0.0
      %v1220 = vrot.slane %v1216, 4
      %v1221 = vrot.slane %v1217, 4
      %v1224 = vpack.c.bf16 %v1216, %v1216
      %v1225 = vpack.c.bf16 %v1220, %v1220
      %v1226 = vpack.c.bf16 %v1217, %v1217
      %v1227 = vpack.c.bf16 %v1221, %v1221
      %1228 = vst [vmem:[%s170] sm:$0x3] %v1224
      %1229 = vst [vmem:[%s170 + $0x2] sm:$0x3] %v1225
      %1230 = vst [vmem:[%s170 + $0x4] sm:$0x3] %v1226
      %1231 = vst [vmem:[%s170 + $0x6] sm:$0x3] %v1227
      %p1232 = scmp.lt.s32.totalorder %s14, 1
      %s1233 = scalar_select %p1232, %s14, 1
      %s1234 = smul.addr %s1233, 4
      %s1235 = smul.addr %s1234, 2
      %s1236 = scalar_lea.vmem %s3, %s1235
      // Predicated region
      $region33: #{_lambda_.9} parent=31 // pred_check
        %p1237 = pneg %p100
      $region34: #{_lambda_.9} parent=31 // pred_check_branch
        %1239 = sbr.rel (%p1237) target = $region36
      $region35: #{_lambda_.9} parent=31 // pred_region
        _
      $region36: #{_lambda_.9} parent=31 // pred_fallthru
        _
    $region32: #{_lambda_.9} parent=5 // pred_fallthru
      _
    %p1240 = scmp.le.s32.totalorder 2, %s9
    // Predicated region
    $region37: #{_lambda_.9} parent=5 // pred_check
      %p1241 = pneg %p1240
    $region38: #{_lambda_.9} parent=5 // pred_check_branch
      %1243 = sbr.rel (%p1241) target = $region40
    $region39: #{_lambda_.9} parent=5 // pred_region
      %s1244 = ssub.s32 %s9, 2
      // Predicated region
      $region41: #{_lambda_.9} parent=39 // pred_check
        %p1245 = pneg %p106
      $region42: #{_lambda_.9} parent=39 // pred_check_branch
        %1247 = sbr.rel (%p1245) target = $region44
      $region43: #{_lambda_.9} parent=39 // pred_region
        %p1248 = scmp.lt.s32.totalorder %s15, 1
        %s1249 = scalar_select %p1248, %s15, 1
        %s1250 = smul.addr %s1249, 4
        %s1251 = smul.addr %s1250, 2
        %s1252 = scalar_lea.vmem %s3, %s1251
      $region44: #{_lambda_.9} parent=39 // pred_fallthru
        _
    $region40: #{_lambda_.9} parent=5 // pred_fallthru
      _
  $region6: #{_lambda_.9} parent=0 // loop_footer
    %s13 = sadd.s32 1, %s9
  $region7: #{_lambda_.9} parent=0 // loop_footer_branch
    %8 = sbr.rel target = $region3
  $region8: #{_lambda_.9} parent=0 // loop_exit
    _

// kernel: _lambda_.10
$region0: #{_lambda_.10}
  #allocation0 [shape = 'u32[]', space=smem, size = 0x4, offset = 0x4, fixed_abs, tag = 'smem constant byte address 0x4 - core index']
  #allocation1 [shape = 'u32[72,128]{1,0:T(1,128)}', space=vmem, size = 0x9000, scoped, tag = 'internal scratch']
  %s0 = inlined_call_operand.vmem [shape: bf16[2,12,3,128], index: 0, kind: input, shape index: {}]
  %s1 = inlined_call_operand.vmem [shape: bf16[9,128,128], index: 1, kind: input, shape index: {}]
  %s2 = inlined_call_operand.vmem [shape: f32[1,128], index: 2, kind: input, shape index: {}]
  %s3 = inlined_call_operand.vmem [shape: bf16[2,2,2,128], index: 3, kind: output, shape index: {}]
  %s4 = sld [smem:[#allocation0]]
  $region45: #{_lambda_.10} parent=0
    _
  %s6 = ssub.s32 1, %s4
  %s7 = scalar_select 0, %s6, %s4
  loop: start=0, step=1, limit=4
  $region2: #{_lambda_.10} parent=0 // loop_pre_header
    _
  $region3: #{_lambda_.10} parent=0 // loop_header
    %s9 = sphi 0, %s13
    %p10 = scmp.ge.s32.totalorder %s9, 4
    %s19 = sphi 0, %s21
    %s22 = sphi 0, %s19
    %s23 = sphi 0, %s22
    %s39 = sphi 0, %s23
    %s43 = sphi 0, %s43
    %s45 = sphi 0, %s43
    %s46 = sphi 0, %s45
    %s60 = sphi 0, %s46
    %s64 = sphi 0, %s64
    %s66 = sphi 0, %s64
    %s67 = sphi 0, %s66
    %s81 = sphi 0, %s67
    %s87 = sphi 0, %s89
    %s90 = sphi 0, %s87
    %s91 = sphi 0, %s90
    %s107 = sphi 0, %s91
  $region4: #{_lambda_.10} parent=0 // loop_header_branch
    %12 = sbr.rel (%p10) target = $region8
  $region5: #{_lambda_.10} parent=0 // loop_body
    %s14 = ssub.s32 %s9, 1
    %s15 = ssub.s32 %s9, 2
    %s16 = sadd.s32 %s9, 1
    %s17 = ssub.s32 %s9, %s16
    %p18 = scmp.eq.s32.totalorder %s17, 0
    %s20 = sadd.s32 %s19, 1
    %s21 = scalar_select %p18, %s19, %s20
    %p24 = pneg %p18
    %p25 = scmp.eq.s32.totalorder %s9, 1
    %p26 = por %p24, %p25
    %p27 = scmp.ne.s32.totalorder %s19, %s22
    %p28 = scmp.eq.s32.totalorder %s9, 0
    %p29 = por %p27, %p28
    %p30 = scmp.ne.s32.totalorder %s19, %s22
    %p31 = scmp.eq.s32.totalorder %s14, 1
    %p32 = por %p30, %p31
    %p33 = scmp.ne.s32.totalorder %s22, %s23
    %p34 = scmp.eq.s32.totalorder %s14, 0
    %p35 = por %p33, %p34
    %p36 = scmp.ne.s32.totalorder %s22, %s23
    %p37 = scmp.eq.s32.totalorder %s15, 1
    %p38 = por %p36, %p37
    %p40 = scmp.ne.s32.totalorder %s23, %s39
    %p41 = scmp.eq.s32.totalorder %s15, 0
    %p42 = por %p40, %p41
    %s44 = sadd.s32 %s43, 1
    %p47 = scmp.eq.s32.totalorder %s9, 1
    %p48 = scmp.ne.s32.totalorder %s43, %s45
    %p49 = scmp.eq.s32.totalorder %s9, 0
    %p50 = por %p48, %p49
    %p51 = scmp.ne.s32.totalorder %s43, %s45
    %p52 = scmp.eq.s32.totalorder %s14, 1
    %p53 = por %p51, %p52
    %p54 = scmp.ne.s32.totalorder %s45, %s46
    %p55 = scmp.eq.s32.totalorder %s14, 0
    %p56 = por %p54, %p55
    %p57 = scmp.ne.s32.totalorder %s45, %s46
    %p58 = scmp.eq.s32.totalorder %s15, 1
    %p59 = por %p57, %p58
    %p61 = scmp.ne.s32.totalorder %s46, %s60
    %p62 = scmp.eq.s32.totalorder %s15, 0
    %p63 = por %p61, %p62
    %s65 = sadd.s32 %s64, 1
    %p68 = scmp.eq.s32.totalorder %s9, 1
    %p69 = scmp.ne.s32.totalorder %s64, %s66
    %p70 = scmp.eq.s32.totalorder %s9, 0
    %p71 = por %p69, %p70
    %p72 = scmp.ne.s32.totalorder %s64, %s66
    %p73 = scmp.eq.s32.totalorder %s14, 1
    %p74 = por %p72, %p73
    %p75 = scmp.ne.s32.totalorder %s66, %s67
    %p76 = scmp.eq.s32.totalorder %s14, 0
    %p77 = por %p75, %p76
    %p78 = scmp.ne.s32.totalorder %s66, %s67
    %p79 = scmp.eq.s32.totalorder %s15, 1
    %p80 = por %p78, %p79
    %p82 = scmp.ne.s32.totalorder %s67, %s81
    %p83 = scmp.eq.s32.totalorder %s15, 0
    %p84 = por %p82, %p83
    %s85 = ssub.s32 %s9, %s16
    %p86 = scmp.eq.s32.totalorder %s85, 0
    %s88 = sadd.s32 %s87, 1
    %s89 = scalar_select %p86, %s87, %s88
    %p92 = pneg %p86
    %p93 = scmp.eq.s32.totalorder %s9, 1
    %p94 = por %p92, %p93
    %p95 = scmp.ne.s32.totalorder %s87, %s90
    %p96 = scmp.eq.s32.totalorder %s9, 0
    %p97 = por %p95, %p96
    %p98 = scmp.ne.s32.totalorder %s87, %s90
    %p99 = scmp.eq.s32.totalorder %s14, 1
    %p100 = por %p98, %p99
    %p101 = scmp.ne.s32.totalorder %s90, %s91
    %p102 = scmp.eq.s32.totalorder %s14, 0
    %p103 = por %p101, %p102
    %p104 = scmp.ne.s32.totalorder %s90, %s91
    %p105 = scmp.eq.s32.totalorder %s15, 1
    %p106 = por %p104, %p105
    %p108 = scmp.ne.s32.totalorder %s91, %s107
    %p109 = scmp.eq.s32.totalorder %s15, 0
    %p110 = por %p108, %p109
    %p111 = scmp.le.s32.totalorder 1, %s9
    %p112 = scmp.lt.s32.totalorder %s9, 3
    %p113 = pnand %p111, %p112
    %p114 = pneg %p113
    // Predicated region
    $region9: #{_lambda_.10} parent=5 // pred_check
      _
    $region10: #{_lambda_.10} parent=5 // pred_check_branch
      %116 = sbr.rel (%p113) target = $region12
    $region11: #{_lambda_.10} parent=5 // pred_region
      %s117 = ssub.s32 %s9, 1
      // Predicated region
      $region13: #{_lambda_.10} parent=11 // pred_check
        %p118 = pneg %p56
      $region14: #{_lambda_.10} parent=11 // pred_check_branch
        %120 = sbr.rel (%p118) target = $region16
      $region15: #{_lambda_.10} parent=11 // pred_region
        _
      $region16: #{_lambda_.10} parent=11 // pred_fallthru
        _
      // Predicated region
      $region17: #{_lambda_.10} parent=11 // pred_check
        %p121 = pneg %p77
      $region18: #{_lambda_.10} parent=11 // pred_check_branch
        %123 = sbr.rel (%p121) target = $region20
      $region19: #{_lambda_.10} parent=11 // pred_region
        _
      $region20: #{_lambda_.10} parent=11 // pred_fallthru
        _
    $region12: #{_lambda_.10} parent=5 // pred_fallthru
      _
    %p124 = scmp.lt.s32.totalorder %s9, 2
    // Predicated region
    $region21: #{_lambda_.10} parent=5 // pred_check
      %p125 = pneg %p124
    $region22: #{_lambda_.10} parent=5 // pred_check_branch
      %127 = sbr.rel (%p125) target = $region24
    $region23: #{_lambda_.10} parent=5 // pred_region
      // Predicated region
      $region25: #{_lambda_.10} parent=23 // pred_check
        %p128 = pneg %p29
      $region26: #{_lambda_.10} parent=23 // pred_check_branch
        %130 = sbr.rel (%p128) target = $region28
      $region27: #{_lambda_.10} parent=23 // pred_region
        %p131 = scmp.lt.s32.totalorder %s9, 1
        %s132 = scalar_select %p131, %s9, 1
        %s133 = smul.addr %s132, 12
        %s134 = smul.addr %s133, 2
        %s135 = scalar_lea.vmem %s0, %s134
      $region28: #{_lambda_.10} parent=23 // pred_fallthru
        _
    $region24: #{_lambda_.10} parent=5 // pred_fallthru
      _
    %p136 = scmp.le.s32.totalorder 1, %s9
    %p137 = scmp.lt.s32.totalorder %s9, 3
    %p138 = pnand %p136, %p137
    %p139 = pneg %p138
    // Predicated region
    $region29: #{_lambda_.10} parent=5 // pred_check
      _
    $region30: #{_lambda_.10} parent=5 // pred_check_branch
      %141 = sbr.rel (%p138) target = $region32
    $region31: #{_lambda_.10} parent=5 // pred_region
      %s142 = ssub.s32 %s9, 1
      %p143 = scmp.lt.s32.totalorder %s14, 1
      %s144 = scalar_select %p143, %s14, 1
      %s145 = smul.addr %s144, 12
      %s146 = smul.addr %s145, 2
      %s147 = scalar_lea.vmem %s0, %s146
      %p148 = pneg %p35
      %p149 = pneg %p32
      %p150 = pneg %p56
      %p151 = pneg %p53
      %p152 = pneg %p77
      %p153 = pneg %p74
      %p154 = pneg %p103
      %p155 = pneg %p100
      %p156 = scmp.lt.s32.totalorder %s14, 1
      %s157 = scalar_select %p156, %s14, 1
      %s158 = smul.addr %s157, 2
      %s159 = scalar_lea.vmem %s3, %s158
      %p160 = scmp.lt.s32.totalorder %s14, 1
      %s161 = scalar_select %p160, %s14, 1
      %s162 = smul.addr %s161, 12
      %s163 = smul.addr %s162, 2
      %s164 = scalar_lea.vmem %s0, %s163
      %p165 = scmp.lt.s32.totalorder %s14, 1
      %s166 = scalar_select %p165, %s14, 1
      %s167 = smul.addr %s166, 2
      %s168 = scalar_lea.vmem %s3, %s167
      %v169 = vld [vmem:[%s164] sm:$0x3]
      %v170 = vld [vmem:[%s164 + $0x2] sm:$0x3]
      %v171 = vld [vmem:[%s164 + $0x4] sm:$0x3]
      %v172 = vld [vmem:[%s164 + $0x6] sm:$0x3]
      %v173 = vld [vmem:[%s164 + $0x8] sm:$0x3]
      %v174 = vld [vmem:[%s164 + $0xa] sm:$0x3]
      %v175 = vld [vmem:[%s164 + $0xc] sm:$0x3]
      %v176 = vld [vmem:[%s164 + $0xe] sm:$0x3]
      %v177 = vld [vmem:[%s164 + $0x12] sm:$0x3]
      %v178 = vld [vmem:[%s164 + $0x14] sm:$0x3]
      %v179 = vld [vmem:[%s1] sm:$0xf]
      %v180 = vld [vmem:[%s1 + $0x4] sm:$0xf]
      %v181 = vld [vmem:[%s1 + $0x8] sm:$0xf]
      %v182 = vld [vmem:[%s1 + $0xc] sm:$0xf]
      %v183 = vld [vmem:[%s1 + $0x10] sm:$0xf]
      %v184 = vld [vmem:[%s1 + $0x14] sm:$0xf]
      %v185 = vld [vmem:[%s1 + $0x18] sm:$0xf]
      %v186 = vld [vmem:[%s1 + $0x1c] sm:$0xf]
      %v187 = vld [vmem:[%s1 + $0x20] sm:$0xf]
      %v188 = vld [vmem:[%s1 + $0x24] sm:$0xf]
      %v189 = vld [vmem:[%s1 + $0x28] sm:$0xf]
      %v190 = vld [vmem:[%s1 + $0x2c] sm:$0xf]
      %v191 = vld [vmem:[%s1 + $0x30] sm:$0xf]
      %v192 = vld [vmem:[%s1 + $0x34] sm:$0xf]
      %v193 = vld [vmem:[%s1 + $0x38] sm:$0xf]
      %v194 = vld [vmem:[%s1 + $0x3c] sm:$0xf]
      %s195 = scalar_lea.vmem %s1, 64
      %v196 = vld [vmem:[%s195] sm:$0xf]
      %v197 = vld [vmem:[%s195 + $0x4] sm:$0xf]
      %v198 = vld [vmem:[%s195 + $0x8] sm:$0xf]
      %v199 = vld [vmem:[%s195 + $0xc] sm:$0xf]
      %v200 = vld [vmem:[%s195 + $0x10] sm:$0xf]
      %v201 = vld [vmem:[%s195 + $0x14] sm:$0xf]
      %v202 = vld [vmem:[%s195 + $0x18] sm:$0xf]
      %v203 = vld [vmem:[%s195 + $0x1c] sm:$0xf]
      %v204 = vld [vmem:[%s195 + $0x20] sm:$0xf]
      %v205 = vld [vmem:[%s195 + $0x24] sm:$0xf]
      %v206 = vld [vmem:[%s195 + $0x28] sm:$0xf]
      %v207 = vld [vmem:[%s195 + $0x2c] sm:$0xf]
      %v208 = vld [vmem:[%s195 + $0x30] sm:$0xf]
      %v209 = vld [vmem:[%s195 + $0x34] sm:$0xf]
      %v210 = vld [vmem:[%s195 + $0x38] sm:$0xf]
      %v211 = vld [vmem:[%s195 + $0x3c] sm:$0xf]
      %213 = vst [vmem:[#allocation1] ss:$9 sm:$0xff] %v172
      %s215 = scalar_lea.vmem [#allocation1], 1
      %216 = vst [vmem:[%s215] ss:$9 sm:$0xff] %v173
      %v217 = vld [vmem:[#allocation1] sm:$0xff]
      %v235 = vunpack.c.l.b16 %v196
      %v236 = vunpack.c.l.b16 %v197
      %v237 = vunpack.c.l.b16 %v198
      %v238 = vunpack.c.l.b16 %v199
      %v239 = vunpack.c.l.b16 %v200
      %v240 = vunpack.c.l.b16 %v201
      %v241 = vunpack.c.l.b16 %v202
      %v242 = vunpack.c.l.b16 %v203
      %v243 = vunpack.c.l.b16 %v204
      %v244 = vunpack.c.l.b16 %v205
      %v245 = vunpack.c.l.b16 %v206
      %v246 = vunpack.c.l.b16 %v207
      %v247 = vunpack.c.l.b16 %v208
      %v248 = vunpack.c.l.b16 %v209
      %v249 = vunpack.c.l.b16 %v210
      %v250 = vunpack.c.l.b16 %v211
      %v251 = vpack.c.b16 %v236, %v235
      %v252 = vpack.c.b16 %v238, %v237
      %v253 = vpack.c.b16 %v240, %v239
      %v254 = vpack.c.b16 %v242, %v241
      %v255 = vpack.c.b16 %v244, %v243
      %v256 = vpack.c.b16 %v246, %v245
      %v257 = vpack.c.b16 %v248, %v247
      %v258 = vpack.c.b16 %v250, %v249
      %267 = vmatpush.bf16.msra.mxu0 %v258
      %268 = vmatpush.bf16.msra.mxu0 %v257
      %269 = vmatpush.bf16.msra.mxu0 %v256
      %270 = vmatpush.bf16.msra.mxu0 %v255
      %271 = vmatpush.bf16.msra.mxu0 %v254
      %272 = vmatpush.bf16.msra.mxu0 %v253
      %273 = vmatpush.bf16.msra.mxu0 %v252
      %274 = vmatpush.bf16.msra.mxu0 %v251
      %275 = vmatmul.bf16.gmra.mxu0 %v217
      %v276 = vpop.f32.mrf.mxu0
      %v277 = vadd.f32 0.0, %v276
      %v278 = vpop.f32.mrf.mxu0
      %279 = vdwg.mxu0
      %281 = vst [vmem:[#allocation1] ss:$9 sm:$0xff] %v169
      %s283 = scalar_lea.vmem [#allocation1], 1
      %284 = vst [vmem:[%s283] ss:$9 sm:$0xff] %v170
      %v285 = vld [vmem:[#allocation1] sm:$0xff]
      %v303 = vunpack.c.l.b16 %v179
      %v304 = vunpack.c.l.b16 %v180
      %v305 = vunpack.c.l.b16 %v181
      %v306 = vunpack.c.l.b16 %v182
      %v307 = vunpack.c.l.b16 %v183
      %v308 = vunpack.c.l.b16 %v184
      %v309 = vunpack.c.l.b16 %v185
      %v310 = vunpack.c.l.b16 %v186
      %v311 = vunpack.c.l.b16 %v187
      %v312 = vunpack.c.l.b16 %v188
      %v313 = vunpack.c.l.b16 %v189
      %v314 = vunpack.c.l.b16 %v190
      %v315 = vunpack.c.l.b16 %v191
      %v316 = vunpack.c.l.b16 %v192
      %v317 = vunpack.c.l.b16 %v193
      %v318 = vunpack.c.l.b16 %v194
      %v319 = vpack.c.b16 %v304, %v303
      %v320 = vpack.c.b16 %v306, %v305
      %v321 = vpack.c.b16 %v308, %v307
      %v322 = vpack.c.b16 %v310, %v309
      %v323 = vpack.c.b16 %v312, %v311
      %v324 = vpack.c.b16 %v314, %v313
      %v325 = vpack.c.b16 %v316, %v315
      %v326 = vpack.c.b16 %v318, %v317
      %335 = vmatpush.bf16.msra.mxu0 %v326
      %336 = vmatpush.bf16.msra.mxu0 %v325
      %337 = vmatpush.bf16.msra.mxu0 %v324
      %338 = vmatpush.bf16.msra.mxu0 %v323
      %339 = vmatpush.bf16.msra.mxu0 %v322
      %340 = vmatpush.bf16.msra.mxu0 %v321
      %341 = vmatpush.bf16.msra.mxu0 %v320
      %342 = vmatpush.bf16.msra.mxu0 %v319
      %343 = vmatmul.bf16.gmra.mxu0 %v285
      %v344 = vpop.f32.mrf.mxu0
      %v345 = vadd.f32 %v277, %v344
      %v346 = vpop.f32.mrf.mxu0
      %347 = vdwg.mxu0
      %v350 = vrot.slane %v169, 1
      %v351 = vrot.slane %v169, 2
      %v352 = vrot.slane %v169, 3
      %v353 = vrot.slane %v170, 1
      %v354 = vrot.slane %v170, 2
      %v355 = vrot.slane %v170, 3
      %vm356 = vcmask 1040384
      %v358 = vsel %vm356, %v169, %v350
      %vm359 = vcmask 1042434
      %v362 = vsel %vm359, %v351, %v352
      %vm363 = vcmask 1041408
      %v364 = vsel %vm363, %v358, %v362
      %vm365 = vcmask 1041409
      %v366 = vsel %vm365, %v169, %v350
      %vm367 = vcmask 1043459
      %v368 = vsel %vm367, %v351, %v352
      %vm369 = vcmask 1042433
      %v370 = vsel %vm369, %v366, %v368
      %v372 = vrot.slane %v370, 1
      %v374 = vsel %vm356, %v170, %v353
      %v377 = vsel %vm359, %v354, %v355
      %v378 = vsel %vm363, %v374, %v377
      %v379 = vsel %vm365, %v170, %v353
      %v380 = vsel %vm367, %v354, %v355
      %v381 = vsel %vm369, %v379, %v380
      %v383 = vrot.slane %v381, 1
      %vm384 = vsmask.f32 256
      %vm385 = vsmask.f32 1284
      %vm386 = vmor %vm384, %vm385
      %vm387 = vsmask.f32 2312
      %vm388 = vmor %vm386, %vm387
      %vm389 = vsmask.f32 3340
      %vm390 = vmor %vm388, %vm389
      %vm391 = vsmask.f32 4368
      %vm392 = vmor %vm390, %vm391
      %vm393 = vsmask.f32 5396
      %vm394 = vmor %vm392, %vm393
      %vm395 = vsmask.f32 6424
      %vm396 = vmor %vm394, %vm395
      %vm397 = vsmask.f32 7452
      %vm398 = vmor %vm396, %vm397
      %v399 = vshrl.u32 %v364, 16
      %v401 = vrot.slane %v399, 7
      %v402 = vrot.slane %v401, 1
      %v404 = vshll.u32 %v372, 16
      %v406 = vsel %vm398, %v402, %v404
      %v407 = vshrl.u32 %v378, 16
      %v409 = vrot.slane %v407, 7
      %v410 = vrot.slane %v409, 1
      %v412 = vshll.u32 %v383, 16
      %v414 = vsel %vm398, %v410, %v412
      %s415 = scalar_lea.vmem %s1, 128
      %v416 = vld [vmem:[%s415] sm:$0xf]
      %v417 = vld [vmem:[%s415 + $0x4] sm:$0xf]
      %v418 = vld [vmem:[%s415 + $0x8] sm:$0xf]
      %v419 = vld [vmem:[%s415 + $0xc] sm:$0xf]
      %v420 = vld [vmem:[%s415 + $0x10] sm:$0xf]
      %v421 = vld [vmem:[%s415 + $0x14] sm:$0xf]
      %v422 = vld [vmem:[%s415 + $0x18] sm:$0xf]
      %v423 = vld [vmem:[%s415 + $0x1c] sm:$0xf]
      %v424 = vld [vmem:[%s415 + $0x20] sm:$0xf]
      %v425 = vld [vmem:[%s415 + $0x24] sm:$0xf]
      %v426 = vld [vmem:[%s415 + $0x28] sm:$0xf]
      %v427 = vld [vmem:[%s415 + $0x2c] sm:$0xf]
      %v428 = vld [vmem:[%s415 + $0x30] sm:$0xf]
      %v429 = vld [vmem:[%s415 + $0x34] sm:$0xf]
      %v430 = vld [vmem:[%s415 + $0x38] sm:$0xf]
      %v431 = vld [vmem:[%s415 + $0x3c] sm:$0xf]
      %433 = vst [vmem:[#allocation1] ss:$9 sm:$0xff] %v406
      %s435 = scalar_lea.vmem [#allocation1], 1
      %436 = vst [vmem:[%s435] ss:$9 sm:$0xff] %v414
      %v437 = vld [vmem:[#allocation1] sm:$0xff]
      %v455 = vunpack.c.l.b16 %v416
      %v456 = vunpack.c.l.b16 %v417
      %v457 = vunpack.c.l.b16 %v418
      %v458 = vunpack.c.l.b16 %v419
      %v459 = vunpack.c.l.b16 %v420
      %v460 = vunpack.c.l.b16 %v421
      %v461 = vunpack.c.l.b16 %v422
      %v462 = vunpack.c.l.b16 %v423
      %v463 = vunpack.c.l.b16 %v424
      %v464 = vunpack.c.l.b16 %v425
      %v465 = vunpack.c.l.b16 %v426
      %v466 = vunpack.c.l.b16 %v427
      %v467 = vunpack.c.l.b16 %v428
      %v468 = vunpack.c.l.b16 %v429
      %v469 = vunpack.c.l.b16 %v430
      %v470 = vunpack.c.l.b16 %v431
      %v471 = vpack.c.b16 %v456, %v455
      %v472 = vpack.c.b16 %v458, %v457
      %v473 = vpack.c.b16 %v460, %v459
      %v474 = vpack.c.b16 %v462, %v461
      %v475 = vpack.c.b16 %v464, %v463
      %v476 = vpack.c.b16 %v466, %v465
      %v477 = vpack.c.b16 %v468, %v467
      %v478 = vpack.c.b16 %v470, %v469
      %487 = vmatpush.bf16.msra.mxu0 %v478
      %488 = vmatpush.bf16.msra.mxu0 %v477
      %489 = vmatpush.bf16.msra.mxu0 %v476
      %490 = vmatpush.bf16.msra.mxu0 %v475
      %491 = vmatpush.bf16.msra.mxu0 %v474
      %492 = vmatpush.bf16.msra.mxu0 %v473
      %493 = vmatpush.bf16.msra.mxu0 %v472
      %494 = vmatpush.bf16.msra.mxu0 %v471
      %495 = vmatmul.bf16.gmra.mxu0 %v437
      %v496 = vpop.f32.mrf.mxu0
      %v497 = vadd.f32 0.0, %v496
      %v498 = vpop.f32.mrf.mxu0
      %499 = vdwg.mxu0
      %v500 = vadd.f32 %v345, %v497
      %s501 = scalar_lea.vmem %s1, 192
      %v502 = vld [vmem:[%s501] sm:$0xf]
      %v503 = vld [vmem:[%s501 + $0x4] sm:$0xf]
      %v504 = vld [vmem:[%s501 + $0x8] sm:$0xf]
      %v505 = vld [vmem:[%s501 + $0xc] sm:$0xf]
      %v506 = vld [vmem:[%s501 + $0x10] sm:$0xf]
      %v507 = vld [vmem:[%s501 + $0x14] sm:$0xf]
      %v508 = vld [vmem:[%s501 + $0x18] sm:$0xf]
      %v509 = vld [vmem:[%s501 + $0x1c] sm:$0xf]
      %v510 = vld [vmem:[%s501 + $0x20] sm:$0xf]
      %v511 = vld [vmem:[%s501 + $0x24] sm:$0xf]
      %v512 = vld [vmem:[%s501 + $0x28] sm:$0xf]
      %v513 = vld [vmem:[%s501 + $0x2c] sm:$0xf]
      %v514 = vld [vmem:[%s501 + $0x30] sm:$0xf]
      %v515 = vld [vmem:[%s501 + $0x34] sm:$0xf]
      %v516 = vld [vmem:[%s501 + $0x38] sm:$0xf]
      %v517 = vld [vmem:[%s501 + $0x3c] sm:$0xf]
      %519 = vst [vmem:[#allocation1] ss:$9 sm:$0xff] %v175
      %s521 = scalar_lea.vmem [#allocation1], 1
      %522 = vst [vmem:[%s521] ss:$9 sm:$0xff] %v176
      %v523 = vld [vmem:[#allocation1] sm:$0xff]
      %v541 = vunpack.c.l.b16 %v502
      %v542 = vunpack.c.l.b16 %v503
      %v543 = vunpack.c.l.b16 %v504
      %v544 = vunpack.c.l.b16 %v505
      %v545 = vunpack.c.l.b16 %v506
      %v546 = vunpack.c.l.b16 %v507
      %v547 = vunpack.c.l.b16 %v508
      %v548 = vunpack.c.l.b16 %v509
      %v549 = vunpack.c.l.b16 %v510
      %v550 = vunpack.c.l.b16 %v511
      %v551 = vunpack.c.l.b16 %v512
      %v552 = vunpack.c.l.b16 %v513
      %v553 = vunpack.c.l.b16 %v514
      %v554 = vunpack.c.l.b16 %v515
      %v555 = vunpack.c.l.b16 %v516
      %v556 = vunpack.c.l.b16 %v517
      %v557 = vpack.c.b16 %v542, %v541
      %v558 = vpack.c.b16 %v544, %v543
      %v559 = vpack.c.b16 %v546, %v545
      %v560 = vpack.c.b16 %v548, %v547
      %v561 = vpack.c.b16 %v550, %v549
      %v562 = vpack.c.b16 %v552, %v551
      %v563 = vpack.c.b16 %v554, %v553
      %v564 = vpack.c.b16 %v556, %v555
      %573 = vmatpush.bf16.msra.mxu0 %v564
      %574 = vmatpush.bf16.msra.mxu0 %v563
      %575 = vmatpush.bf16.msra.mxu0 %v562
      %576 = vmatpush.bf16.msra.mxu0 %v561
      %577 = vmatpush.bf16.msra.mxu0 %v560
      %578 = vmatpush.bf16.msra.mxu0 %v559
      %579 = vmatpush.bf16.msra.mxu0 %v558
      %580 = vmatpush.bf16.msra.mxu0 %v557
      %581 = vmatmul.bf16.gmra.mxu0 %v523
      %v582 = vpop.f32.mrf.mxu0
      %v583 = vadd.f32 0.0, %v582
      %v584 = vpop.f32.mrf.mxu0
      %585 = vdwg.mxu0
      %v586 = vadd.f32 %v500, %v583
      %s587 = scalar_lea.vmem %s1, 256
      %v588 = vld [vmem:[%s587] sm:$0xf]
      %v589 = vld [vmem:[%s587 + $0x4] sm:$0xf]
      %v590 = vld [vmem:[%s587 + $0x8] sm:$0xf]
      %v591 = vld [vmem:[%s587 + $0xc] sm:$0xf]
      %v592 = vld [vmem:[%s587 + $0x10] sm:$0xf]
      %v593 = vld [vmem:[%s587 + $0x14] sm:$0xf]
      %v594 = vld [vmem:[%s587 + $0x18] sm:$0xf]
      %v595 = vld [vmem:[%s587 + $0x1c] sm:$0xf]
      %v596 = vld [vmem:[%s587 + $0x20] sm:$0xf]
      %v597 = vld [vmem:[%s587 + $0x24] sm:$0xf]
      %v598 = vld [vmem:[%s587 + $0x28] sm:$0xf]
      %v599 = vld [vmem:[%s587 + $0x2c] sm:$0xf]
      %v600 = vld [vmem:[%s587 + $0x30] sm:$0xf]
      %v601 = vld [vmem:[%s587 + $0x34] sm:$0xf]
      %v602 = vld [vmem:[%s587 + $0x38] sm:$0xf]
      %v603 = vld [vmem:[%s587 + $0x3c] sm:$0xf]
      %605 = vst [vmem:[#allocation1] ss:$9 sm:$0xff] %v177
      %s607 = scalar_lea.vmem [#allocation1], 1
      %608 = vst [vmem:[%s607] ss:$9 sm:$0xff] %v178
      %v609 = vld [vmem:[#allocation1] sm:$0xff]
      %v627 = vunpack.c.l.b16 %v588
      %v628 = vunpack.c.l.b16 %v589
      %v629 = vunpack.c.l.b16 %v590
      %v630 = vunpack.c.l.b16 %v591
      %v631 = vunpack.c.l.b16 %v592
      %v632 = vunpack.c.l.b16 %v593
      %v633 = vunpack.c.l.b16 %v594
      %v634 = vunpack.c.l.b16 %v595
      %v635 = vunpack.c.l.b16 %v596
      %v636 = vunpack.c.l.b16 %v597
      %v637 = vunpack.c.l.b16 %v598
      %v638 = vunpack.c.l.b16 %v599
      %v639 = vunpack.c.l.b16 %v600
      %v640 = vunpack.c.l.b16 %v601
      %v641 = vunpack.c.l.b16 %v602
      %v642 = vunpack.c.l.b16 %v603
      %v643 = vpack.c.b16 %v628, %v627
      %v644 = vpack.c.b16 %v630, %v629
      %v645 = vpack.c.b16 %v632, %v631
      %v646 = vpack.c.b16 %v634, %v633
      %v647 = vpack.c.b16 %v636, %v635
      %v648 = vpack.c.b16 %v638, %v637
      %v649 = vpack.c.b16 %v640, %v639
      %v650 = vpack.c.b16 %v642, %v641
      %659 = vmatpush.bf16.msra.mxu0 %v650
      %660 = vmatpush.bf16.msra.mxu0 %v649
      %661 = vmatpush.bf16.msra.mxu0 %v648
      %662 = vmatpush.bf16.msra.mxu0 %v647
      %663 = vmatpush.bf16.msra.mxu0 %v646
      %664 = vmatpush.bf16.msra.mxu0 %v645
      %665 = vmatpush.bf16.msra.mxu0 %v644
      %666 = vmatpush.bf16.msra.mxu0 %v643
      %667 = vmatmul.bf16.gmra.mxu0 %v609
      %v668 = vpop.f32.mrf.mxu0
      %v669 = vadd.f32 0.0, %v668
      %v670 = vpop.f32.mrf.mxu0
      %671 = vdwg.mxu0
      %v672 = vadd.f32 %v586, %v669
      %v675 = vrot.slane %v175, 1
      %v676 = vrot.slane %v175, 2
      %v677 = vrot.slane %v175, 3
      %v678 = vrot.slane %v176, 1
      %v679 = vrot.slane %v176, 2
      %v680 = vrot.slane %v176, 3
      %v682 = vsel %vm356, %v175, %v675
      %v685 = vsel %vm359, %v676, %v677
      %v686 = vsel %vm363, %v682, %v685
      %v687 = vsel %vm365, %v175, %v675
      %v688 = vsel %vm367, %v676, %v677
      %v689 = vsel %vm369, %v687, %v688
      %v691 = vrot.slane %v689, 1
      %v693 = vsel %vm356, %v176, %v678
      %v696 = vsel %vm359, %v679, %v680
      %v697 = vsel %vm363, %v693, %v696
      %v698 = vsel %vm365, %v176, %v678
      %v699 = vsel %vm367, %v679, %v680
      %v700 = vsel %vm369, %v698, %v699
      %v702 = vrot.slane %v700, 1
      %v703 = vshrl.u32 %v686, 16
      %v705 = vrot.slane %v703, 7
      %v706 = vrot.slane %v705, 1
      %v708 = vshll.u32 %v691, 16
      %v710 = vsel %vm398, %v706, %v708
      %v711 = vshrl.u32 %v697, 16
      %v713 = vrot.slane %v711, 7
      %v714 = vrot.slane %v713, 1
      %v716 = vshll.u32 %v702, 16
      %v718 = vsel %vm398, %v714, %v716
      %s719 = scalar_lea.vmem %s1, 320
      %v720 = vld [vmem:[%s719] sm:$0xf]
      %v721 = vld [vmem:[%s719 + $0x4] sm:$0xf]
      %v722 = vld [vmem:[%s719 + $0x8] sm:$0xf]
      %v723 = vld [vmem:[%s719 + $0xc] sm:$0xf]
      %v724 = vld [vmem:[%s719 + $0x10] sm:$0xf]
      %v725 = vld [vmem:[%s719 + $0x14] sm:$0xf]
      %v726 = vld [vmem:[%s719 + $0x18] sm:$0xf]
      %v727 = vld [vmem:[%s719 + $0x1c] sm:$0xf]
      %v728 = vld [vmem:[%s719 + $0x20] sm:$0xf]
      %v729 = vld [vmem:[%s719 + $0x24] sm:$0xf]
      %v730 = vld [vmem:[%s719 + $0x28] sm:$0xf]
      %v731 = vld [vmem:[%s719 + $0x2c] sm:$0xf]
      %v732 = vld [vmem:[%s719 + $0x30] sm:$0xf]
      %v733 = vld [vmem:[%s719 + $0x34] sm:$0xf]
      %v734 = vld [vmem:[%s719 + $0x38] sm:$0xf]
      %v735 = vld [vmem:[%s719 + $0x3c] sm:$0xf]
      %737 = vst [vmem:[#allocation1] ss:$9 sm:$0xff] %v710
      %s739 = scalar_lea.vmem [#allocation1], 1
      %740 = vst [vmem:[%s739] ss:$9 sm:$0xff] %v718
      %v741 = vld [vmem:[#allocation1] sm:$0xff]
      %v759 = vunpack.c.l.b16 %v720
      %v760 = vunpack.c.l.b16 %v721
      %v761 = vunpack.c.l.b16 %v722
      %v762 = vunpack.c.l.b16 %v723
      %v763 = vunpack.c.l.b16 %v724
      %v764 = vunpack.c.l.b16 %v725
      %v765 = vunpack.c.l.b16 %v726
      %v766 = vunpack.c.l.b16 %v727
      %v767 = vunpack.c.l.b16 %v728
      %v768 = vunpack.c.l.b16 %v729
      %v769 = vunpack.c.l.b16 %v730
      %v770 = vunpack.c.l.b16 %v731
      %v771 = vunpack.c.l.b16 %v732
      %v772 = vunpack.c.l.b16 %v733
      %v773 = vunpack.c.l.b16 %v734
      %v774 = vunpack.c.l.b16 %v735
      %v775 = vpack.c.b16 %v760, %v759
      %v776 = vpack.c.b16 %v762, %v761
      %v777 = vpack.c.b16 %v764, %v763
      %v778 = vpack.c.b16 %v766, %v765
      %v779 = vpack.c.b16 %v768, %v767
      %v780 = vpack.c.b16 %v770, %v769
      %v781 = vpack.c.b16 %v772, %v771
      %v782 = vpack.c.b16 %v774, %v773
      %791 = vmatpush.bf16.msra.mxu0 %v782
      %792 = vmatpush.bf16.msra.mxu0 %v781
      %793 = vmatpush.bf16.msra.mxu0 %v780
      %794 = vmatpush.bf16.msra.mxu0 %v779
      %795 = vmatpush.bf16.msra.mxu0 %v778
      %796 = vmatpush.bf16.msra.mxu0 %v777
      %797 = vmatpush.bf16.msra.mxu0 %v776
      %798 = vmatpush.bf16.msra.mxu0 %v775
      %799 = vmatmul.bf16.gmra.mxu0 %v741
      %v800 = vpop.f32.mrf.mxu0
      %v801 = vadd.f32 0.0, %v800
      %v802 = vpop.f32.mrf.mxu0
      %803 = vdwg.mxu0
      %v804 = vadd.f32 %v672, %v801
      %s805 = scalar_lea.vmem %s1, 384
      %v806 = vld [vmem:[%s805] sm:$0xf]
      %v807 = vld [vmem:[%s805 + $0x4] sm:$0xf]
      %v808 = vld [vmem:[%s805 + $0x8] sm:$0xf]
      %v809 = vld [vmem:[%s805 + $0xc] sm:$0xf]
      %v810 = vld [vmem:[%s805 + $0x10] sm:$0xf]
      %v811 = vld [vmem:[%s805 + $0x14] sm:$0xf]
      %v812 = vld [vmem:[%s805 + $0x18] sm:$0xf]
      %v813 = vld [vmem:[%s805 + $0x1c] sm:$0xf]
      %v814 = vld [vmem:[%s805 + $0x20] sm:$0xf]
      %v815 = vld [vmem:[%s805 + $0x24] sm:$0xf]
      %v816 = vld [vmem:[%s805 + $0x28] sm:$0xf]
      %v817 = vld [vmem:[%s805 + $0x2c] sm:$0xf]
      %v818 = vld [vmem:[%s805 + $0x30] sm:$0xf]
      %v819 = vld [vmem:[%s805 + $0x34] sm:$0xf]
      %v820 = vld [vmem:[%s805 + $0x38] sm:$0xf]
      %v821 = vld [vmem:[%s805 + $0x3c] sm:$0xf]
      %822 = vst [vmem:[#allocation1] ss:$9 sm:$0xff] %v170
      %s824 = scalar_lea.vmem [#allocation1], 1
      %825 = vst [vmem:[%s824] ss:$9 sm:$0xff] %v171
      %v826 = vld [vmem:[#allocation1] sm:$0xff]
      %v844 = vunpack.c.l.b16 %v806
      %v845 = vunpack.c.l.b16 %v807
      %v846 = vunpack.c.l.b16 %v808
      %v847 = vunpack.c.l.b16 %v809
      %v848 = vunpack.c.l.b16 %v810
      %v849 = vunpack.c.l.b16 %v811
      %v850 = vunpack.c.l.b16 %v812
      %v851 = vunpack.c.l.b16 %v813
      %v852 = vunpack.c.l.b16 %v814
      %v853 = vunpack.c.l.b16 %v815
      %v854 = vunpack.c.l.b16 %v816
      %v855 = vunpack.c.l.b16 %v817
      %v856 = vunpack.c.l.b16 %v818
      %v857 = vunpack.c.l.b16 %v819
      %v858 = vunpack.c.l.b16 %v820
      %v859 = vunpack.c.l.b16 %v821
      %v860 = vpack.c.b16 %v845, %v844
      %v861 = vpack.c.b16 %v847, %v846
      %v862 = vpack.c.b16 %v849, %v848
      %v863 = vpack.c.b16 %v851, %v850
      %v864 = vpack.c.b16 %v853, %v852
      %v865 = vpack.c.b16 %v855, %v854
      %v866 = vpack.c.b16 %v857, %v856
      %v867 = vpack.c.b16 %v859, %v858
      %876 = vmatpush.bf16.msra.mxu0 %v867
      %877 = vmatpush.bf16.msra.mxu0 %v866
      %878 = vmatpush.bf16.msra.mxu0 %v865
      %879 = vmatpush.bf16.msra.mxu0 %v864
      %880 = vmatpush.bf16.msra.mxu0 %v863
      %881 = vmatpush.bf16.msra.mxu0 %v862
      %882 = vmatpush.bf16.msra.mxu0 %v861
      %883 = vmatpush.bf16.msra.mxu0 %v860
      %884 = vmatmul.bf16.gmra.mxu0 %v826
      %v885 = vpop.f32.mrf.mxu0
      %v886 = vadd.f32 0.0, %v885
      %v887 = vpop.f32.mrf.mxu0
      %888 = vdwg.mxu0
      %v889 = vadd.f32 %v804, %v886
      %s890 = scalar_lea.vmem %s1, 448
      %v891 = vld [vmem:[%s890] sm:$0xf]
      %v892 = vld [vmem:[%s890 + $0x4] sm:$0xf]
      %v893 = vld [vmem:[%s890 + $0x8] sm:$0xf]
      %v894 = vld [vmem:[%s890 + $0xc] sm:$0xf]
      %v895 = vld [vmem:[%s890 + $0x10] sm:$0xf]
      %v896 = vld [vmem:[%s890 + $0x14] sm:$0xf]
      %v897 = vld [vmem:[%s890 + $0x18] sm:$0xf]
      %v898 = vld [vmem:[%s890 + $0x1c] sm:$0xf]
      %v899 = vld [vmem:[%s890 + $0x20] sm:$0xf]
      %v900 = vld [vmem:[%s890 + $0x24] sm:$0xf]
      %v901 = vld [vmem:[%s890 + $0x28] sm:$0xf]
      %v902 = vld [vmem:[%s890 + $0x2c] sm:$0xf]
      %v903 = vld [vmem:[%s890 + $0x30] sm:$0xf]
      %v904 = vld [vmem:[%s890 + $0x34] sm:$0xf]
      %v905 = vld [vmem:[%s890 + $0x38] sm:$0xf]
      %v906 = vld [vmem:[%s890 + $0x3c] sm:$0xf]
      %907 = vst [vmem:[#allocation1] ss:$9 sm:$0xff] %v173
      %s909 = scalar_lea.vmem [#allocation1], 1
      %910 = vst [vmem:[%s909] ss:$9 sm:$0xff] %v174
      %v911 = vld [vmem:[#allocation1] sm:$0xff]
      %v929 = vunpack.c.l.b16 %v891
      %v930 = vunpack.c.l.b16 %v892
      %v931 = vunpack.c.l.b16 %v893
      %v932 = vunpack.c.l.b16 %v894
      %v933 = vunpack.c.l.b16 %v895
      %v934 = vunpack.c.l.b16 %v896
      %v935 = vunpack.c.l.b16 %v897
      %v936 = vunpack.c.l.b16 %v898
      %v937 = vunpack.c.l.b16 %v899
      %v938 = vunpack.c.l.b16 %v900
      %v939 = vunpack.c.l.b16 %v901
      %v940 = vunpack.c.l.b16 %v902
      %v941 = vunpack.c.l.b16 %v903
      %v942 = vunpack.c.l.b16 %v904
      %v943 = vunpack.c.l.b16 %v905
      %v944 = vunpack.c.l.b16 %v906
      %v945 = vpack.c.b16 %v930, %v929
      %v946 = vpack.c.b16 %v932, %v931
      %v947 = vpack.c.b16 %v934, %v933
      %v948 = vpack.c.b16 %v936, %v935
      %v949 = vpack.c.b16 %v938, %v937
      %v950 = vpack.c.b16 %v940, %v939
      %v951 = vpack.c.b16 %v942, %v941
      %v952 = vpack.c.b16 %v944, %v943
      %961 = vmatpush.bf16.msra.mxu0 %v952
      %962 = vmatpush.bf16.msra.mxu0 %v951
      %963 = vmatpush.bf16.msra.mxu0 %v950
      %964 = vmatpush.bf16.msra.mxu0 %v949
      %965 = vmatpush.bf16.msra.mxu0 %v948
      %966 = vmatpush.bf16.msra.mxu0 %v947
      %967 = vmatpush.bf16.msra.mxu0 %v946
      %968 = vmatpush.bf16.msra.mxu0 %v945
      %969 = vmatmul.bf16.gmra.mxu0 %v911
      %v970 = vpop.f32.mrf.mxu0
      %v971 = vadd.f32 0.0, %v970
      %v972 = vpop.f32.mrf.mxu0
      %973 = vdwg.mxu0
      %v974 = vadd.f32 %v889, %v971
      %v976 = vrot.slane %v171, 1
      %v977 = vrot.slane %v171, 2
      %v978 = vrot.slane %v171, 3
      %v980 = vsel %vm356, %v171, %v976
      %v983 = vsel %vm359, %v977, %v978
      %v984 = vsel %vm363, %v980, %v983
      %v985 = vsel %vm365, %v171, %v976
      %v986 = vsel %vm367, %v977, %v978
      %v987 = vsel %vm369, %v985, %v986
      %v989 = vrot.slane %v987, 1
      %v990 = vshrl.u32 %v984, 16
      %v992 = vrot.slane %v990, 7
      %v993 = vrot.slane %v992, 1
      %v995 = vshll.u32 %v989, 16
      %v997 = vsel %vm398, %v993, %v995
      %s998 = scalar_lea.vmem %s1, 512
      %v999 = vld [vmem:[%s998] sm:$0xf]
      %v1000 = vld [vmem:[%s998 + $0x4] sm:$0xf]
      %v1001 = vld [vmem:[%s998 + $0x8] sm:$0xf]
      %v1002 = vld [vmem:[%s998 + $0xc] sm:$0xf]
      %v1003 = vld [vmem:[%s998 + $0x10] sm:$0xf]
      %v1004 = vld [vmem:[%s998 + $0x14] sm:$0xf]
      %v1005 = vld [vmem:[%s998 + $0x18] sm:$0xf]
      %v1006 = vld [vmem:[%s998 + $0x1c] sm:$0xf]
      %v1007 = vld [vmem:[%s998 + $0x20] sm:$0xf]
      %v1008 = vld [vmem:[%s998 + $0x24] sm:$0xf]
      %v1009 = vld [vmem:[%s998 + $0x28] sm:$0xf]
      %v1010 = vld [vmem:[%s998 + $0x2c] sm:$0xf]
      %v1011 = vld [vmem:[%s998 + $0x30] sm:$0xf]
      %v1012 = vld [vmem:[%s998 + $0x34] sm:$0xf]
      %v1013 = vld [vmem:[%s998 + $0x38] sm:$0xf]
      %v1014 = vld [vmem:[%s998 + $0x3c] sm:$0xf]
      %1015 = vst [vmem:[#allocation1] ss:$9 sm:$0xff] %v414
      %s1017 = scalar_lea.vmem [#allocation1], 1
      %1018 = vst [vmem:[%s1017] ss:$9 sm:$0xff] %v997
      %v1019 = vld [vmem:[#allocation1] sm:$0xff]
      %v1037 = vunpack.c.l.b16 %v999
      %v1038 = vunpack.c.l.b16 %v1000
      %v1039 = vunpack.c.l.b16 %v1001
      %v1040 = vunpack.c.l.b16 %v1002
      %v1041 = vunpack.c.l.b16 %v1003
      %v1042 = vunpack.c.l.b16 %v1004
      %v1043 = vunpack.c.l.b16 %v1005
      %v1044 = vunpack.c.l.b16 %v1006
      %v1045 = vunpack.c.l.b16 %v1007
      %v1046 = vunpack.c.l.b16 %v1008
      %v1047 = vunpack.c.l.b16 %v1009
      %v1048 = vunpack.c.l.b16 %v1010
      %v1049 = vunpack.c.l.b16 %v1011
      %v1050 = vunpack.c.l.b16 %v1012
      %v1051 = vunpack.c.l.b16 %v1013
      %v1052 = vunpack.c.l.b16 %v1014
      %v1053 = vpack.c.b16 %v1038, %v1037
      %v1054 = vpack.c.b16 %v1040, %v1039
      %v1055 = vpack.c.b16 %v1042, %v1041
      %v1056 = vpack.c.b16 %v1044, %v1043
      %v1057 = vpack.c.b16 %v1046, %v1045
      %v1058 = vpack.c.b16 %v1048, %v1047
      %v1059 = vpack.c.b16 %v1050, %v1049
      %v1060 = vpack.c.b16 %v1052, %v1051
      %1069 = vmatpush.bf16.msra.mxu0 %v1060
      %1070 = vmatpush.bf16.msra.mxu0 %v1059
      %1071 = vmatpush.bf16.msra.mxu0 %v1058
      %1072 = vmatpush.bf16.msra.mxu0 %v1057
      %1073 = vmatpush.bf16.msra.mxu0 %v1056
      %1074 = vmatpush.bf16.msra.mxu0 %v1055
      %1075 = vmatpush.bf16.msra.mxu0 %v1054
      %1076 = vmatpush.bf16.msra.mxu0 %v1053
      %1077 = vmatmul.bf16.gmra.mxu0 %v1019
      %v1078 = vpop.f32.mrf.mxu0
      %v1079 = vadd.f32 0.0, %v1078
      %v1080 = vpop.f32.mrf.mxu0
      %1081 = vdwg.mxu0
      %v1082 = vadd.f32 %v974, %v1079
      %v1083 = vld [vmem:[%s2] sm:$0x1]
      %v1085 = vperm.slane %v1083, 0
      %v1087 = vadd.f32 %v1082, %v1085
      %v1088 = vmax.f32 %v1087, 0.0
      %v1090 = vrot.slane %v1088, 2
      %v1092 = vpack.c.bf16 %v1088, %v1088
      %v1093 = vpack.c.bf16 %v1090, %v1090
      %1094 = vst [vmem:[%s168] sm:$0x1] %v1092
      %1095 = vst [vmem:[%s168 + $0x1] sm:$0x1] %v1093
      %p1096 = scmp.lt.s32.totalorder %s14, 1
      %s1097 = scalar_select %p1096, %s14, 1
      %s1098 = smul.addr %s1097, 2
      %s1099 = scalar_lea.vmem %s3, %s1098
      // Predicated region
      $region33: #{_lambda_.10} parent=31 // pred_check
        %p1100 = pneg %p100
      $region34: #{_lambda_.10} parent=31 // pred_check_branch
        %1102 = sbr.rel (%p1100) target = $region36
      $region35: #{_lambda_.10} parent=31 // pred_region
        _
      $region36: #{_lambda_.10} parent=31 // pred_fallthru
        _
    $region32: #{_lambda_.10} parent=5 // pred_fallthru
      _
    %p1103 = scmp.le.s32.totalorder 2, %s9
    // Predicated region
    $region37: #{_lambda_.10} parent=5 // pred_check
      %p1104 = pneg %p1103
    $region38: #{_lambda_.10} parent=5 // pred_check_branch
      %1106 = sbr.rel (%p1104) target = $region40
    $region39: #{_lambda_.10} parent=5 // pred_region
      %s1107 = ssub.s32 %s9, 2
      // Predicated region
      $region41: #{_lambda_.10} parent=39 // pred_check
        %p1108 = pneg %p106
      $region42: #{_lambda_.10} parent=39 // pred_check_branch
        %1110 = sbr.rel (%p1108) target = $region44
      $region43: #{_lambda_.10} parent=39 // pred_region
        %p1111 = scmp.lt.s32.totalorder %s15, 1
        %s1112 = scalar_select %p1111, %s15, 1
        %s1113 = smul.addr %s1112, 2
        %s1114 = scalar_lea.vmem %s3, %s1113
      $region44: #{_lambda_.10} parent=39 // pred_fallthru
        _
    $region40: #{_lambda_.10} parent=5 // pred_fallthru
      _
  $region6: #{_lambda_.10} parent=0 // loop_footer
    %s13 = sadd.s32 1, %s9
  $region7: #{_lambda_.10} parent=0 // loop_footer_branch
    %8 = sbr.rel target = $region3
  $region8: #{_lambda_.10} parent=0 // loop_exit
    _

// kernel: _lambda_.11
$region0: #{_lambda_.11}
  #allocation0 [shape = 'u32[]', space=smem, size = 0x4, offset = 0x4, fixed_abs, tag = 'smem constant byte address 0x4 - core index']
  #allocation1 [shape = 'u32[72,128]{1,0:T(1,128)}', space=vmem, size = 0x9000, scoped, tag = 'internal scratch']
  %s0 = inlined_call_operand.vmem [shape: bf16[2,8,2,128], index: 0, kind: input, shape index: {}]
  %s1 = inlined_call_operand.vmem [shape: bf16[9,128,128], index: 1, kind: input, shape index: {}]
  %s2 = inlined_call_operand.vmem [shape: f32[1,128], index: 2, kind: input, shape index: {}]
  %s3 = inlined_call_operand.vmem [shape: f32[128,128], index: 3, kind: input, shape index: {}]
  %s4 = inlined_call_operand.vmem [shape: f32[1,128], index: 4, kind: input, shape index: {}]
  %s5 = inlined_call_operand.hbm [shape: f32[2,1,128], index: 5, kind: output, shape index: {}]
  %s6 = sld [smem:[#allocation0]]
  $region53: #{_lambda_.11} parent=0
    _
  %s8 = ssub.s32 1, %s6
  %s9 = scalar_select 0, %s8, %s6
  $region1: #{_lambda_.11} parent=0
    #allocation2 [shape = 'u8[1024]{0}', space=vmem, size = 0x400, scoped, tag = 'output window, operand 0']
    #allocation3 [shape = 's32[2]{0}', space=sflag, size = 0x8, scoped, tag = 'scoped memory for _lambda_.11']
    %10 = vsyncpa [#allocation3], 0
    %s11 = scalar_lea.sflag [#allocation3], 1
    %12 = vsyncpa %s11, 0
    loop: start=0, step=1, limit=4
    $region2: #{_lambda_.11} parent=1 // loop_pre_header
      _
    $region3: #{_lambda_.11} parent=1 // loop_header
      %s14 = sphi 0, %s18
      %p15 = scmp.ge.s32.totalorder %s14, 4
      %s24 = sphi 0, %s26
      %s27 = sphi 0, %s24
      %s28 = sphi 0, %s27
      %s44 = sphi 0, %s28
      %s48 = sphi 0, %s48
      %s50 = sphi 0, %s48
      %s51 = sphi 0, %s50
      %s65 = sphi 0, %s51
      %s69 = sphi 0, %s69
      %s71 = sphi 0, %s69
      %s72 = sphi 0, %s71
      %s86 = sphi 0, %s72
      %s90 = sphi 0, %s90
      %s92 = sphi 0, %s90
      %s93 = sphi 0, %s92
      %s107 = sphi 0, %s93
      %s111 = sphi 0, %s111
      %s113 = sphi 0, %s111
      %s114 = sphi 0, %s113
      %s128 = sphi 0, %s114
      %s134 = sphi 0, %s136
      %s137 = sphi 0, %s134
      %s138 = sphi 0, %s137
      %s154 = sphi 0, %s138
    $region4: #{_lambda_.11} parent=1 // loop_header_branch
      %17 = sbr.rel (%p15) target = $region8
    $region5: #{_lambda_.11} parent=1 // loop_body
      %s19 = ssub.s32 %s14, 1
      %s20 = ssub.s32 %s14, 2
      %s21 = sadd.s32 %s14, 1
      %s22 = ssub.s32 %s14, %s21
      %p23 = scmp.eq.s32.totalorder %s22, 0
      %s25 = sadd.s32 %s24, 1
      %s26 = scalar_select %p23, %s24, %s25
      %p29 = pneg %p23
      %p30 = scmp.eq.s32.totalorder %s14, 1
      %p31 = por %p29, %p30
      %p32 = scmp.ne.s32.totalorder %s24, %s27
      %p33 = scmp.eq.s32.totalorder %s14, 0
      %p34 = por %p32, %p33
      %p35 = scmp.ne.s32.totalorder %s24, %s27
      %p36 = scmp.eq.s32.totalorder %s19, 1
      %p37 = por %p35, %p36
      %p38 = scmp.ne.s32.totalorder %s27, %s28
      %p39 = scmp.eq.s32.totalorder %s19, 0
      %p40 = por %p38, %p39
      %p41 = scmp.ne.s32.totalorder %s27, %s28
      %p42 = scmp.eq.s32.totalorder %s20, 1
      %p43 = por %p41, %p42
      %p45 = scmp.ne.s32.totalorder %s28, %s44
      %p46 = scmp.eq.s32.totalorder %s20, 0
      %p47 = por %p45, %p46
      %s49 = sadd.s32 %s48, 1
      %p52 = scmp.eq.s32.totalorder %s14, 1
      %p53 = scmp.ne.s32.totalorder %s48, %s50
      %p54 = scmp.eq.s32.totalorder %s14, 0
      %p55 = por %p53, %p54
      %p56 = scmp.ne.s32.totalorder %s48, %s50
      %p57 = scmp.eq.s32.totalorder %s19, 1
      %p58 = por %p56, %p57
      %p59 = scmp.ne.s32.totalorder %s50, %s51
      %p60 = scmp.eq.s32.totalorder %s19, 0
      %p61 = por %p59, %p60
      %p62 = scmp.ne.s32.totalorder %s50, %s51
      %p63 = scmp.eq.s32.totalorder %s20, 1
      %p64 = por %p62, %p63
      %p66 = scmp.ne.s32.totalorder %s51, %s65
      %p67 = scmp.eq.s32.totalorder %s20, 0
      %p68 = por %p66, %p67
      %s70 = sadd.s32 %s69, 1
      %p73 = scmp.eq.s32.totalorder %s14, 1
      %p74 = scmp.ne.s32.totalorder %s69, %s71
      %p75 = scmp.eq.s32.totalorder %s14, 0
      %p76 = por %p74, %p75
      %p77 = scmp.ne.s32.totalorder %s69, %s71
      %p78 = scmp.eq.s32.totalorder %s19, 1
      %p79 = por %p77, %p78
      %p80 = scmp.ne.s32.totalorder %s71, %s72
      %p81 = scmp.eq.s32.totalorder %s19, 0
      %p82 = por %p80, %p81
      %p83 = scmp.ne.s32.totalorder %s71, %s72
      %p84 = scmp.eq.s32.totalorder %s20, 1
      %p85 = por %p83, %p84
      %p87 = scmp.ne.s32.totalorder %s72, %s86
      %p88 = scmp.eq.s32.totalorder %s20, 0
      %p89 = por %p87, %p88
      %s91 = sadd.s32 %s90, 1
      %p94 = scmp.eq.s32.totalorder %s14, 1
      %p95 = scmp.ne.s32.totalorder %s90, %s92
      %p96 = scmp.eq.s32.totalorder %s14, 0
      %p97 = por %p95, %p96
      %p98 = scmp.ne.s32.totalorder %s90, %s92
      %p99 = scmp.eq.s32.totalorder %s19, 1
      %p100 = por %p98, %p99
      %p101 = scmp.ne.s32.totalorder %s92, %s93
      %p102 = scmp.eq.s32.totalorder %s19, 0
      %p103 = por %p101, %p102
      %p104 = scmp.ne.s32.totalorder %s92, %s93
      %p105 = scmp.eq.s32.totalorder %s20, 1
      %p106 = por %p104, %p105
      %p108 = scmp.ne.s32.totalorder %s93, %s107
      %p109 = scmp.eq.s32.totalorder %s20, 0
      %p110 = por %p108, %p109
      %s112 = sadd.s32 %s111, 1
      %p115 = scmp.eq.s32.totalorder %s14, 1
      %p116 = scmp.ne.s32.totalorder %s111, %s113
      %p117 = scmp.eq.s32.totalorder %s14, 0
      %p118 = por %p116, %p117
      %p119 = scmp.ne.s32.totalorder %s111, %s113
      %p120 = scmp.eq.s32.totalorder %s19, 1
      %p121 = por %p119, %p120
      %p122 = scmp.ne.s32.totalorder %s113, %s114
      %p123 = scmp.eq.s32.totalorder %s19, 0
      %p124 = por %p122, %p123
      %p125 = scmp.ne.s32.totalorder %s113, %s114
      %p126 = scmp.eq.s32.totalorder %s20, 1
      %p127 = por %p125, %p126
      %p129 = scmp.ne.s32.totalorder %s114, %s128
      %p130 = scmp.eq.s32.totalorder %s20, 0
      %p131 = por %p129, %p130
      %s132 = ssub.s32 %s14, %s21
      %p133 = scmp.eq.s32.totalorder %s132, 0
      %s135 = sadd.s32 %s134, 1
      %s136 = scalar_select %p133, %s134, %s135
      %p139 = pneg %p133
      %p140 = scmp.eq.s32.totalorder %s14, 1
      %p141 = por %p139, %p140
      %p142 = scmp.ne.s32.totalorder %s134, %s137
      %p143 = scmp.eq.s32.totalorder %s14, 0
      %p144 = por %p142, %p143
      %p145 = scmp.ne.s32.totalorder %s134, %s137
      %p146 = scmp.eq.s32.totalorder %s19, 1
      %p147 = por %p145, %p146
      %p148 = scmp.ne.s32.totalorder %s137, %s138
      %p149 = scmp.eq.s32.totalorder %s19, 0
      %p150 = por %p148, %p149
      %p151 = scmp.ne.s32.totalorder %s137, %s138
      %p152 = scmp.eq.s32.totalorder %s20, 1
      %p153 = por %p151, %p152
      %p155 = scmp.ne.s32.totalorder %s138, %s154
      %p156 = scmp.eq.s32.totalorder %s20, 0
      %p157 = por %p155, %p156
      %p158 = scmp.le.s32.totalorder 1, %s14
      %p159 = scmp.lt.s32.totalorder %s14, 3
      %p160 = pnand %p158, %p159
      %p161 = pneg %p160
      // Predicated region
      $region9: #{_lambda_.11} parent=5 // pred_check
        _
      $region10: #{_lambda_.11} parent=5 // pred_check_branch
        %163 = sbr.rel (%p160) target = $region12
      $region11: #{_lambda_.11} parent=5 // pred_region
        %s164 = ssub.s32 %s14, 1
        // Predicated region
        $region13: #{_lambda_.11} parent=11 // pred_check
          %p165 = pneg %p61
        $region14: #{_lambda_.11} parent=11 // pred_check_branch
          %167 = sbr.rel (%p165) target = $region16
        $region15: #{_lambda_.11} parent=11 // pred_region
          _
        $region16: #{_lambda_.11} parent=11 // pred_fallthru
          _
        // Predicated region
        $region17: #{_lambda_.11} parent=11 // pred_check
          %p168 = pneg %p82
        $region18: #{_lambda_.11} parent=11 // pred_check_branch
          %170 = sbr.rel (%p168) target = $region20
        $region19: #{_lambda_.11} parent=11 // pred_region
          _
        $region20: #{_lambda_.11} parent=11 // pred_fallthru
          _
        // Predicated region
        $region21: #{_lambda_.11} parent=11 // pred_check
          %p171 = pneg %p103
        $region22: #{_lambda_.11} parent=11 // pred_check_branch
          %173 = sbr.rel (%p171) target = $region24
        $region23: #{_lambda_.11} parent=11 // pred_region
          _
        $region24: #{_lambda_.11} parent=11 // pred_fallthru
          _
        // Predicated region
        $region25: #{_lambda_.11} parent=11 // pred_check
          %p174 = pneg %p124
        $region26: #{_lambda_.11} parent=11 // pred_check_branch
          %176 = sbr.rel (%p174) target = $region28
        $region27: #{_lambda_.11} parent=11 // pred_region
          _
        $region28: #{_lambda_.11} parent=11 // pred_fallthru
          _
      $region12: #{_lambda_.11} parent=5 // pred_fallthru
        _
      %p177 = scmp.lt.s32.totalorder %s14, 2
      // Predicated region
      $region29: #{_lambda_.11} parent=5 // pred_check
        %p178 = pneg %p177
      $region30: #{_lambda_.11} parent=5 // pred_check_branch
        %180 = sbr.rel (%p178) target = $region32
      $region31: #{_lambda_.11} parent=5 // pred_region
        // Predicated region
        $region33: #{_lambda_.11} parent=31 // pred_check
          %p181 = pneg %p34
        $region34: #{_lambda_.11} parent=31 // pred_check_branch
          %183 = sbr.rel (%p181) target = $region36
        $region35: #{_lambda_.11} parent=31 // pred_region
          %p184 = scmp.lt.s32.totalorder %s14, 1
          %s185 = scalar_select %p184, %s14, 1
          %s186 = smul.addr %s185, 8
          %s187 = scalar_lea.vmem %s0, %s186
        $region36: #{_lambda_.11} parent=31 // pred_fallthru
          _
      $region32: #{_lambda_.11} parent=5 // pred_fallthru
        _
      %p188 = scmp.le.s32.totalorder 1, %s14
      %p189 = scmp.lt.s32.totalorder %s14, 3
      %p190 = pnand %p188, %p189
      %p191 = pneg %p190
      // Predicated region
      $region37: #{_lambda_.11} parent=5 // pred_check
        _
      $region38: #{_lambda_.11} parent=5 // pred_check_branch
        %193 = sbr.rel (%p190) target = $region40
      $region39: #{_lambda_.11} parent=5 // pred_region
        %s194 = ssub.s32 %s14, 1
        %p195 = scmp.lt.s32.totalorder %s19, 1
        %s196 = scalar_select %p195, %s19, 1
        %s197 = smul.addr %s196, 8
        %s198 = scalar_lea.vmem %s0, %s197
        %p199 = pneg %p40
        %p200 = pneg %p37
        %p201 = pneg %p61
        %p202 = pneg %p58
        %p203 = pneg %p82
        %p204 = pneg %p79
        %p205 = pneg %p103
        %p206 = pneg %p100
        %p207 = pneg %p124
        %p208 = pneg %p121
        %p209 = pneg %p150
        %p210 = pneg %p147
        %s211 = sand.u32 %s137, 1
        %s212 = scalar_lea.sflag [#allocation3], %s211
        %s213 = sand.u32 %s137, 1
        %s214 = scalar_lea.vmem [#allocation2], %s213
        %p215 = scmp.lt.s32.totalorder %s19, 1
        %s216 = scalar_select %p215, %s19, 1
        %s217 = smul.addr %s216, 8
        %s218 = scalar_lea.vmem %s0, %s217
        %v219 = vld [vmem:[%s218] sm:$0x1]
        %v220 = vld [vmem:[%s218 + $0x1] sm:$0x1]
        %v221 = vld [vmem:[%s218 + $0x2] sm:$0x1]
        %v222 = vld [vmem:[%s218 + $0x3] sm:$0x1]
        %v223 = vld [vmem:[%s218 + $0x4] sm:$0x1]
        %v224 = vld [vmem:[%s218 + $0x6] sm:$0x1]
        %v225 = vld [vmem:[%s1] sm:$0xf]
        %v226 = vld [vmem:[%s1 + $0x4] sm:$0xf]
        %v227 = vld [vmem:[%s1 + $0x8] sm:$0xf]
        %v228 = vld [vmem:[%s1 + $0xc] sm:$0xf]
        %v229 = vld [vmem:[%s1 + $0x10] sm:$0xf]
        %v230 = vld [vmem:[%s1 + $0x14] sm:$0xf]
        %v231 = vld [vmem:[%s1 + $0x18] sm:$0xf]
        %v232 = vld [vmem:[%s1 + $0x1c] sm:$0xf]
        %v233 = vld [vmem:[%s1 + $0x20] sm:$0xf]
        %v234 = vld [vmem:[%s1 + $0x24] sm:$0xf]
        %v235 = vld [vmem:[%s1 + $0x28] sm:$0xf]
        %v236 = vld [vmem:[%s1 + $0x2c] sm:$0xf]
        %v237 = vld [vmem:[%s1 + $0x30] sm:$0xf]
        %v238 = vld [vmem:[%s1 + $0x34] sm:$0xf]
        %v239 = vld [vmem:[%s1 + $0x38] sm:$0xf]
        %v240 = vld [vmem:[%s1 + $0x3c] sm:$0xf]
        %s241 = scalar_lea.vmem %s1, 64
        %v242 = vld [vmem:[%s241] sm:$0xf]
        %v243 = vld [vmem:[%s241 + $0x4] sm:$0xf]
        %v244 = vld [vmem:[%s241 + $0x8] sm:$0xf]
        %v245 = vld [vmem:[%s241 + $0xc] sm:$0xf]
        %v246 = vld [vmem:[%s241 + $0x10] sm:$0xf]
        %v247 = vld [vmem:[%s241 + $0x14] sm:$0xf]
        %v248 = vld [vmem:[%s241 + $0x18] sm:$0xf]
        %v249 = vld [vmem:[%s241 + $0x1c] sm:$0xf]
        %v250 = vld [vmem:[%s241 + $0x20] sm:$0xf]
        %v251 = vld [vmem:[%s241 + $0x24] sm:$0xf]
        %v252 = vld [vmem:[%s241 + $0x28] sm:$0xf]
        %v253 = vld [vmem:[%s241 + $0x2c] sm:$0xf]
        %v254 = vld [vmem:[%s241 + $0x30] sm:$0xf]
        %v255 = vld [vmem:[%s241 + $0x34] sm:$0xf]
        %v256 = vld [vmem:[%s241 + $0x38] sm:$0xf]
        %v257 = vld [vmem:[%s241 + $0x3c] sm:$0xf]
        %v274 = vunpack.c.l.b16 %v242
        %v275 = vunpack.c.l.b16 %v243
        %v276 = vunpack.c.l.b16 %v244
        %v277 = vunpack.c.l.b16 %v245
        %v278 = vunpack.c.l.b16 %v246
        %v279 = vunpack.c.l.b16 %v247
        %v280 = vunpack.c.l.b16 %v248
        %v281 = vunpack.c.l.b16 %v249
        %v282 = vunpack.c.l.b16 %v250
        %v283 = vunpack.c.l.b16 %v251
        %v284 = vunpack.c.l.b16 %v252
        %v285 = vunpack.c.l.b16 %v253
        %v286 = vunpack.c.l.b16 %v254
        %v287 = vunpack.c.l.b16 %v255
        %v288 = vunpack.c.l.b16 %v256
        %v289 = vunpack.c.l.b16 %v257
        %v290 = vpack.c.b16 %v275, %v274
        %v291 = vpack.c.b16 %v277, %v276
        %v292 = vpack.c.b16 %v279, %v278
        %v293 = vpack.c.b16 %v281, %v280
        %v294 = vpack.c.b16 %v283, %v282
        %v295 = vpack.c.b16 %v285, %v284
        %v296 = vpack.c.b16 %v287, %v286
        %v297 = vpack.c.b16 %v289, %v288
        %306 = vmatpush.bf16.msra.mxu0 %v297
        %307 = vmatpush.bf16.msra.mxu0 %v296
        %308 = vmatpush.bf16.msra.mxu0 %v295
        %309 = vmatpush.bf16.msra.mxu0 %v294
        %310 = vmatpush.bf16.msra.mxu0 %v293
        %311 = vmatpush.bf16.msra.mxu0 %v292
        %312 = vmatpush.bf16.msra.mxu0 %v291
        %313 = vmatpush.bf16.msra.mxu0 %v290
        %314 = vmatmul.bf16.gmra.mxu0 %v221
        %v315 = vpop.f32.mrf.mxu0
        %v316 = vadd.f32 0.0, %v315
        %v317 = vpop.f32.mrf.mxu0
        %318 = vdwg.mxu0
        %v335 = vunpack.c.l.b16 %v225
        %v336 = vunpack.c.l.b16 %v226
        %v337 = vunpack.c.l.b16 %v227
        %v338 = vunpack.c.l.b16 %v228
        %v339 = vunpack.c.l.b16 %v229
        %v340 = vunpack.c.l.b16 %v230
        %v341 = vunpack.c.l.b16 %v231
        %v342 = vunpack.c.l.b16 %v232
        %v343 = vunpack.c.l.b16 %v233
        %v344 = vunpack.c.l.b16 %v234
        %v345 = vunpack.c.l.b16 %v235
        %v346 = vunpack.c.l.b16 %v236
        %v347 = vunpack.c.l.b16 %v237
        %v348 = vunpack.c.l.b16 %v238
        %v349 = vunpack.c.l.b16 %v239
        %v350 = vunpack.c.l.b16 %v240
        %v351 = vpack.c.b16 %v336, %v335
        %v352 = vpack.c.b16 %v338, %v337
        %v353 = vpack.c.b16 %v340, %v339
        %v354 = vpack.c.b16 %v342, %v341
        %v355 = vpack.c.b16 %v344, %v343
        %v356 = vpack.c.b16 %v346, %v345
        %v357 = vpack.c.b16 %v348, %v347
        %v358 = vpack.c.b16 %v350, %v349
        %367 = vmatpush.bf16.msra.mxu0 %v358
        %368 = vmatpush.bf16.msra.mxu0 %v357
        %369 = vmatpush.bf16.msra.mxu0 %v356
        %370 = vmatpush.bf16.msra.mxu0 %v355
        %371 = vmatpush.bf16.msra.mxu0 %v354
        %372 = vmatpush.bf16.msra.mxu0 %v353
        %373 = vmatpush.bf16.msra.mxu0 %v352
        %374 = vmatpush.bf16.msra.mxu0 %v351
        %375 = vmatmul.bf16.gmra.mxu0 %v219
        %v376 = vpop.f32.mrf.mxu0
        %v377 = vadd.f32 %v316, %v376
        %v378 = vpop.f32.mrf.mxu0
        %379 = vdwg.mxu0
        %s380 = scalar_lea.vmem %s1, 128
        %v381 = vld [vmem:[%s380] sm:$0xf]
        %v382 = vld [vmem:[%s380 + $0x4] sm:$0xf]
        %v383 = vld [vmem:[%s380 + $0x8] sm:$0xf]
        %v384 = vld [vmem:[%s380 + $0xc] sm:$0xf]
        %v385 = vld [vmem:[%s380 + $0x10] sm:$0xf]
        %v386 = vld [vmem:[%s380 + $0x14] sm:$0xf]
        %v387 = vld [vmem:[%s380 + $0x18] sm:$0xf]
        %v388 = vld [vmem:[%s380 + $0x1c] sm:$0xf]
        %v389 = vld [vmem:[%s380 + $0x20] sm:$0xf]
        %v390 = vld [vmem:[%s380 + $0x24] sm:$0xf]
        %v391 = vld [vmem:[%s380 + $0x28] sm:$0xf]
        %v392 = vld [vmem:[%s380 + $0x2c] sm:$0xf]
        %v393 = vld [vmem:[%s380 + $0x30] sm:$0xf]
        %v394 = vld [vmem:[%s380 + $0x34] sm:$0xf]
        %v395 = vld [vmem:[%s380 + $0x38] sm:$0xf]
        %v396 = vld [vmem:[%s380 + $0x3c] sm:$0xf]
        %398 = vst [vmem:[#allocation1] ss:$9 sm:$0xff] %v219
        %v399 = vld [vmem:[#allocation1] sm:$0xff]
        %v400 = vshrl.u32 %v399, 16
        %v419 = vunpack.c.l.b16 %v381
        %v420 = vunpack.c.l.b16 %v382
        %v421 = vunpack.c.l.b16 %v383
        %v422 = vunpack.c.l.b16 %v384
        %v423 = vunpack.c.l.b16 %v385
        %v424 = vunpack.c.l.b16 %v386
        %v425 = vunpack.c.l.b16 %v387
        %v426 = vunpack.c.l.b16 %v388
        %v427 = vunpack.c.l.b16 %v389
        %v428 = vunpack.c.l.b16 %v390
        %v429 = vunpack.c.l.b16 %v391
        %v430 = vunpack.c.l.b16 %v392
        %v431 = vunpack.c.l.b16 %v393
        %v432 = vunpack.c.l.b16 %v394
        %v433 = vunpack.c.l.b16 %v395
        %v434 = vunpack.c.l.b16 %v396
        %v435 = vpack.c.b16 %v420, %v419
        %v436 = vpack.c.b16 %v422, %v421
        %v437 = vpack.c.b16 %v424, %v423
        %v438 = vpack.c.b16 %v426, %v425
        %v439 = vpack.c.b16 %v428, %v427
        %v440 = vpack.c.b16 %v430, %v429
        %v441 = vpack.c.b16 %v432, %v431
        %v442 = vpack.c.b16 %v434, %v433
        %451 = vmatpush.bf16.msra.mxu0 %v442
        %452 = vmatpush.bf16.msra.mxu0 %v441
        %453 = vmatpush.bf16.msra.mxu0 %v440
        %454 = vmatpush.bf16.msra.mxu0 %v439
        %455 = vmatpush.bf16.msra.mxu0 %v438
        %456 = vmatpush.bf16.msra.mxu0 %v437
        %457 = vmatpush.bf16.msra.mxu0 %v436
        %458 = vmatpush.bf16.msra.mxu0 %v435
        %459 = vmatmul.bf16.gmra.mxu0 %v400
        %v460 = vpop.f32.mrf.mxu0
        %v461 = vadd.f32 0.0, %v460
        %v462 = vpop.f32.mrf.mxu0
        %463 = vdwg.mxu0
        %v464 = vadd.f32 %v377, %v461
        %s465 = scalar_lea.vmem %s1, 192
        %v466 = vld [vmem:[%s465] sm:$0xf]
        %v467 = vld [vmem:[%s465 + $0x4] sm:$0xf]
        %v468 = vld [vmem:[%s465 + $0x8] sm:$0xf]
        %v469 = vld [vmem:[%s465 + $0xc] sm:$0xf]
        %v470 = vld [vmem:[%s465 + $0x10] sm:$0xf]
        %v471 = vld [vmem:[%s465 + $0x14] sm:$0xf]
        %v472 = vld [vmem:[%s465 + $0x18] sm:$0xf]
        %v473 = vld [vmem:[%s465 + $0x1c] sm:$0xf]
        %v474 = vld [vmem:[%s465 + $0x20] sm:$0xf]
        %v475 = vld [vmem:[%s465 + $0x24] sm:$0xf]
        %v476 = vld [vmem:[%s465 + $0x28] sm:$0xf]
        %v477 = vld [vmem:[%s465 + $0x2c] sm:$0xf]
        %v478 = vld [vmem:[%s465 + $0x30] sm:$0xf]
        %v479 = vld [vmem:[%s465 + $0x34] sm:$0xf]
        %v480 = vld [vmem:[%s465 + $0x38] sm:$0xf]
        %v481 = vld [vmem:[%s465 + $0x3c] sm:$0xf]
        %v498 = vunpack.c.l.b16 %v466
        %v499 = vunpack.c.l.b16 %v467
        %v500 = vunpack.c.l.b16 %v468
        %v501 = vunpack.c.l.b16 %v469
        %v502 = vunpack.c.l.b16 %v470
        %v503 = vunpack.c.l.b16 %v471
        %v504 = vunpack.c.l.b16 %v472
        %v505 = vunpack.c.l.b16 %v473
        %v506 = vunpack.c.l.b16 %v474
        %v507 = vunpack.c.l.b16 %v475
        %v508 = vunpack.c.l.b16 %v476
        %v509 = vunpack.c.l.b16 %v477
        %v510 = vunpack.c.l.b16 %v478
        %v511 = vunpack.c.l.b16 %v479
        %v512 = vunpack.c.l.b16 %v480
        %v513 = vunpack.c.l.b16 %v481
        %v514 = vpack.c.b16 %v499, %v498
        %v515 = vpack.c.b16 %v501, %v500
        %v516 = vpack.c.b16 %v503, %v502
        %v517 = vpack.c.b16 %v505, %v504
        %v518 = vpack.c.b16 %v507, %v506
        %v519 = vpack.c.b16 %v509, %v508
        %v520 = vpack.c.b16 %v511, %v510
        %v521 = vpack.c.b16 %v513, %v512
        %530 = vmatpush.bf16.msra.mxu0 %v521
        %531 = vmatpush.bf16.msra.mxu0 %v520
        %532 = vmatpush.bf16.msra.mxu0 %v519
        %533 = vmatpush.bf16.msra.mxu0 %v518
        %534 = vmatpush.bf16.msra.mxu0 %v517
        %535 = vmatpush.bf16.msra.mxu0 %v516
        %536 = vmatpush.bf16.msra.mxu0 %v515
        %537 = vmatpush.bf16.msra.mxu0 %v514
        %538 = vmatmul.bf16.gmra.mxu0 %v223
        %v539 = vpop.f32.mrf.mxu0
        %v540 = vadd.f32 0.0, %v539
        %v541 = vpop.f32.mrf.mxu0
        %542 = vdwg.mxu0
        %v543 = vadd.f32 %v464, %v540
        %s544 = scalar_lea.vmem %s1, 256
        %v545 = vld [vmem:[%s544] sm:$0xf]
        %v546 = vld [vmem:[%s544 + $0x4] sm:$0xf]
        %v547 = vld [vmem:[%s544 + $0x8] sm:$0xf]
        %v548 = vld [vmem:[%s544 + $0xc] sm:$0xf]
        %v549 = vld [vmem:[%s544 + $0x10] sm:$0xf]
        %v550 = vld [vmem:[%s544 + $0x14] sm:$0xf]
        %v551 = vld [vmem:[%s544 + $0x18] sm:$0xf]
        %v552 = vld [vmem:[%s544 + $0x1c] sm:$0xf]
        %v553 = vld [vmem:[%s544 + $0x20] sm:$0xf]
        %v554 = vld [vmem:[%s544 + $0x24] sm:$0xf]
        %v555 = vld [vmem:[%s544 + $0x28] sm:$0xf]
        %v556 = vld [vmem:[%s544 + $0x2c] sm:$0xf]
        %v557 = vld [vmem:[%s544 + $0x30] sm:$0xf]
        %v558 = vld [vmem:[%s544 + $0x34] sm:$0xf]
        %v559 = vld [vmem:[%s544 + $0x38] sm:$0xf]
        %v560 = vld [vmem:[%s544 + $0x3c] sm:$0xf]
        %v577 = vunpack.c.l.b16 %v545
        %v578 = vunpack.c.l.b16 %v546
        %v579 = vunpack.c.l.b16 %v547
        %v580 = vunpack.c.l.b16 %v548
        %v581 = vunpack.c.l.b16 %v549
        %v582 = vunpack.c.l.b16 %v550
        %v583 = vunpack.c.l.b16 %v551
        %v584 = vunpack.c.l.b16 %v552
        %v585 = vunpack.c.l.b16 %v553
        %v586 = vunpack.c.l.b16 %v554
        %v587 = vunpack.c.l.b16 %v555
        %v588 = vunpack.c.l.b16 %v556
        %v589 = vunpack.c.l.b16 %v557
        %v590 = vunpack.c.l.b16 %v558
        %v591 = vunpack.c.l.b16 %v559
        %v592 = vunpack.c.l.b16 %v560
        %v593 = vpack.c.b16 %v578, %v577
        %v594 = vpack.c.b16 %v580, %v579
        %v595 = vpack.c.b16 %v582, %v581
        %v596 = vpack.c.b16 %v584, %v583
        %v597 = vpack.c.b16 %v586, %v585
        %v598 = vpack.c.b16 %v588, %v587
        %v599 = vpack.c.b16 %v590, %v589
        %v600 = vpack.c.b16 %v592, %v591
        %609 = vmatpush.bf16.msra.mxu0 %v600
        %610 = vmatpush.bf16.msra.mxu0 %v599
        %611 = vmatpush.bf16.msra.mxu0 %v598
        %612 = vmatpush.bf16.msra.mxu0 %v597
        %613 = vmatpush.bf16.msra.mxu0 %v596
        %614 = vmatpush.bf16.msra.mxu0 %v595
        %615 = vmatpush.bf16.msra.mxu0 %v594
        %616 = vmatpush.bf16.msra.mxu0 %v593
        %617 = vmatmul.bf16.gmra.mxu0 %v224
        %v618 = vpop.f32.mrf.mxu0
        %v619 = vadd.f32 0.0, %v618
        %v620 = vpop.f32.mrf.mxu0
        %621 = vdwg.mxu0
        %v622 = vadd.f32 %v543, %v619
        %s623 = scalar_lea.vmem %s1, 320
        %v624 = vld [vmem:[%s623] sm:$0xf]
        %v625 = vld [vmem:[%s623 + $0x4] sm:$0xf]
        %v626 = vld [vmem:[%s623 + $0x8] sm:$0xf]
        %v627 = vld [vmem:[%s623 + $0xc] sm:$0xf]
        %v628 = vld [vmem:[%s623 + $0x10] sm:$0xf]
        %v629 = vld [vmem:[%s623 + $0x14] sm:$0xf]
        %v630 = vld [vmem:[%s623 + $0x18] sm:$0xf]
        %v631 = vld [vmem:[%s623 + $0x1c] sm:$0xf]
        %v632 = vld [vmem:[%s623 + $0x20] sm:$0xf]
        %v633 = vld [vmem:[%s623 + $0x24] sm:$0xf]
        %v634 = vld [vmem:[%s623 + $0x28] sm:$0xf]
        %v635 = vld [vmem:[%s623 + $0x2c] sm:$0xf]
        %v636 = vld [vmem:[%s623 + $0x30] sm:$0xf]
        %v637 = vld [vmem:[%s623 + $0x34] sm:$0xf]
        %v638 = vld [vmem:[%s623 + $0x38] sm:$0xf]
        %v639 = vld [vmem:[%s623 + $0x3c] sm:$0xf]
        %641 = vst [vmem:[#allocation1] ss:$9 sm:$0xff] %v223
        %v642 = vld [vmem:[#allocation1] sm:$0xff]
        %v643 = vshrl.u32 %v642, 16
        %v662 = vunpack.c.l.b16 %v624
        %v663 = vunpack.c.l.b16 %v625
        %v664 = vunpack.c.l.b16 %v626
        %v665 = vunpack.c.l.b16 %v627
        %v666 = vunpack.c.l.b16 %v628
        %v667 = vunpack.c.l.b16 %v629
        %v668 = vunpack.c.l.b16 %v630
        %v669 = vunpack.c.l.b16 %v631
        %v670 = vunpack.c.l.b16 %v632
        %v671 = vunpack.c.l.b16 %v633
        %v672 = vunpack.c.l.b16 %v634
        %v673 = vunpack.c.l.b16 %v635
        %v674 = vunpack.c.l.b16 %v636
        %v675 = vunpack.c.l.b16 %v637
        %v676 = vunpack.c.l.b16 %v638
        %v677 = vunpack.c.l.b16 %v639
        %v678 = vpack.c.b16 %v663, %v662
        %v679 = vpack.c.b16 %v665, %v664
        %v680 = vpack.c.b16 %v667, %v666
        %v681 = vpack.c.b16 %v669, %v668
        %v682 = vpack.c.b16 %v671, %v670
        %v683 = vpack.c.b16 %v673, %v672
        %v684 = vpack.c.b16 %v675, %v674
        %v685 = vpack.c.b16 %v677, %v676
        %694 = vmatpush.bf16.msra.mxu0 %v685
        %695 = vmatpush.bf16.msra.mxu0 %v684
        %696 = vmatpush.bf16.msra.mxu0 %v683
        %697 = vmatpush.bf16.msra.mxu0 %v682
        %698 = vmatpush.bf16.msra.mxu0 %v681
        %699 = vmatpush.bf16.msra.mxu0 %v680
        %700 = vmatpush.bf16.msra.mxu0 %v679
        %701 = vmatpush.bf16.msra.mxu0 %v678
        %702 = vmatmul.bf16.gmra.mxu0 %v643
        %v703 = vpop.f32.mrf.mxu0
        %v704 = vadd.f32 0.0, %v703
        %v705 = vpop.f32.mrf.mxu0
        %706 = vdwg.mxu0
        %v707 = vadd.f32 %v622, %v704
        %s708 = scalar_lea.vmem %s1, 384
        %v709 = vld [vmem:[%s708] sm:$0xf]
        %v710 = vld [vmem:[%s708 + $0x4] sm:$0xf]
        %v711 = vld [vmem:[%s708 + $0x8] sm:$0xf]
        %v712 = vld [vmem:[%s708 + $0xc] sm:$0xf]
        %v713 = vld [vmem:[%s708 + $0x10] sm:$0xf]
        %v714 = vld [vmem:[%s708 + $0x14] sm:$0xf]
        %v715 = vld [vmem:[%s708 + $0x18] sm:$0xf]
        %v716 = vld [vmem:[%s708 + $0x1c] sm:$0xf]
        %v717 = vld [vmem:[%s708 + $0x20] sm:$0xf]
        %v718 = vld [vmem:[%s708 + $0x24] sm:$0xf]
        %v719 = vld [vmem:[%s708 + $0x28] sm:$0xf]
        %v720 = vld [vmem:[%s708 + $0x2c] sm:$0xf]
        %v721 = vld [vmem:[%s708 + $0x30] sm:$0xf]
        %v722 = vld [vmem:[%s708 + $0x34] sm:$0xf]
        %v723 = vld [vmem:[%s708 + $0x38] sm:$0xf]
        %v724 = vld [vmem:[%s708 + $0x3c] sm:$0xf]
        %v741 = vunpack.c.l.b16 %v709
        %v742 = vunpack.c.l.b16 %v710
        %v743 = vunpack.c.l.b16 %v711
        %v744 = vunpack.c.l.b16 %v712
        %v745 = vunpack.c.l.b16 %v713
        %v746 = vunpack.c.l.b16 %v714
        %v747 = vunpack.c.l.b16 %v715
        %v748 = vunpack.c.l.b16 %v716
        %v749 = vunpack.c.l.b16 %v717
        %v750 = vunpack.c.l.b16 %v718
        %v751 = vunpack.c.l.b16 %v719
        %v752 = vunpack.c.l.b16 %v720
        %v753 = vunpack.c.l.b16 %v721
        %v754 = vunpack.c.l.b16 %v722
        %v755 = vunpack.c.l.b16 %v723
        %v756 = vunpack.c.l.b16 %v724
        %v757 = vpack.c.b16 %v742, %v741
        %v758 = vpack.c.b16 %v744, %v743
        %v759 = vpack.c.b16 %v746, %v745
        %v760 = vpack.c.b16 %v748, %v747
        %v761 = vpack.c.b16 %v750, %v749
        %v762 = vpack.c.b16 %v752, %v751
        %v763 = vpack.c.b16 %v754, %v753
        %v764 = vpack.c.b16 %v756, %v755
        %773 = vmatpush.bf16.msra.mxu0 %v764
        %774 = vmatpush.bf16.msra.mxu0 %v763
        %775 = vmatpush.bf16.msra.mxu0 %v762
        %776 = vmatpush.bf16.msra.mxu0 %v761
        %777 = vmatpush.bf16.msra.mxu0 %v760
        %778 = vmatpush.bf16.msra.mxu0 %v759
        %779 = vmatpush.bf16.msra.mxu0 %v758
        %780 = vmatpush.bf16.msra.mxu0 %v757
        %781 = vmatmul.bf16.gmra.mxu0 %v220
        %v782 = vpop.f32.mrf.mxu0
        %v783 = vadd.f32 0.0, %v782
        %v784 = vpop.f32.mrf.mxu0
        %785 = vdwg.mxu0
        %v786 = vadd.f32 %v707, %v783
        %s787 = scalar_lea.vmem %s1, 448
        %v788 = vld [vmem:[%s787] sm:$0xf]
        %v789 = vld [vmem:[%s787 + $0x4] sm:$0xf]
        %v790 = vld [vmem:[%s787 + $0x8] sm:$0xf]
        %v791 = vld [vmem:[%s787 + $0xc] sm:$0xf]
        %v792 = vld [vmem:[%s787 + $0x10] sm:$0xf]
        %v793 = vld [vmem:[%s787 + $0x14] sm:$0xf]
        %v794 = vld [vmem:[%s787 + $0x18] sm:$0xf]
        %v795 = vld [vmem:[%s787 + $0x1c] sm:$0xf]
        %v796 = vld [vmem:[%s787 + $0x20] sm:$0xf]
        %v797 = vld [vmem:[%s787 + $0x24] sm:$0xf]
        %v798 = vld [vmem:[%s787 + $0x28] sm:$0xf]
        %v799 = vld [vmem:[%s787 + $0x2c] sm:$0xf]
        %v800 = vld [vmem:[%s787 + $0x30] sm:$0xf]
        %v801 = vld [vmem:[%s787 + $0x34] sm:$0xf]
        %v802 = vld [vmem:[%s787 + $0x38] sm:$0xf]
        %v803 = vld [vmem:[%s787 + $0x3c] sm:$0xf]
        %v820 = vunpack.c.l.b16 %v788
        %v821 = vunpack.c.l.b16 %v789
        %v822 = vunpack.c.l.b16 %v790
        %v823 = vunpack.c.l.b16 %v791
        %v824 = vunpack.c.l.b16 %v792
        %v825 = vunpack.c.l.b16 %v793
        %v826 = vunpack.c.l.b16 %v794
        %v827 = vunpack.c.l.b16 %v795
        %v828 = vunpack.c.l.b16 %v796
        %v829 = vunpack.c.l.b16 %v797
        %v830 = vunpack.c.l.b16 %v798
        %v831 = vunpack.c.l.b16 %v799
        %v832 = vunpack.c.l.b16 %v800
        %v833 = vunpack.c.l.b16 %v801
        %v834 = vunpack.c.l.b16 %v802
        %v835 = vunpack.c.l.b16 %v803
        %v836 = vpack.c.b16 %v821, %v820
        %v837 = vpack.c.b16 %v823, %v822
        %v838 = vpack.c.b16 %v825, %v824
        %v839 = vpack.c.b16 %v827, %v826
        %v840 = vpack.c.b16 %v829, %v828
        %v841 = vpack.c.b16 %v831, %v830
        %v842 = vpack.c.b16 %v833, %v832
        %v843 = vpack.c.b16 %v835, %v834
        %852 = vmatpush.bf16.msra.mxu0 %v843
        %853 = vmatpush.bf16.msra.mxu0 %v842
        %854 = vmatpush.bf16.msra.mxu0 %v841
        %855 = vmatpush.bf16.msra.mxu0 %v840
        %856 = vmatpush.bf16.msra.mxu0 %v839
        %857 = vmatpush.bf16.msra.mxu0 %v838
        %858 = vmatpush.bf16.msra.mxu0 %v837
        %859 = vmatpush.bf16.msra.mxu0 %v836
        %860 = vmatmul.bf16.gmra.mxu0 %v222
        %v861 = vpop.f32.mrf.mxu0
        %v862 = vadd.f32 0.0, %v861
        %v863 = vpop.f32.mrf.mxu0
        %864 = vdwg.mxu0
        %v865 = vadd.f32 %v786, %v862
        %s866 = scalar_lea.vmem %s1, 512
        %v867 = vld [vmem:[%s866] sm:$0xf]
        %v868 = vld [vmem:[%s866 + $0x4] sm:$0xf]
        %v869 = vld [vmem:[%s866 + $0x8] sm:$0xf]
        %v870 = vld [vmem:[%s866 + $0xc] sm:$0xf]
        %v871 = vld [vmem:[%s866 + $0x10] sm:$0xf]
        %v872 = vld [vmem:[%s866 + $0x14] sm:$0xf]
        %v873 = vld [vmem:[%s866 + $0x18] sm:$0xf]
        %v874 = vld [vmem:[%s866 + $0x1c] sm:$0xf]
        %v875 = vld [vmem:[%s866 + $0x20] sm:$0xf]
        %v876 = vld [vmem:[%s866 + $0x24] sm:$0xf]
        %v877 = vld [vmem:[%s866 + $0x28] sm:$0xf]
        %v878 = vld [vmem:[%s866 + $0x2c] sm:$0xf]
        %v879 = vld [vmem:[%s866 + $0x30] sm:$0xf]
        %v880 = vld [vmem:[%s866 + $0x34] sm:$0xf]
        %v881 = vld [vmem:[%s866 + $0x38] sm:$0xf]
        %v882 = vld [vmem:[%s866 + $0x3c] sm:$0xf]
        %884 = vst [vmem:[#allocation1] ss:$9 sm:$0xff] %v220
        %v885 = vld [vmem:[#allocation1] sm:$0xff]
        %v886 = vshrl.u32 %v885, 16
        %v905 = vunpack.c.l.b16 %v867
        %v906 = vunpack.c.l.b16 %v868
        %v907 = vunpack.c.l.b16 %v869
        %v908 = vunpack.c.l.b16 %v870
        %v909 = vunpack.c.l.b16 %v871
        %v910 = vunpack.c.l.b16 %v872
        %v911 = vunpack.c.l.b16 %v873
        %v912 = vunpack.c.l.b16 %v874
        %v913 = vunpack.c.l.b16 %v875
        %v914 = vunpack.c.l.b16 %v876
        %v915 = vunpack.c.l.b16 %v877
        %v916 = vunpack.c.l.b16 %v878
        %v917 = vunpack.c.l.b16 %v879
        %v918 = vunpack.c.l.b16 %v880
        %v919 = vunpack.c.l.b16 %v881
        %v920 = vunpack.c.l.b16 %v882
        %v921 = vpack.c.b16 %v906, %v905
        %v922 = vpack.c.b16 %v908, %v907
        %v923 = vpack.c.b16 %v910, %v909
        %v924 = vpack.c.b16 %v912, %v911
        %v925 = vpack.c.b16 %v914, %v913
        %v926 = vpack.c.b16 %v916, %v915
        %v927 = vpack.c.b16 %v918, %v917
        %v928 = vpack.c.b16 %v920, %v919
        %937 = vmatpush.bf16.msra.mxu0 %v928
        %938 = vmatpush.bf16.msra.mxu0 %v927
        %939 = vmatpush.bf16.msra.mxu0 %v926
        %940 = vmatpush.bf16.msra.mxu0 %v925
        %941 = vmatpush.bf16.msra.mxu0 %v924
        %942 = vmatpush.bf16.msra.mxu0 %v923
        %943 = vmatpush.bf16.msra.mxu0 %v922
        %944 = vmatpush.bf16.msra.mxu0 %v921
        %945 = vmatmul.bf16.gmra.mxu0 %v886
        %v946 = vpop.f32.mrf.mxu0
        %v947 = vadd.f32 0.0, %v946
        %v948 = vpop.f32.mrf.mxu0
        %949 = vdwg.mxu0
        %v950 = vadd.f32 %v865, %v947
        %v951 = vld [vmem:[%s2] sm:$0x1]
        %v952 = vadd.f32 %v950, %v951
        %v953 = vmax.f32 %v952, 0.0
        %v954 = vadd.f32 %v953, 0.0
        %v955 = vld [vmem:[%s3] sm:$0xff]
        %v956 = vld [vmem:[%s3 + $0x8] sm:$0xff]
        %v957 = vld [vmem:[%s3 + $0x10] sm:$0xff]
        %v958 = vld [vmem:[%s3 + $0x18] sm:$0xff]
        %v959 = vld [vmem:[%s3 + $0x20] sm:$0xff]
        %v960 = vld [vmem:[%s3 + $0x28] sm:$0xff]
        %v961 = vld [vmem:[%s3 + $0x30] sm:$0xff]
        %v962 = vld [vmem:[%s3 + $0x38] sm:$0xff]
        %v963 = vld [vmem:[%s3 + $0x40] sm:$0xff]
        %v964 = vld [vmem:[%s3 + $0x48] sm:$0xff]
        %v965 = vld [vmem:[%s3 + $0x50] sm:$0xff]
        %v966 = vld [vmem:[%s3 + $0x58] sm:$0xff]
        %v967 = vld [vmem:[%s3 + $0x60] sm:$0xff]
        %v968 = vld [vmem:[%s3 + $0x68] sm:$0xff]
        %v969 = vld [vmem:[%s3 + $0x70] sm:$0xff]
        %v970 = vld [vmem:[%s3 + $0x78] sm:$0xff]
        %v971 = vld [vmem:[%s4] sm:$0x1]
        %972 = vmatpush.msra.mxu0 %v970
        %973 = vmatpush.msra.mxu0 %v969
        %974 = vmatpush.msra.mxu0 %v968
        %975 = vmatpush.msra.mxu0 %v967
        %976 = vmatpush.msra.mxu0 %v966
        %977 = vmatpush.msra.mxu0 %v965
        %978 = vmatpush.msra.mxu0 %v964
        %979 = vmatpush.msra.mxu0 %v963
        %980 = vmatpush.msra.mxu0 %v962
        %981 = vmatpush.msra.mxu0 %v961
        %982 = vmatpush.msra.mxu0 %v960
        %983 = vmatpush.msra.mxu0 %v959
        %984 = vmatpush.msra.mxu0 %v958
        %985 = vmatpush.msra.mxu0 %v957
        %986 = vmatpush.msra.mxu0 %v956
        %987 = vmatpush.msra.mxu0 %v955
        %988 = vmatmul.f32.gmra.mxu0 %v954
        %v989 = vpop.f32.mrf.mxu0
        %v990 = vadd.f32 %v971, %v989
        %991 = vdwg.mxu0
        %992 = vst [vmem:[%s214] sm:$0x1] %v990
        %s993 = sand.u32 %s137, 1
        %s994 = scalar_lea.sflag [#allocation3], %s993
        %s995 = sand.u32 %s137, 1
        %s996 = scalar_lea.vmem [#allocation2], %s995
        // Predicated region
        $region41: #{_lambda_.11} parent=39 // pred_check
          %p997 = pneg %p147
        $region42: #{_lambda_.11} parent=39 // pred_check_branch
          %999 = sbr.rel (%p997) target = $region44
        $region43: #{_lambda_.11} parent=39 // pred_region
          %1001 = vsyncadd %s994, 0
          %s1002 = scalar_lea.hbm %s5, %s19
          %s1004 = sshll.u32 %s996, 4
          %s1005 = int_to_ptr.vmem [resolvable:$true] %s1004
          %s1006 = sshll.u32 %s1002, 4
          %s1007 = int_to_ptr.hbm [resolvable:$true] %s1006
          %1009 = dma.vmem_to_hbm [thread:$0]  %s1005, 16, %s1007, %s994
        $region44: #{_lambda_.11} parent=39 // pred_fallthru
          _
      $region40: #{_lambda_.11} parent=5 // pred_fallthru
        _
      %p1010 = scmp.le.s32.totalorder 2, %s14
      // Predicated region
      $region45: #{_lambda_.11} parent=5 // pred_check
        %p1011 = pneg %p1010
      $region46: #{_lambda_.11} parent=5 // pred_check_branch
        %1013 = sbr.rel (%p1011) target = $region48
      $region47: #{_lambda_.11} parent=5 // pred_region
        %s1014 = ssub.s32 %s14, 2
        // Predicated region
        $region49: #{_lambda_.11} parent=47 // pred_check
          %p1015 = pneg %p153
        $region50: #{_lambda_.11} parent=47 // pred_check_branch
          %1017 = sbr.rel (%p1015) target = $region52
        $region51: #{_lambda_.11} parent=47 // pred_region
          %s1018 = sand.u32 %s138, 1
          %s1019 = scalar_lea.sflag [#allocation3], %s1018
          %s1020 = sand.u32 %s138, 1
          %s1021 = scalar_lea.vmem [#allocation2], %s1020
          %1023 = dma.done %s1019, 16
        $region52: #{_lambda_.11} parent=47 // pred_fallthru
          _
      $region48: #{_lambda_.11} parent=5 // pred_fallthru
        _
    $region6: #{_lambda_.11} parent=1 // loop_footer
      %s18 = sadd.s32 1, %s14
    $region7: #{_lambda_.11} parent=1 // loop_footer_branch
      %13 = sbr.rel target = $region3
    $region8: #{_lambda_.11} parent=1 // loop_exit
      _
    %1024 = vsyncpa [#allocation3], 1
    %s1025 = scalar_lea.sflag [#allocation3], 1
    %1026 = vsyncpa %s1025, 1

</llo_original>
